<compile_context>
chip_gen: v6e
topology: v6e:2x2x1
jax: 0.10.0
libtpu: 0.0.40
codegen_flags: <defaults>
</compile_context>

<pallas_src>
import math
from functools import partial

import jax
import jax.numpy as jnp
from jax.experimental import pallas as pl
from jax.experimental.pallas import tpu as pltpu

# ---- module config (defaults of Regular) ----
C_IN = 32
OUT_DIV = (11, 11, 10)                    # per-branch out channels
C_OUT = sum(OUT_DIV)                      # 32
DILATIONS = (1, 2, 5)
MAX_PAD = max(DILATIONS)                  # pad once with 5
KSIZE = 3
N_TAPS = len(DILATIONS) * KSIZE * KSIZE   # 27
TAPS_PER_GROUP = 4                        # 4 taps * 32 ch = 128 lanes / store
N_TAPS_PAD = ((N_TAPS + TAPS_PER_GROUP - 1) // TAPS_PER_GROUP) * TAPS_PER_GROUP
N_GROUPS = N_TAPS_PAD // TAPS_PER_GROUP   # 7
K_PACK = N_TAPS_PAD * C_IN                # 896 (27 real + 1 zero tap)
BN_EPS = 1e-5
LANES = 128

# ---- generation-aware tiling caps (v7x has 64 MiB VMEM, v5e/v6e 128 MiB) ----
def _tpu_vmem_bytes():
    try:
        return int(pltpu.get_tpu_info().vmem_capacity_bytes)
    except Exception:
        return 64 * 1024 * 1024           # conservative fallback
_VMEM_CAP_BYTES = _tpu_vmem_bytes()
_SMALL_VMEM = _VMEM_CAP_BYTES <= 64 * 1024 * 1024
_TILE_M_CAP = 2048 if _SMALL_VMEM else 8192      # rows of im2col per H-tile
_TILE_R_CAP = 2048 if _SMALL_VMEM else 8192      # rows per BN/ReLU tile
_VMEM_LIMIT = int(min(3 * _VMEM_CAP_BYTES // 4, 96 * 1024 * 1024))


def _tap_offsets():
    """(h0, w0) offsets into the MAX_PAD-padded input per tap, plus zero pads."""
    taps = []
    for d in DILATIONS:
        base = MAX_PAD - d
        for ky in range(KSIZE):
            for kx in range(KSIZE):
                taps.append((base + ky * d, base + kx * d))
    while len(taps) < N_TAPS_PAD:
        taps.append(None)                  # dummy tap -> zero weight rows
    return taps


def _pick_tile_h(H, W, cap_rows):
    """Largest divisor tile_h of H with tile_h*W <= cap_rows and 8-aligned rows.
    Never falls back to the full extent when it would blow the cap; prefers an
    even tile_h so the tile can be split into two overlapped sub-chunks."""
    divs = [t for t in range(1, H + 1) if H % t == 0]
    ok = [t for t in divs if t * W <= cap_rows and (t * W) % 8 == 0]
    if not ok:
        ok = [t for t in divs if t * W <= cap_rows] or [1]
    tile_h = max(ok)
    even = [t for t in ok if t % 2 == 0 and ((t // 2) * W) % 8 == 0]
    if even and 2 * max(even) >= tile_h:
        tile_h = max(even)
    n_sub = 2 if (tile_h % 2 == 0 and ((tile_h // 2) * W) % 8 == 0) else 1
    return tile_h, n_sub


def _largest_divisor(n, cap):
    cap = max(1, min(n, cap))
    for t in range(cap, 0, -1):
        if n % t == 0 and (t % 8 == 0 or t == n):
            return t
    return n


def _conv_stats_kernel(x_ref, w_ref, conv_ref, stats_ref, *lhs_refs,
                       tile_h, w_out):
    """Dilated-conv tile + fused BN partial statistics.

    x_ref    : (Hp, Wp, C_IN)          bf16  padded input of one batch element
    w_ref    : (K_PACK, C_OUT)         bf16  packed per-tap weights (im2col)
    conv_ref : (tile_h*w_out, C_OUT)   f32   pre-BN conv output tile
    stats_ref: (2, C_OUT)              f32   [sum; sum of squares] of this tile
    lhs_refs : n_sub x (sub_m, K_PACK) bf16  im2col scratch (one per sub-chunk)
    """
    n_sub = len(lhs_refs)
    sub_h = tile_h // n_sub
    sub_m = sub_h * w_out
    hs = pl.program_id(1) * tile_h
    taps = _tap_offsets()

    s1 = jnp.zeros((1, C_OUT), jnp.float32)
    s2 = jnp.zeros((1, C_OUT), jnp.float32)

    # Two independent pack->matmul chains (separate scratch refs) so the MXU
    # matmul of sub-chunk 0 can overlap the packing stores of sub-chunk 1.
    for s in range(n_sub):
        lhs = lhs_refs[s]
        row0 = hs + s * sub_h
        for g in range(N_GROUPS):
            pieces = []
            for j in range(TAPS_PER_GROUP):
                tap = taps[g * TAPS_PER_GROUP + j]
                if tap is None:
                    pieces.append(jnp.zeros((sub_h, w_out, C_IN), jnp.bfloat16))
                else:
                    h0, w0 = tap
                    pieces.append(
                        x_ref[pl.ds(row0 + h0, sub_h), pl.ds(w0, w_out), :])
            grp = jnp.concatenate(pieces, axis=-1)       # (sub_h, w_out, 128)
            # One unmasked 128-lane-wide store per group of 4 taps.
            lhs[:, g * LANES:(g + 1) * LANES] = grp.reshape(sub_m, LANES)

        # Single K-packed bf16 MXU matmul: (sub_m, 896) x (896, 32) -> f32.
        acc = jnp.dot(lhs[...], w_ref[...], preferred_element_type=jnp.float32)
        conv_ref[pl.ds(s * sub_m, sub_m), :] = acc

        # Fused BN partial statistics (f32). Single-pass E[x^2]-E[x]^2 form:
        # fine here (conv outputs are ~zero-mean), clamp guards tiny negatives.
        s1 = s1 + jnp.sum(acc, axis=0, keepdims=True)
        s2 = s2 + jnp.sum(acc * acc, axis=0, keepdims=True)

    stats_ref[...] = jnp.concatenate([s1, s2], axis=0)


def _bn_relu_kernel(y_ref, scale_ref, shift_ref, o_ref):
    """Lane-dense (tile_r, 128) affine + ReLU apply pass."""
    o_ref[...] = jnp.maximum(y_ref[...] * scale_ref[...] + shift_ref[...], 0.0)


def pack_weights(w1, w2, w3):
    """PyTorch OIHW branch weights -> (K_PACK, C_OUT) bf16 im2col weight.
    Row block t*C_IN:(t+1)*C_IN of tap t=(branch,ky,kx) holds that tap's
    (C_IN, co) matrix in the branch's output-channel columns (rest zero);
    the padded 28th tap's rows stay zero."""
    wp = jnp.zeros((K_PACK, C_OUT), jnp.float32)
    off = 0
    t = 0
    for w in (w1, w2, w3):
        co = w.shape[0]
        for ky in range(KSIZE):
            for kx in range(KSIZE):
                wp = wp.at[t * C_IN:(t + 1) * C_IN, off:off + co].set(
                    jnp.transpose(w[:, :, ky, kx]))
                t += 1
        off += co
    return wp.astype(jnp.bfloat16)


def regular_forward(x_nchw, w1, w2, w3, gamma, beta):
    N, C, H, W = x_nchw.shape
    assert C == C_IN
    group = LANES // C_OUT                       # 4 pixels per 128-lane row
    assert LANES % C_OUT == 0 and (N * H * W) % group == 0

    # bf16 BEFORE the layout transpose + pad (half the prep-pass HBM bytes).
    x = jnp.transpose(x_nchw.astype(jnp.bfloat16), (0, 2, 3, 1))   # NHWC bf16
    x_pad = jnp.pad(x, ((0, 0), (MAX_PAD, MAX_PAD), (MAX_PAD, MAX_PAD), (0, 0)))
    Hp, Wp = H + 2 * MAX_PAD, W + 2 * MAX_PAD
    w_packed = pack_weights(w1, w2, w3)

    # H-tiling keeps the im2col scratch / output block within VMEM budget.
    tile_h, n_sub = _pick_tile_h(H, W, _TILE_M_CAP)
    n_ht = H // tile_h
    tile_m = tile_h * W
    sub_m = (tile_h // n_sub) * W
    # TODO(synk): for very large feature maps the whole padded image is still
    # a (double-buffered) input block; a halo-window manual DMA (memory_space=
    # pl.ANY) would shrink kernel-1 VMEM residency further on v7x.

    conv_flops = 2 * N * H * W * K_PACK * C_OUT
    conv_bytes = (N * Hp * Wp * C_IN * 2 + K_PACK * C_OUT * 2
                  + N * H * W * C_OUT * 4 + N * n_ht * 2 * C_OUT * 4)

    conv_out, stats = pl.pallas_call(
        partial(_conv_stats_kernel, tile_h=tile_h, w_out=W),
        grid=(N, n_ht),
        in_specs=[
            pl.BlockSpec((None, Hp, Wp, C_IN), lambda n, h: (n, 0, 0, 0)),
            pl.BlockSpec((K_PACK, C_OUT), lambda n, h: (0, 0)),
        ],
        out_specs=[
            pl.BlockSpec((None, tile_m, C_OUT), lambda n, h: (n, h, 0)),
            pl.BlockSpec((None, None, 2, C_OUT), lambda n, h: (n, h, 0, 0)),
        ],
        out_shape=[
            jax.ShapeDtypeStruct((N, H * W, C_OUT), jnp.float32),
            jax.ShapeDtypeStruct((N, n_ht, 2, C_OUT), jnp.float32),
        ],
        scratch_shapes=[pltpu.VMEM((sub_m, K_PACK), jnp.bfloat16)
                        for _ in range(n_sub)],
        compiler_params=pltpu.CompilerParams(
            # no cross-tile carry -> both axes parallel (v7x megacore for N=1)
            dimension_semantics=("parallel", "parallel"),
            vmem_limit_bytes=_VMEM_LIMIT),
        cost_estimate=pl.CostEstimate(
            flops=conv_flops, transcendentals=0, bytes_accessed=conv_bytes),
    )(x_pad, w_packed)

    # BatchNorm (training mode, biased stats over N*H*W) folded to one affine.
    cnt = float(N * H * W)
    sums = jnp.sum(stats, axis=(0, 1))            # (2, C_OUT)
    mean = sums[0] / cnt
    var = jnp.maximum(sums[1] / cnt - mean * mean, 0.0)
    scale = gamma * jax.lax.rsqrt(var + BN_EPS)
    shift = beta - mean * scale

    # Lane-dense view: 4 consecutive pixels x 32 channels = 128 lanes per row.
    # (contiguous reshape -> identical HBM layout, free at the XLA level)
    rows = (N * H * W) // group
    conv_flat = conv_out.reshape(rows, LANES)
    scale_l = jnp.tile(scale, group).reshape(1, LANES)
    shift_l = jnp.tile(shift, group).reshape(1, LANES)

    tile_r = _largest_divisor(rows, _TILE_R_CAP)
    bn_bytes = rows * LANES * 4 * 2 + 2 * LANES * 4
    y = pl.pallas_call(
        _bn_relu_kernel,
        grid=(rows // tile_r,),
        in_specs=[
            pl.BlockSpec((tile_r, LANES), lambda r: (r, 0)),
            pl.BlockSpec((1, LANES), lambda r: (0, 0)),
            pl.BlockSpec((1, LANES), lambda r: (0, 0)),
        ],
        out_specs=pl.BlockSpec((tile_r, LANES), lambda r: (r, 0)),
        out_shape=jax.ShapeDtypeStruct((rows, LANES), jnp.float32),
        compiler_params=pltpu.CompilerParams(
            dimension_semantics=("parallel",),
            vmem_limit_bytes=_VMEM_LIMIT),
        cost_estimate=pl.CostEstimate(
            flops=3 * rows * LANES, transcendentals=0, bytes_accessed=bn_bytes),
    )(conv_flat, scale_l, shift_l)

    out_nhwc = y.reshape(N, H, W, C_OUT)
    # NHWC -> NCHW left to XLA (in-kernel channel de-interleave skipped to keep
    # the epilogue lowering simple and robust).
    return jnp.transpose(out_nhwc, (0, 3, 1, 2))


def reference_forward(x, w1, w2, w3, gamma, beta):
    outs = []
    for w, d in zip((w1, w2, w3), DILATIONS):
        o = jax.lax.conv_general_dilated(
            x, w, window_strides=(1, 1), padding=((d, d), (d, d)),
            rhs_dilation=(d, d),
            dimension_numbers=("NCHW", "OIHW", "NCHW"),
            precision=jax.lax.Precision.HIGHEST)
        outs.append(o)
    out = jnp.concatenate(outs, axis=1)
    mean = out.mean(axis=(0, 2, 3), keepdims=True)
    var = ((out - mean) ** 2).mean(axis=(0, 2, 3), keepdims=True)
    xhat = (out - mean) / jnp.sqrt(var + BN_EPS)
    yy = gamma.reshape(1, -1, 1, 1) * xhat + beta.reshape(1, -1, 1, 1)
    return jnp.maximum(yy, 0.0)


if __name__ == "__main__":
    key = jax.random.PRNGKey(0)
    k1, k2, k3, kg, kb, kx = jax.random.split(key, 6)

    # Deterministic synthetic parameters (PyTorch-like kaiming-uniform scale),
    # conv bias=False per module defaults; BN affine params slightly perturbed
    # from the fresh-init (1, 0) to exercise the affine path.
    bound = 1.0 / math.sqrt(C_IN * KSIZE * KSIZE)
    w1 = jax.random.uniform(k1, (OUT_DIV[0], C_IN, KSIZE, KSIZE),
                            minval=-bound, maxval=bound, dtype=jnp.float32)
    w2 = jax.random.uniform(k2, (OUT_DIV[1], C_IN, KSIZE, KSIZE),
                            minval=-bound, maxval=bound, dtype=jnp.float32)
    w3 = jax.random.uniform(k3, (OUT_DIV[2], C_IN, KSIZE, KSIZE),
                            minval=-bound, maxval=bound, dtype=jnp.float32)
    gamma = 1.0 + 0.1 * jax.random.normal(kg, (C_OUT,), dtype=jnp.float32)
    beta = 0.1 * jax.random.normal(kb, (C_OUT,), dtype=jnp.float32)

    x = jax.random.normal(kx, (2, C_IN, 16, 16), dtype=jnp.float32)

    fwd = jax.jit(regular_forward)
    out = jax.block_until_ready(fwd(x, w1, w2, w3, gamma, beta))

    ref = jax.block_until_ready(reference_forward(x, w1, w2, w3, gamma, beta))
    max_err = float(jnp.max(jnp.abs(out - ref)))
    assert out.shape == (2, C_OUT, 16, 16), out.shape
    assert max_err < 5e-2, f"mismatch vs reference: {max_err}"

    # TODO(synk): BatchNorm2d running_mean/running_var buffer updates (a
    # training-time side effect) are not materialized; only the forward output.
    print("KERNEL_OK")
</pallas_src>

<mosaic_0001>
module attributes {stable_mosaic.version = 11 : i64} {
  func.func @_conv_stats_kernel(%arg0: i32, %arg1: i32, %arg2: memref<1x26x26x32xbf16, #tpu.memory_space<vmem>>, %arg3: memref<896x32xbf16, #tpu.memory_space<vmem>>, %arg4: memref<1x256x32xf32, #tpu.memory_space<vmem>>, %arg5: memref<1x1x2x32xf32, #tpu.memory_space<vmem>>, %arg6: memref<128x896xbf16, #tpu.memory_space<vmem>>, %arg7: memref<128x896xbf16, #tpu.memory_space<vmem>>) attributes {dimension_semantics = [#tpu.dimension_semantics<parallel>, #tpu.dimension_semantics<parallel>], iteration_bounds = array<i64: 2, 1>, scalar_prefetch = 0 : i64, scratch_operands = 2 : i64, tpu.core_type = #tpu.core_type<tc>, window_params = [{transform_indices = @transform_0, window_bounds = array<i64: 1, 26, 26, 32>}, {pipeline_mode = #tpu.pipeline_mode<synchronous>, transform_indices = @transform_1, window_bounds = array<i64: 896, 32>}, {transform_indices = @transform_2, window_bounds = array<i64: 1, 256, 32>}, {transform_indices = @transform_3, window_bounds = array<i64: 1, 1, 2, 32>}]} {
    %c16_i32 = arith.constant 16 : i32
    %0 = arith.muli %arg1, %c16_i32 : i32
    %cst = arith.constant 0.000000e+00 : f32
    %1 = vector.broadcast %cst : f32 to vector<1x32xf32>
    %cst_0 = arith.constant 0.000000e+00 : f32
    %2 = vector.broadcast %cst_0 : f32 to vector<1x32xf32>
    %c0_i32 = arith.constant 0 : i32
    %3 = arith.addi %0, %c0_i32 : i32
    %c4_i32 = arith.constant 4 : i32
    %4 = arith.addi %3, %c4_i32 : i32
    %c0 = arith.constant 0 : index
    %5 = arith.index_cast %4 : i32 to index
    %c4 = arith.constant 4 : index
    %c0_1 = arith.constant 0 : index
    %6 = vector.load %arg2[%c0, %5, %c4, %c0_1] : memref<1x26x26x32xbf16, #tpu.memory_space<vmem>>, vector<1x8x16x32xbf16>
    %7 = vector.shape_cast %6 : vector<1x8x16x32xbf16> to vector<8x16x32xbf16>
    %c4_i32_2 = arith.constant 4 : i32
    %8 = arith.addi %3, %c4_i32_2 : i32
    %c0_3 = arith.constant 0 : index
    %9 = arith.index_cast %8 : i32 to index
    %c5 = arith.constant 5 : index
    %c0_4 = arith.constant 0 : index
    %10 = vector.load %arg2[%c0_3, %9, %c5, %c0_4] : memref<1x26x26x32xbf16, #tpu.memory_space<vmem>>, vector<1x8x16x32xbf16>
    %11 = vector.shape_cast %10 : vector<1x8x16x32xbf16> to vector<8x16x32xbf16>
    %c4_i32_5 = arith.constant 4 : i32
    %12 = arith.addi %3, %c4_i32_5 : i32
    %c0_6 = arith.constant 0 : index
    %13 = arith.index_cast %12 : i32 to index
    %c6 = arith.constant 6 : index
    %c0_7 = arith.constant 0 : index
    %14 = vector.load %arg2[%c0_6, %13, %c6, %c0_7] : memref<1x26x26x32xbf16, #tpu.memory_space<vmem>>, vector<1x8x16x32xbf16>
    %15 = vector.shape_cast %14 : vector<1x8x16x32xbf16> to vector<8x16x32xbf16>
    %c5_i32 = arith.constant 5 : i32
    %16 = arith.addi %3, %c5_i32 : i32
    %c0_8 = arith.constant 0 : index
    %17 = arith.index_cast %16 : i32 to index
    %c4_9 = arith.constant 4 : index
    %c0_10 = arith.constant 0 : index
    %18 = vector.load %arg2[%c0_8, %17, %c4_9, %c0_10] : memref<1x26x26x32xbf16, #tpu.memory_space<vmem>>, vector<1x8x16x32xbf16>
    %19 = vector.shape_cast %18 : vector<1x8x16x32xbf16> to vector<8x16x32xbf16>
    %20 = tpu.concatenate %7, %11, %15, %19 in 2 : vector<8x16x32xbf16>, vector<8x16x32xbf16>, vector<8x16x32xbf16>, vector<8x16x32xbf16> -> vector<8x16x128xbf16>
    %21 = vector.shape_cast %20 : vector<8x16x128xbf16> to vector<128x128xbf16>
    %c0_11 = arith.constant 0 : index
    %c0_12 = arith.constant 0 : index
    %22 = vector.load %arg6[%c0_11, %c0_12] : memref<128x896xbf16, #tpu.memory_space<vmem>>, vector<128x128xbf16>
    tpu.vector_store %arg6[%c0_11, %c0_12], %21 {strides = array<i32>} : memref<128x896xbf16, #tpu.memory_space<vmem>>, vector<128x128xbf16>,
    %c5_i32_13 = arith.constant 5 : i32
    %23 = arith.addi %3, %c5_i32_13 : i32
    %c0_14 = arith.constant 0 : index
    %24 = arith.index_cast %23 : i32 to index
    %c5_15 = arith.constant 5 : index
    %c0_16 = arith.constant 0 : index
    %25 = vector.load %arg2[%c0_14, %24, %c5_15, %c0_16] : memref<1x26x26x32xbf16, #tpu.memory_space<vmem>>, vector<1x8x16x32xbf16>
    %26 = vector.shape_cast %25 : vector<1x8x16x32xbf16> to vector<8x16x32xbf16>
    %c5_i32_17 = arith.constant 5 : i32
    %27 = arith.addi %3, %c5_i32_17 : i32
    %c0_18 = arith.constant 0 : index
    %28 = arith.index_cast %27 : i32 to index
    %c6_19 = arith.constant 6 : index
    %c0_20 = arith.constant 0 : index
    %29 = vector.load %arg2[%c0_18, %28, %c6_19, %c0_20] : memref<1x26x26x32xbf16, #tpu.memory_space<vmem>>, vector<1x8x16x32xbf16>
    %30 = vector.shape_cast %29 : vector<1x8x16x32xbf16> to vector<8x16x32xbf16>
    %c6_i32 = arith.constant 6 : i32
    %31 = arith.addi %3, %c6_i32 : i32
    %c0_21 = arith.constant 0 : index
    %32 = arith.index_cast %31 : i32 to index
    %c4_22 = arith.constant 4 : index
    %c0_23 = arith.constant 0 : index
    %33 = vector.load %arg2[%c0_21, %32, %c4_22, %c0_23] : memref<1x26x26x32xbf16, #tpu.memory_space<vmem>>, vector<1x8x16x32xbf16>
    %34 = vector.shape_cast %33 : vector<1x8x16x32xbf16> to vector<8x16x32xbf16>
    %c6_i32_24 = arith.constant 6 : i32
    %35 = arith.addi %3, %c6_i32_24 : i32
    %c0_25 = arith.constant 0 : index
    %36 = arith.index_cast %35 : i32 to index
    %c5_26 = arith.constant 5 : index
    %c0_27 = arith.constant 0 : index
    %37 = vector.load %arg2[%c0_25, %36, %c5_26, %c0_27] : memref<1x26x26x32xbf16, #tpu.memory_space<vmem>>, vector<1x8x16x32xbf16>
    %38 = vector.shape_cast %37 : vector<1x8x16x32xbf16> to vector<8x16x32xbf16>
    %39 = tpu.concatenate %26, %30, %34, %38 in 2 : vector<8x16x32xbf16>, vector<8x16x32xbf16>, vector<8x16x32xbf16>, vector<8x16x32xbf16> -> vector<8x16x128xbf16>
    %40 = vector.shape_cast %39 : vector<8x16x128xbf16> to vector<128x128xbf16>
    %c0_28 = arith.constant 0 : index
    %c128 = arith.constant 128 : index
    %41 = vector.load %arg6[%c0_28, %c128] : memref<128x896xbf16, #tpu.memory_space<vmem>>, vector<128x128xbf16>
    tpu.vector_store %arg6[%c0_28, %c128], %40 {strides = array<i32>} : memref<128x896xbf16, #tpu.memory_space<vmem>>, vector<128x128xbf16>,
    %c6_i32_29 = arith.constant 6 : i32
    %42 = arith.addi %3, %c6_i32_29 : i32
    %c0_30 = arith.constant 0 : index
    %43 = arith.index_cast %42 : i32 to index
    %c6_31 = arith.constant 6 : index
    %c0_32 = arith.constant 0 : index
    %44 = vector.load %arg2[%c0_30, %43, %c6_31, %c0_32] : memref<1x26x26x32xbf16, #tpu.memory_space<vmem>>, vector<1x8x16x32xbf16>
    %45 = vector.shape_cast %44 : vector<1x8x16x32xbf16> to vector<8x16x32xbf16>
    %c3_i32 = arith.constant 3 : i32
    %46 = arith.addi %3, %c3_i32 : i32
    %c0_33 = arith.constant 0 : index
    %47 = arith.index_cast %46 : i32 to index
    %c3 = arith.constant 3 : index
    %c0_34 = arith.constant 0 : index
    %48 = vector.load %arg2[%c0_33, %47, %c3, %c0_34] : memref<1x26x26x32xbf16, #tpu.memory_space<vmem>>, vector<1x8x16x32xbf16>
    %49 = vector.shape_cast %48 : vector<1x8x16x32xbf16> to vector<8x16x32xbf16>
    %c3_i32_35 = arith.constant 3 : i32
    %50 = arith.addi %3, %c3_i32_35 : i32
    %c0_36 = arith.constant 0 : index
    %51 = arith.index_cast %50 : i32 to index
    %c5_37 = arith.constant 5 : index
    %c0_38 = arith.constant 0 : index
    %52 = vector.load %arg2[%c0_36, %51, %c5_37, %c0_38] : memref<1x26x26x32xbf16, #tpu.memory_space<vmem>>, vector<1x8x16x32xbf16>
    %53 = vector.shape_cast %52 : vector<1x8x16x32xbf16> to vector<8x16x32xbf16>
    %c3_i32_39 = arith.constant 3 : i32
    %54 = arith.addi %3, %c3_i32_39 : i32
    %c0_40 = arith.constant 0 : index
    %55 = arith.index_cast %54 : i32 to index
    %c7 = arith.constant 7 : index
    %c0_41 = arith.constant 0 : index
    %56 = vector.load %arg2[%c0_40, %55, %c7, %c0_41] : memref<1x26x26x32xbf16, #tpu.memory_space<vmem>>, vector<1x8x16x32xbf16>
    %57 = vector.shape_cast %56 : vector<1x8x16x32xbf16> to vector<8x16x32xbf16>
    %58 = tpu.concatenate %45, %49, %53, %57 in 2 : vector<8x16x32xbf16>, vector<8x16x32xbf16>, vector<8x16x32xbf16>, vector<8x16x32xbf16> -> vector<8x16x128xbf16>
    %59 = vector.shape_cast %58 : vector<8x16x128xbf16> to vector<128x128xbf16>
    %c0_42 = arith.constant 0 : index
    %c256 = arith.constant 256 : index
    %60 = vector.load %arg6[%c0_42, %c256] : memref<128x896xbf16, #tpu.memory_space<vmem>>, vector<128x128xbf16>
    tpu.vector_store %arg6[%c0_42, %c256], %59 {strides = array<i32>} : memref<128x896xbf16, #tpu.memory_space<vmem>>, vector<128x128xbf16>,
    %c5_i32_43 = arith.constant 5 : i32
    %61 = arith.addi %3, %c5_i32_43 : i32
    %c0_44 = arith.constant 0 : index
    %62 = arith.index_cast %61 : i32 to index
    %c3_45 = arith.constant 3 : index
    %c0_46 = arith.constant 0 : index
    %63 = vector.load %arg2[%c0_44, %62, %c3_45, %c0_46] : memref<1x26x26x32xbf16, #tpu.memory_space<vmem>>, vector<1x8x16x32xbf16>
    %64 = vector.shape_cast %63 : vector<1x8x16x32xbf16> to vector<8x16x32xbf16>
    %c5_i32_47 = arith.constant 5 : i32
    %65 = arith.addi %3, %c5_i32_47 : i32
    %c0_48 = arith.constant 0 : index
    %66 = arith.index_cast %65 : i32 to index
    %c5_49 = arith.constant 5 : index
    %c0_50 = arith.constant 0 : index
    %67 = vector.load %arg2[%c0_48, %66, %c5_49, %c0_50] : memref<1x26x26x32xbf16, #tpu.memory_space<vmem>>, vector<1x8x16x32xbf16>
    %68 = vector.shape_cast %67 : vector<1x8x16x32xbf16> to vector<8x16x32xbf16>
    %c5_i32_51 = arith.constant 5 : i32
    %69 = arith.addi %3, %c5_i32_51 : i32
    %c0_52 = arith.constant 0 : index
    %70 = arith.index_cast %69 : i32 to index
    %c7_53 = arith.constant 7 : index
    %c0_54 = arith.constant 0 : index
    %71 = vector.load %arg2[%c0_52, %70, %c7_53, %c0_54] : memref<1x26x26x32xbf16, #tpu.memory_space<vmem>>, vector<1x8x16x32xbf16>
    %72 = vector.shape_cast %71 : vector<1x8x16x32xbf16> to vector<8x16x32xbf16>
    %c7_i32 = arith.constant 7 : i32
    %73 = arith.addi %3, %c7_i32 : i32
    %c0_55 = arith.constant 0 : index
    %74 = arith.index_cast %73 : i32 to index
    %c3_56 = arith.constant 3 : index
    %c0_57 = arith.constant 0 : index
    %75 = vector.load %arg2[%c0_55, %74, %c3_56, %c0_57] : memref<1x26x26x32xbf16, #tpu.memory_space<vmem>>, vector<1x8x16x32xbf16>
    %76 = vector.shape_cast %75 : vector<1x8x16x32xbf16> to vector<8x16x32xbf16>
    %77 = tpu.concatenate %64, %68, %72, %76 in 2 : vector<8x16x32xbf16>, vector<8x16x32xbf16>, vector<8x16x32xbf16>, vector<8x16x32xbf16> -> vector<8x16x128xbf16>
    %78 = vector.shape_cast %77 : vector<8x16x128xbf16> to vector<128x128xbf16>
    %c0_58 = arith.constant 0 : index
    %c384 = arith.constant 384 : index
    %79 = vector.load %arg6[%c0_58, %c384] : memref<128x896xbf16, #tpu.memory_space<vmem>>, vector<128x128xbf16>
    tpu.vector_store %arg6[%c0_58, %c384], %78 {strides = array<i32>} : memref<128x896xbf16, #tpu.memory_space<vmem>>, vector<128x128xbf16>,
    %c7_i32_59 = arith.constant 7 : i32
    %80 = arith.addi %3, %c7_i32_59 : i32
    %c0_60 = arith.constant 0 : index
    %81 = arith.index_cast %80 : i32 to index
    %c5_61 = arith.constant 5 : index
    %c0_62 = arith.constant 0 : index
    %82 = vector.load %arg2[%c0_60, %81, %c5_61, %c0_62] : memref<1x26x26x32xbf16, #tpu.memory_space<vmem>>, vector<1x8x16x32xbf16>
    %83 = vector.shape_cast %82 : vector<1x8x16x32xbf16> to vector<8x16x32xbf16>
    %c7_i32_63 = arith.constant 7 : i32
    %84 = arith.addi %3, %c7_i32_63 : i32
    %c0_64 = arith.constant 0 : index
    %85 = arith.index_cast %84 : i32 to index
    %c7_65 = arith.constant 7 : index
    %c0_66 = arith.constant 0 : index
    %86 = vector.load %arg2[%c0_64, %85, %c7_65, %c0_66] : memref<1x26x26x32xbf16, #tpu.memory_space<vmem>>, vector<1x8x16x32xbf16>
    %87 = vector.shape_cast %86 : vector<1x8x16x32xbf16> to vector<8x16x32xbf16>
    %c0_i32_67 = arith.constant 0 : i32
    %88 = arith.addi %3, %c0_i32_67 : i32
    %c0_68 = arith.constant 0 : index
    %89 = arith.index_cast %88 : i32 to index
    %c0_69 = arith.constant 0 : index
    %c0_70 = arith.constant 0 : index
    %90 = vector.load %arg2[%c0_68, %89, %c0_69, %c0_70] : memref<1x26x26x32xbf16, #tpu.memory_space<vmem>>, vector<1x8x16x32xbf16>
    %91 = vector.shape_cast %90 : vector<1x8x16x32xbf16> to vector<8x16x32xbf16>
    %c0_i32_71 = arith.constant 0 : i32
    %92 = arith.addi %3, %c0_i32_71 : i32
    %c0_72 = arith.constant 0 : index
    %93 = arith.index_cast %92 : i32 to index
    %c5_73 = arith.constant 5 : index
    %c0_74 = arith.constant 0 : index
    %94 = vector.load %arg2[%c0_72, %93, %c5_73, %c0_74] : memref<1x26x26x32xbf16, #tpu.memory_space<vmem>>, vector<1x8x16x32xbf16>
    %95 = vector.shape_cast %94 : vector<1x8x16x32xbf16> to vector<8x16x32xbf16>
    %96 = tpu.concatenate %83, %87, %91, %95 in 2 : vector<8x16x32xbf16>, vector<8x16x32xbf16>, vector<8x16x32xbf16>, vector<8x16x32xbf16> -> vector<8x16x128xbf16>
    %97 = vector.shape_cast %96 : vector<8x16x128xbf16> to vector<128x128xbf16>
    %c0_75 = arith.constant 0 : index
    %c512 = arith.constant 512 : index
    %98 = vector.load %arg6[%c0_75, %c512] : memref<128x896xbf16, #tpu.memory_space<vmem>>, vector<128x128xbf16>
    tpu.vector_store %arg6[%c0_75, %c512], %97 {strides = array<i32>} : memref<128x896xbf16, #tpu.memory_space<vmem>>, vector<128x128xbf16>,
    %c0_i32_76 = arith.constant 0 : i32
    %99 = arith.addi %3, %c0_i32_76 : i32
    %c0_77 = arith.constant 0 : index
    %100 = arith.index_cast %99 : i32 to index
    %c10 = arith.constant 10 : index
    %c0_78 = arith.constant 0 : index
    %101 = vector.load %arg2[%c0_77, %100, %c10, %c0_78] : memref<1x26x26x32xbf16, #tpu.memory_space<vmem>>, vector<1x8x16x32xbf16>
    %102 = vector.shape_cast %101 : vector<1x8x16x32xbf16> to vector<8x16x32xbf16>
    %c5_i32_79 = arith.constant 5 : i32
    %103 = arith.addi %3, %c5_i32_79 : i32
    %c0_80 = arith.constant 0 : index
    %104 = arith.index_cast %103 : i32 to index
    %c0_81 = arith.constant 0 : index
    %c0_82 = arith.constant 0 : index
    %105 = vector.load %arg2[%c0_80, %104, %c0_81, %c0_82] : memref<1x26x26x32xbf16, #tpu.memory_space<vmem>>, vector<1x8x16x32xbf16>
    %106 = vector.shape_cast %105 : vector<1x8x16x32xbf16> to vector<8x16x32xbf16>
    %c5_i32_83 = arith.constant 5 : i32
    %107 = arith.addi %3, %c5_i32_83 : i32
    %c0_84 = arith.constant 0 : index
    %108 = arith.index_cast %107 : i32 to index
    %c5_85 = arith.constant 5 : index
    %c0_86 = arith.constant 0 : index
    %109 = vector.load %arg2[%c0_84, %108, %c5_85, %c0_86] : memref<1x26x26x32xbf16, #tpu.memory_space<vmem>>, vector<1x8x16x32xbf16>
    %110 = vector.shape_cast %109 : vector<1x8x16x32xbf16> to vector<8x16x32xbf16>
    %c5_i32_87 = arith.constant 5 : i32
    %111 = arith.addi %3, %c5_i32_87 : i32
    %c0_88 = arith.constant 0 : index
    %112 = arith.index_cast %111 : i32 to index
    %c10_89 = arith.constant 10 : index
    %c0_90 = arith.constant 0 : index
    %113 = vector.load %arg2[%c0_88, %112, %c10_89, %c0_90] : memref<1x26x26x32xbf16, #tpu.memory_space<vmem>>, vector<1x8x16x32xbf16>
    %114 = vector.shape_cast %113 : vector<1x8x16x32xbf16> to vector<8x16x32xbf16>
    %115 = tpu.concatenate %102, %106, %110, %114 in 2 : vector<8x16x32xbf16>, vector<8x16x32xbf16>, vector<8x16x32xbf16>, vector<8x16x32xbf16> -> vector<8x16x128xbf16>
    %116 = vector.shape_cast %115 : vector<8x16x128xbf16> to vector<128x128xbf16>
    %c0_91 = arith.constant 0 : index
    %c640 = arith.constant 640 : index
    %117 = vector.load %arg6[%c0_91, %c640] : memref<128x896xbf16, #tpu.memory_space<vmem>>, vector<128x128xbf16>
    tpu.vector_store %arg6[%c0_91, %c640], %116 {strides = array<i32>} : memref<128x896xbf16, #tpu.memory_space<vmem>>, vector<128x128xbf16>,
    %c10_i32 = arith.constant 10 : i32
    %118 = arith.addi %3, %c10_i32 : i32
    %c0_92 = arith.constant 0 : index
    %119 = arith.index_cast %118 : i32 to index
    %c0_93 = arith.constant 0 : index
    %c0_94 = arith.constant 0 : index
    %120 = vector.load %arg2[%c0_92, %119, %c0_93, %c0_94] : memref<1x26x26x32xbf16, #tpu.memory_space<vmem>>, vector<1x8x16x32xbf16>
    %121 = vector.shape_cast %120 : vector<1x8x16x32xbf16> to vector<8x16x32xbf16>
    %c10_i32_95 = arith.constant 10 : i32
    %122 = arith.addi %3, %c10_i32_95 : i32
    %c0_96 = arith.constant 0 : index
    %123 = arith.index_cast %122 : i32 to index
    %c5_97 = arith.constant 5 : index
    %c0_98 = arith.constant 0 : index
    %124 = vector.load %arg2[%c0_96, %123, %c5_97, %c0_98] : memref<1x26x26x32xbf16, #tpu.memory_space<vmem>>, vector<1x8x16x32xbf16>
    %125 = vector.shape_cast %124 : vector<1x8x16x32xbf16> to vector<8x16x32xbf16>
    %c10_i32_99 = arith.constant 10 : i32
    %126 = arith.addi %3, %c10_i32_99 : i32
    %c0_100 = arith.constant 0 : index
    %127 = arith.index_cast %126 : i32 to index
    %c10_101 = arith.constant 10 : index
    %c0_102 = arith.constant 0 : index
    %128 = vector.load %arg2[%c0_100, %127, %c10_101, %c0_102] : memref<1x26x26x32xbf16, #tpu.memory_space<vmem>>, vector<1x8x16x32xbf16>
    %129 = vector.shape_cast %128 : vector<1x8x16x32xbf16> to vector<8x16x32xbf16>
    %cst_103 = arith.constant 0.000000e+00 : bf16
    %130 = vector.broadcast %cst_103 : bf16 to vector<8x16x32xbf16>
    %131 = tpu.concatenate %121, %125, %129, %130 in 2 : vector<8x16x32xbf16>, vector<8x16x32xbf16>, vector<8x16x32xbf16>, vector<8x16x32xbf16> -> vector<8x16x128xbf16>
    %132 = vector.shape_cast %131 : vector<8x16x128xbf16> to vector<128x128xbf16>
    %c0_104 = arith.constant 0 : index
    %c768 = arith.constant 768 : index
    %133 = vector.load %arg6[%c0_104, %c768] : memref<128x896xbf16, #tpu.memory_space<vmem>>, vector<128x128xbf16>
    tpu.vector_store %arg6[%c0_104, %c768], %132 {strides = array<i32>} : memref<128x896xbf16, #tpu.memory_space<vmem>>, vector<128x128xbf16>,
    %c0_105 = arith.constant 0 : index
    %c0_106 = arith.constant 0 : index
    %134 = vector.load %arg6[%c0_105, %c0_106] : memref<128x896xbf16, #tpu.memory_space<vmem>>, vector<128x896xbf16>
    %c0_107 = arith.constant 0 : index
    %c0_108 = arith.constant 0 : index
    %135 = vector.load %arg3[%c0_107, %c0_108] : memref<896x32xbf16, #tpu.memory_space<vmem>>, vector<896x32xbf16>
    %cst_109 = arith.constant dense<0.000000e+00> : vector<128x32xf32>
    %136 = tpu.matmul %134, %135, %cst_109 {dimension_numbers = #tpu.dot_dimension_numbers<[1], [0], [0], [1], [0, 0, 1, 1], [], []>} : vector<128x896xbf16>, vector<896x32xbf16>, vector<128x32xf32> -> vector<128x32xf32>
    %c0_110 = arith.constant 0 : index
    %c0_111 = arith.constant 0 : index
    %c0_112 = arith.constant 0 : index
    %137 = vector.load %arg4[%c0_110, %c0_111, %c0_112] : memref<1x256x32xf32, #tpu.memory_space<vmem>>, vector<1x128x32xf32>
    %138 = vector.shape_cast %137 : vector<1x128x32xf32> to vector<128x32xf32>
    %139 = vector.shape_cast %136 : vector<128x32xf32> to vector<1x128x32xf32>
    tpu.vector_store %arg4[%c0_110, %c0_111, %c0_112], %139 {strides = array<i32>} : memref<1x256x32xf32, #tpu.memory_space<vmem>>, vector<1x128x32xf32>,
    %cst_113 = arith.constant dense<0.000000e+00> : vector<32xf32>
    %140 = vector.multi_reduction <add>, %136, %cst_113 [0] : vector<128x32xf32> to vector<32xf32>
    %141 = vector.shape_cast %140 : vector<32xf32> to vector<1x32xf32>
    %142 = arith.addf %1, %141 : vector<1x32xf32>
    %143 = arith.mulf %136, %136 : vector<128x32xf32>
    %cst_114 = arith.constant dense<0.000000e+00> : vector<32xf32>
    %144 = vector.multi_reduction <add>, %143, %cst_114 [0] : vector<128x32xf32> to vector<32xf32>
    %145 = vector.shape_cast %144 : vector<32xf32> to vector<1x32xf32>
    %146 = arith.addf %2, %145 : vector<1x32xf32>
    %c8_i32 = arith.constant 8 : i32
    %147 = arith.addi %0, %c8_i32 : i32
    %c4_i32_115 = arith.constant 4 : i32
    %148 = arith.addi %147, %c4_i32_115 : i32
    %c0_116 = arith.constant 0 : index
    %149 = arith.index_cast %148 : i32 to index
    %c4_117 = arith.constant 4 : index
    %c0_118 = arith.constant 0 : index
    %150 = vector.load %arg2[%c0_116, %149, %c4_117, %c0_118] : memref<1x26x26x32xbf16, #tpu.memory_space<vmem>>, vector<1x8x16x32xbf16>
    %151 = vector.shape_cast %150 : vector<1x8x16x32xbf16> to vector<8x16x32xbf16>
    %c4_i32_119 = arith.constant 4 : i32
    %152 = arith.addi %147, %c4_i32_119 : i32
    %c0_120 = arith.constant 0 : index
    %153 = arith.index_cast %152 : i32 to index
    %c5_121 = arith.constant 5 : index
    %c0_122 = arith.constant 0 : index
    %154 = vector.load %arg2[%c0_120, %153, %c5_121, %c0_122] : memref<1x26x26x32xbf16, #tpu.memory_space<vmem>>, vector<1x8x16x32xbf16>
    %155 = vector.shape_cast %154 : vector<1x8x16x32xbf16> to vector<8x16x32xbf16>
    %c4_i32_123 = arith.constant 4 : i32
    %156 = arith.addi %147, %c4_i32_123 : i32
    %c0_124 = arith.constant 0 : index
    %157 = arith.index_cast %156 : i32 to index
    %c6_125 = arith.constant 6 : index
    %c0_126 = arith.constant 0 : index
    %158 = vector.load %arg2[%c0_124, %157, %c6_125, %c0_126] : memref<1x26x26x32xbf16, #tpu.memory_space<vmem>>, vector<1x8x16x32xbf16>
    %159 = vector.shape_cast %158 : vector<1x8x16x32xbf16> to vector<8x16x32xbf16>
    %c5_i32_127 = arith.constant 5 : i32
    %160 = arith.addi %147, %c5_i32_127 : i32
    %c0_128 = arith.constant 0 : index
    %161 = arith.index_cast %160 : i32 to index
    %c4_129 = arith.constant 4 : index
    %c0_130 = arith.constant 0 : index
    %162 = vector.load %arg2[%c0_128, %161, %c4_129, %c0_130] : memref<1x26x26x32xbf16, #tpu.memory_space<vmem>>, vector<1x8x16x32xbf16>
    %163 = vector.shape_cast %162 : vector<1x8x16x32xbf16> to vector<8x16x32xbf16>
    %164 = tpu.concatenate %151, %155, %159, %163 in 2 : vector<8x16x32xbf16>, vector<8x16x32xbf16>, vector<8x16x32xbf16>, vector<8x16x32xbf16> -> vector<8x16x128xbf16>
    %165 = vector.shape_cast %164 : vector<8x16x128xbf16> to vector<128x128xbf16>
    %c0_131 = arith.constant 0 : index
    %c0_132 = arith.constant 0 : index
    %166 = vector.load %arg7[%c0_131, %c0_132] : memref<128x896xbf16, #tpu.memory_space<vmem>>, vector<128x128xbf16>
    tpu.vector_store %arg7[%c0_131, %c0_132], %165 {strides = array<i32>} : memref<128x896xbf16, #tpu.memory_space<vmem>>, vector<128x128xbf16>,
    %c5_i32_133 = arith.constant 5 : i32
    %167 = arith.addi %147, %c5_i32_133 : i32
    %c0_134 = arith.constant 0 : index
    %168 = arith.index_cast %167 : i32 to index
    %c5_135 = arith.constant 5 : index
    %c0_136 = arith.constant 0 : index
    %169 = vector.load %arg2[%c0_134, %168, %c5_135, %c0_136] : memref<1x26x26x32xbf16, #tpu.memory_space<vmem>>, vector<1x8x16x32xbf16>
    %170 = vector.shape_cast %169 : vector<1x8x16x32xbf16> to vector<8x16x32xbf16>
    %c5_i32_137 = arith.constant 5 : i32
    %171 = arith.addi %147, %c5_i32_137 : i32
    %c0_138 = arith.constant 0 : index
    %172 = arith.index_cast %171 : i32 to index
    %c6_139 = arith.constant 6 : index
    %c0_140 = arith.constant 0 : index
    %173 = vector.load %arg2[%c0_138, %172, %c6_139, %c0_140] : memref<1x26x26x32xbf16, #tpu.memory_space<vmem>>, vector<1x8x16x32xbf16>
    %174 = vector.shape_cast %173 : vector<1x8x16x32xbf16> to vector<8x16x32xbf16>
    %c6_i32_141 = arith.constant 6 : i32
    %175 = arith.addi %147, %c6_i32_141 : i32
    %c0_142 = arith.constant 0 : index
    %176 = arith.index_cast %175 : i32 to index
    %c4_143 = arith.constant 4 : index
    %c0_144 = arith.constant 0 : index
    %177 = vector.load %arg2[%c0_142, %176, %c4_143, %c0_144] : memref<1x26x26x32xbf16, #tpu.memory_space<vmem>>, vector<1x8x16x32xbf16>
    %178 = vector.shape_cast %177 : vector<1x8x16x32xbf16> to vector<8x16x32xbf16>
    %c6_i32_145 = arith.constant 6 : i32
    %179 = arith.addi %147, %c6_i32_145 : i32
    %c0_146 = arith.constant 0 : index
    %180 = arith.index_cast %179 : i32 to index
    %c5_147 = arith.constant 5 : index
    %c0_148 = arith.constant 0 : index
    %181 = vector.load %arg2[%c0_146, %180, %c5_147, %c0_148] : memref<1x26x26x32xbf16, #tpu.memory_space<vmem>>, vector<1x8x16x32xbf16>
    %182 = vector.shape_cast %181 : vector<1x8x16x32xbf16> to vector<8x16x32xbf16>
    %183 = tpu.concatenate %170, %174, %178, %182 in 2 : vector<8x16x32xbf16>, vector<8x16x32xbf16>, vector<8x16x32xbf16>, vector<8x16x32xbf16> -> vector<8x16x128xbf16>
    %184 = vector.shape_cast %183 : vector<8x16x128xbf16> to vector<128x128xbf16>
    %c0_149 = arith.constant 0 : index
    %c128_150 = arith.constant 128 : index
    %185 = vector.load %arg7[%c0_149, %c128_150] : memref<128x896xbf16, #tpu.memory_space<vmem>>, vector<128x128xbf16>
    tpu.vector_store %arg7[%c0_149, %c128_150], %184 {strides = array<i32>} : memref<128x896xbf16, #tpu.memory_space<vmem>>, vector<128x128xbf16>,
    %c6_i32_151 = arith.constant 6 : i32
    %186 = arith.addi %147, %c6_i32_151 : i32
    %c0_152 = arith.constant 0 : index
    %187 = arith.index_cast %186 : i32 to index
    %c6_153 = arith.constant 6 : index
    %c0_154 = arith.constant 0 : index
    %188 = vector.load %arg2[%c0_152, %187, %c6_153, %c0_154] : memref<1x26x26x32xbf16, #tpu.memory_space<vmem>>, vector<1x8x16x32xbf16>
    %189 = vector.shape_cast %188 : vector<1x8x16x32xbf16> to vector<8x16x32xbf16>
    %c3_i32_155 = arith.constant 3 : i32
    %190 = arith.addi %147, %c3_i32_155 : i32
    %c0_156 = arith.constant 0 : index
    %191 = arith.index_cast %190 : i32 to index
    %c3_157 = arith.constant 3 : index
    %c0_158 = arith.constant 0 : index
    %192 = vector.load %arg2[%c0_156, %191, %c3_157, %c0_158] : memref<1x26x26x32xbf16, #tpu.memory_space<vmem>>, vector<1x8x16x32xbf16>
    %193 = vector.shape_cast %192 : vector<1x8x16x32xbf16> to vector<8x16x32xbf16>
    %c3_i32_159 = arith.constant 3 : i32
    %194 = arith.addi %147, %c3_i32_159 : i32
    %c0_160 = arith.constant 0 : index
    %195 = arith.index_cast %194 : i32 to index
    %c5_161 = arith.constant 5 : index
    %c0_162 = arith.constant 0 : index
    %196 = vector.load %arg2[%c0_160, %195, %c5_161, %c0_162] : memref<1x26x26x32xbf16, #tpu.memory_space<vmem>>, vector<1x8x16x32xbf16>
    %197 = vector.shape_cast %196 : vector<1x8x16x32xbf16> to vector<8x16x32xbf16>
    %c3_i32_163 = arith.constant 3 : i32
    %198 = arith.addi %147, %c3_i32_163 : i32
    %c0_164 = arith.constant 0 : index
    %199 = arith.index_cast %198 : i32 to index
    %c7_165 = arith.constant 7 : index
    %c0_166 = arith.constant 0 : index
    %200 = vector.load %arg2[%c0_164, %199, %c7_165, %c0_166] : memref<1x26x26x32xbf16, #tpu.memory_space<vmem>>, vector<1x8x16x32xbf16>
    %201 = vector.shape_cast %200 : vector<1x8x16x32xbf16> to vector<8x16x32xbf16>
    %202 = tpu.concatenate %189, %193, %197, %201 in 2 : vector<8x16x32xbf16>, vector<8x16x32xbf16>, vector<8x16x32xbf16>, vector<8x16x32xbf16> -> vector<8x16x128xbf16>
    %203 = vector.shape_cast %202 : vector<8x16x128xbf16> to vector<128x128xbf16>
    %c0_167 = arith.constant 0 : index
    %c256_168 = arith.constant 256 : index
    %204 = vector.load %arg7[%c0_167, %c256_168] : memref<128x896xbf16, #tpu.memory_space<vmem>>, vector<128x128xbf16>
    tpu.vector_store %arg7[%c0_167, %c256_168], %203 {strides = array<i32>} : memref<128x896xbf16, #tpu.memory_space<vmem>>, vector<128x128xbf16>,
    %c5_i32_169 = arith.constant 5 : i32
    %205 = arith.addi %147, %c5_i32_169 : i32
    %c0_170 = arith.constant 0 : index
    %206 = arith.index_cast %205 : i32 to index
    %c3_171 = arith.constant 3 : index
    %c0_172 = arith.constant 0 : index
    %207 = vector.load %arg2[%c0_170, %206, %c3_171, %c0_172] : memref<1x26x26x32xbf16, #tpu.memory_space<vmem>>, vector<1x8x16x32xbf16>
    %208 = vector.shape_cast %207 : vector<1x8x16x32xbf16> to vector<8x16x32xbf16>
    %c5_i32_173 = arith.constant 5 : i32
    %209 = arith.addi %147, %c5_i32_173 : i32
    %c0_174 = arith.constant 0 : index
    %210 = arith.index_cast %209 : i32 to index
    %c5_175 = arith.constant 5 : index
    %c0_176 = arith.constant 0 : index
    %211 = vector.load %arg2[%c0_174, %210, %c5_175, %c0_176] : memref<1x26x26x32xbf16, #tpu.memory_space<vmem>>, vector<1x8x16x32xbf16>
    %212 = vector.shape_cast %211 : vector<1x8x16x32xbf16> to vector<8x16x32xbf16>
    %c5_i32_177 = arith.constant 5 : i32
    %213 = arith.addi %147, %c5_i32_177 : i32
    %c0_178 = arith.constant 0 : index
    %214 = arith.index_cast %213 : i32 to index
    %c7_179 = arith.constant 7 : index
    %c0_180 = arith.constant 0 : index
    %215 = vector.load %arg2[%c0_178, %214, %c7_179, %c0_180] : memref<1x26x26x32xbf16, #tpu.memory_space<vmem>>, vector<1x8x16x32xbf16>
    %216 = vector.shape_cast %215 : vector<1x8x16x32xbf16> to vector<8x16x32xbf16>
    %c7_i32_181 = arith.constant 7 : i32
    %217 = arith.addi %147, %c7_i32_181 : i32
    %c0_182 = arith.constant 0 : index
    %218 = arith.index_cast %217 : i32 to index
    %c3_183 = arith.constant 3 : index
    %c0_184 = arith.constant 0 : index
    %219 = vector.load %arg2[%c0_182, %218, %c3_183, %c0_184] : memref<1x26x26x32xbf16, #tpu.memory_space<vmem>>, vector<1x8x16x32xbf16>
    %220 = vector.shape_cast %219 : vector<1x8x16x32xbf16> to vector<8x16x32xbf16>
    %221 = tpu.concatenate %208, %212, %216, %220 in 2 : vector<8x16x32xbf16>, vector<8x16x32xbf16>, vector<8x16x32xbf16>, vector<8x16x32xbf16> -> vector<8x16x128xbf16>
    %222 = vector.shape_cast %221 : vector<8x16x128xbf16> to vector<128x128xbf16>
    %c0_185 = arith.constant 0 : index
    %c384_186 = arith.constant 384 : index
    %223 = vector.load %arg7[%c0_185, %c384_186] : memref<128x896xbf16, #tpu.memory_space<vmem>>, vector<128x128xbf16>
    tpu.vector_store %arg7[%c0_185, %c384_186], %222 {strides = array<i32>} : memref<128x896xbf16, #tpu.memory_space<vmem>>, vector<128x128xbf16>,
    %c7_i32_187 = arith.constant 7 : i32
    %224 = arith.addi %147, %c7_i32_187 : i32
    %c0_188 = arith.constant 0 : index
    %225 = arith.index_cast %224 : i32 to index
    %c5_189 = arith.constant 5 : index
    %c0_190 = arith.constant 0 : index
    %226 = vector.load %arg2[%c0_188, %225, %c5_189, %c0_190] : memref<1x26x26x32xbf16, #tpu.memory_space<vmem>>, vector<1x8x16x32xbf16>
    %227 = vector.shape_cast %226 : vector<1x8x16x32xbf16> to vector<8x16x32xbf16>
    %c7_i32_191 = arith.constant 7 : i32
    %228 = arith.addi %147, %c7_i32_191 : i32
    %c0_192 = arith.constant 0 : index
    %229 = arith.index_cast %228 : i32 to index
    %c7_193 = arith.constant 7 : index
    %c0_194 = arith.constant 0 : index
    %230 = vector.load %arg2[%c0_192, %229, %c7_193, %c0_194] : memref<1x26x26x32xbf16, #tpu.memory_space<vmem>>, vector<1x8x16x32xbf16>
    %231 = vector.shape_cast %230 : vector<1x8x16x32xbf16> to vector<8x16x32xbf16>
    %c0_i32_195 = arith.constant 0 : i32
    %232 = arith.addi %147, %c0_i32_195 : i32
    %c0_196 = arith.constant 0 : index
    %233 = arith.index_cast %232 : i32 to index
    %c0_197 = arith.constant 0 : index
    %c0_198 = arith.constant 0 : index
    %234 = vector.load %arg2[%c0_196, %233, %c0_197, %c0_198] : memref<1x26x26x32xbf16, #tpu.memory_space<vmem>>, vector<1x8x16x32xbf16>
    %235 = vector.shape_cast %234 : vector<1x8x16x32xbf16> to vector<8x16x32xbf16>
    %c0_i32_199 = arith.constant 0 : i32
    %236 = arith.addi %147, %c0_i32_199 : i32
    %c0_200 = arith.constant 0 : index
    %237 = arith.index_cast %236 : i32 to index
    %c5_201 = arith.constant 5 : index
    %c0_202 = arith.constant 0 : index
    %238 = vector.load %arg2[%c0_200, %237, %c5_201, %c0_202] : memref<1x26x26x32xbf16, #tpu.memory_space<vmem>>, vector<1x8x16x32xbf16>
    %239 = vector.shape_cast %238 : vector<1x8x16x32xbf16> to vector<8x16x32xbf16>
    %240 = tpu.concatenate %227, %231, %235, %239 in 2 : vector<8x16x32xbf16>, vector<8x16x32xbf16>, vector<8x16x32xbf16>, vector<8x16x32xbf16> -> vector<8x16x128xbf16>
    %241 = vector.shape_cast %240 : vector<8x16x128xbf16> to vector<128x128xbf16>
    %c0_203 = arith.constant 0 : index
    %c512_204 = arith.constant 512 : index
    %242 = vector.load %arg7[%c0_203, %c512_204] : memref<128x896xbf16, #tpu.memory_space<vmem>>, vector<128x128xbf16>
    tpu.vector_store %arg7[%c0_203, %c512_204], %241 {strides = array<i32>} : memref<128x896xbf16, #tpu.memory_space<vmem>>, vector<128x128xbf16>,
    %c0_i32_205 = arith.constant 0 : i32
    %243 = arith.addi %147, %c0_i32_205 : i32
    %c0_206 = arith.constant 0 : index
    %244 = arith.index_cast %243 : i32 to index
    %c10_207 = arith.constant 10 : index
    %c0_208 = arith.constant 0 : index
    %245 = vector.load %arg2[%c0_206, %244, %c10_207, %c0_208] : memref<1x26x26x32xbf16, #tpu.memory_space<vmem>>, vector<1x8x16x32xbf16>
    %246 = vector.shape_cast %245 : vector<1x8x16x32xbf16> to vector<8x16x32xbf16>
    %c5_i32_209 = arith.constant 5 : i32
    %247 = arith.addi %147, %c5_i32_209 : i32
    %c0_210 = arith.constant 0 : index
    %248 = arith.index_cast %247 : i32 to index
    %c0_211 = arith.constant 0 : index
    %c0_212 = arith.constant 0 : index
    %249 = vector.load %arg2[%c0_210, %248, %c0_211, %c0_212] : memref<1x26x26x32xbf16, #tpu.memory_space<vmem>>, vector<1x8x16x32xbf16>
    %250 = vector.shape_cast %249 : vector<1x8x16x32xbf16> to vector<8x16x32xbf16>
    %c5_i32_213 = arith.constant 5 : i32
    %251 = arith.addi %147, %c5_i32_213 : i32
    %c0_214 = arith.constant 0 : index
    %252 = arith.index_cast %251 : i32 to index
    %c5_215 = arith.constant 5 : index
    %c0_216 = arith.constant 0 : index
    %253 = vector.load %arg2[%c0_214, %252, %c5_215, %c0_216] : memref<1x26x26x32xbf16, #tpu.memory_space<vmem>>, vector<1x8x16x32xbf16>
    %254 = vector.shape_cast %253 : vector<1x8x16x32xbf16> to vector<8x16x32xbf16>
    %c5_i32_217 = arith.constant 5 : i32
    %255 = arith.addi %147, %c5_i32_217 : i32
    %c0_218 = arith.constant 0 : index
    %256 = arith.index_cast %255 : i32 to index
    %c10_219 = arith.constant 10 : index
    %c0_220 = arith.constant 0 : index
    %257 = vector.load %arg2[%c0_218, %256, %c10_219, %c0_220] : memref<1x26x26x32xbf16, #tpu.memory_space<vmem>>, vector<1x8x16x32xbf16>
    %258 = vector.shape_cast %257 : vector<1x8x16x32xbf16> to vector<8x16x32xbf16>
    %259 = tpu.concatenate %246, %250, %254, %258 in 2 : vector<8x16x32xbf16>, vector<8x16x32xbf16>, vector<8x16x32xbf16>, vector<8x16x32xbf16> -> vector<8x16x128xbf16>
    %260 = vector.shape_cast %259 : vector<8x16x128xbf16> to vector<128x128xbf16>
    %c0_221 = arith.constant 0 : index
    %c640_222 = arith.constant 640 : index
    %261 = vector.load %arg7[%c0_221, %c640_222] : memref<128x896xbf16, #tpu.memory_space<vmem>>, vector<128x128xbf16>
    tpu.vector_store %arg7[%c0_221, %c640_222], %260 {strides = array<i32>} : memref<128x896xbf16, #tpu.memory_space<vmem>>, vector<128x128xbf16>,
    %c10_i32_223 = arith.constant 10 : i32
    %262 = arith.addi %147, %c10_i32_223 : i32
    %c0_224 = arith.constant 0 : index
    %263 = arith.index_cast %262 : i32 to index
    %c0_225 = arith.constant 0 : index
    %c0_226 = arith.constant 0 : index
    %264 = vector.load %arg2[%c0_224, %263, %c0_225, %c0_226] : memref<1x26x26x32xbf16, #tpu.memory_space<vmem>>, vector<1x8x16x32xbf16>
    %265 = vector.shape_cast %264 : vector<1x8x16x32xbf16> to vector<8x16x32xbf16>
    %c10_i32_227 = arith.constant 10 : i32
    %266 = arith.addi %147, %c10_i32_227 : i32
    %c0_228 = arith.constant 0 : index
    %267 = arith.index_cast %266 : i32 to index
    %c5_229 = arith.constant 5 : index
    %c0_230 = arith.constant 0 : index
    %268 = vector.load %arg2[%c0_228, %267, %c5_229, %c0_230] : memref<1x26x26x32xbf16, #tpu.memory_space<vmem>>, vector<1x8x16x32xbf16>
    %269 = vector.shape_cast %268 : vector<1x8x16x32xbf16> to vector<8x16x32xbf16>
    %c10_i32_231 = arith.constant 10 : i32
    %270 = arith.addi %147, %c10_i32_231 : i32
    %c0_232 = arith.constant 0 : index
    %271 = arith.index_cast %270 : i32 to index
    %c10_233 = arith.constant 10 : index
    %c0_234 = arith.constant 0 : index
    %272 = vector.load %arg2[%c0_232, %271, %c10_233, %c0_234] : memref<1x26x26x32xbf16, #tpu.memory_space<vmem>>, vector<1x8x16x32xbf16>
    %273 = vector.shape_cast %272 : vector<1x8x16x32xbf16> to vector<8x16x32xbf16>
    %cst_235 = arith.constant 0.000000e+00 : bf16
    %274 = vector.broadcast %cst_235 : bf16 to vector<8x16x32xbf16>
    %275 = tpu.concatenate %265, %269, %273, %274 in 2 : vector<8x16x32xbf16>, vector<8x16x32xbf16>, vector<8x16x32xbf16>, vector<8x16x32xbf16> -> vector<8x16x128xbf16>
    %276 = vector.shape_cast %275 : vector<8x16x128xbf16> to vector<128x128xbf16>
    %c0_236 = arith.constant 0 : index
    %c768_237 = arith.constant 768 : index
    %277 = vector.load %arg7[%c0_236, %c768_237] : memref<128x896xbf16, #tpu.memory_space<vmem>>, vector<128x128xbf16>
    tpu.vector_store %arg7[%c0_236, %c768_237], %276 {strides = array<i32>} : memref<128x896xbf16, #tpu.memory_space<vmem>>, vector<128x128xbf16>,
    %c0_238 = arith.constant 0 : index
    %c0_239 = arith.constant 0 : index
    %278 = vector.load %arg7[%c0_238, %c0_239] : memref<128x896xbf16, #tpu.memory_space<vmem>>, vector<128x896xbf16>
    %c0_240 = arith.constant 0 : index
    %c0_241 = arith.constant 0 : index
    %279 = vector.load %arg3[%c0_240, %c0_241] : memref<896x32xbf16, #tpu.memory_space<vmem>>, vector<896x32xbf16>
    %cst_242 = arith.constant dense<0.000000e+00> : vector<128x32xf32>
    %280 = tpu.matmul %278, %279, %cst_242 {dimension_numbers = #tpu.dot_dimension_numbers<[1], [0], [0], [1], [0, 0, 1, 1], [], []>} : vector<128x896xbf16>, vector<896x32xbf16>, vector<128x32xf32> -> vector<128x32xf32>
    %c0_243 = arith.constant 0 : index
    %c128_244 = arith.constant 128 : index
    %c0_245 = arith.constant 0 : index
    %281 = vector.load %arg4[%c0_243, %c128_244, %c0_245] : memref<1x256x32xf32, #tpu.memory_space<vmem>>, vector<1x128x32xf32>
    %282 = vector.shape_cast %281 : vector<1x128x32xf32> to vector<128x32xf32>
    %283 = vector.shape_cast %280 : vector<128x32xf32> to vector<1x128x32xf32>
    tpu.vector_store %arg4[%c0_243, %c128_244, %c0_245], %283 {strides = array<i32>} : memref<1x256x32xf32, #tpu.memory_space<vmem>>, vector<1x128x32xf32>,
    %cst_246 = arith.constant dense<0.000000e+00> : vector<32xf32>
    %284 = vector.multi_reduction <add>, %280, %cst_246 [0] : vector<128x32xf32> to vector<32xf32>
    %285 = vector.shape_cast %284 : vector<32xf32> to vector<1x32xf32>
    %286 = arith.addf %142, %285 : vector<1x32xf32>
    %287 = arith.mulf %280, %280 : vector<128x32xf32>
    %cst_247 = arith.constant dense<0.000000e+00> : vector<32xf32>
    %288 = vector.multi_reduction <add>, %287, %cst_247 [0] : vector<128x32xf32> to vector<32xf32>
    %289 = vector.shape_cast %288 : vector<32xf32> to vector<1x32xf32>
    %290 = arith.addf %146, %289 : vector<1x32xf32>
    %291 = tpu.concatenate %286, %290 in 0 : vector<1x32xf32>, vector<1x32xf32> -> vector<2x32xf32>
    %c0_248 = arith.constant 0 : index
    %c0_249 = arith.constant 0 : index
    %c0_250 = arith.constant 0 : index
    %c0_251 = arith.constant 0 : index
    %292 = vector.load %arg5[%c0_248, %c0_249, %c0_250, %c0_251] : memref<1x1x2x32xf32, #tpu.memory_space<vmem>>, vector<1x1x2x32xf32>
    %293 = vector.shape_cast %292 : vector<1x1x2x32xf32> to vector<2x32xf32>
    %294 = vector.shape_cast %291 : vector<2x32xf32> to vector<1x1x2x32xf32>
    tpu.vector_store %arg5[%c0_248, %c0_249, %c0_250, %c0_251], %294 {strides = array<i32>} : memref<1x1x2x32xf32, #tpu.memory_space<vmem>>, vector<1x1x2x32xf32>,
    return
  }
  func.func @transform_0(%arg0: i32, %arg1: i32) -> (i32, i32, i32, i32) {
    %c0_i32 = arith.constant 0 : i32
    %c0_i32_0 = arith.constant 0 : i32
    %c0_i32_1 = arith.constant 0 : i32
    %c0_i32_2 = arith.constant 0 : i32
    return %arg0, %c0_i32, %c0_i32_0, %c0_i32_1 : i32, i32, i32, i32
  }
  func.func @transform_1(%arg0: i32, %arg1: i32) -> (i32, i32) {
    %c0_i32 = arith.constant 0 : i32
    %c0_i32_0 = arith.constant 0 : i32
    %c0_i32_1 = arith.constant 0 : i32
    return %c0_i32, %c0_i32_0 : i32, i32
  }
  func.func @transform_2(%arg0: i32, %arg1: i32) -> (i32, i32, i32) {
    %c0_i32 = arith.constant 0 : i32
    %c0_i32_0 = arith.constant 0 : i32
    return %arg0, %arg1, %c0_i32 : i32, i32, i32
  }
  func.func @transform_3(%arg0: i32, %arg1: i32) -> (i32, i32, i32, i32) {
    %c0_i32 = arith.constant 0 : i32
    %c0_i32_0 = arith.constant 0 : i32
    %c0_i32_1 = arith.constant 0 : i32
    return %arg0, %arg1, %c0_i32, %c0_i32_0 : i32, i32, i32, i32
  }
}

module attributes {stable_mosaic.version = 11 : i64} {
  func.func @_bn_relu_kernel(%arg0: i32, %arg1: memref<128x128xf32, #tpu.memory_space<vmem>>, %arg2: memref<1x128xf32, #tpu.memory_space<vmem>>, %arg3: memref<1x128xf32, #tpu.memory_space<vmem>>, %arg4: memref<128x128xf32, #tpu.memory_space<vmem>>) attributes {dimension_semantics = [#tpu.dimension_semantics<parallel>], iteration_bounds = array<i64: 1>, scalar_prefetch = 0 : i64, scratch_operands = 0 : i64, tpu.core_type = #tpu.core_type<tc>, window_params = [{transform_indices = @transform_0, window_bounds = array<i64: 128, 128>}, {pipeline_mode = #tpu.pipeline_mode<synchronous>, transform_indices = @transform_1, window_bounds = array<i64: 1, 128>}, {pipeline_mode = #tpu.pipeline_mode<synchronous>, transform_indices = @transform_2, window_bounds = array<i64: 1, 128>}, {transform_indices = @transform_3, window_bounds = array<i64: 128, 128>}]} {
    %c0 = arith.constant 0 : index
    %c0_0 = arith.constant 0 : index
    %0 = vector.load %arg1[%c0, %c0_0] : memref<128x128xf32, #tpu.memory_space<vmem>>, vector<128x128xf32>
    %c0_1 = arith.constant 0 : index
    %c0_2 = arith.constant 0 : index
    %1 = vector.load %arg2[%c0_1, %c0_2] : memref<1x128xf32, #tpu.memory_space<vmem>>, vector<1x128xf32>
    %2 = vector.broadcast %1 : vector<1x128xf32> to vector<128x128xf32>
    %3 = arith.mulf %0, %2 : vector<128x128xf32>
    %c0_3 = arith.constant 0 : index
    %c0_4 = arith.constant 0 : index
    %4 = vector.load %arg3[%c0_3, %c0_4] : memref<1x128xf32, #tpu.memory_space<vmem>>, vector<1x128xf32>
    %5 = vector.broadcast %4 : vector<1x128xf32> to vector<128x128xf32>
    %6 = arith.addf %3, %5 : vector<128x128xf32>
    %cst = arith.constant 0.000000e+00 : f32
    %7 = vector.broadcast %cst : f32 to vector<128x128xf32>
    %8 = arith.maximumf %6, %7 : vector<128x128xf32>
    %c0_5 = arith.constant 0 : index
    %c0_6 = arith.constant 0 : index
    %9 = vector.load %arg4[%c0_5, %c0_6] : memref<128x128xf32, #tpu.memory_space<vmem>>, vector<128x128xf32>
    tpu.vector_store %arg4[%c0_5, %c0_6], %8 {strides = array<i32>} : memref<128x128xf32, #tpu.memory_space<vmem>>, vector<128x128xf32>,
    return
  }
  func.func @transform_0(%arg0: i32) -> (i32, i32) {
    %c0_i32 = arith.constant 0 : i32
    %c0_i32_0 = arith.constant 0 : i32
    return %arg0, %c0_i32 : i32, i32
  }
  func.func @transform_1(%arg0: i32) -> (i32, i32) {
    %c0_i32 = arith.constant 0 : i32
    %c0_i32_0 = arith.constant 0 : i32
    %c0_i32_1 = arith.constant 0 : i32
    return %c0_i32, %c0_i32_0 : i32, i32
  }
  func.func @transform_2(%arg0: i32) -> (i32, i32) {
    %c0_i32 = arith.constant 0 : i32
    %c0_i32_0 = arith.constant 0 : i32
    %c0_i32_1 = arith.constant 0 : i32
    return %c0_i32, %c0_i32_0 : i32, i32
  }
  func.func @transform_3(%arg0: i32) -> (i32, i32) {
    %c0_i32 = arith.constant 0 : i32
    %c0_i32_0 = arith.constant 0 : i32
    return %arg0, %c0_i32 : i32, i32
  }
}

</mosaic_0001>

<llo_original>
// kernel: tile.18
$region0: #{tile.18}
  #allocation0 [shape = 's32[1]{0}', space=sflag, size = 0x4, scoped, tag = 'scoped memory for tile.18']
  %s0 = inlined_call_operand.vmem [shape: f32[32], index: 0, kind: input, shape index: {}]
  %s1 = inlined_call_operand.vmem [shape: f32[4,32], index: 1, kind: output, shape index: {}]
  // Predicated region
  $region2: #{tile.18} parent=0 // pred_check
    _
  $region3: #{tile.18} parent=0 // pred_check_branch
    %3 = sbr.rel (0) target = $region5
  $region4: #{tile.18} parent=0 // pred_region
    _
  $region5: #{tile.18} parent=0 // pred_fallthru
    _
  %v4 = vld [vmem:[%s0] ss:$0 sm:$0xff]
  %5 = vst [vmem:[%s1] sm:$0xf] %v4

// kernel: tile.19
$region0: #{tile.19}
  %s0 = inlined_call_operand.vmem [shape: f32[4,32], index: 0, kind: input, shape index: {}]
  %s1 = inlined_call_operand.vmem [shape: f32[1,128], index: 1, kind: output, shape index: {}]
  $region1: #{tile.19} parent=0
    #allocation0 [shape = 'u8[4096]{0}', space=vmem, size = 0x1000, scoped, tag = 'scoped mem for output reshape']
    #allocation1 [shape = 'u8[4096]{0}', space=vmem, size = 0x1000, scoped, tag = 'scoped mem for input reshape']
    %s3 = sshll.u32 1, 4
    %s4 = ssub.s32 %s3, 1
    %v5 = vld [vmem:[%s0] sm:%s4]
    %6 = vst [vmem:[#allocation1] sm:%s4] %v5
    %v7 = vld [vmem:[#allocation1] sm:$0x1]
    %vm8 = vcmask 261120
    %9 = vst.msk [vmem:[#allocation0] sm:$0x1] %vm8, %v7
    %s10 = scalar_lea.vmem [#allocation1], 3
    %v11 = vld [vmem:[%s10] sm:$0x1]
    %12 = vrot.lane.b32.xlu0 %v11, 96
    %v13 = vpop.permute.xlu0 %12
    %vm14 = vcmask 1048320
    %15 = vst.msk [vmem:[#allocation0] sm:$0x1] %vm14, %v13
    %s16 = scalar_lea.vmem [#allocation1], 2
    %v17 = vld [vmem:[%s16] sm:$0x1]
    %18 = vrot.lane.b32.xlu0 %v17, 64
    %v19 = vpop.permute.xlu0 %18
    %vm20 = vcmask 785920
    %21 = vst.msk [vmem:[#allocation0] sm:$0x1] %vm20, %v19
    %s22 = scalar_lea.vmem [#allocation1], 1
    %v23 = vld [vmem:[%s22] sm:$0x1]
    %24 = vrot.lane.b32.xlu0 %v23, 32
    %v25 = vpop.permute.xlu0 %24
    %vm26 = vcmask 523520
    %27 = vst.msk [vmem:[#allocation0] sm:$0x1] %vm26, %v25
    %s29 = sshll.u32 1, 1
    %s30 = ssub.s32 %s29, 1
    %v32 = vld [vmem:[#allocation0] sm:%s30]
    %s33 = sshll.u32 1, 1
    %s34 = ssub.s32 %s33, 1
    %35 = vst [vmem:[%s1] sm:%s34] %v32

// kernel: regular_forward.3
$region0: #{regular_forward.3}
  #allocation0 [shape = 'u32[]', space=smem, size = 0x4, offset = 0x4, fixed_abs, tag = 'smem constant byte address 0x4 - core index']
  #allocation1 [shape = 'u32[144,128]{1,0:T(1,128)}', space=vmem, size = 0x12000, scoped, tag = 'internal scratch']
  %s0 = inlined_call_operand.vmem [shape: f32[128,128], index: 0, kind: input, shape index: {}]
  %s1 = inlined_call_operand.vmem [shape: f32[1,128], index: 1, kind: input, shape index: {}]
  %s2 = inlined_call_operand.vmem [shape: f32[1,128], index: 2, kind: input, shape index: {}]
  %s3 = inlined_call_operand.vmem [shape: f32[128,128], index: 3, kind: output, shape index: {}]
  %s4 = sld [smem:[#allocation0]]
  $region22: #{regular_forward.3} parent=0
    _
  %s6 = ssub.s32 1, %s4
  %s7 = scalar_select 0, %s6, %s4
  // Predicated region
  $region2: #{regular_forward.3} parent=0 // pred_check
    _
  $region3: #{regular_forward.3} parent=0 // pred_check_branch
    %9 = sbr.rel (0) target = $region5
  $region4: #{regular_forward.3} parent=0 // pred_region
    _
  $region5: #{regular_forward.3} parent=0 // pred_fallthru
    _
  // Predicated region
  $region6: #{regular_forward.3} parent=0 // pred_check
    _
  $region7: #{regular_forward.3} parent=0 // pred_check_branch
    %11 = sbr.rel (0) target = $region9
  $region8: #{regular_forward.3} parent=0 // pred_region
    _
  $region9: #{regular_forward.3} parent=0 // pred_fallthru
    _
  // Predicated region
  $region10: #{regular_forward.3} parent=0 // pred_check
    _
  $region11: #{regular_forward.3} parent=0 // pred_check_branch
    %13 = sbr.rel (0) target = $region13
  $region12: #{regular_forward.3} parent=0 // pred_region
    _
  $region13: #{regular_forward.3} parent=0 // pred_fallthru
    _
  %v14 = vld [vmem:[%s0] sm:$0xff]
  %v15 = vld [vmem:[%s0 + $0x8] sm:$0xff]
  %v16 = vld [vmem:[%s0 + $0x10] sm:$0xff]
  %v17 = vld [vmem:[%s0 + $0x18] sm:$0xff]
  %v18 = vld [vmem:[%s0 + $0x20] sm:$0xff]
  %v19 = vld [vmem:[%s0 + $0x28] sm:$0xff]
  %v20 = vld [vmem:[%s0 + $0x30] sm:$0xff]
  %v21 = vld [vmem:[%s0 + $0x38] sm:$0xff]
  %v22 = vld [vmem:[%s0 + $0x40] sm:$0xff]
  %v23 = vld [vmem:[%s0 + $0x48] sm:$0xff]
  %v24 = vld [vmem:[%s0 + $0x50] sm:$0xff]
  %v25 = vld [vmem:[%s0 + $0x58] sm:$0xff]
  %v26 = vld [vmem:[%s0 + $0x60] sm:$0xff]
  %v27 = vld [vmem:[%s0 + $0x68] sm:$0xff]
  %v28 = vld [vmem:[%s0 + $0x70] sm:$0xff]
  %v29 = vld [vmem:[%s0 + $0x78] sm:$0xff]
  %v30 = vld [vmem:[%s1] sm:$0x1]
  %v32 = vlaneseq
  %v33 = vshrl.u32 %v32, 7
  %v34 = vsub.s32 0, %v33
  %v35 = vrot.slane %v30, %v34
  %v37 = vmul.f32 %v14, %v35
  %v38 = vmul.f32 %v15, %v35
  %v39 = vmul.f32 %v16, %v35
  %v40 = vmul.f32 %v17, %v35
  %v41 = vmul.f32 %v18, %v35
  %v42 = vmul.f32 %v19, %v35
  %v43 = vmul.f32 %v20, %v35
  %v44 = vmul.f32 %v21, %v35
  %v45 = vmul.f32 %v22, %v35
  %v46 = vmul.f32 %v23, %v35
  %v47 = vmul.f32 %v24, %v35
  %v48 = vmul.f32 %v25, %v35
  %v49 = vmul.f32 %v26, %v35
  %v50 = vmul.f32 %v27, %v35
  %v51 = vmul.f32 %v28, %v35
  %v52 = vmul.f32 %v29, %v35
  %v53 = vld [vmem:[%s2] sm:$0x1]
  %v55 = vlaneseq
  %v56 = vshrl.u32 %v55, 7
  %v57 = vsub.s32 0, %v56
  %v58 = vrot.slane %v53, %v57
  %v60 = vadd.f32 %v37, %v58
  %v61 = vadd.f32 %v38, %v58
  %v62 = vadd.f32 %v39, %v58
  %v63 = vadd.f32 %v40, %v58
  %v64 = vadd.f32 %v41, %v58
  %v65 = vadd.f32 %v42, %v58
  %v66 = vadd.f32 %v43, %v58
  %v67 = vadd.f32 %v44, %v58
  %v68 = vadd.f32 %v45, %v58
  %v69 = vadd.f32 %v46, %v58
  %v70 = vadd.f32 %v47, %v58
  %v71 = vadd.f32 %v48, %v58
  %v72 = vadd.f32 %v49, %v58
  %v73 = vadd.f32 %v50, %v58
  %v74 = vadd.f32 %v51, %v58
  %v75 = vadd.f32 %v52, %v58
  %v76 = vmax.f32 %v60, 0.0
  %v77 = vmax.f32 %v61, 0.0
  %v78 = vmax.f32 %v62, 0.0
  %v79 = vmax.f32 %v63, 0.0
  %v80 = vmax.f32 %v64, 0.0
  %v81 = vmax.f32 %v65, 0.0
  %v82 = vmax.f32 %v66, 0.0
  %v83 = vmax.f32 %v67, 0.0
  %v84 = vmax.f32 %v68, 0.0
  %v85 = vmax.f32 %v69, 0.0
  %v86 = vmax.f32 %v70, 0.0
  %v87 = vmax.f32 %v71, 0.0
  %v88 = vmax.f32 %v72, 0.0
  %v89 = vmax.f32 %v73, 0.0
  %v90 = vmax.f32 %v74, 0.0
  %v91 = vmax.f32 %v75, 0.0
  %92 = vst [vmem:[%s3] sm:$0xff] %v76
  %93 = vst [vmem:[%s3 + $0x8] sm:$0xff] %v77
  %94 = vst [vmem:[%s3 + $0x10] sm:$0xff] %v78
  %95 = vst [vmem:[%s3 + $0x18] sm:$0xff] %v79
  %96 = vst [vmem:[%s3 + $0x20] sm:$0xff] %v80
  %97 = vst [vmem:[%s3 + $0x28] sm:$0xff] %v81
  %98 = vst [vmem:[%s3 + $0x30] sm:$0xff] %v82
  %99 = vst [vmem:[%s3 + $0x38] sm:$0xff] %v83
  %100 = vst [vmem:[%s3 + $0x40] sm:$0xff] %v84
  %101 = vst [vmem:[%s3 + $0x48] sm:$0xff] %v85
  %102 = vst [vmem:[%s3 + $0x50] sm:$0xff] %v86
  %103 = vst [vmem:[%s3 + $0x58] sm:$0xff] %v87
  %104 = vst [vmem:[%s3 + $0x60] sm:$0xff] %v88
  %105 = vst [vmem:[%s3 + $0x68] sm:$0xff] %v89
  %106 = vst [vmem:[%s3 + $0x70] sm:$0xff] %v90
  %107 = vst [vmem:[%s3 + $0x78] sm:$0xff] %v91
  // Predicated region
  $region14: #{regular_forward.3} parent=0 // pred_check
    _
  $region15: #{regular_forward.3} parent=0 // pred_check_branch
    %109 = sbr.rel (0) target = $region17
  $region16: #{regular_forward.3} parent=0 // pred_region
    _
  $region17: #{regular_forward.3} parent=0 // pred_fallthru
    _
  // Predicated region
  $region18: #{regular_forward.3} parent=0 // pred_check
    _
  $region19: #{regular_forward.3} parent=0 // pred_check_branch
    %111 = sbr.rel (0) target = $region21
  $region20: #{regular_forward.3} parent=0 // pred_region
    _
  $region21: #{regular_forward.3} parent=0 // pred_fallthru
    _

// kernel: regular_forward.2
$region0: #{regular_forward.2}
  #allocation0 [shape = 'u32[]', space=smem, size = 0x4, offset = 0x4, fixed_abs, tag = 'smem constant byte address 0x4 - core index']
  #allocation1 [shape = 'u32[144,128]{1,0:T(1,128)}', space=vmem, size = 0x12000, scoped, tag = 'internal scratch']
  #allocation2 [shape = 'bf16[128,896]{1,0:T(8,128)(2,1)}', space=vmem, size = 0x38000, scoped, tag = 'scratch operand']
  #allocation3 [shape = 'bf16[128,896]{1,0:T(8,128)(2,1)}', space=vmem, size = 0x38000, scoped, tag = 'scratch operand']
  %s0 = inlined_call_operand.vmem [shape: bf16[2,26,26,32], index: 0, kind: input, shape index: {}]
  %s1 = inlined_call_operand.vmem [shape: bf16[896,32], index: 1, kind: input, shape index: {}]
  %s2 = inlined_call_operand.vmem [shape: f32[2,256,32], index: 2, kind: output, shape index: {0}]
  %s3 = inlined_call_operand.vmem [shape: f32[2,1,2,32], index: 3, kind: output, shape index: {1}]
  %4 = xla_tuple %s2, %s3
  %s5 = sld [smem:[#allocation0]]
  $region49: #{regular_forward.2} parent=0
    _
  %s7 = ssub.s32 1, %s5
  %s8 = scalar_select 0, %s7, %s5
  loop: start=0, step=1, limit=4
  $region2: #{regular_forward.2} parent=0 // loop_pre_header
    _
  $region3: #{regular_forward.2} parent=0 // loop_header
    %s10 = sphi 0, %s14
    %p11 = scmp.ge.s32.totalorder %s10, 4
    %s17 = sphi 0, %s29
    %s18 = sphi 0, %s25
    %s19 = sphi 0, %s17
    %s20 = sphi 0, %s18
    %s21 = sphi 0, %s19
    %s22 = sphi 0, %s20
    %s32 = sphi 0, %s34
    %s35 = sphi 0, %s32
    %s36 = sphi 0, %s35
    %s52 = sphi 0, %s36
    %s56 = sphi 0, %s56
    %s58 = sphi 0, %s56
    %s59 = sphi 0, %s58
    %s73 = sphi 0, %s59
    %s81 = sphi 0, %s83
    %s84 = sphi 0, %s81
    %s85 = sphi 0, %s84
    %s101 = sphi 0, %s85
    %s109 = sphi 0, %s111
    %s112 = sphi 0, %s109
    %s113 = sphi 0, %s112
    %s129 = sphi 0, %s113
  $region4: #{regular_forward.2} parent=0 // loop_header_branch
    %13 = sbr.rel (%p11) target = $region8
  $region5: #{regular_forward.2} parent=0 // loop_body
    %s15 = ssub.s32 %s10, 1
    %s16 = ssub.s32 %s10, 2
    %s23 = sadd.s32 1, %s18
    %p24 = scmp.ge.s32.totalorder %s23, 1
    %s25 = scalar_select %p24, 0, %s23
    %s26 = sadd.s32 1, %s17
    %s27 = scalar_select %p24, %s26, %s17
    %p28 = scmp.ge.s32.totalorder %s27, 2
    %s29 = scalar_select %p28, 0, %s27
    %s30 = ssub.s32 %s17, %s29
    %p31 = scmp.eq.s32.totalorder %s30, 0
    %s33 = sadd.s32 %s32, 1
    %s34 = scalar_select %p31, %s32, %s33
    %p37 = pneg %p31
    %p38 = scmp.eq.s32.totalorder %s10, 1
    %p39 = por %p37, %p38
    %p40 = scmp.ne.s32.totalorder %s32, %s35
    %p41 = scmp.eq.s32.totalorder %s10, 0
    %p42 = por %p40, %p41
    %p43 = scmp.ne.s32.totalorder %s32, %s35
    %p44 = scmp.eq.s32.totalorder %s15, 1
    %p45 = por %p43, %p44
    %p46 = scmp.ne.s32.totalorder %s35, %s36
    %p47 = scmp.eq.s32.totalorder %s15, 0
    %p48 = por %p46, %p47
    %p49 = scmp.ne.s32.totalorder %s35, %s36
    %p50 = scmp.eq.s32.totalorder %s16, 1
    %p51 = por %p49, %p50
    %p53 = scmp.ne.s32.totalorder %s36, %s52
    %p54 = scmp.eq.s32.totalorder %s16, 0
    %p55 = por %p53, %p54
    %s57 = sadd.s32 %s56, 1
    %p60 = scmp.eq.s32.totalorder %s10, 1
    %p61 = scmp.ne.s32.totalorder %s56, %s58
    %p62 = scmp.eq.s32.totalorder %s10, 0
    %p63 = por %p61, %p62
    %p64 = scmp.ne.s32.totalorder %s56, %s58
    %p65 = scmp.eq.s32.totalorder %s15, 1
    %p66 = por %p64, %p65
    %p67 = scmp.ne.s32.totalorder %s58, %s59
    %p68 = scmp.eq.s32.totalorder %s15, 0
    %p69 = por %p67, %p68
    %p70 = scmp.ne.s32.totalorder %s58, %s59
    %p71 = scmp.eq.s32.totalorder %s16, 1
    %p72 = por %p70, %p71
    %p74 = scmp.ne.s32.totalorder %s59, %s73
    %p75 = scmp.eq.s32.totalorder %s16, 0
    %p76 = por %p74, %p75
    %s77 = ssub.s32 %s17, %s29
    %s78 = ssub.s32 %s18, %s25
    %s79 = sor.u32 %s77, %s78
    %p80 = scmp.eq.s32.totalorder %s79, 0
    %s82 = sadd.s32 %s81, 1
    %s83 = scalar_select %p80, %s81, %s82
    %p86 = pneg %p80
    %p87 = scmp.eq.s32.totalorder %s10, 1
    %p88 = por %p86, %p87
    %p89 = scmp.ne.s32.totalorder %s81, %s84
    %p90 = scmp.eq.s32.totalorder %s10, 0
    %p91 = por %p89, %p90
    %p92 = scmp.ne.s32.totalorder %s81, %s84
    %p93 = scmp.eq.s32.totalorder %s15, 1
    %p94 = por %p92, %p93
    %p95 = scmp.ne.s32.totalorder %s84, %s85
    %p96 = scmp.eq.s32.totalorder %s15, 0
    %p97 = por %p95, %p96
    %p98 = scmp.ne.s32.totalorder %s84, %s85
    %p99 = scmp.eq.s32.totalorder %s16, 1
    %p100 = por %p98, %p99
    %p102 = scmp.ne.s32.totalorder %s85, %s101
    %p103 = scmp.eq.s32.totalorder %s16, 0
    %p104 = por %p102, %p103
    %s105 = ssub.s32 %s17, %s29
    %s106 = ssub.s32 %s18, %s25
    %s107 = sor.u32 %s105, %s106
    %p108 = scmp.eq.s32.totalorder %s107, 0
    %s110 = sadd.s32 %s109, 1
    %s111 = scalar_select %p108, %s109, %s110
    %p114 = pneg %p108
    %p115 = scmp.eq.s32.totalorder %s10, 1
    %p116 = por %p114, %p115
    %p117 = scmp.ne.s32.totalorder %s109, %s112
    %p118 = scmp.eq.s32.totalorder %s10, 0
    %p119 = por %p117, %p118
    %p120 = scmp.ne.s32.totalorder %s109, %s112
    %p121 = scmp.eq.s32.totalorder %s15, 1
    %p122 = por %p120, %p121
    %p123 = scmp.ne.s32.totalorder %s112, %s113
    %p124 = scmp.eq.s32.totalorder %s15, 0
    %p125 = por %p123, %p124
    %p126 = scmp.ne.s32.totalorder %s112, %s113
    %p127 = scmp.eq.s32.totalorder %s16, 1
    %p128 = por %p126, %p127
    %p130 = scmp.ne.s32.totalorder %s113, %s129
    %p131 = scmp.eq.s32.totalorder %s16, 0
    %p132 = por %p130, %p131
    %p133 = scmp.le.s32.totalorder 1, %s10
    %p134 = scmp.lt.s32.totalorder %s10, 3
    %p135 = pnand %p133, %p134
    %p136 = pneg %p135
    // Predicated region
    $region9: #{regular_forward.2} parent=5 // pred_check
      _
    $region10: #{regular_forward.2} parent=5 // pred_check_branch
      %138 = sbr.rel (%p135) target = $region12
    $region11: #{regular_forward.2} parent=5 // pred_region
      %s139 = ssub.s32 %s10, 1
      // Predicated region
      $region13: #{regular_forward.2} parent=11 // pred_check
        %p140 = pneg %p69
      $region14: #{regular_forward.2} parent=11 // pred_check_branch
        %142 = sbr.rel (%p140) target = $region16
      $region15: #{regular_forward.2} parent=11 // pred_region
        _
      $region16: #{regular_forward.2} parent=11 // pred_fallthru
        _
    $region12: #{regular_forward.2} parent=5 // pred_fallthru
      _
    %p143 = scmp.lt.s32.totalorder %s10, 2
    // Predicated region
    $region17: #{regular_forward.2} parent=5 // pred_check
      %p144 = pneg %p143
    $region18: #{regular_forward.2} parent=5 // pred_check_branch
      %146 = sbr.rel (%p144) target = $region20
    $region19: #{regular_forward.2} parent=5 // pred_region
      // Predicated region
      $region21: #{regular_forward.2} parent=19 // pred_check
        %p147 = pneg %p42
      $region22: #{regular_forward.2} parent=19 // pred_check_branch
        %149 = sbr.rel (%p147) target = $region24
      $region23: #{regular_forward.2} parent=19 // pred_region
        %p150 = scmp.lt.s32.totalorder %s17, 1
        %s151 = scalar_select %p150, %s17, 1
        %s152 = smul.addr %s151, 104
        %s153 = smul.addr %s152, 4
        %s154 = scalar_lea.vmem %s0, %s153
      $region24: #{regular_forward.2} parent=19 // pred_fallthru
        _
    $region20: #{regular_forward.2} parent=5 // pred_fallthru
      _
    %p155 = scmp.le.s32.totalorder 1, %s10
    %p156 = scmp.lt.s32.totalorder %s10, 3
    %p157 = pnand %p155, %p156
    %p158 = pneg %p157
    // Predicated region
    $region25: #{regular_forward.2} parent=5 // pred_check
      _
    $region26: #{regular_forward.2} parent=5 // pred_check_branch
      %160 = sbr.rel (%p157) target = $region28
    $region27: #{regular_forward.2} parent=5 // pred_region
      %s161 = ssub.s32 %s10, 1
      %p162 = scmp.lt.s32.totalorder %s19, 1
      %s163 = scalar_select %p162, %s19, 1
      %s164 = smul.addr %s163, 104
      %s165 = smul.addr %s164, 4
      %s166 = scalar_lea.vmem %s0, %s165
      %p167 = pneg %p48
      %p168 = pneg %p45
      %p169 = pneg %p69
      %p170 = pneg %p66
      %p171 = pneg %p97
      %p172 = pneg %p94
      %s173 = smul.u32 32, %s20
      %p174 = scmp.lt.s32.totalorder %s19, 1
      %s175 = scalar_select %p174, %s19, 1
      %p176 = scmp.lt.s32.totalorder %s173, 31
      %s177 = scalar_select %p176, %s173, 31
      %s178 = smul.addr %s175, 32
      %s179 = sadd.s32 %s177, %s178
      %s180 = smul.addr %s179, 8
      %s181 = scalar_lea.vmem %s2, %s180
      %p182 = pneg %p125
      %p183 = pneg %p122
      %p184 = scmp.lt.s32.totalorder %s19, 1
      %s185 = scalar_select %p184, %s19, 1
      %p186 = scmp.lt.s32.totalorder %s20, 0
      %s187 = scalar_select %p186, %s20, 0
      %s188 = sadd.s32 %s187, %s185
      %s189 = smul.addr %s188, 2
      %s190 = scalar_lea.vmem %s3, %s189
      %p191 = scmp.lt.s32.totalorder %s19, 1
      %s192 = scalar_select %p191, %s19, 1
      %s193 = smul.addr %s192, 104
      %s194 = smul.addr %s193, 4
      %s195 = scalar_lea.vmem %s0, %s194
      %s196 = smul.u32 32, %s20
      %p197 = scmp.lt.s32.totalorder %s19, 1
      %s198 = scalar_select %p197, %s19, 1
      %p199 = scmp.lt.s32.totalorder %s196, 31
      %s200 = scalar_select %p199, %s196, 31
      %s201 = smul.addr %s198, 32
      %s202 = sadd.s32 %s200, %s201
      %s203 = smul.addr %s202, 8
      %s204 = scalar_lea.vmem %s2, %s203
      %s205 = smul.u32 32, %s20
      %p206 = scmp.lt.s32.totalorder %s19, 1
      %s207 = scalar_select %p206, %s19, 1
      %p208 = scmp.lt.s32.totalorder %s20, 0
      %s209 = scalar_select %p208, %s20, 0
      %s210 = sadd.s32 %s209, %s207
      %s211 = smul.addr %s210, 2
      %s212 = scalar_lea.vmem %s3, %s211
      %s214 = smul.u32 %s20, 16
      %s215 = sadd.s32 %s214, 4
      %s216 = smul.u32 %s215, 4
      %s217 = smul.addr %s216, 4
      %s218 = scalar_lea.vmem %s195, %s217
      %v219 = vld [vmem:[%s218] sm:$0xc]
      %v220 = vld [vmem:[%s218 + $0x4] sm:$0xf]
      %v221 = vld [vmem:[%s218 + $0x8] sm:$0x3]
      %v222 = vld [vmem:[%s218 + $0x10] sm:$0xc]
      %v223 = vld [vmem:[%s218 + $0x14] sm:$0xf]
      %v224 = vld [vmem:[%s218 + $0x18] sm:$0x3]
      %v225 = vld [vmem:[%s218 + $0x20] sm:$0xc]
      %v226 = vld [vmem:[%s218 + $0x24] sm:$0xf]
      %v227 = vld [vmem:[%s218 + $0x28] sm:$0x3]
      %v228 = vld [vmem:[%s218 + $0x30] sm:$0xc]
      %v229 = vld [vmem:[%s218 + $0x34] sm:$0xf]
      %v230 = vld [vmem:[%s218 + $0x38] sm:$0x3]
      %v231 = vld [vmem:[%s218 + $0x40] sm:$0xc]
      %v232 = vld [vmem:[%s218 + $0x44] sm:$0xf]
      %v233 = vld [vmem:[%s218 + $0x48] sm:$0x3]
      %v234 = vld [vmem:[%s218 + $0x50] sm:$0xc]
      %v235 = vld [vmem:[%s218 + $0x54] sm:$0xf]
      %v236 = vld [vmem:[%s218 + $0x58] sm:$0x3]
      %v237 = vld [vmem:[%s218 + $0x60] sm:$0xc]
      %v238 = vld [vmem:[%s218 + $0x64] sm:$0xf]
      %v239 = vld [vmem:[%s218 + $0x68] sm:$0x3]
      %v240 = vld [vmem:[%s218 + $0x70] sm:$0xc]
      %v241 = vld [vmem:[%s218 + $0x74] sm:$0xf]
      %v242 = vld [vmem:[%s218 + $0x78] sm:$0x3]
      %v243 = vld [vmem:[%s218 + $0x8] sm:$0x7]
      %v244 = vld [vmem:[%s218 + $0x18] sm:$0x7]
      %v245 = vld [vmem:[%s218 + $0x28] sm:$0x7]
      %v246 = vld [vmem:[%s218 + $0x38] sm:$0x7]
      %v247 = vld [vmem:[%s218 + $0x48] sm:$0x7]
      %v248 = vld [vmem:[%s218 + $0x58] sm:$0x7]
      %v249 = vld [vmem:[%s218 + $0x68] sm:$0x7]
      %v250 = vld [vmem:[%s218 + $0x78] sm:$0x7]
      %v251 = vld [vmem:[%s218] sm:$0x8]
      %v252 = vld [vmem:[%s218 + $0x10] sm:$0x8]
      %v253 = vld [vmem:[%s218 + $0x20] sm:$0x8]
      %v254 = vld [vmem:[%s218 + $0x30] sm:$0x8]
      %v255 = vld [vmem:[%s218 + $0x40] sm:$0x8]
      %v256 = vld [vmem:[%s218 + $0x50] sm:$0x8]
      %v257 = vld [vmem:[%s218 + $0x60] sm:$0x8]
      %v258 = vld [vmem:[%s218 + $0x70] sm:$0x8]
      %s259 = sadd.s32 %s214, 5
      %s260 = smul.u32 %s259, 4
      %s261 = smul.addr %s260, 4
      %s262 = scalar_lea.vmem %s195, %s261
      %v263 = vld [vmem:[%s262] sm:$0xc]
      %v264 = vld [vmem:[%s262 + $0x4] sm:$0xf]
      %v265 = vld [vmem:[%s262 + $0x8] sm:$0x3]
      %v266 = vld [vmem:[%s262 + $0x10] sm:$0xc]
      %v267 = vld [vmem:[%s262 + $0x14] sm:$0xf]
      %v268 = vld [vmem:[%s262 + $0x18] sm:$0x3]
      %v269 = vld [vmem:[%s262 + $0x20] sm:$0xc]
      %v270 = vld [vmem:[%s262 + $0x24] sm:$0xf]
      %v271 = vld [vmem:[%s262 + $0x28] sm:$0x3]
      %v272 = vld [vmem:[%s262 + $0x30] sm:$0xc]
      %v273 = vld [vmem:[%s262 + $0x34] sm:$0xf]
      %v274 = vld [vmem:[%s262 + $0x38] sm:$0x3]
      %v275 = vld [vmem:[%s262 + $0x40] sm:$0xc]
      %v276 = vld [vmem:[%s262 + $0x44] sm:$0xf]
      %v277 = vld [vmem:[%s262 + $0x48] sm:$0x3]
      %v278 = vld [vmem:[%s262 + $0x50] sm:$0xc]
      %v279 = vld [vmem:[%s262 + $0x54] sm:$0xf]
      %v280 = vld [vmem:[%s262 + $0x58] sm:$0x3]
      %v281 = vld [vmem:[%s262 + $0x60] sm:$0xc]
      %v282 = vld [vmem:[%s262 + $0x64] sm:$0xf]
      %v283 = vld [vmem:[%s262 + $0x68] sm:$0x3]
      %v284 = vld [vmem:[%s262 + $0x70] sm:$0xc]
      %v285 = vld [vmem:[%s262 + $0x74] sm:$0xf]
      %v286 = vld [vmem:[%s262 + $0x78] sm:$0x3]
      %v311 = vunpack.c.l.b16 %v219
      %v312 = vunpack.c.l.b16 %v220
      %v313 = vunpack.c.l.b16 %v221
      %v314 = vunpack.c.l.b16 %v222
      %v315 = vunpack.c.l.b16 %v223
      %v316 = vunpack.c.l.b16 %v224
      %v317 = vunpack.c.l.b16 %v225
      %v318 = vunpack.c.l.b16 %v226
      %v319 = vunpack.c.l.b16 %v227
      %v320 = vunpack.c.l.b16 %v228
      %v321 = vunpack.c.l.b16 %v229
      %v322 = vunpack.c.l.b16 %v230
      %v323 = vunpack.c.l.b16 %v231
      %v324 = vunpack.c.l.b16 %v232
      %v325 = vunpack.c.l.b16 %v233
      %v326 = vunpack.c.l.b16 %v234
      %v327 = vunpack.c.l.b16 %v235
      %v328 = vunpack.c.l.b16 %v236
      %v329 = vunpack.c.l.b16 %v237
      %v330 = vunpack.c.l.b16 %v238
      %v331 = vunpack.c.l.b16 %v239
      %v332 = vunpack.c.l.b16 %v240
      %v333 = vunpack.c.l.b16 %v241
      %v334 = vunpack.c.l.b16 %v242
      %v335 = vpack.c.b16 %v312, %v311
      %v336 = vpack.c.b16 %v313, %v313
      %v337 = vpack.c.b16 %v315, %v314
      %v338 = vpack.c.b16 %v316, %v316
      %v339 = vpack.c.b16 %v318, %v317
      %v340 = vpack.c.b16 %v319, %v319
      %v341 = vpack.c.b16 %v321, %v320
      %v342 = vpack.c.b16 %v322, %v322
      %v343 = vpack.c.b16 %v324, %v323
      %v344 = vpack.c.b16 %v325, %v325
      %v345 = vpack.c.b16 %v327, %v326
      %v346 = vpack.c.b16 %v328, %v328
      %v347 = vpack.c.b16 %v330, %v329
      %v348 = vpack.c.b16 %v331, %v331
      %v349 = vpack.c.b16 %v333, %v332
      %v350 = vpack.c.b16 %v334, %v334
      %v359 = vunpack.c.l.b16 %v243
      %v360 = vunpack.c.l.b16 %v244
      %v361 = vunpack.c.l.b16 %v245
      %v362 = vunpack.c.l.b16 %v246
      %v363 = vunpack.c.l.b16 %v247
      %v364 = vunpack.c.l.b16 %v248
      %v365 = vunpack.c.l.b16 %v249
      %v366 = vunpack.c.l.b16 %v250
      %v367 = vpack.c.b16 %v359, %v359
      %v368 = vpack.c.b16 %v360, %v360
      %v369 = vpack.c.b16 %v361, %v361
      %v370 = vpack.c.b16 %v362, %v362
      %v371 = vpack.c.b16 %v363, %v363
      %v372 = vpack.c.b16 %v364, %v364
      %v373 = vpack.c.b16 %v365, %v365
      %v374 = vpack.c.b16 %v366, %v366
      %vm375 = vsmask.f32 7424
      %v377 = vshrl.u32 %v335, 16
      %v379 = vshll.u32 %v335, 16
      %v381 = vrot.slane %v379, 1
      %v382 = vor.u32 %v377, %v381
      %v384 = vshll.u32 %v367, 16
      %v386 = vrot.slane %v384, 1
      %v387 = vsel %vm375, %v382, %v386
      %v388 = vshrl.u32 %v367, 16
      %v390 = vor.u32 %v388, %v386
      %v392 = vshrl.u32 %v337, 16
      %v394 = vshll.u32 %v337, 16
      %v396 = vrot.slane %v394, 1
      %v397 = vor.u32 %v392, %v396
      %v399 = vshll.u32 %v368, 16
      %v401 = vrot.slane %v399, 1
      %v402 = vsel %vm375, %v397, %v401
      %v403 = vshrl.u32 %v368, 16
      %v405 = vor.u32 %v403, %v401
      %v407 = vshrl.u32 %v339, 16
      %v409 = vshll.u32 %v339, 16
      %v411 = vrot.slane %v409, 1
      %v412 = vor.u32 %v407, %v411
      %v414 = vshll.u32 %v369, 16
      %v416 = vrot.slane %v414, 1
      %v417 = vsel %vm375, %v412, %v416
      %v418 = vshrl.u32 %v369, 16
      %v420 = vor.u32 %v418, %v416
      %v422 = vshrl.u32 %v341, 16
      %v424 = vshll.u32 %v341, 16
      %v426 = vrot.slane %v424, 1
      %v427 = vor.u32 %v422, %v426
      %v429 = vshll.u32 %v370, 16
      %v431 = vrot.slane %v429, 1
      %v432 = vsel %vm375, %v427, %v431
      %v433 = vshrl.u32 %v370, 16
      %v435 = vor.u32 %v433, %v431
      %v437 = vshrl.u32 %v343, 16
      %v439 = vshll.u32 %v343, 16
      %v441 = vrot.slane %v439, 1
      %v442 = vor.u32 %v437, %v441
      %v444 = vshll.u32 %v371, 16
      %v446 = vrot.slane %v444, 1
      %v447 = vsel %vm375, %v442, %v446
      %v448 = vshrl.u32 %v371, 16
      %v450 = vor.u32 %v448, %v446
      %v452 = vshrl.u32 %v345, 16
      %v454 = vshll.u32 %v345, 16
      %v456 = vrot.slane %v454, 1
      %v457 = vor.u32 %v452, %v456
      %v459 = vshll.u32 %v372, 16
      %v461 = vrot.slane %v459, 1
      %v462 = vsel %vm375, %v457, %v461
      %v463 = vshrl.u32 %v372, 16
      %v465 = vor.u32 %v463, %v461
      %v467 = vshrl.u32 %v347, 16
      %v469 = vshll.u32 %v347, 16
      %v471 = vrot.slane %v469, 1
      %v472 = vor.u32 %v467, %v471
      %v474 = vshll.u32 %v373, 16
      %v476 = vrot.slane %v474, 1
      %v477 = vsel %vm375, %v472, %v476
      %v478 = vshrl.u32 %v373, 16
      %v480 = vor.u32 %v478, %v476
      %v482 = vshrl.u32 %v349, 16
      %v484 = vshll.u32 %v349, 16
      %v486 = vrot.slane %v484, 1
      %v487 = vor.u32 %v482, %v486
      %v489 = vshll.u32 %v374, 16
      %v491 = vrot.slane %v489, 1
      %v492 = vsel %vm375, %v487, %v491
      %v493 = vshrl.u32 %v374, 16
      %v495 = vor.u32 %v493, %v491
      %496 = vrot.lane.b32.xlu0 %v387, 32
      %v497 = vpop.permute.xlu0 %496
      %498 = vrot.lane.b32.xlu0 %v390, 32
      %v499 = vpop.permute.xlu0 %498
      %500 = vrot.lane.b32.xlu0 %v402, 32
      %v501 = vpop.permute.xlu0 %500
      %502 = vrot.lane.b32.xlu0 %v405, 32
      %v503 = vpop.permute.xlu0 %502
      %504 = vrot.lane.b32.xlu0 %v417, 32
      %v505 = vpop.permute.xlu0 %504
      %506 = vrot.lane.b32.xlu0 %v420, 32
      %v507 = vpop.permute.xlu0 %506
      %508 = vrot.lane.b32.xlu0 %v432, 32
      %v509 = vpop.permute.xlu0 %508
      %510 = vrot.lane.b32.xlu0 %v435, 32
      %v511 = vpop.permute.xlu0 %510
      %512 = vrot.lane.b32.xlu0 %v447, 32
      %v513 = vpop.permute.xlu0 %512
      %514 = vrot.lane.b32.xlu0 %v450, 32
      %v515 = vpop.permute.xlu0 %514
      %516 = vrot.lane.b32.xlu0 %v462, 32
      %v517 = vpop.permute.xlu0 %516
      %518 = vrot.lane.b32.xlu0 %v465, 32
      %v519 = vpop.permute.xlu0 %518
      %520 = vrot.lane.b32.xlu0 %v477, 32
      %v521 = vpop.permute.xlu0 %520
      %522 = vrot.lane.b32.xlu0 %v480, 32
      %v523 = vpop.permute.xlu0 %522
      %524 = vrot.lane.b32.xlu0 %v492, 32
      %v525 = vpop.permute.xlu0 %524
      %526 = vrot.lane.b32.xlu0 %v495, 32
      %v527 = vpop.permute.xlu0 %526
      %v536 = vunpack.c.l.b16 %v251
      %v537 = vunpack.c.l.b16 %v252
      %v538 = vunpack.c.l.b16 %v253
      %v539 = vunpack.c.l.b16 %v254
      %v540 = vunpack.c.l.b16 %v255
      %v541 = vunpack.c.l.b16 %v256
      %v542 = vunpack.c.l.b16 %v257
      %v543 = vunpack.c.l.b16 %v258
      %v544 = vpack.c.b16 %v312, %v536
      %v545 = vpack.c.b16 %v315, %v537
      %v546 = vpack.c.b16 %v318, %v538
      %v547 = vpack.c.b16 %v321, %v539
      %v548 = vpack.c.b16 %v324, %v540
      %v549 = vpack.c.b16 %v327, %v541
      %v550 = vpack.c.b16 %v330, %v542
      %v551 = vpack.c.b16 %v333, %v543
      %vm552 = vcmask 1046528
      %v553 = vrot.slane %v544, 1
      %v554 = vrot.slane %v367, 1
      %v555 = vsel %vm552, %v553, %v554
      %v556 = vrot.slane %v545, 1
      %v557 = vrot.slane %v368, 1
      %v558 = vsel %vm552, %v556, %v557
      %v559 = vrot.slane %v546, 1
      %v560 = vrot.slane %v369, 1
      %v561 = vsel %vm552, %v559, %v560
      %v562 = vrot.slane %v547, 1
      %v563 = vrot.slane %v370, 1
      %v564 = vsel %vm552, %v562, %v563
      %v565 = vrot.slane %v548, 1
      %v566 = vrot.slane %v371, 1
      %v567 = vsel %vm552, %v565, %v566
      %v568 = vrot.slane %v549, 1
      %v569 = vrot.slane %v372, 1
      %v570 = vsel %vm552, %v568, %v569
      %v571 = vrot.slane %v550, 1
      %v572 = vrot.slane %v373, 1
      %v573 = vsel %vm552, %v571, %v572
      %v574 = vrot.slane %v551, 1
      %v575 = vrot.slane %v374, 1
      %v576 = vsel %vm552, %v574, %v575
      %577 = vrot.lane.b32.xlu0 %v555, 64
      %v578 = vpop.permute.xlu0 %577
      %579 = vrot.lane.b32.xlu0 %v554, 64
      %v580 = vpop.permute.xlu0 %579
      %581 = vrot.lane.b32.xlu0 %v558, 64
      %v582 = vpop.permute.xlu0 %581
      %583 = vrot.lane.b32.xlu0 %v557, 64
      %v584 = vpop.permute.xlu0 %583
      %585 = vrot.lane.b32.xlu0 %v561, 64
      %v586 = vpop.permute.xlu0 %585
      %587 = vrot.lane.b32.xlu0 %v560, 64
      %v588 = vpop.permute.xlu0 %587
      %589 = vrot.lane.b32.xlu0 %v564, 64
      %v590 = vpop.permute.xlu0 %589
      %591 = vrot.lane.b32.xlu0 %v563, 64
      %v592 = vpop.permute.xlu0 %591
      %593 = vrot.lane.b32.xlu0 %v567, 64
      %v594 = vpop.permute.xlu0 %593
      %595 = vrot.lane.b32.xlu0 %v566, 64
      %v596 = vpop.permute.xlu0 %595
      %597 = vrot.lane.b32.xlu0 %v570, 64
      %v598 = vpop.permute.xlu0 %597
      %599 = vrot.lane.b32.xlu0 %v569, 64
      %v600 = vpop.permute.xlu0 %599
      %601 = vrot.lane.b32.xlu0 %v573, 64
      %v602 = vpop.permute.xlu0 %601
      %603 = vrot.lane.b32.xlu0 %v572, 64
      %v604 = vpop.permute.xlu0 %603
      %605 = vrot.lane.b32.xlu0 %v576, 64
      %v606 = vpop.permute.xlu0 %605
      %607 = vrot.lane.b32.xlu0 %v575, 64
      %v608 = vpop.permute.xlu0 %607
      %v633 = vunpack.c.l.b16 %v263
      %v634 = vunpack.c.l.b16 %v264
      %v635 = vunpack.c.l.b16 %v265
      %v636 = vunpack.c.l.b16 %v266
      %v637 = vunpack.c.l.b16 %v267
      %v638 = vunpack.c.l.b16 %v268
      %v639 = vunpack.c.l.b16 %v269
      %v640 = vunpack.c.l.b16 %v270
      %v641 = vunpack.c.l.b16 %v271
      %v642 = vunpack.c.l.b16 %v272
      %v643 = vunpack.c.l.b16 %v273
      %v644 = vunpack.c.l.b16 %v274
      %v645 = vunpack.c.l.b16 %v275
      %v646 = vunpack.c.l.b16 %v276
      %v647 = vunpack.c.l.b16 %v277
      %v648 = vunpack.c.l.b16 %v278
      %v649 = vunpack.c.l.b16 %v279
      %v650 = vunpack.c.l.b16 %v280
      %v651 = vunpack.c.l.b16 %v281
      %v652 = vunpack.c.l.b16 %v282
      %v653 = vunpack.c.l.b16 %v283
      %v654 = vunpack.c.l.b16 %v284
      %v655 = vunpack.c.l.b16 %v285
      %v656 = vunpack.c.l.b16 %v286
      %v657 = vpack.c.b16 %v634, %v633
      %v658 = vpack.c.b16 %v635, %v635
      %v659 = vpack.c.b16 %v637, %v636
      %v660 = vpack.c.b16 %v638, %v638
      %v661 = vpack.c.b16 %v640, %v639
      %v662 = vpack.c.b16 %v641, %v641
      %v663 = vpack.c.b16 %v643, %v642
      %v664 = vpack.c.b16 %v644, %v644
      %v665 = vpack.c.b16 %v646, %v645
      %v666 = vpack.c.b16 %v647, %v647
      %v667 = vpack.c.b16 %v649, %v648
      %v668 = vpack.c.b16 %v650, %v650
      %v669 = vpack.c.b16 %v652, %v651
      %v670 = vpack.c.b16 %v653, %v653
      %v671 = vpack.c.b16 %v655, %v654
      %v672 = vpack.c.b16 %v656, %v656
      %673 = vrot.lane.b32.xlu0 %v657, 96
      %v674 = vpop.permute.xlu0 %673
      %675 = vrot.lane.b32.xlu0 %v658, 96
      %v676 = vpop.permute.xlu0 %675
      %677 = vrot.lane.b32.xlu0 %v659, 96
      %v678 = vpop.permute.xlu0 %677
      %679 = vrot.lane.b32.xlu0 %v660, 96
      %v680 = vpop.permute.xlu0 %679
      %681 = vrot.lane.b32.xlu0 %v661, 96
      %v682 = vpop.permute.xlu0 %681
      %683 = vrot.lane.b32.xlu0 %v662, 96
      %v684 = vpop.permute.xlu0 %683
      %685 = vrot.lane.b32.xlu0 %v663, 96
      %v686 = vpop.permute.xlu0 %685
      %687 = vrot.lane.b32.xlu0 %v664, 96
      %v688 = vpop.permute.xlu0 %687
      %689 = vrot.lane.b32.xlu0 %v665, 96
      %v690 = vpop.permute.xlu0 %689
      %691 = vrot.lane.b32.xlu0 %v666, 96
      %v692 = vpop.permute.xlu0 %691
      %693 = vrot.lane.b32.xlu0 %v667, 96
      %v694 = vpop.permute.xlu0 %693
      %695 = vrot.lane.b32.xlu0 %v668, 96
      %v696 = vpop.permute.xlu0 %695
      %697 = vrot.lane.b32.xlu0 %v669, 96
      %v698 = vpop.permute.xlu0 %697
      %699 = vrot.lane.b32.xlu0 %v670, 96
      %v700 = vpop.permute.xlu0 %699
      %701 = vrot.lane.b32.xlu0 %v671, 96
      %v702 = vpop.permute.xlu0 %701
      %703 = vrot.lane.b32.xlu0 %v672, 96
      %v704 = vpop.permute.xlu0 %703
      %vm705 = vcmask 261120
      %v707 = vsel %vm705, %v335, %v497
      %v710 = vsel %vm705, %v336, %v499
      %v712 = vsel %vm705, %v337, %v501
      %v715 = vsel %vm705, %v338, %v503
      %v717 = vsel %vm705, %v339, %v505
      %v720 = vsel %vm705, %v340, %v507
      %v722 = vsel %vm705, %v341, %v509
      %v725 = vsel %vm705, %v342, %v511
      %v727 = vsel %vm705, %v343, %v513
      %v730 = vsel %vm705, %v344, %v515
      %v732 = vsel %vm705, %v345, %v517
      %v735 = vsel %vm705, %v346, %v519
      %v737 = vsel %vm705, %v347, %v521
      %v740 = vsel %vm705, %v348, %v523
      %v742 = vsel %vm705, %v349, %v525
      %v745 = vsel %vm705, %v350, %v527
      %vm746 = vcmask 523264
      %v748 = vsel %vm746, %v707, %v578
      %v750 = vsel %vm746, %v710, %v580
      %v752 = vsel %vm746, %v712, %v582
      %v754 = vsel %vm746, %v715, %v584
      %v756 = vsel %vm746, %v717, %v586
      %v758 = vsel %vm746, %v720, %v588
      %v760 = vsel %vm746, %v722, %v590
      %v762 = vsel %vm746, %v725, %v592
      %v764 = vsel %vm746, %v727, %v594
      %v766 = vsel %vm746, %v730, %v596
      %v768 = vsel %vm746, %v732, %v598
      %v770 = vsel %vm746, %v735, %v600
      %v772 = vsel %vm746, %v737, %v602
      %v774 = vsel %vm746, %v740, %v604
      %v776 = vsel %vm746, %v742, %v606
      %v778 = vsel %vm746, %v745, %v608
      %vm779 = vcmask 785408
      %v781 = vsel %vm779, %v748, %v674
      %v783 = vsel %vm779, %v750, %v676
      %v785 = vsel %vm779, %v752, %v678
      %v787 = vsel %vm779, %v754, %v680
      %v789 = vsel %vm779, %v756, %v682
      %v791 = vsel %vm779, %v758, %v684
      %v793 = vsel %vm779, %v760, %v686
      %v795 = vsel %vm779, %v762, %v688
      %v797 = vsel %vm779, %v764, %v690
      %v799 = vsel %vm779, %v766, %v692
      %v801 = vsel %vm779, %v768, %v694
      %v803 = vsel %vm779, %v770, %v696
      %v805 = vsel %vm779, %v772, %v698
      %v807 = vsel %vm779, %v774, %v700
      %v809 = vsel %vm779, %v776, %v702
      %v811 = vsel %vm779, %v778, %v704
      %vm828 = vcmask 1045504
      %v829 = vrot.slane %v781, 2
      %v830 = vrot.slane %v783, 2
      %v831 = vsel %vm828, %v829, %v830
      %v832 = vrot.slane %v785, 2
      %v833 = vrot.slane %v787, 2
      %v834 = vsel %vm828, %v832, %v833
      %v835 = vrot.slane %v789, 2
      %v836 = vrot.slane %v791, 2
      %v837 = vsel %vm828, %v835, %v836
      %v838 = vrot.slane %v793, 2
      %v839 = vrot.slane %v795, 2
      %v840 = vsel %vm828, %v838, %v839
      %v841 = vrot.slane %v797, 2
      %v842 = vrot.slane %v799, 2
      %v843 = vsel %vm828, %v841, %v842
      %v844 = vrot.slane %v801, 2
      %v845 = vrot.slane %v803, 2
      %v846 = vsel %vm828, %v844, %v845
      %v847 = vrot.slane %v805, 2
      %v848 = vrot.slane %v807, 2
      %v849 = vsel %vm828, %v847, %v848
      %v850 = vrot.slane %v809, 2
      %v851 = vrot.slane %v811, 2
      %v852 = vsel %vm828, %v850, %v851
      %v853 = vunpack.c.l.b16 %v831
      %v854 = vunpack.c.h.b16 %v831
      %v855 = vunpack.c.l.b16 %v834
      %v856 = vunpack.c.h.b16 %v834
      %v857 = vunpack.c.l.b16 %v837
      %v858 = vunpack.c.h.b16 %v837
      %v859 = vunpack.c.l.b16 %v840
      %v860 = vunpack.c.h.b16 %v840
      %v861 = vunpack.c.l.b16 %v843
      %v862 = vunpack.c.h.b16 %v843
      %v863 = vunpack.c.l.b16 %v846
      %v864 = vunpack.c.h.b16 %v846
      %v865 = vunpack.c.l.b16 %v849
      %v866 = vunpack.c.h.b16 %v849
      %v867 = vunpack.c.l.b16 %v852
      %v868 = vunpack.c.h.b16 %v852
      %v869 = vpack.c.b16 %v853, %v853
      %v870 = vpack.c.b16 %v854, %v854
      %v871 = vpack.c.b16 %v855, %v855
      %v872 = vpack.c.b16 %v856, %v856
      %v873 = vpack.c.b16 %v857, %v857
      %v874 = vpack.c.b16 %v858, %v858
      %v875 = vpack.c.b16 %v859, %v859
      %v876 = vpack.c.b16 %v860, %v860
      %v877 = vpack.c.b16 %v861, %v861
      %v878 = vpack.c.b16 %v862, %v862
      %v879 = vpack.c.b16 %v863, %v863
      %v880 = vpack.c.b16 %v864, %v864
      %v881 = vpack.c.b16 %v865, %v865
      %v882 = vpack.c.b16 %v866, %v866
      %v883 = vpack.c.b16 %v867, %v867
      %v884 = vpack.c.b16 %v868, %v868
      %901 = vst [vmem:[#allocation2] sm:$0xf] %v869
      %902 = vst [vmem:[#allocation2 + $0x1c] sm:$0xf] %v870
      %903 = vst [vmem:[#allocation2 + $0x38] sm:$0xf] %v871
      %904 = vst [vmem:[#allocation2 + $0x54] sm:$0xf] %v872
      %905 = vst [vmem:[#allocation2 + $0x70] sm:$0xf] %v873
      %906 = vst [vmem:[#allocation2 + $0x8c] sm:$0xf] %v874
      %907 = vst [vmem:[#allocation2 + $0xa8] sm:$0xf] %v875
      %908 = vst [vmem:[#allocation2 + $0xc4] sm:$0xf] %v876
      %909 = vst [vmem:[#allocation2 + $0xe0] sm:$0xf] %v877
      %910 = vst [vmem:[#allocation2 + $0xfc] sm:$0xf] %v878
      %911 = vst [vmem:[#allocation2 + $0x118] sm:$0xf] %v879
      %912 = vst [vmem:[#allocation2 + $0x134] sm:$0xf] %v880
      %913 = vst [vmem:[#allocation2 + $0x150] sm:$0xf] %v881
      %914 = vst [vmem:[#allocation2 + $0x16c] sm:$0xf] %v882
      %915 = vst [vmem:[#allocation2 + $0x188] sm:$0xf] %v883
      %916 = vst [vmem:[#allocation2 + $0x1a4] sm:$0xf] %v884
      %v917 = vld [vmem:[%s262] sm:$0xc]
      %v918 = vld [vmem:[%s262 + $0x4] sm:$0xf]
      %v919 = vld [vmem:[%s262 + $0x8] sm:$0x7]
      %v920 = vld [vmem:[%s262 + $0x10] sm:$0xc]
      %v921 = vld [vmem:[%s262 + $0x14] sm:$0xf]
      %v922 = vld [vmem:[%s262 + $0x18] sm:$0x7]
      %v923 = vld [vmem:[%s262 + $0x20] sm:$0xc]
      %v924 = vld [vmem:[%s262 + $0x24] sm:$0xf]
      %v925 = vld [vmem:[%s262 + $0x28] sm:$0x7]
      %v926 = vld [vmem:[%s262 + $0x30] sm:$0xc]
      %v927 = vld [vmem:[%s262 + $0x34] sm:$0xf]
      %v928 = vld [vmem:[%s262 + $0x38] sm:$0x7]
      %v929 = vld [vmem:[%s262 + $0x40] sm:$0xc]
      %v930 = vld [vmem:[%s262 + $0x44] sm:$0xf]
      %v931 = vld [vmem:[%s262 + $0x48] sm:$0x7]
      %v932 = vld [vmem:[%s262 + $0x50] sm:$0xc]
      %v933 = vld [vmem:[%s262 + $0x54] sm:$0xf]
      %v934 = vld [vmem:[%s262 + $0x58] sm:$0x7]
      %v935 = vld [vmem:[%s262 + $0x60] sm:$0xc]
      %v936 = vld [vmem:[%s262 + $0x64] sm:$0xf]
      %v937 = vld [vmem:[%s262 + $0x68] sm:$0x7]
      %v938 = vld [vmem:[%s262 + $0x70] sm:$0xc]
      %v939 = vld [vmem:[%s262 + $0x74] sm:$0xf]
      %v940 = vld [vmem:[%s262 + $0x78] sm:$0x7]
      %v941 = vld [vmem:[%s262] sm:$0x8]
      %v942 = vld [vmem:[%s262 + $0x10] sm:$0x8]
      %v943 = vld [vmem:[%s262 + $0x20] sm:$0x8]
      %v944 = vld [vmem:[%s262 + $0x30] sm:$0x8]
      %v945 = vld [vmem:[%s262 + $0x40] sm:$0x8]
      %v946 = vld [vmem:[%s262 + $0x50] sm:$0x8]
      %v947 = vld [vmem:[%s262 + $0x60] sm:$0x8]
      %v948 = vld [vmem:[%s262 + $0x70] sm:$0x8]
      %s949 = sadd.s32 %s214, 6
      %s950 = smul.u32 %s949, 4
      %s951 = smul.addr %s950, 4
      %s952 = scalar_lea.vmem %s195, %s951
      %v953 = vld [vmem:[%s952] sm:$0xc]
      %v954 = vld [vmem:[%s952 + $0x4] sm:$0xf]
      %v955 = vld [vmem:[%s952 + $0x8] sm:$0x3]
      %v956 = vld [vmem:[%s952 + $0x10] sm:$0xc]
      %v957 = vld [vmem:[%s952 + $0x14] sm:$0xf]
      %v958 = vld [vmem:[%s952 + $0x18] sm:$0x3]
      %v959 = vld [vmem:[%s952 + $0x20] sm:$0xc]
      %v960 = vld [vmem:[%s952 + $0x24] sm:$0xf]
      %v961 = vld [vmem:[%s952 + $0x28] sm:$0x3]
      %v962 = vld [vmem:[%s952 + $0x30] sm:$0xc]
      %v963 = vld [vmem:[%s952 + $0x34] sm:$0xf]
      %v964 = vld [vmem:[%s952 + $0x38] sm:$0x3]
      %v965 = vld [vmem:[%s952 + $0x40] sm:$0xc]
      %v966 = vld [vmem:[%s952 + $0x44] sm:$0xf]
      %v967 = vld [vmem:[%s952 + $0x48] sm:$0x3]
      %v968 = vld [vmem:[%s952 + $0x50] sm:$0xc]
      %v969 = vld [vmem:[%s952 + $0x54] sm:$0xf]
      %v970 = vld [vmem:[%s952 + $0x58] sm:$0x3]
      %v971 = vld [vmem:[%s952 + $0x60] sm:$0xc]
      %v972 = vld [vmem:[%s952 + $0x64] sm:$0xf]
      %v973 = vld [vmem:[%s952 + $0x68] sm:$0x3]
      %v974 = vld [vmem:[%s952 + $0x70] sm:$0xc]
      %v975 = vld [vmem:[%s952 + $0x74] sm:$0xf]
      %v976 = vld [vmem:[%s952 + $0x78] sm:$0x3]
      %v977 = vld [vmem:[%s952 + $0x8] sm:$0x7]
      %v978 = vld [vmem:[%s952 + $0x18] sm:$0x7]
      %v979 = vld [vmem:[%s952 + $0x28] sm:$0x7]
      %v980 = vld [vmem:[%s952 + $0x38] sm:$0x7]
      %v981 = vld [vmem:[%s952 + $0x48] sm:$0x7]
      %v982 = vld [vmem:[%s952 + $0x58] sm:$0x7]
      %v983 = vld [vmem:[%s952 + $0x68] sm:$0x7]
      %v984 = vld [vmem:[%s952 + $0x78] sm:$0x7]
      %v1009 = vunpack.c.l.b16 %v917
      %v1010 = vunpack.c.l.b16 %v918
      %v1011 = vunpack.c.l.b16 %v919
      %v1012 = vunpack.c.l.b16 %v920
      %v1013 = vunpack.c.l.b16 %v921
      %v1014 = vunpack.c.l.b16 %v922
      %v1015 = vunpack.c.l.b16 %v923
      %v1016 = vunpack.c.l.b16 %v924
      %v1017 = vunpack.c.l.b16 %v925
      %v1018 = vunpack.c.l.b16 %v926
      %v1019 = vunpack.c.l.b16 %v927
      %v1020 = vunpack.c.l.b16 %v928
      %v1021 = vunpack.c.l.b16 %v929
      %v1022 = vunpack.c.l.b16 %v930
      %v1023 = vunpack.c.l.b16 %v931
      %v1024 = vunpack.c.l.b16 %v932
      %v1025 = vunpack.c.l.b16 %v933
      %v1026 = vunpack.c.l.b16 %v934
      %v1027 = vunpack.c.l.b16 %v935
      %v1028 = vunpack.c.l.b16 %v936
      %v1029 = vunpack.c.l.b16 %v937
      %v1030 = vunpack.c.l.b16 %v938
      %v1031 = vunpack.c.l.b16 %v939
      %v1032 = vunpack.c.l.b16 %v940
      %v1033 = vpack.c.b16 %v1010, %v1009
      %v1034 = vpack.c.b16 %v1011, %v1011
      %v1035 = vpack.c.b16 %v1013, %v1012
      %v1036 = vpack.c.b16 %v1014, %v1014
      %v1037 = vpack.c.b16 %v1016, %v1015
      %v1038 = vpack.c.b16 %v1017, %v1017
      %v1039 = vpack.c.b16 %v1019, %v1018
      %v1040 = vpack.c.b16 %v1020, %v1020
      %v1041 = vpack.c.b16 %v1022, %v1021
      %v1042 = vpack.c.b16 %v1023, %v1023
      %v1043 = vpack.c.b16 %v1025, %v1024
      %v1044 = vpack.c.b16 %v1026, %v1026
      %v1045 = vpack.c.b16 %v1028, %v1027
      %v1046 = vpack.c.b16 %v1029, %v1029
      %v1047 = vpack.c.b16 %v1031, %v1030
      %v1048 = vpack.c.b16 %v1032, %v1032
      %v1057 = vunpack.c.l.b16 %v941
      %v1058 = vunpack.c.l.b16 %v942
      %v1059 = vunpack.c.l.b16 %v943
      %v1060 = vunpack.c.l.b16 %v944
      %v1061 = vunpack.c.l.b16 %v945
      %v1062 = vunpack.c.l.b16 %v946
      %v1063 = vunpack.c.l.b16 %v947
      %v1064 = vunpack.c.l.b16 %v948
      %v1065 = vpack.c.b16 %v1010, %v1057
      %v1066 = vpack.c.b16 %v1013, %v1058
      %v1067 = vpack.c.b16 %v1016, %v1059
      %v1068 = vpack.c.b16 %v1019, %v1060
      %v1069 = vpack.c.b16 %v1022, %v1061
      %v1070 = vpack.c.b16 %v1025, %v1062
      %v1071 = vpack.c.b16 %v1028, %v1063
      %v1072 = vpack.c.b16 %v1031, %v1064
      %v1074 = vshrl.u32 %v1065, 16
      %v1076 = vshll.u32 %v1065, 16
      %v1078 = vrot.slane %v1076, 1
      %v1079 = vor.u32 %v1074, %v1078
      %v1081 = vshll.u32 %v1034, 16
      %v1083 = vrot.slane %v1081, 1
      %v1084 = vsel %vm375, %v1079, %v1083
      %v1085 = vshrl.u32 %v1034, 16
      %v1087 = vor.u32 %v1085, %v1083
      %v1089 = vshrl.u32 %v1066, 16
      %v1091 = vshll.u32 %v1066, 16
      %v1093 = vrot.slane %v1091, 1
      %v1094 = vor.u32 %v1089, %v1093
      %v1096 = vshll.u32 %v1036, 16
      %v1098 = vrot.slane %v1096, 1
      %v1099 = vsel %vm375, %v1094, %v1098
      %v1100 = vshrl.u32 %v1036, 16
      %v1102 = vor.u32 %v1100, %v1098
      %v1104 = vshrl.u32 %v1067, 16
      %v1106 = vshll.u32 %v1067, 16
      %v1108 = vrot.slane %v1106, 1
      %v1109 = vor.u32 %v1104, %v1108
      %v1111 = vshll.u32 %v1038, 16
      %v1113 = vrot.slane %v1111, 1
      %v1114 = vsel %vm375, %v1109, %v1113
      %v1115 = vshrl.u32 %v1038, 16
      %v1117 = vor.u32 %v1115, %v1113
      %v1119 = vshrl.u32 %v1068, 16
      %v1121 = vshll.u32 %v1068, 16
      %v1123 = vrot.slane %v1121, 1
      %v1124 = vor.u32 %v1119, %v1123
      %v1126 = vshll.u32 %v1040, 16
      %v1128 = vrot.slane %v1126, 1
      %v1129 = vsel %vm375, %v1124, %v1128
      %v1130 = vshrl.u32 %v1040, 16
      %v1132 = vor.u32 %v1130, %v1128
      %v1134 = vshrl.u32 %v1069, 16
      %v1136 = vshll.u32 %v1069, 16
      %v1138 = vrot.slane %v1136, 1
      %v1139 = vor.u32 %v1134, %v1138
      %v1141 = vshll.u32 %v1042, 16
      %v1143 = vrot.slane %v1141, 1
      %v1144 = vsel %vm375, %v1139, %v1143
      %v1145 = vshrl.u32 %v1042, 16
      %v1147 = vor.u32 %v1145, %v1143
      %v1149 = vshrl.u32 %v1070, 16
      %v1151 = vshll.u32 %v1070, 16
      %v1153 = vrot.slane %v1151, 1
      %v1154 = vor.u32 %v1149, %v1153
      %v1156 = vshll.u32 %v1044, 16
      %v1158 = vrot.slane %v1156, 1
      %v1159 = vsel %vm375, %v1154, %v1158
      %v1160 = vshrl.u32 %v1044, 16
      %v1162 = vor.u32 %v1160, %v1158
      %v1164 = vshrl.u32 %v1071, 16
      %v1166 = vshll.u32 %v1071, 16
      %v1168 = vrot.slane %v1166, 1
      %v1169 = vor.u32 %v1164, %v1168
      %v1171 = vshll.u32 %v1046, 16
      %v1173 = vrot.slane %v1171, 1
      %v1174 = vsel %vm375, %v1169, %v1173
      %v1175 = vshrl.u32 %v1046, 16
      %v1177 = vor.u32 %v1175, %v1173
      %v1179 = vshrl.u32 %v1072, 16
      %v1181 = vshll.u32 %v1072, 16
      %v1183 = vrot.slane %v1181, 1
      %v1184 = vor.u32 %v1179, %v1183
      %v1186 = vshll.u32 %v1048, 16
      %v1188 = vrot.slane %v1186, 1
      %v1189 = vsel %vm375, %v1184, %v1188
      %v1190 = vshrl.u32 %v1048, 16
      %v1192 = vor.u32 %v1190, %v1188
      %1193 = vrot.lane.b32.xlu0 %v1084, 32
      %v1194 = vpop.permute.xlu0 %1193
      %1195 = vrot.lane.b32.xlu0 %v1087, 32
      %v1196 = vpop.permute.xlu0 %1195
      %1197 = vrot.lane.b32.xlu0 %v1099, 32
      %v1198 = vpop.permute.xlu0 %1197
      %1199 = vrot.lane.b32.xlu0 %v1102, 32
      %v1200 = vpop.permute.xlu0 %1199
      %1201 = vrot.lane.b32.xlu0 %v1114, 32
      %v1202 = vpop.permute.xlu0 %1201
      %1203 = vrot.lane.b32.xlu0 %v1117, 32
      %v1204 = vpop.permute.xlu0 %1203
      %1205 = vrot.lane.b32.xlu0 %v1129, 32
      %v1206 = vpop.permute.xlu0 %1205
      %1207 = vrot.lane.b32.xlu0 %v1132, 32
      %v1208 = vpop.permute.xlu0 %1207
      %1209 = vrot.lane.b32.xlu0 %v1144, 32
      %v1210 = vpop.permute.xlu0 %1209
      %1211 = vrot.lane.b32.xlu0 %v1147, 32
      %v1212 = vpop.permute.xlu0 %1211
      %1213 = vrot.lane.b32.xlu0 %v1159, 32
      %v1214 = vpop.permute.xlu0 %1213
      %1215 = vrot.lane.b32.xlu0 %v1162, 32
      %v1216 = vpop.permute.xlu0 %1215
      %1217 = vrot.lane.b32.xlu0 %v1174, 32
      %v1218 = vpop.permute.xlu0 %1217
      %1219 = vrot.lane.b32.xlu0 %v1177, 32
      %v1220 = vpop.permute.xlu0 %1219
      %1221 = vrot.lane.b32.xlu0 %v1189, 32
      %v1222 = vpop.permute.xlu0 %1221
      %1223 = vrot.lane.b32.xlu0 %v1192, 32
      %v1224 = vpop.permute.xlu0 %1223
      %v1249 = vunpack.c.l.b16 %v953
      %v1250 = vunpack.c.l.b16 %v954
      %v1251 = vunpack.c.l.b16 %v955
      %v1252 = vunpack.c.l.b16 %v956
      %v1253 = vunpack.c.l.b16 %v957
      %v1254 = vunpack.c.l.b16 %v958
      %v1255 = vunpack.c.l.b16 %v959
      %v1256 = vunpack.c.l.b16 %v960
      %v1257 = vunpack.c.l.b16 %v961
      %v1258 = vunpack.c.l.b16 %v962
      %v1259 = vunpack.c.l.b16 %v963
      %v1260 = vunpack.c.l.b16 %v964
      %v1261 = vunpack.c.l.b16 %v965
      %v1262 = vunpack.c.l.b16 %v966
      %v1263 = vunpack.c.l.b16 %v967
      %v1264 = vunpack.c.l.b16 %v968
      %v1265 = vunpack.c.l.b16 %v969
      %v1266 = vunpack.c.l.b16 %v970
      %v1267 = vunpack.c.l.b16 %v971
      %v1268 = vunpack.c.l.b16 %v972
      %v1269 = vunpack.c.l.b16 %v973
      %v1270 = vunpack.c.l.b16 %v974
      %v1271 = vunpack.c.l.b16 %v975
      %v1272 = vunpack.c.l.b16 %v976
      %v1273 = vpack.c.b16 %v1250, %v1249
      %v1274 = vpack.c.b16 %v1251, %v1251
      %v1275 = vpack.c.b16 %v1253, %v1252
      %v1276 = vpack.c.b16 %v1254, %v1254
      %v1277 = vpack.c.b16 %v1256, %v1255
      %v1278 = vpack.c.b16 %v1257, %v1257
      %v1279 = vpack.c.b16 %v1259, %v1258
      %v1280 = vpack.c.b16 %v1260, %v1260
      %v1281 = vpack.c.b16 %v1262, %v1261
      %v1282 = vpack.c.b16 %v1263, %v1263
      %v1283 = vpack.c.b16 %v1265, %v1264
      %v1284 = vpack.c.b16 %v1266, %v1266
      %v1285 = vpack.c.b16 %v1268, %v1267
      %v1286 = vpack.c.b16 %v1269, %v1269
      %v1287 = vpack.c.b16 %v1271, %v1270
      %v1288 = vpack.c.b16 %v1272, %v1272
      %vm1289 = vsmask.f32 256
      %v1291 = vshrl.u32 %v1273, 16
      %v1293 = vrot.slane %v1291, 7
      %v1294 = vshll.u32 %v1273, 16
      %v1296 = vor.u32 %v1293, %v1294
      %v1298 = vshrl.u32 %v1274, 16
      %v1300 = vrot.slane %v1298, 7
      %v1301 = vshll.u32 %v1274, 16
      %v1303 = vor.u32 %v1300, %v1301
      %v1304 = vsel %vm1289, %v1293, %v1303
      %v1306 = vshrl.u32 %v1275, 16
      %v1308 = vrot.slane %v1306, 7
      %v1309 = vshll.u32 %v1275, 16
      %v1311 = vor.u32 %v1308, %v1309
      %v1313 = vshrl.u32 %v1276, 16
      %v1315 = vrot.slane %v1313, 7
      %v1316 = vshll.u32 %v1276, 16
      %v1318 = vor.u32 %v1315, %v1316
      %v1319 = vsel %vm1289, %v1308, %v1318
      %v1321 = vshrl.u32 %v1277, 16
      %v1323 = vrot.slane %v1321, 7
      %v1324 = vshll.u32 %v1277, 16
      %v1326 = vor.u32 %v1323, %v1324
      %v1328 = vshrl.u32 %v1278, 16
      %v1330 = vrot.slane %v1328, 7
      %v1331 = vshll.u32 %v1278, 16
      %v1333 = vor.u32 %v1330, %v1331
      %v1334 = vsel %vm1289, %v1323, %v1333
      %v1336 = vshrl.u32 %v1279, 16
      %v1338 = vrot.slane %v1336, 7
      %v1339 = vshll.u32 %v1279, 16
      %v1341 = vor.u32 %v1338, %v1339
      %v1343 = vshrl.u32 %v1280, 16
      %v1345 = vrot.slane %v1343, 7
      %v1346 = vshll.u32 %v1280, 16
      %v1348 = vor.u32 %v1345, %v1346
      %v1349 = vsel %vm1289, %v1338, %v1348
      %v1351 = vshrl.u32 %v1281, 16
      %v1353 = vrot.slane %v1351, 7
      %v1354 = vshll.u32 %v1281, 16
      %v1356 = vor.u32 %v1353, %v1354
      %v1358 = vshrl.u32 %v1282, 16
      %v1360 = vrot.slane %v1358, 7
      %v1361 = vshll.u32 %v1282, 16
      %v1363 = vor.u32 %v1360, %v1361
      %v1364 = vsel %vm1289, %v1353, %v1363
      %v1366 = vshrl.u32 %v1283, 16
      %v1368 = vrot.slane %v1366, 7
      %v1369 = vshll.u32 %v1283, 16
      %v1371 = vor.u32 %v1368, %v1369
      %v1373 = vshrl.u32 %v1284, 16
      %v1375 = vrot.slane %v1373, 7
      %v1376 = vshll.u32 %v1284, 16
      %v1378 = vor.u32 %v1375, %v1376
      %v1379 = vsel %vm1289, %v1368, %v1378
      %v1381 = vshrl.u32 %v1285, 16
      %v1383 = vrot.slane %v1381, 7
      %v1384 = vshll.u32 %v1285, 16
      %v1386 = vor.u32 %v1383, %v1384
      %v1388 = vshrl.u32 %v1286, 16
      %v1390 = vrot.slane %v1388, 7
      %v1391 = vshll.u32 %v1286, 16
      %v1393 = vor.u32 %v1390, %v1391
      %v1394 = vsel %vm1289, %v1383, %v1393
      %v1396 = vshrl.u32 %v1287, 16
      %v1398 = vrot.slane %v1396, 7
      %v1399 = vshll.u32 %v1287, 16
      %v1401 = vor.u32 %v1398, %v1399
      %v1403 = vshrl.u32 %v1288, 16
      %v1405 = vrot.slane %v1403, 7
      %v1406 = vshll.u32 %v1288, 16
      %v1408 = vor.u32 %v1405, %v1406
      %v1409 = vsel %vm1289, %v1398, %v1408
      %1410 = vrot.lane.b32.xlu0 %v1296, 64
      %v1411 = vpop.permute.xlu0 %1410
      %1412 = vrot.lane.b32.xlu0 %v1304, 64
      %v1413 = vpop.permute.xlu0 %1412
      %1414 = vrot.lane.b32.xlu0 %v1311, 64
      %v1415 = vpop.permute.xlu0 %1414
      %1416 = vrot.lane.b32.xlu0 %v1319, 64
      %v1417 = vpop.permute.xlu0 %1416
      %1418 = vrot.lane.b32.xlu0 %v1326, 64
      %v1419 = vpop.permute.xlu0 %1418
      %1420 = vrot.lane.b32.xlu0 %v1334, 64
      %v1421 = vpop.permute.xlu0 %1420
      %1422 = vrot.lane.b32.xlu0 %v1341, 64
      %v1423 = vpop.permute.xlu0 %1422
      %1424 = vrot.lane.b32.xlu0 %v1349, 64
      %v1425 = vpop.permute.xlu0 %1424
      %1426 = vrot.lane.b32.xlu0 %v1356, 64
      %v1427 = vpop.permute.xlu0 %1426
      %1428 = vrot.lane.b32.xlu0 %v1364, 64
      %v1429 = vpop.permute.xlu0 %1428
      %1430 = vrot.lane.b32.xlu0 %v1371, 64
      %v1431 = vpop.permute.xlu0 %1430
      %1432 = vrot.lane.b32.xlu0 %v1379, 64
      %v1433 = vpop.permute.xlu0 %1432
      %1434 = vrot.lane.b32.xlu0 %v1386, 64
      %v1435 = vpop.permute.xlu0 %1434
      %1436 = vrot.lane.b32.xlu0 %v1394, 64
      %v1437 = vpop.permute.xlu0 %1436
      %1438 = vrot.lane.b32.xlu0 %v1401, 64
      %v1439 = vpop.permute.xlu0 %1438
      %1440 = vrot.lane.b32.xlu0 %v1409, 64
      %v1441 = vpop.permute.xlu0 %1440
      %v1450 = vunpack.c.l.b16 %v977
      %v1451 = vunpack.c.l.b16 %v978
      %v1452 = vunpack.c.l.b16 %v979
      %v1453 = vunpack.c.l.b16 %v980
      %v1454 = vunpack.c.l.b16 %v981
      %v1455 = vunpack.c.l.b16 %v982
      %v1456 = vunpack.c.l.b16 %v983
      %v1457 = vunpack.c.l.b16 %v984
      %v1458 = vpack.c.b16 %v1450, %v1450
      %v1459 = vpack.c.b16 %v1451, %v1451
      %v1460 = vpack.c.b16 %v1452, %v1452
      %v1461 = vpack.c.b16 %v1453, %v1453
      %v1462 = vpack.c.b16 %v1454, %v1454
      %v1463 = vpack.c.b16 %v1455, %v1455
      %v1464 = vpack.c.b16 %v1456, %v1456
      %v1465 = vpack.c.b16 %v1457, %v1457
      %1466 = vrot.lane.b32.xlu0 %v1273, 96
      %v1467 = vpop.permute.xlu0 %1466
      %1468 = vrot.lane.b32.xlu0 %v1458, 96
      %v1469 = vpop.permute.xlu0 %1468
      %1470 = vrot.lane.b32.xlu0 %v1275, 96
      %v1471 = vpop.permute.xlu0 %1470
      %1472 = vrot.lane.b32.xlu0 %v1459, 96
      %v1473 = vpop.permute.xlu0 %1472
      %1474 = vrot.lane.b32.xlu0 %v1277, 96
      %v1475 = vpop.permute.xlu0 %1474
      %1476 = vrot.lane.b32.xlu0 %v1460, 96
      %v1477 = vpop.permute.xlu0 %1476
      %1478 = vrot.lane.b32.xlu0 %v1279, 96
      %v1479 = vpop.permute.xlu0 %1478
      %1480 = vrot.lane.b32.xlu0 %v1461, 96
      %v1481 = vpop.permute.xlu0 %1480
      %1482 = vrot.lane.b32.xlu0 %v1281, 96
      %v1483 = vpop.permute.xlu0 %1482
      %1484 = vrot.lane.b32.xlu0 %v1462, 96
      %v1485 = vpop.permute.xlu0 %1484
      %1486 = vrot.lane.b32.xlu0 %v1283, 96
      %v1487 = vpop.permute.xlu0 %1486
      %1488 = vrot.lane.b32.xlu0 %v1463, 96
      %v1489 = vpop.permute.xlu0 %1488
      %1490 = vrot.lane.b32.xlu0 %v1285, 96
      %v1491 = vpop.permute.xlu0 %1490
      %1492 = vrot.lane.b32.xlu0 %v1464, 96
      %v1493 = vpop.permute.xlu0 %1492
      %1494 = vrot.lane.b32.xlu0 %v1287, 96
      %v1495 = vpop.permute.xlu0 %1494
      %1496 = vrot.lane.b32.xlu0 %v1465, 96
      %v1497 = vpop.permute.xlu0 %1496
      %v1500 = vsel %vm705, %v1033, %v1194
      %v1502 = vsel %vm705, %v1034, %v1196
      %v1505 = vsel %vm705, %v1035, %v1198
      %v1507 = vsel %vm705, %v1036, %v1200
      %v1510 = vsel %vm705, %v1037, %v1202
      %v1512 = vsel %vm705, %v1038, %v1204
      %v1515 = vsel %vm705, %v1039, %v1206
      %v1517 = vsel %vm705, %v1040, %v1208
      %v1520 = vsel %vm705, %v1041, %v1210
      %v1522 = vsel %vm705, %v1042, %v1212
      %v1525 = vsel %vm705, %v1043, %v1214
      %v1527 = vsel %vm705, %v1044, %v1216
      %v1530 = vsel %vm705, %v1045, %v1218
      %v1532 = vsel %vm705, %v1046, %v1220
      %v1535 = vsel %vm705, %v1047, %v1222
      %v1537 = vsel %vm705, %v1048, %v1224
      %v1539 = vsel %vm746, %v1500, %v1411
      %v1541 = vsel %vm746, %v1502, %v1413
      %v1543 = vsel %vm746, %v1505, %v1415
      %v1545 = vsel %vm746, %v1507, %v1417
      %v1547 = vsel %vm746, %v1510, %v1419
      %v1549 = vsel %vm746, %v1512, %v1421
      %v1551 = vsel %vm746, %v1515, %v1423
      %v1553 = vsel %vm746, %v1517, %v1425
      %v1555 = vsel %vm746, %v1520, %v1427
      %v1557 = vsel %vm746, %v1522, %v1429
      %v1559 = vsel %vm746, %v1525, %v1431
      %v1561 = vsel %vm746, %v1527, %v1433
      %v1563 = vsel %vm746, %v1530, %v1435
      %v1565 = vsel %vm746, %v1532, %v1437
      %v1567 = vsel %vm746, %v1535, %v1439
      %v1569 = vsel %vm746, %v1537, %v1441
      %v1571 = vsel %vm779, %v1539, %v1467
      %v1573 = vsel %vm779, %v1541, %v1469
      %v1575 = vsel %vm779, %v1543, %v1471
      %v1577 = vsel %vm779, %v1545, %v1473
      %v1579 = vsel %vm779, %v1547, %v1475
      %v1581 = vsel %vm779, %v1549, %v1477
      %v1583 = vsel %vm779, %v1551, %v1479
      %v1585 = vsel %vm779, %v1553, %v1481
      %v1587 = vsel %vm779, %v1555, %v1483
      %v1589 = vsel %vm779, %v1557, %v1485
      %v1591 = vsel %vm779, %v1559, %v1487
      %v1593 = vsel %vm779, %v1561, %v1489
      %v1595 = vsel %vm779, %v1563, %v1491
      %v1597 = vsel %vm779, %v1565, %v1493
      %v1599 = vsel %vm779, %v1567, %v1495
      %v1601 = vsel %vm779, %v1569, %v1497
      %vm1602 = vsmask.f32 5376
      %v1603 = vshrl.u32 %v1571, 16
      %v1605 = vrot.slane %v1603, 2
      %v1606 = vshll.u32 %v1571, 16
      %v1608 = vrot.slane %v1606, 3
      %v1609 = vor.u32 %v1605, %v1608
      %v1610 = vshrl.u32 %v1573, 16
      %v1612 = vrot.slane %v1610, 2
      %v1613 = vshll.u32 %v1573, 16
      %v1615 = vrot.slane %v1613, 3
      %v1616 = vor.u32 %v1612, %v1615
      %v1617 = vsel %vm1602, %v1609, %v1616
      %v1618 = vshrl.u32 %v1575, 16
      %v1620 = vrot.slane %v1618, 2
      %v1621 = vshll.u32 %v1575, 16
      %v1623 = vrot.slane %v1621, 3
      %v1624 = vor.u32 %v1620, %v1623
      %v1625 = vshrl.u32 %v1577, 16
      %v1627 = vrot.slane %v1625, 2
      %v1628 = vshll.u32 %v1577, 16
      %v1630 = vrot.slane %v1628, 3
      %v1631 = vor.u32 %v1627, %v1630
      %v1632 = vsel %vm1602, %v1624, %v1631
      %v1633 = vshrl.u32 %v1579, 16
      %v1635 = vrot.slane %v1633, 2
      %v1636 = vshll.u32 %v1579, 16
      %v1638 = vrot.slane %v1636, 3
      %v1639 = vor.u32 %v1635, %v1638
      %v1640 = vshrl.u32 %v1581, 16
      %v1642 = vrot.slane %v1640, 2
      %v1643 = vshll.u32 %v1581, 16
      %v1645 = vrot.slane %v1643, 3
      %v1646 = vor.u32 %v1642, %v1645
      %v1647 = vsel %vm1602, %v1639, %v1646
      %v1648 = vshrl.u32 %v1583, 16
      %v1650 = vrot.slane %v1648, 2
      %v1651 = vshll.u32 %v1583, 16
      %v1653 = vrot.slane %v1651, 3
      %v1654 = vor.u32 %v1650, %v1653
      %v1655 = vshrl.u32 %v1585, 16
      %v1657 = vrot.slane %v1655, 2
      %v1658 = vshll.u32 %v1585, 16
      %v1660 = vrot.slane %v1658, 3
      %v1661 = vor.u32 %v1657, %v1660
      %v1662 = vsel %vm1602, %v1654, %v1661
      %v1663 = vshrl.u32 %v1587, 16
      %v1665 = vrot.slane %v1663, 2
      %v1666 = vshll.u32 %v1587, 16
      %v1668 = vrot.slane %v1666, 3
      %v1669 = vor.u32 %v1665, %v1668
      %v1670 = vshrl.u32 %v1589, 16
      %v1672 = vrot.slane %v1670, 2
      %v1673 = vshll.u32 %v1589, 16
      %v1675 = vrot.slane %v1673, 3
      %v1676 = vor.u32 %v1672, %v1675
      %v1677 = vsel %vm1602, %v1669, %v1676
      %v1678 = vshrl.u32 %v1591, 16
      %v1680 = vrot.slane %v1678, 2
      %v1681 = vshll.u32 %v1591, 16
      %v1683 = vrot.slane %v1681, 3
      %v1684 = vor.u32 %v1680, %v1683
      %v1685 = vshrl.u32 %v1593, 16
      %v1687 = vrot.slane %v1685, 2
      %v1688 = vshll.u32 %v1593, 16
      %v1690 = vrot.slane %v1688, 3
      %v1691 = vor.u32 %v1687, %v1690
      %v1692 = vsel %vm1602, %v1684, %v1691
      %v1693 = vshrl.u32 %v1595, 16
      %v1695 = vrot.slane %v1693, 2
      %v1696 = vshll.u32 %v1595, 16
      %v1698 = vrot.slane %v1696, 3
      %v1699 = vor.u32 %v1695, %v1698
      %v1700 = vshrl.u32 %v1597, 16
      %v1702 = vrot.slane %v1700, 2
      %v1703 = vshll.u32 %v1597, 16
      %v1705 = vrot.slane %v1703, 3
      %v1706 = vor.u32 %v1702, %v1705
      %v1707 = vsel %vm1602, %v1699, %v1706
      %v1708 = vshrl.u32 %v1599, 16
      %v1710 = vrot.slane %v1708, 2
      %v1711 = vshll.u32 %v1599, 16
      %v1713 = vrot.slane %v1711, 3
      %v1714 = vor.u32 %v1710, %v1713
      %v1715 = vshrl.u32 %v1601, 16
      %v1717 = vrot.slane %v1715, 2
      %v1718 = vshll.u32 %v1601, 16
      %v1720 = vrot.slane %v1718, 3
      %v1721 = vor.u32 %v1717, %v1720
      %v1722 = vsel %vm1602, %v1714, %v1721
      %v1723 = vunpack.c.l.b16 %v1617
      %v1724 = vunpack.c.h.b16 %v1617
      %v1725 = vunpack.c.l.b16 %v1632
      %v1726 = vunpack.c.h.b16 %v1632
      %v1727 = vunpack.c.l.b16 %v1647
      %v1728 = vunpack.c.h.b16 %v1647
      %v1729 = vunpack.c.l.b16 %v1662
      %v1730 = vunpack.c.h.b16 %v1662
      %v1731 = vunpack.c.l.b16 %v1677
      %v1732 = vunpack.c.h.b16 %v1677
      %v1733 = vunpack.c.l.b16 %v1692
      %v1734 = vunpack.c.h.b16 %v1692
      %v1735 = vunpack.c.l.b16 %v1707
      %v1736 = vunpack.c.h.b16 %v1707
      %v1737 = vunpack.c.l.b16 %v1722
      %v1738 = vunpack.c.h.b16 %v1722
      %v1739 = vpack.c.b16 %v1723, %v1723
      %v1740 = vpack.c.b16 %v1724, %v1724
      %v1741 = vpack.c.b16 %v1725, %v1725
      %v1742 = vpack.c.b16 %v1726, %v1726
      %v1743 = vpack.c.b16 %v1727, %v1727
      %v1744 = vpack.c.b16 %v1728, %v1728
      %v1745 = vpack.c.b16 %v1729, %v1729
      %v1746 = vpack.c.b16 %v1730, %v1730
      %v1747 = vpack.c.b16 %v1731, %v1731
      %v1748 = vpack.c.b16 %v1732, %v1732
      %v1749 = vpack.c.b16 %v1733, %v1733
      %v1750 = vpack.c.b16 %v1734, %v1734
      %v1751 = vpack.c.b16 %v1735, %v1735
      %v1752 = vpack.c.b16 %v1736, %v1736
      %v1753 = vpack.c.b16 %v1737, %v1737
      %v1754 = vpack.c.b16 %v1738, %v1738
      %1771 = vst [vmem:[#allocation2 + $0x4] sm:$0xf] %v1739
      %1772 = vst [vmem:[#allocation2 + $0x20] sm:$0xf] %v1740
      %1773 = vst [vmem:[#allocation2 + $0x3c] sm:$0xf] %v1741
      %1774 = vst [vmem:[#allocation2 + $0x58] sm:$0xf] %v1742
      %1775 = vst [vmem:[#allocation2 + $0x74] sm:$0xf] %v1743
      %1776 = vst [vmem:[#allocation2 + $0x90] sm:$0xf] %v1744
      %1777 = vst [vmem:[#allocation2 + $0xac] sm:$0xf] %v1745
      %1778 = vst [vmem:[#allocation2 + $0xc8] sm:$0xf] %v1746
      %1779 = vst [vmem:[#allocation2 + $0xe4] sm:$0xf] %v1747
      %1780 = vst [vmem:[#allocation2 + $0x100] sm:$0xf] %v1748
      %1781 = vst [vmem:[#allocation2 + $0x11c] sm:$0xf] %v1749
      %1782 = vst [vmem:[#allocation2 + $0x138] sm:$0xf] %v1750
      %1783 = vst [vmem:[#allocation2 + $0x154] sm:$0xf] %v1751
      %1784 = vst [vmem:[#allocation2 + $0x170] sm:$0xf] %v1752
      %1785 = vst [vmem:[#allocation2 + $0x18c] sm:$0xf] %v1753
      %1786 = vst [vmem:[#allocation2 + $0x1a8] sm:$0xf] %v1754
      %v1787 = vld [vmem:[%s952] sm:$0x8]
      %v1788 = vld [vmem:[%s952 + $0x4] sm:$0xf]
      %v1789 = vld [vmem:[%s952 + $0x8] sm:$0x7]
      %v1790 = vld [vmem:[%s952 + $0x10] sm:$0x8]
      %v1791 = vld [vmem:[%s952 + $0x14] sm:$0xf]
      %v1792 = vld [vmem:[%s952 + $0x18] sm:$0x7]
      %v1793 = vld [vmem:[%s952 + $0x20] sm:$0x8]
      %v1794 = vld [vmem:[%s952 + $0x24] sm:$0xf]
      %v1795 = vld [vmem:[%s952 + $0x28] sm:$0x7]
      %v1796 = vld [vmem:[%s952 + $0x30] sm:$0x8]
      %v1797 = vld [vmem:[%s952 + $0x34] sm:$0xf]
      %v1798 = vld [vmem:[%s952 + $0x38] sm:$0x7]
      %v1799 = vld [vmem:[%s952 + $0x40] sm:$0x8]
      %v1800 = vld [vmem:[%s952 + $0x44] sm:$0xf]
      %v1801 = vld [vmem:[%s952 + $0x48] sm:$0x7]
      %v1802 = vld [vmem:[%s952 + $0x50] sm:$0x8]
      %v1803 = vld [vmem:[%s952 + $0x54] sm:$0xf]
      %v1804 = vld [vmem:[%s952 + $0x58] sm:$0x7]
      %v1805 = vld [vmem:[%s952 + $0x60] sm:$0x8]
      %v1806 = vld [vmem:[%s952 + $0x64] sm:$0xf]
      %v1807 = vld [vmem:[%s952 + $0x68] sm:$0x7]
      %v1808 = vld [vmem:[%s952 + $0x70] sm:$0x8]
      %v1809 = vld [vmem:[%s952 + $0x74] sm:$0xf]
      %v1810 = vld [vmem:[%s952 + $0x78] sm:$0x7]
      %s1811 = sadd.s32 %s214, 3
      %s1812 = smul.u32 %s1811, 4
      %s1813 = smul.addr %s1812, 4
      %s1814 = scalar_lea.vmem %s195, %s1813
      %v1815 = vld [vmem:[%s1814] sm:$0xe]
      %v1816 = vld [vmem:[%s1814 + $0x4] sm:$0xf]
      %v1817 = vld [vmem:[%s1814 + $0x8] sm:$0x3]
      %v1818 = vld [vmem:[%s1814 + $0x10] sm:$0xe]
      %v1819 = vld [vmem:[%s1814 + $0x14] sm:$0xf]
      %v1820 = vld [vmem:[%s1814 + $0x18] sm:$0x3]
      %v1821 = vld [vmem:[%s1814 + $0x20] sm:$0xe]
      %v1822 = vld [vmem:[%s1814 + $0x24] sm:$0xf]
      %v1823 = vld [vmem:[%s1814 + $0x28] sm:$0x3]
      %v1824 = vld [vmem:[%s1814 + $0x30] sm:$0xe]
      %v1825 = vld [vmem:[%s1814 + $0x34] sm:$0xf]
      %v1826 = vld [vmem:[%s1814 + $0x38] sm:$0x3]
      %v1827 = vld [vmem:[%s1814 + $0x40] sm:$0xe]
      %v1828 = vld [vmem:[%s1814 + $0x44] sm:$0xf]
      %v1829 = vld [vmem:[%s1814 + $0x48] sm:$0x3]
      %v1830 = vld [vmem:[%s1814 + $0x50] sm:$0xe]
      %v1831 = vld [vmem:[%s1814 + $0x54] sm:$0xf]
      %v1832 = vld [vmem:[%s1814 + $0x58] sm:$0x3]
      %v1833 = vld [vmem:[%s1814 + $0x60] sm:$0xe]
      %v1834 = vld [vmem:[%s1814 + $0x64] sm:$0xf]
      %v1835 = vld [vmem:[%s1814 + $0x68] sm:$0x3]
      %v1836 = vld [vmem:[%s1814 + $0x70] sm:$0xe]
      %v1837 = vld [vmem:[%s1814 + $0x74] sm:$0xf]
      %v1838 = vld [vmem:[%s1814 + $0x78] sm:$0x3]
      %v1839 = vld [vmem:[%s1814] sm:$0xc]
      %v1840 = vld [vmem:[%s1814 + $0x8] sm:$0x7]
      %v1841 = vld [vmem:[%s1814 + $0x10] sm:$0xc]
      %v1842 = vld [vmem:[%s1814 + $0x18] sm:$0x7]
      %v1843 = vld [vmem:[%s1814 + $0x20] sm:$0xc]
      %v1844 = vld [vmem:[%s1814 + $0x28] sm:$0x7]
      %v1845 = vld [vmem:[%s1814 + $0x30] sm:$0xc]
      %v1846 = vld [vmem:[%s1814 + $0x38] sm:$0x7]
      %v1847 = vld [vmem:[%s1814 + $0x40] sm:$0xc]
      %v1848 = vld [vmem:[%s1814 + $0x48] sm:$0x7]
      %v1849 = vld [vmem:[%s1814 + $0x50] sm:$0xc]
      %v1850 = vld [vmem:[%s1814 + $0x58] sm:$0x7]
      %v1851 = vld [vmem:[%s1814 + $0x60] sm:$0xc]
      %v1852 = vld [vmem:[%s1814 + $0x68] sm:$0x7]
      %v1853 = vld [vmem:[%s1814 + $0x70] sm:$0xc]
      %v1854 = vld [vmem:[%s1814 + $0x78] sm:$0x7]
      %v1855 = vld [vmem:[%s1814] sm:$0x8]
      %v1856 = vld [vmem:[%s1814 + $0x8] sm:$0xf]
      %v1857 = vld [vmem:[%s1814 + $0x10] sm:$0x8]
      %v1858 = vld [vmem:[%s1814 + $0x18] sm:$0xf]
      %v1859 = vld [vmem:[%s1814 + $0x20] sm:$0x8]
      %v1860 = vld [vmem:[%s1814 + $0x28] sm:$0xf]
      %v1861 = vld [vmem:[%s1814 + $0x30] sm:$0x8]
      %v1862 = vld [vmem:[%s1814 + $0x38] sm:$0xf]
      %v1863 = vld [vmem:[%s1814 + $0x40] sm:$0x8]
      %v1864 = vld [vmem:[%s1814 + $0x48] sm:$0xf]
      %v1865 = vld [vmem:[%s1814 + $0x50] sm:$0x8]
      %v1866 = vld [vmem:[%s1814 + $0x58] sm:$0xf]
      %v1867 = vld [vmem:[%s1814 + $0x60] sm:$0x8]
      %v1868 = vld [vmem:[%s1814 + $0x68] sm:$0xf]
      %v1869 = vld [vmem:[%s1814 + $0x70] sm:$0x8]
      %v1870 = vld [vmem:[%s1814 + $0x78] sm:$0xf]
      %v1895 = vunpack.c.l.b16 %v1787
      %v1896 = vunpack.c.l.b16 %v1788
      %v1897 = vunpack.c.l.b16 %v1789
      %v1898 = vunpack.c.l.b16 %v1790
      %v1899 = vunpack.c.l.b16 %v1791
      %v1900 = vunpack.c.l.b16 %v1792
      %v1901 = vunpack.c.l.b16 %v1793
      %v1902 = vunpack.c.l.b16 %v1794
      %v1903 = vunpack.c.l.b16 %v1795
      %v1904 = vunpack.c.l.b16 %v1796
      %v1905 = vunpack.c.l.b16 %v1797
      %v1906 = vunpack.c.l.b16 %v1798
      %v1907 = vunpack.c.l.b16 %v1799
      %v1908 = vunpack.c.l.b16 %v1800
      %v1909 = vunpack.c.l.b16 %v1801
      %v1910 = vunpack.c.l.b16 %v1802
      %v1911 = vunpack.c.l.b16 %v1803
      %v1912 = vunpack.c.l.b16 %v1804
      %v1913 = vunpack.c.l.b16 %v1805
      %v1914 = vunpack.c.l.b16 %v1806
      %v1915 = vunpack.c.l.b16 %v1807
      %v1916 = vunpack.c.l.b16 %v1808
      %v1917 = vunpack.c.l.b16 %v1809
      %v1918 = vunpack.c.l.b16 %v1810
      %v1919 = vpack.c.b16 %v1896, %v1895
      %v1920 = vpack.c.b16 %v1897, %v1897
      %v1921 = vpack.c.b16 %v1899, %v1898
      %v1922 = vpack.c.b16 %v1900, %v1900
      %v1923 = vpack.c.b16 %v1902, %v1901
      %v1924 = vpack.c.b16 %v1903, %v1903
      %v1925 = vpack.c.b16 %v1905, %v1904
      %v1926 = vpack.c.b16 %v1906, %v1906
      %v1927 = vpack.c.b16 %v1908, %v1907
      %v1928 = vpack.c.b16 %v1909, %v1909
      %v1929 = vpack.c.b16 %v1911, %v1910
      %v1930 = vpack.c.b16 %v1912, %v1912
      %v1931 = vpack.c.b16 %v1914, %v1913
      %v1932 = vpack.c.b16 %v1915, %v1915
      %v1933 = vpack.c.b16 %v1917, %v1916
      %v1934 = vpack.c.b16 %v1918, %v1918
      %v1959 = vunpack.c.l.b16 %v1815
      %v1960 = vunpack.c.l.b16 %v1816
      %v1961 = vunpack.c.l.b16 %v1817
      %v1962 = vunpack.c.l.b16 %v1818
      %v1963 = vunpack.c.l.b16 %v1819
      %v1964 = vunpack.c.l.b16 %v1820
      %v1965 = vunpack.c.l.b16 %v1821
      %v1966 = vunpack.c.l.b16 %v1822
      %v1967 = vunpack.c.l.b16 %v1823
      %v1968 = vunpack.c.l.b16 %v1824
      %v1969 = vunpack.c.l.b16 %v1825
      %v1970 = vunpack.c.l.b16 %v1826
      %v1971 = vunpack.c.l.b16 %v1827
      %v1972 = vunpack.c.l.b16 %v1828
      %v1973 = vunpack.c.l.b16 %v1829
      %v1974 = vunpack.c.l.b16 %v1830
      %v1975 = vunpack.c.l.b16 %v1831
      %v1976 = vunpack.c.l.b16 %v1832
      %v1977 = vunpack.c.l.b16 %v1833
      %v1978 = vunpack.c.l.b16 %v1834
      %v1979 = vunpack.c.l.b16 %v1835
      %v1980 = vunpack.c.l.b16 %v1836
      %v1981 = vunpack.c.l.b16 %v1837
      %v1982 = vunpack.c.l.b16 %v1838
      %v1983 = vpack.c.b16 %v1960, %v1959
      %v1984 = vpack.c.b16 %v1961, %v1961
      %v1985 = vpack.c.b16 %v1963, %v1962
      %v1986 = vpack.c.b16 %v1964, %v1964
      %v1987 = vpack.c.b16 %v1966, %v1965
      %v1988 = vpack.c.b16 %v1967, %v1967
      %v1989 = vpack.c.b16 %v1969, %v1968
      %v1990 = vpack.c.b16 %v1970, %v1970
      %v1991 = vpack.c.b16 %v1972, %v1971
      %v1992 = vpack.c.b16 %v1973, %v1973
      %v1993 = vpack.c.b16 %v1975, %v1974
      %v1994 = vpack.c.b16 %v1976, %v1976
      %v1995 = vpack.c.b16 %v1978, %v1977
      %v1996 = vpack.c.b16 %v1979, %v1979
      %v1997 = vpack.c.b16 %v1981, %v1980
      %v1998 = vpack.c.b16 %v1982, %v1982
      %vm1999 = vsmask.f32 1280
      %v2001 = vshrl.u32 %v1983, 16
      %v2003 = vrot.slane %v2001, 6
      %v2004 = vshll.u32 %v1983, 16
      %v2006 = vrot.slane %v2004, 7
      %v2007 = vor.u32 %v2003, %v2006
      %v2009 = vshrl.u32 %v1984, 16
      %v2011 = vrot.slane %v2009, 6
      %v2012 = vshll.u32 %v1984, 16
      %v2014 = vrot.slane %v2012, 7
      %v2015 = vor.u32 %v2011, %v2014
      %v2016 = vsel %vm1999, %v2007, %v2015
      %v2018 = vshrl.u32 %v1985, 16
      %v2020 = vrot.slane %v2018, 6
      %v2021 = vshll.u32 %v1985, 16
      %v2023 = vrot.slane %v2021, 7
      %v2024 = vor.u32 %v2020, %v2023
      %v2026 = vshrl.u32 %v1986, 16
      %v2028 = vrot.slane %v2026, 6
      %v2029 = vshll.u32 %v1986, 16
      %v2031 = vrot.slane %v2029, 7
      %v2032 = vor.u32 %v2028, %v2031
      %v2033 = vsel %vm1999, %v2024, %v2032
      %v2035 = vshrl.u32 %v1987, 16
      %v2037 = vrot.slane %v2035, 6
      %v2038 = vshll.u32 %v1987, 16
      %v2040 = vrot.slane %v2038, 7
      %v2041 = vor.u32 %v2037, %v2040
      %v2043 = vshrl.u32 %v1988, 16
      %v2045 = vrot.slane %v2043, 6
      %v2046 = vshll.u32 %v1988, 16
      %v2048 = vrot.slane %v2046, 7
      %v2049 = vor.u32 %v2045, %v2048
      %v2050 = vsel %vm1999, %v2041, %v2049
      %v2052 = vshrl.u32 %v1989, 16
      %v2054 = vrot.slane %v2052, 6
      %v2055 = vshll.u32 %v1989, 16
      %v2057 = vrot.slane %v2055, 7
      %v2058 = vor.u32 %v2054, %v2057
      %v2060 = vshrl.u32 %v1990, 16
      %v2062 = vrot.slane %v2060, 6
      %v2063 = vshll.u32 %v1990, 16
      %v2065 = vrot.slane %v2063, 7
      %v2066 = vor.u32 %v2062, %v2065
      %v2067 = vsel %vm1999, %v2058, %v2066
      %v2069 = vshrl.u32 %v1991, 16
      %v2071 = vrot.slane %v2069, 6
      %v2072 = vshll.u32 %v1991, 16
      %v2074 = vrot.slane %v2072, 7
      %v2075 = vor.u32 %v2071, %v2074
      %v2077 = vshrl.u32 %v1992, 16
      %v2079 = vrot.slane %v2077, 6
      %v2080 = vshll.u32 %v1992, 16
      %v2082 = vrot.slane %v2080, 7
      %v2083 = vor.u32 %v2079, %v2082
      %v2084 = vsel %vm1999, %v2075, %v2083
      %v2086 = vshrl.u32 %v1993, 16
      %v2088 = vrot.slane %v2086, 6
      %v2089 = vshll.u32 %v1993, 16
      %v2091 = vrot.slane %v2089, 7
      %v2092 = vor.u32 %v2088, %v2091
      %v2094 = vshrl.u32 %v1994, 16
      %v2096 = vrot.slane %v2094, 6
      %v2097 = vshll.u32 %v1994, 16
      %v2099 = vrot.slane %v2097, 7
      %v2100 = vor.u32 %v2096, %v2099
      %v2101 = vsel %vm1999, %v2092, %v2100
      %v2103 = vshrl.u32 %v1995, 16
      %v2105 = vrot.slane %v2103, 6
      %v2106 = vshll.u32 %v1995, 16
      %v2108 = vrot.slane %v2106, 7
      %v2109 = vor.u32 %v2105, %v2108
      %v2111 = vshrl.u32 %v1996, 16
      %v2113 = vrot.slane %v2111, 6
      %v2114 = vshll.u32 %v1996, 16
      %v2116 = vrot.slane %v2114, 7
      %v2117 = vor.u32 %v2113, %v2116
      %v2118 = vsel %vm1999, %v2109, %v2117
      %v2120 = vshrl.u32 %v1997, 16
      %v2122 = vrot.slane %v2120, 6
      %v2123 = vshll.u32 %v1997, 16
      %v2125 = vrot.slane %v2123, 7
      %v2126 = vor.u32 %v2122, %v2125
      %v2128 = vshrl.u32 %v1998, 16
      %v2130 = vrot.slane %v2128, 6
      %v2131 = vshll.u32 %v1998, 16
      %v2133 = vrot.slane %v2131, 7
      %v2134 = vor.u32 %v2130, %v2133
      %v2135 = vsel %vm1999, %v2126, %v2134
      %2136 = vrot.lane.b32.xlu0 %v2007, 32
      %v2137 = vpop.permute.xlu0 %2136
      %2138 = vrot.lane.b32.xlu0 %v2016, 32
      %v2139 = vpop.permute.xlu0 %2138
      %2140 = vrot.lane.b32.xlu0 %v2024, 32
      %v2141 = vpop.permute.xlu0 %2140
      %2142 = vrot.lane.b32.xlu0 %v2033, 32
      %v2143 = vpop.permute.xlu0 %2142
      %2144 = vrot.lane.b32.xlu0 %v2041, 32
      %v2145 = vpop.permute.xlu0 %2144
      %2146 = vrot.lane.b32.xlu0 %v2050, 32
      %v2147 = vpop.permute.xlu0 %2146
      %2148 = vrot.lane.b32.xlu0 %v2058, 32
      %v2149 = vpop.permute.xlu0 %2148
      %2150 = vrot.lane.b32.xlu0 %v2067, 32
      %v2151 = vpop.permute.xlu0 %2150
      %2152 = vrot.lane.b32.xlu0 %v2075, 32
      %v2153 = vpop.permute.xlu0 %2152
      %2154 = vrot.lane.b32.xlu0 %v2084, 32
      %v2155 = vpop.permute.xlu0 %2154
      %2156 = vrot.lane.b32.xlu0 %v2092, 32
      %v2157 = vpop.permute.xlu0 %2156
      %2158 = vrot.lane.b32.xlu0 %v2101, 32
      %v2159 = vpop.permute.xlu0 %2158
      %2160 = vrot.lane.b32.xlu0 %v2109, 32
      %v2161 = vpop.permute.xlu0 %2160
      %2162 = vrot.lane.b32.xlu0 %v2118, 32
      %v2163 = vpop.permute.xlu0 %2162
      %2164 = vrot.lane.b32.xlu0 %v2126, 32
      %v2165 = vpop.permute.xlu0 %2164
      %2166 = vrot.lane.b32.xlu0 %v2135, 32
      %v2167 = vpop.permute.xlu0 %2166
      %v2184 = vunpack.c.l.b16 %v1839
      %v2185 = vunpack.c.l.b16 %v1840
      %v2186 = vunpack.c.l.b16 %v1841
      %v2187 = vunpack.c.l.b16 %v1842
      %v2188 = vunpack.c.l.b16 %v1843
      %v2189 = vunpack.c.l.b16 %v1844
      %v2190 = vunpack.c.l.b16 %v1845
      %v2191 = vunpack.c.l.b16 %v1846
      %v2192 = vunpack.c.l.b16 %v1847
      %v2193 = vunpack.c.l.b16 %v1848
      %v2194 = vunpack.c.l.b16 %v1849
      %v2195 = vunpack.c.l.b16 %v1850
      %v2196 = vunpack.c.l.b16 %v1851
      %v2197 = vunpack.c.l.b16 %v1852
      %v2198 = vunpack.c.l.b16 %v1853
      %v2199 = vunpack.c.l.b16 %v1854
      %v2200 = vpack.c.b16 %v1960, %v2184
      %v2201 = vpack.c.b16 %v2185, %v2185
      %v2202 = vpack.c.b16 %v1963, %v2186
      %v2203 = vpack.c.b16 %v2187, %v2187
      %v2204 = vpack.c.b16 %v1966, %v2188
      %v2205 = vpack.c.b16 %v2189, %v2189
      %v2206 = vpack.c.b16 %v1969, %v2190
      %v2207 = vpack.c.b16 %v2191, %v2191
      %v2208 = vpack.c.b16 %v1972, %v2192
      %v2209 = vpack.c.b16 %v2193, %v2193
      %v2210 = vpack.c.b16 %v1975, %v2194
      %v2211 = vpack.c.b16 %v2195, %v2195
      %v2212 = vpack.c.b16 %v1978, %v2196
      %v2213 = vpack.c.b16 %v2197, %v2197
      %v2214 = vpack.c.b16 %v1981, %v2198
      %v2215 = vpack.c.b16 %v2199, %v2199
      %v2217 = vshrl.u32 %v2200, 16
      %v2219 = vrot.slane %v2217, 7
      %v2220 = vshll.u32 %v2200, 16
      %v2222 = vor.u32 %v2219, %v2220
      %v2224 = vshrl.u32 %v2201, 16
      %v2226 = vrot.slane %v2224, 7
      %v2227 = vshll.u32 %v2201, 16
      %v2229 = vor.u32 %v2226, %v2227
      %v2230 = vsel %vm1289, %v2219, %v2229
      %v2232 = vshrl.u32 %v2202, 16
      %v2234 = vrot.slane %v2232, 7
      %v2235 = vshll.u32 %v2202, 16
      %v2237 = vor.u32 %v2234, %v2235
      %v2239 = vshrl.u32 %v2203, 16
      %v2241 = vrot.slane %v2239, 7
      %v2242 = vshll.u32 %v2203, 16
      %v2244 = vor.u32 %v2241, %v2242
      %v2245 = vsel %vm1289, %v2234, %v2244
      %v2247 = vshrl.u32 %v2204, 16
      %v2249 = vrot.slane %v2247, 7
      %v2250 = vshll.u32 %v2204, 16
      %v2252 = vor.u32 %v2249, %v2250
      %v2254 = vshrl.u32 %v2205, 16
      %v2256 = vrot.slane %v2254, 7
      %v2257 = vshll.u32 %v2205, 16
      %v2259 = vor.u32 %v2256, %v2257
      %v2260 = vsel %vm1289, %v2249, %v2259
      %v2262 = vshrl.u32 %v2206, 16
      %v2264 = vrot.slane %v2262, 7
      %v2265 = vshll.u32 %v2206, 16
      %v2267 = vor.u32 %v2264, %v2265
      %v2269 = vshrl.u32 %v2207, 16
      %v2271 = vrot.slane %v2269, 7
      %v2272 = vshll.u32 %v2207, 16
      %v2274 = vor.u32 %v2271, %v2272
      %v2275 = vsel %vm1289, %v2264, %v2274
      %v2277 = vshrl.u32 %v2208, 16
      %v2279 = vrot.slane %v2277, 7
      %v2280 = vshll.u32 %v2208, 16
      %v2282 = vor.u32 %v2279, %v2280
      %v2284 = vshrl.u32 %v2209, 16
      %v2286 = vrot.slane %v2284, 7
      %v2287 = vshll.u32 %v2209, 16
      %v2289 = vor.u32 %v2286, %v2287
      %v2290 = vsel %vm1289, %v2279, %v2289
      %v2292 = vshrl.u32 %v2210, 16
      %v2294 = vrot.slane %v2292, 7
      %v2295 = vshll.u32 %v2210, 16
      %v2297 = vor.u32 %v2294, %v2295
      %v2299 = vshrl.u32 %v2211, 16
      %v2301 = vrot.slane %v2299, 7
      %v2302 = vshll.u32 %v2211, 16
      %v2304 = vor.u32 %v2301, %v2302
      %v2305 = vsel %vm1289, %v2294, %v2304
      %v2307 = vshrl.u32 %v2212, 16
      %v2309 = vrot.slane %v2307, 7
      %v2310 = vshll.u32 %v2212, 16
      %v2312 = vor.u32 %v2309, %v2310
      %v2314 = vshrl.u32 %v2213, 16
      %v2316 = vrot.slane %v2314, 7
      %v2317 = vshll.u32 %v2213, 16
      %v2319 = vor.u32 %v2316, %v2317
      %v2320 = vsel %vm1289, %v2309, %v2319
      %v2322 = vshrl.u32 %v2214, 16
      %v2324 = vrot.slane %v2322, 7
      %v2325 = vshll.u32 %v2214, 16
      %v2327 = vor.u32 %v2324, %v2325
      %v2329 = vshrl.u32 %v2215, 16
      %v2331 = vrot.slane %v2329, 7
      %v2332 = vshll.u32 %v2215, 16
      %v2334 = vor.u32 %v2331, %v2332
      %v2335 = vsel %vm1289, %v2324, %v2334
      %2336 = vrot.lane.b32.xlu0 %v2222, 64
      %v2337 = vpop.permute.xlu0 %2336
      %2338 = vrot.lane.b32.xlu0 %v2230, 64
      %v2339 = vpop.permute.xlu0 %2338
      %2340 = vrot.lane.b32.xlu0 %v2237, 64
      %v2341 = vpop.permute.xlu0 %2340
      %2342 = vrot.lane.b32.xlu0 %v2245, 64
      %v2343 = vpop.permute.xlu0 %2342
      %2344 = vrot.lane.b32.xlu0 %v2252, 64
      %v2345 = vpop.permute.xlu0 %2344
      %2346 = vrot.lane.b32.xlu0 %v2260, 64
      %v2347 = vpop.permute.xlu0 %2346
      %2348 = vrot.lane.b32.xlu0 %v2267, 64
      %v2349 = vpop.permute.xlu0 %2348
      %2350 = vrot.lane.b32.xlu0 %v2275, 64
      %v2351 = vpop.permute.xlu0 %2350
      %2352 = vrot.lane.b32.xlu0 %v2282, 64
      %v2353 = vpop.permute.xlu0 %2352
      %2354 = vrot.lane.b32.xlu0 %v2290, 64
      %v2355 = vpop.permute.xlu0 %2354
      %2356 = vrot.lane.b32.xlu0 %v2297, 64
      %v2357 = vpop.permute.xlu0 %2356
      %2358 = vrot.lane.b32.xlu0 %v2305, 64
      %v2359 = vpop.permute.xlu0 %2358
      %2360 = vrot.lane.b32.xlu0 %v2312, 64
      %v2361 = vpop.permute.xlu0 %2360
      %2362 = vrot.lane.b32.xlu0 %v2320, 64
      %v2363 = vpop.permute.xlu0 %2362
      %2364 = vrot.lane.b32.xlu0 %v2327, 64
      %v2365 = vpop.permute.xlu0 %2364
      %2366 = vrot.lane.b32.xlu0 %v2335, 64
      %v2367 = vpop.permute.xlu0 %2366
      %v2384 = vunpack.c.l.b16 %v1855
      %v2385 = vunpack.c.l.b16 %v1856
      %v2386 = vunpack.c.l.b16 %v1857
      %v2387 = vunpack.c.l.b16 %v1858
      %v2388 = vunpack.c.l.b16 %v1859
      %v2389 = vunpack.c.l.b16 %v1860
      %v2390 = vunpack.c.l.b16 %v1861
      %v2391 = vunpack.c.l.b16 %v1862
      %v2392 = vunpack.c.l.b16 %v1863
      %v2393 = vunpack.c.l.b16 %v1864
      %v2394 = vunpack.c.l.b16 %v1865
      %v2395 = vunpack.c.l.b16 %v1866
      %v2396 = vunpack.c.l.b16 %v1867
      %v2397 = vunpack.c.l.b16 %v1868
      %v2398 = vunpack.c.l.b16 %v1869
      %v2399 = vunpack.c.l.b16 %v1870
      %v2400 = vpack.c.b16 %v1960, %v2384
      %v2401 = vpack.c.b16 %v2385, %v2385
      %v2402 = vpack.c.b16 %v1963, %v2386
      %v2403 = vpack.c.b16 %v2387, %v2387
      %v2404 = vpack.c.b16 %v1966, %v2388
      %v2405 = vpack.c.b16 %v2389, %v2389
      %v2406 = vpack.c.b16 %v1969, %v2390
      %v2407 = vpack.c.b16 %v2391, %v2391
      %v2408 = vpack.c.b16 %v1972, %v2392
      %v2409 = vpack.c.b16 %v2393, %v2393
      %v2410 = vpack.c.b16 %v1975, %v2394
      %v2411 = vpack.c.b16 %v2395, %v2395
      %v2412 = vpack.c.b16 %v1978, %v2396
      %v2413 = vpack.c.b16 %v2397, %v2397
      %v2414 = vpack.c.b16 %v1981, %v2398
      %v2415 = vpack.c.b16 %v2399, %v2399
      %v2417 = vshrl.u32 %v2400, 16
      %v2419 = vshll.u32 %v2400, 16
      %v2421 = vrot.slane %v2419, 1
      %v2422 = vor.u32 %v2417, %v2421
      %v2424 = vshll.u32 %v2401, 16
      %v2426 = vrot.slane %v2424, 1
      %v2427 = vsel %vm375, %v2422, %v2426
      %v2428 = vshrl.u32 %v2401, 16
      %v2430 = vor.u32 %v2428, %v2426
      %v2432 = vshrl.u32 %v2402, 16
      %v2434 = vshll.u32 %v2402, 16
      %v2436 = vrot.slane %v2434, 1
      %v2437 = vor.u32 %v2432, %v2436
      %v2439 = vshll.u32 %v2403, 16
      %v2441 = vrot.slane %v2439, 1
      %v2442 = vsel %vm375, %v2437, %v2441
      %v2443 = vshrl.u32 %v2403, 16
      %v2445 = vor.u32 %v2443, %v2441
      %v2447 = vshrl.u32 %v2404, 16
      %v2449 = vshll.u32 %v2404, 16
      %v2451 = vrot.slane %v2449, 1
      %v2452 = vor.u32 %v2447, %v2451
      %v2454 = vshll.u32 %v2405, 16
      %v2456 = vrot.slane %v2454, 1
      %v2457 = vsel %vm375, %v2452, %v2456
      %v2458 = vshrl.u32 %v2405, 16
      %v2460 = vor.u32 %v2458, %v2456
      %v2462 = vshrl.u32 %v2406, 16
      %v2464 = vshll.u32 %v2406, 16
      %v2466 = vrot.slane %v2464, 1
      %v2467 = vor.u32 %v2462, %v2466
      %v2469 = vshll.u32 %v2407, 16
      %v2471 = vrot.slane %v2469, 1
      %v2472 = vsel %vm375, %v2467, %v2471
      %v2473 = vshrl.u32 %v2407, 16
      %v2475 = vor.u32 %v2473, %v2471
      %v2477 = vshrl.u32 %v2408, 16
      %v2479 = vshll.u32 %v2408, 16
      %v2481 = vrot.slane %v2479, 1
      %v2482 = vor.u32 %v2477, %v2481
      %v2484 = vshll.u32 %v2409, 16
      %v2486 = vrot.slane %v2484, 1
      %v2487 = vsel %vm375, %v2482, %v2486
      %v2488 = vshrl.u32 %v2409, 16
      %v2490 = vor.u32 %v2488, %v2486
      %v2492 = vshrl.u32 %v2410, 16
      %v2494 = vshll.u32 %v2410, 16
      %v2496 = vrot.slane %v2494, 1
      %v2497 = vor.u32 %v2492, %v2496
      %v2499 = vshll.u32 %v2411, 16
      %v2501 = vrot.slane %v2499, 1
      %v2502 = vsel %vm375, %v2497, %v2501
      %v2503 = vshrl.u32 %v2411, 16
      %v2505 = vor.u32 %v2503, %v2501
      %v2507 = vshrl.u32 %v2412, 16
      %v2509 = vshll.u32 %v2412, 16
      %v2511 = vrot.slane %v2509, 1
      %v2512 = vor.u32 %v2507, %v2511
      %v2514 = vshll.u32 %v2413, 16
      %v2516 = vrot.slane %v2514, 1
      %v2517 = vsel %vm375, %v2512, %v2516
      %v2518 = vshrl.u32 %v2413, 16
      %v2520 = vor.u32 %v2518, %v2516
      %v2522 = vshrl.u32 %v2414, 16
      %v2524 = vshll.u32 %v2414, 16
      %v2526 = vrot.slane %v2524, 1
      %v2527 = vor.u32 %v2522, %v2526
      %v2529 = vshll.u32 %v2415, 16
      %v2531 = vrot.slane %v2529, 1
      %v2532 = vsel %vm375, %v2527, %v2531
      %v2533 = vshrl.u32 %v2415, 16
      %v2535 = vor.u32 %v2533, %v2531
      %2536 = vrot.lane.b32.xlu0 %v2427, 96
      %v2537 = vpop.permute.xlu0 %2536
      %2538 = vrot.lane.b32.xlu0 %v2430, 96
      %v2539 = vpop.permute.xlu0 %2538
      %2540 = vrot.lane.b32.xlu0 %v2442, 96
      %v2541 = vpop.permute.xlu0 %2540
      %2542 = vrot.lane.b32.xlu0 %v2445, 96
      %v2543 = vpop.permute.xlu0 %2542
      %2544 = vrot.lane.b32.xlu0 %v2457, 96
      %v2545 = vpop.permute.xlu0 %2544
      %2546 = vrot.lane.b32.xlu0 %v2460, 96
      %v2547 = vpop.permute.xlu0 %2546
      %2548 = vrot.lane.b32.xlu0 %v2472, 96
      %v2549 = vpop.permute.xlu0 %2548
      %2550 = vrot.lane.b32.xlu0 %v2475, 96
      %v2551 = vpop.permute.xlu0 %2550
      %2552 = vrot.lane.b32.xlu0 %v2487, 96
      %v2553 = vpop.permute.xlu0 %2552
      %2554 = vrot.lane.b32.xlu0 %v2490, 96
      %v2555 = vpop.permute.xlu0 %2554
      %2556 = vrot.lane.b32.xlu0 %v2502, 96
      %v2557 = vpop.permute.xlu0 %2556
      %2558 = vrot.lane.b32.xlu0 %v2505, 96
      %v2559 = vpop.permute.xlu0 %2558
      %2560 = vrot.lane.b32.xlu0 %v2517, 96
      %v2561 = vpop.permute.xlu0 %2560
      %2562 = vrot.lane.b32.xlu0 %v2520, 96
      %v2563 = vpop.permute.xlu0 %2562
      %2564 = vrot.lane.b32.xlu0 %v2532, 96
      %v2565 = vpop.permute.xlu0 %2564
      %2566 = vrot.lane.b32.xlu0 %v2535, 96
      %v2567 = vpop.permute.xlu0 %2566
      %v2570 = vsel %vm705, %v1919, %v2137
      %v2573 = vsel %vm705, %v1920, %v2139
      %v2576 = vsel %vm705, %v1921, %v2141
      %v2579 = vsel %vm705, %v1922, %v2143
      %v2582 = vsel %vm705, %v1923, %v2145
      %v2585 = vsel %vm705, %v1924, %v2147
      %v2588 = vsel %vm705, %v1925, %v2149
      %v2591 = vsel %vm705, %v1926, %v2151
      %v2594 = vsel %vm705, %v1927, %v2153
      %v2597 = vsel %vm705, %v1928, %v2155
      %v2600 = vsel %vm705, %v1929, %v2157
      %v2603 = vsel %vm705, %v1930, %v2159
      %v2606 = vsel %vm705, %v1931, %v2161
      %v2609 = vsel %vm705, %v1932, %v2163
      %v2612 = vsel %vm705, %v1933, %v2165
      %v2615 = vsel %vm705, %v1934, %v2167
      %v2617 = vsel %vm746, %v2570, %v2337
      %v2619 = vsel %vm746, %v2573, %v2339
      %v2621 = vsel %vm746, %v2576, %v2341
      %v2623 = vsel %vm746, %v2579, %v2343
      %v2625 = vsel %vm746, %v2582, %v2345
      %v2627 = vsel %vm746, %v2585, %v2347
      %v2629 = vsel %vm746, %v2588, %v2349
      %v2631 = vsel %vm746, %v2591, %v2351
      %v2633 = vsel %vm746, %v2594, %v2353
      %v2635 = vsel %vm746, %v2597, %v2355
      %v2637 = vsel %vm746, %v2600, %v2357
      %v2639 = vsel %vm746, %v2603, %v2359
      %v2641 = vsel %vm746, %v2606, %v2361
      %v2643 = vsel %vm746, %v2609, %v2363
      %v2645 = vsel %vm746, %v2612, %v2365
      %v2647 = vsel %vm746, %v2615, %v2367
      %v2649 = vsel %vm779, %v2617, %v2537
      %v2651 = vsel %vm779, %v2619, %v2539
      %v2653 = vsel %vm779, %v2621, %v2541
      %v2655 = vsel %vm779, %v2623, %v2543
      %v2657 = vsel %vm779, %v2625, %v2545
      %v2659 = vsel %vm779, %v2627, %v2547
      %v2661 = vsel %vm779, %v2629, %v2549
      %v2663 = vsel %vm779, %v2631, %v2551
      %v2665 = vsel %vm779, %v2633, %v2553
      %v2667 = vsel %vm779, %v2635, %v2555
      %v2669 = vsel %vm779, %v2637, %v2557
      %v2671 = vsel %vm779, %v2639, %v2559
      %v2673 = vsel %vm779, %v2641, %v2561
      %v2675 = vsel %vm779, %v2643, %v2563
      %v2677 = vsel %vm779, %v2645, %v2565
      %v2679 = vsel %vm779, %v2647, %v2567
      %vm2696 = vcmask 1044480
      %v2697 = vrot.slane %v2649, 3
      %v2698 = vrot.slane %v2651, 3
      %v2699 = vsel %vm2696, %v2697, %v2698
      %v2700 = vrot.slane %v2653, 3
      %v2701 = vrot.slane %v2655, 3
      %v2702 = vsel %vm2696, %v2700, %v2701
      %v2703 = vrot.slane %v2657, 3
      %v2704 = vrot.slane %v2659, 3
      %v2705 = vsel %vm2696, %v2703, %v2704
      %v2706 = vrot.slane %v2661, 3
      %v2707 = vrot.slane %v2663, 3
      %v2708 = vsel %vm2696, %v2706, %v2707
      %v2709 = vrot.slane %v2665, 3
      %v2710 = vrot.slane %v2667, 3
      %v2711 = vsel %vm2696, %v2709, %v2710
      %v2712 = vrot.slane %v2669, 3
      %v2713 = vrot.slane %v2671, 3
      %v2714 = vsel %vm2696, %v2712, %v2713
      %v2715 = vrot.slane %v2673, 3
      %v2716 = vrot.slane %v2675, 3
      %v2717 = vsel %vm2696, %v2715, %v2716
      %v2718 = vrot.slane %v2677, 3
      %v2719 = vrot.slane %v2679, 3
      %v2720 = vsel %vm2696, %v2718, %v2719
      %v2721 = vunpack.c.l.b16 %v2699
      %v2722 = vunpack.c.h.b16 %v2699
      %v2723 = vunpack.c.l.b16 %v2702
      %v2724 = vunpack.c.h.b16 %v2702
      %v2725 = vunpack.c.l.b16 %v2705
      %v2726 = vunpack.c.h.b16 %v2705
      %v2727 = vunpack.c.l.b16 %v2708
      %v2728 = vunpack.c.h.b16 %v2708
      %v2729 = vunpack.c.l.b16 %v2711
      %v2730 = vunpack.c.h.b16 %v2711
      %v2731 = vunpack.c.l.b16 %v2714
      %v2732 = vunpack.c.h.b16 %v2714
      %v2733 = vunpack.c.l.b16 %v2717
      %v2734 = vunpack.c.h.b16 %v2717
      %v2735 = vunpack.c.l.b16 %v2720
      %v2736 = vunpack.c.h.b16 %v2720
      %v2737 = vpack.c.b16 %v2721, %v2721
      %v2738 = vpack.c.b16 %v2722, %v2722
      %v2739 = vpack.c.b16 %v2723, %v2723
      %v2740 = vpack.c.b16 %v2724, %v2724
      %v2741 = vpack.c.b16 %v2725, %v2725
      %v2742 = vpack.c.b16 %v2726, %v2726
      %v2743 = vpack.c.b16 %v2727, %v2727
      %v2744 = vpack.c.b16 %v2728, %v2728
      %v2745 = vpack.c.b16 %v2729, %v2729
      %v2746 = vpack.c.b16 %v2730, %v2730
      %v2747 = vpack.c.b16 %v2731, %v2731
      %v2748 = vpack.c.b16 %v2732, %v2732
      %v2749 = vpack.c.b16 %v2733, %v2733
      %v2750 = vpack.c.b16 %v2734, %v2734
      %v2751 = vpack.c.b16 %v2735, %v2735
      %v2752 = vpack.c.b16 %v2736, %v2736
      %2769 = vst [vmem:[#allocation2 + $0x8] sm:$0xf] %v2737
      %2770 = vst [vmem:[#allocation2 + $0x24] sm:$0xf] %v2738
      %2771 = vst [vmem:[#allocation2 + $0x40] sm:$0xf] %v2739
      %2772 = vst [vmem:[#allocation2 + $0x5c] sm:$0xf] %v2740
      %2773 = vst [vmem:[#allocation2 + $0x78] sm:$0xf] %v2741
      %2774 = vst [vmem:[#allocation2 + $0x94] sm:$0xf] %v2742
      %2775 = vst [vmem:[#allocation2 + $0xb0] sm:$0xf] %v2743
      %2776 = vst [vmem:[#allocation2 + $0xcc] sm:$0xf] %v2744
      %2777 = vst [vmem:[#allocation2 + $0xe8] sm:$0xf] %v2745
      %2778 = vst [vmem:[#allocation2 + $0x104] sm:$0xf] %v2746
      %2779 = vst [vmem:[#allocation2 + $0x120] sm:$0xf] %v2747
      %2780 = vst [vmem:[#allocation2 + $0x13c] sm:$0xf] %v2748
      %2781 = vst [vmem:[#allocation2 + $0x158] sm:$0xf] %v2749
      %2782 = vst [vmem:[#allocation2 + $0x174] sm:$0xf] %v2750
      %2783 = vst [vmem:[#allocation2 + $0x190] sm:$0xf] %v2751
      %2784 = vst [vmem:[#allocation2 + $0x1ac] sm:$0xf] %v2752
      %v2785 = vld [vmem:[%s262] sm:$0xe]
      %v2786 = vld [vmem:[%s262 + $0x4] sm:$0xf]
      %v2787 = vld [vmem:[%s262 + $0x8] sm:$0x3]
      %v2788 = vld [vmem:[%s262 + $0x10] sm:$0xe]
      %v2789 = vld [vmem:[%s262 + $0x14] sm:$0xf]
      %v2790 = vld [vmem:[%s262 + $0x18] sm:$0x3]
      %v2791 = vld [vmem:[%s262 + $0x20] sm:$0xe]
      %v2792 = vld [vmem:[%s262 + $0x24] sm:$0xf]
      %v2793 = vld [vmem:[%s262 + $0x28] sm:$0x3]
      %v2794 = vld [vmem:[%s262 + $0x30] sm:$0xe]
      %v2795 = vld [vmem:[%s262 + $0x34] sm:$0xf]
      %v2796 = vld [vmem:[%s262 + $0x38] sm:$0x3]
      %v2797 = vld [vmem:[%s262 + $0x40] sm:$0xe]
      %v2798 = vld [vmem:[%s262 + $0x44] sm:$0xf]
      %v2799 = vld [vmem:[%s262 + $0x48] sm:$0x3]
      %v2800 = vld [vmem:[%s262 + $0x50] sm:$0xe]
      %v2801 = vld [vmem:[%s262 + $0x54] sm:$0xf]
      %v2802 = vld [vmem:[%s262 + $0x58] sm:$0x3]
      %v2803 = vld [vmem:[%s262 + $0x60] sm:$0xe]
      %v2804 = vld [vmem:[%s262 + $0x64] sm:$0xf]
      %v2805 = vld [vmem:[%s262 + $0x68] sm:$0x3]
      %v2806 = vld [vmem:[%s262 + $0x70] sm:$0xe]
      %v2807 = vld [vmem:[%s262 + $0x74] sm:$0xf]
      %v2808 = vld [vmem:[%s262 + $0x78] sm:$0x3]
      %v2809 = vld [vmem:[%s262] sm:$0xc]
      %v2810 = vld [vmem:[%s262 + $0x8] sm:$0x7]
      %v2811 = vld [vmem:[%s262 + $0x10] sm:$0xc]
      %v2812 = vld [vmem:[%s262 + $0x18] sm:$0x7]
      %v2813 = vld [vmem:[%s262 + $0x20] sm:$0xc]
      %v2814 = vld [vmem:[%s262 + $0x28] sm:$0x7]
      %v2815 = vld [vmem:[%s262 + $0x30] sm:$0xc]
      %v2816 = vld [vmem:[%s262 + $0x38] sm:$0x7]
      %v2817 = vld [vmem:[%s262 + $0x40] sm:$0xc]
      %v2818 = vld [vmem:[%s262 + $0x48] sm:$0x7]
      %v2819 = vld [vmem:[%s262 + $0x50] sm:$0xc]
      %v2820 = vld [vmem:[%s262 + $0x58] sm:$0x7]
      %v2821 = vld [vmem:[%s262 + $0x60] sm:$0xc]
      %v2822 = vld [vmem:[%s262 + $0x68] sm:$0x7]
      %v2823 = vld [vmem:[%s262 + $0x70] sm:$0xc]
      %v2824 = vld [vmem:[%s262 + $0x78] sm:$0x7]
      %v2825 = vld [vmem:[%s262] sm:$0x8]
      %v2826 = vld [vmem:[%s262 + $0x8] sm:$0xf]
      %v2827 = vld [vmem:[%s262 + $0x10] sm:$0x8]
      %v2828 = vld [vmem:[%s262 + $0x18] sm:$0xf]
      %v2829 = vld [vmem:[%s262 + $0x20] sm:$0x8]
      %v2830 = vld [vmem:[%s262 + $0x28] sm:$0xf]
      %v2831 = vld [vmem:[%s262 + $0x30] sm:$0x8]
      %v2832 = vld [vmem:[%s262 + $0x38] sm:$0xf]
      %v2833 = vld [vmem:[%s262 + $0x40] sm:$0x8]
      %v2834 = vld [vmem:[%s262 + $0x48] sm:$0xf]
      %v2835 = vld [vmem:[%s262 + $0x50] sm:$0x8]
      %v2836 = vld [vmem:[%s262 + $0x58] sm:$0xf]
      %v2837 = vld [vmem:[%s262 + $0x60] sm:$0x8]
      %v2838 = vld [vmem:[%s262 + $0x68] sm:$0xf]
      %v2839 = vld [vmem:[%s262 + $0x70] sm:$0x8]
      %v2840 = vld [vmem:[%s262 + $0x78] sm:$0xf]
      %s2841 = sadd.s32 %s214, 7
      %s2842 = smul.u32 %s2841, 4
      %s2843 = smul.addr %s2842, 4
      %s2844 = scalar_lea.vmem %s195, %s2843
      %v2845 = vld [vmem:[%s2844] sm:$0xe]
      %v2846 = vld [vmem:[%s2844 + $0x4] sm:$0xf]
      %v2847 = vld [vmem:[%s2844 + $0x8] sm:$0x3]
      %v2848 = vld [vmem:[%s2844 + $0x10] sm:$0xe]
      %v2849 = vld [vmem:[%s2844 + $0x14] sm:$0xf]
      %v2850 = vld [vmem:[%s2844 + $0x18] sm:$0x3]
      %v2851 = vld [vmem:[%s2844 + $0x20] sm:$0xe]
      %v2852 = vld [vmem:[%s2844 + $0x24] sm:$0xf]
      %v2853 = vld [vmem:[%s2844 + $0x28] sm:$0x3]
      %v2854 = vld [vmem:[%s2844 + $0x30] sm:$0xe]
      %v2855 = vld [vmem:[%s2844 + $0x34] sm:$0xf]
      %v2856 = vld [vmem:[%s2844 + $0x38] sm:$0x3]
      %v2857 = vld [vmem:[%s2844 + $0x40] sm:$0xe]
      %v2858 = vld [vmem:[%s2844 + $0x44] sm:$0xf]
      %v2859 = vld [vmem:[%s2844 + $0x48] sm:$0x3]
      %v2860 = vld [vmem:[%s2844 + $0x50] sm:$0xe]
      %v2861 = vld [vmem:[%s2844 + $0x54] sm:$0xf]
      %v2862 = vld [vmem:[%s2844 + $0x58] sm:$0x3]
      %v2863 = vld [vmem:[%s2844 + $0x60] sm:$0xe]
      %v2864 = vld [vmem:[%s2844 + $0x64] sm:$0xf]
      %v2865 = vld [vmem:[%s2844 + $0x68] sm:$0x3]
      %v2866 = vld [vmem:[%s2844 + $0x70] sm:$0xe]
      %v2867 = vld [vmem:[%s2844 + $0x74] sm:$0xf]
      %v2868 = vld [vmem:[%s2844 + $0x78] sm:$0x3]
      %v2893 = vunpack.c.l.b16 %v2785
      %v2894 = vunpack.c.l.b16 %v2786
      %v2895 = vunpack.c.l.b16 %v2787
      %v2896 = vunpack.c.l.b16 %v2788
      %v2897 = vunpack.c.l.b16 %v2789
      %v2898 = vunpack.c.l.b16 %v2790
      %v2899 = vunpack.c.l.b16 %v2791
      %v2900 = vunpack.c.l.b16 %v2792
      %v2901 = vunpack.c.l.b16 %v2793
      %v2902 = vunpack.c.l.b16 %v2794
      %v2903 = vunpack.c.l.b16 %v2795
      %v2904 = vunpack.c.l.b16 %v2796
      %v2905 = vunpack.c.l.b16 %v2797
      %v2906 = vunpack.c.l.b16 %v2798
      %v2907 = vunpack.c.l.b16 %v2799
      %v2908 = vunpack.c.l.b16 %v2800
      %v2909 = vunpack.c.l.b16 %v2801
      %v2910 = vunpack.c.l.b16 %v2802
      %v2911 = vunpack.c.l.b16 %v2803
      %v2912 = vunpack.c.l.b16 %v2804
      %v2913 = vunpack.c.l.b16 %v2805
      %v2914 = vunpack.c.l.b16 %v2806
      %v2915 = vunpack.c.l.b16 %v2807
      %v2916 = vunpack.c.l.b16 %v2808
      %v2917 = vpack.c.b16 %v2894, %v2893
      %v2918 = vpack.c.b16 %v2895, %v2895
      %v2919 = vpack.c.b16 %v2897, %v2896
      %v2920 = vpack.c.b16 %v2898, %v2898
      %v2921 = vpack.c.b16 %v2900, %v2899
      %v2922 = vpack.c.b16 %v2901, %v2901
      %v2923 = vpack.c.b16 %v2903, %v2902
      %v2924 = vpack.c.b16 %v2904, %v2904
      %v2925 = vpack.c.b16 %v2906, %v2905
      %v2926 = vpack.c.b16 %v2907, %v2907
      %v2927 = vpack.c.b16 %v2909, %v2908
      %v2928 = vpack.c.b16 %v2910, %v2910
      %v2929 = vpack.c.b16 %v2912, %v2911
      %v2930 = vpack.c.b16 %v2913, %v2913
      %v2931 = vpack.c.b16 %v2915, %v2914
      %v2932 = vpack.c.b16 %v2916, %v2916
      %v2949 = vunpack.c.l.b16 %v2809
      %v2950 = vunpack.c.l.b16 %v2810
      %v2951 = vunpack.c.l.b16 %v2811
      %v2952 = vunpack.c.l.b16 %v2812
      %v2953 = vunpack.c.l.b16 %v2813
      %v2954 = vunpack.c.l.b16 %v2814
      %v2955 = vunpack.c.l.b16 %v2815
      %v2956 = vunpack.c.l.b16 %v2816
      %v2957 = vunpack.c.l.b16 %v2817
      %v2958 = vunpack.c.l.b16 %v2818
      %v2959 = vunpack.c.l.b16 %v2819
      %v2960 = vunpack.c.l.b16 %v2820
      %v2961 = vunpack.c.l.b16 %v2821
      %v2962 = vunpack.c.l.b16 %v2822
      %v2963 = vunpack.c.l.b16 %v2823
      %v2964 = vunpack.c.l.b16 %v2824
      %v2965 = vpack.c.b16 %v2894, %v2949
      %v2966 = vpack.c.b16 %v2950, %v2950
      %v2967 = vpack.c.b16 %v2897, %v2951
      %v2968 = vpack.c.b16 %v2952, %v2952
      %v2969 = vpack.c.b16 %v2900, %v2953
      %v2970 = vpack.c.b16 %v2954, %v2954
      %v2971 = vpack.c.b16 %v2903, %v2955
      %v2972 = vpack.c.b16 %v2956, %v2956
      %v2973 = vpack.c.b16 %v2906, %v2957
      %v2974 = vpack.c.b16 %v2958, %v2958
      %v2975 = vpack.c.b16 %v2909, %v2959
      %v2976 = vpack.c.b16 %v2960, %v2960
      %v2977 = vpack.c.b16 %v2912, %v2961
      %v2978 = vpack.c.b16 %v2962, %v2962
      %v2979 = vpack.c.b16 %v2915, %v2963
      %v2980 = vpack.c.b16 %v2964, %v2964
      %v2981 = vrot.slane %v2965, 1
      %v2982 = vrot.slane %v2966, 1
      %v2983 = vsel %vm552, %v2981, %v2982
      %v2984 = vrot.slane %v2967, 1
      %v2985 = vrot.slane %v2968, 1
      %v2986 = vsel %vm552, %v2984, %v2985
      %v2987 = vrot.slane %v2969, 1
      %v2988 = vrot.slane %v2970, 1
      %v2989 = vsel %vm552, %v2987, %v2988
      %v2990 = vrot.slane %v2971, 1
      %v2991 = vrot.slane %v2972, 1
      %v2992 = vsel %vm552, %v2990, %v2991
      %v2993 = vrot.slane %v2973, 1
      %v2994 = vrot.slane %v2974, 1
      %v2995 = vsel %vm552, %v2993, %v2994
      %v2996 = vrot.slane %v2975, 1
      %v2997 = vrot.slane %v2976, 1
      %v2998 = vsel %vm552, %v2996, %v2997
      %v2999 = vrot.slane %v2977, 1
      %v3000 = vrot.slane %v2978, 1
      %v3001 = vsel %vm552, %v2999, %v3000
      %v3002 = vrot.slane %v2979, 1
      %v3003 = vrot.slane %v2980, 1
      %v3004 = vsel %vm552, %v3002, %v3003
      %3005 = vrot.lane.b32.xlu0 %v2983, 32
      %v3006 = vpop.permute.xlu0 %3005
      %3007 = vrot.lane.b32.xlu0 %v2982, 32
      %v3008 = vpop.permute.xlu0 %3007
      %3009 = vrot.lane.b32.xlu0 %v2986, 32
      %v3010 = vpop.permute.xlu0 %3009
      %3011 = vrot.lane.b32.xlu0 %v2985, 32
      %v3012 = vpop.permute.xlu0 %3011
      %3013 = vrot.lane.b32.xlu0 %v2989, 32
      %v3014 = vpop.permute.xlu0 %3013
      %3015 = vrot.lane.b32.xlu0 %v2988, 32
      %v3016 = vpop.permute.xlu0 %3015
      %3017 = vrot.lane.b32.xlu0 %v2992, 32
      %v3018 = vpop.permute.xlu0 %3017
      %3019 = vrot.lane.b32.xlu0 %v2991, 32
      %v3020 = vpop.permute.xlu0 %3019
      %3021 = vrot.lane.b32.xlu0 %v2995, 32
      %v3022 = vpop.permute.xlu0 %3021
      %3023 = vrot.lane.b32.xlu0 %v2994, 32
      %v3024 = vpop.permute.xlu0 %3023
      %3025 = vrot.lane.b32.xlu0 %v2998, 32
      %v3026 = vpop.permute.xlu0 %3025
      %3027 = vrot.lane.b32.xlu0 %v2997, 32
      %v3028 = vpop.permute.xlu0 %3027
      %3029 = vrot.lane.b32.xlu0 %v3001, 32
      %v3030 = vpop.permute.xlu0 %3029
      %3031 = vrot.lane.b32.xlu0 %v3000, 32
      %v3032 = vpop.permute.xlu0 %3031
      %3033 = vrot.lane.b32.xlu0 %v3004, 32
      %v3034 = vpop.permute.xlu0 %3033
      %3035 = vrot.lane.b32.xlu0 %v3003, 32
      %v3036 = vpop.permute.xlu0 %3035
      %v3053 = vunpack.c.l.b16 %v2825
      %v3054 = vunpack.c.l.b16 %v2826
      %v3055 = vunpack.c.l.b16 %v2827
      %v3056 = vunpack.c.l.b16 %v2828
      %v3057 = vunpack.c.l.b16 %v2829
      %v3058 = vunpack.c.l.b16 %v2830
      %v3059 = vunpack.c.l.b16 %v2831
      %v3060 = vunpack.c.l.b16 %v2832
      %v3061 = vunpack.c.l.b16 %v2833
      %v3062 = vunpack.c.l.b16 %v2834
      %v3063 = vunpack.c.l.b16 %v2835
      %v3064 = vunpack.c.l.b16 %v2836
      %v3065 = vunpack.c.l.b16 %v2837
      %v3066 = vunpack.c.l.b16 %v2838
      %v3067 = vunpack.c.l.b16 %v2839
      %v3068 = vunpack.c.l.b16 %v2840
      %v3069 = vpack.c.b16 %v2894, %v3053
      %v3070 = vpack.c.b16 %v3054, %v3054
      %v3071 = vpack.c.b16 %v2897, %v3055
      %v3072 = vpack.c.b16 %v3056, %v3056
      %v3073 = vpack.c.b16 %v2900, %v3057
      %v3074 = vpack.c.b16 %v3058, %v3058
      %v3075 = vpack.c.b16 %v2903, %v3059
      %v3076 = vpack.c.b16 %v3060, %v3060
      %v3077 = vpack.c.b16 %v2906, %v3061
      %v3078 = vpack.c.b16 %v3062, %v3062
      %v3079 = vpack.c.b16 %v2909, %v3063
      %v3080 = vpack.c.b16 %v3064, %v3064
      %v3081 = vpack.c.b16 %v2912, %v3065
      %v3082 = vpack.c.b16 %v3066, %v3066
      %v3083 = vpack.c.b16 %v2915, %v3067
      %v3084 = vpack.c.b16 %v3068, %v3068
      %v3085 = vrot.slane %v3069, 2
      %v3086 = vrot.slane %v3070, 2
      %v3087 = vsel %vm828, %v3085, %v3086
      %v3088 = vrot.slane %v3071, 2
      %v3089 = vrot.slane %v3072, 2
      %v3090 = vsel %vm828, %v3088, %v3089
      %v3091 = vrot.slane %v3073, 2
      %v3092 = vrot.slane %v3074, 2
      %v3093 = vsel %vm828, %v3091, %v3092
      %v3094 = vrot.slane %v3075, 2
      %v3095 = vrot.slane %v3076, 2
      %v3096 = vsel %vm828, %v3094, %v3095
      %v3097 = vrot.slane %v3077, 2
      %v3098 = vrot.slane %v3078, 2
      %v3099 = vsel %vm828, %v3097, %v3098
      %v3100 = vrot.slane %v3079, 2
      %v3101 = vrot.slane %v3080, 2
      %v3102 = vsel %vm828, %v3100, %v3101
      %v3103 = vrot.slane %v3081, 2
      %v3104 = vrot.slane %v3082, 2
      %v3105 = vsel %vm828, %v3103, %v3104
      %v3106 = vrot.slane %v3083, 2
      %v3107 = vrot.slane %v3084, 2
      %v3108 = vsel %vm828, %v3106, %v3107
      %3109 = vrot.lane.b32.xlu0 %v3087, 64
      %v3110 = vpop.permute.xlu0 %3109
      %3111 = vrot.lane.b32.xlu0 %v3086, 64
      %v3112 = vpop.permute.xlu0 %3111
      %3113 = vrot.lane.b32.xlu0 %v3090, 64
      %v3114 = vpop.permute.xlu0 %3113
      %3115 = vrot.lane.b32.xlu0 %v3089, 64
      %v3116 = vpop.permute.xlu0 %3115
      %3117 = vrot.lane.b32.xlu0 %v3093, 64
      %v3118 = vpop.permute.xlu0 %3117
      %3119 = vrot.lane.b32.xlu0 %v3092, 64
      %v3120 = vpop.permute.xlu0 %3119
      %3121 = vrot.lane.b32.xlu0 %v3096, 64
      %v3122 = vpop.permute.xlu0 %3121
      %3123 = vrot.lane.b32.xlu0 %v3095, 64
      %v3124 = vpop.permute.xlu0 %3123
      %3125 = vrot.lane.b32.xlu0 %v3099, 64
      %v3126 = vpop.permute.xlu0 %3125
      %3127 = vrot.lane.b32.xlu0 %v3098, 64
      %v3128 = vpop.permute.xlu0 %3127
      %3129 = vrot.lane.b32.xlu0 %v3102, 64
      %v3130 = vpop.permute.xlu0 %3129
      %3131 = vrot.lane.b32.xlu0 %v3101, 64
      %v3132 = vpop.permute.xlu0 %3131
      %3133 = vrot.lane.b32.xlu0 %v3105, 64
      %v3134 = vpop.permute.xlu0 %3133
      %3135 = vrot.lane.b32.xlu0 %v3104, 64
      %v3136 = vpop.permute.xlu0 %3135
      %3137 = vrot.lane.b32.xlu0 %v3108, 64
      %v3138 = vpop.permute.xlu0 %3137
      %3139 = vrot.lane.b32.xlu0 %v3107, 64
      %v3140 = vpop.permute.xlu0 %3139
      %v3165 = vunpack.c.l.b16 %v2845
      %v3166 = vunpack.c.l.b16 %v2846
      %v3167 = vunpack.c.l.b16 %v2847
      %v3168 = vunpack.c.l.b16 %v2848
      %v3169 = vunpack.c.l.b16 %v2849
      %v3170 = vunpack.c.l.b16 %v2850
      %v3171 = vunpack.c.l.b16 %v2851
      %v3172 = vunpack.c.l.b16 %v2852
      %v3173 = vunpack.c.l.b16 %v2853
      %v3174 = vunpack.c.l.b16 %v2854
      %v3175 = vunpack.c.l.b16 %v2855
      %v3176 = vunpack.c.l.b16 %v2856
      %v3177 = vunpack.c.l.b16 %v2857
      %v3178 = vunpack.c.l.b16 %v2858
      %v3179 = vunpack.c.l.b16 %v2859
      %v3180 = vunpack.c.l.b16 %v2860
      %v3181 = vunpack.c.l.b16 %v2861
      %v3182 = vunpack.c.l.b16 %v2862
      %v3183 = vunpack.c.l.b16 %v2863
      %v3184 = vunpack.c.l.b16 %v2864
      %v3185 = vunpack.c.l.b16 %v2865
      %v3186 = vunpack.c.l.b16 %v2866
      %v3187 = vunpack.c.l.b16 %v2867
      %v3188 = vunpack.c.l.b16 %v2868
      %v3189 = vpack.c.b16 %v3166, %v3165
      %v3190 = vpack.c.b16 %v3167, %v3167
      %v3191 = vpack.c.b16 %v3169, %v3168
      %v3192 = vpack.c.b16 %v3170, %v3170
      %v3193 = vpack.c.b16 %v3172, %v3171
      %v3194 = vpack.c.b16 %v3173, %v3173
      %v3195 = vpack.c.b16 %v3175, %v3174
      %v3196 = vpack.c.b16 %v3176, %v3176
      %v3197 = vpack.c.b16 %v3178, %v3177
      %v3198 = vpack.c.b16 %v3179, %v3179
      %v3199 = vpack.c.b16 %v3181, %v3180
      %v3200 = vpack.c.b16 %v3182, %v3182
      %v3201 = vpack.c.b16 %v3184, %v3183
      %v3202 = vpack.c.b16 %v3185, %v3185
      %v3203 = vpack.c.b16 %v3187, %v3186
      %v3204 = vpack.c.b16 %v3188, %v3188
      %3205 = vrot.lane.b32.xlu0 %v3189, 96
      %v3206 = vpop.permute.xlu0 %3205
      %3207 = vrot.lane.b32.xlu0 %v3190, 96
      %v3208 = vpop.permute.xlu0 %3207
      %3209 = vrot.lane.b32.xlu0 %v3191, 96
      %v3210 = vpop.permute.xlu0 %3209
      %3211 = vrot.lane.b32.xlu0 %v3192, 96
      %v3212 = vpop.permute.xlu0 %3211
      %3213 = vrot.lane.b32.xlu0 %v3193, 96
      %v3214 = vpop.permute.xlu0 %3213
      %3215 = vrot.lane.b32.xlu0 %v3194, 96
      %v3216 = vpop.permute.xlu0 %3215
      %3217 = vrot.lane.b32.xlu0 %v3195, 96
      %v3218 = vpop.permute.xlu0 %3217
      %3219 = vrot.lane.b32.xlu0 %v3196, 96
      %v3220 = vpop.permute.xlu0 %3219
      %3221 = vrot.lane.b32.xlu0 %v3197, 96
      %v3222 = vpop.permute.xlu0 %3221
      %3223 = vrot.lane.b32.xlu0 %v3198, 96
      %v3224 = vpop.permute.xlu0 %3223
      %3225 = vrot.lane.b32.xlu0 %v3199, 96
      %v3226 = vpop.permute.xlu0 %3225
      %3227 = vrot.lane.b32.xlu0 %v3200, 96
      %v3228 = vpop.permute.xlu0 %3227
      %3229 = vrot.lane.b32.xlu0 %v3201, 96
      %v3230 = vpop.permute.xlu0 %3229
      %3231 = vrot.lane.b32.xlu0 %v3202, 96
      %v3232 = vpop.permute.xlu0 %3231
      %3233 = vrot.lane.b32.xlu0 %v3203, 96
      %v3234 = vpop.permute.xlu0 %3233
      %3235 = vrot.lane.b32.xlu0 %v3204, 96
      %v3236 = vpop.permute.xlu0 %3235
      %v3239 = vsel %vm705, %v2917, %v3006
      %v3242 = vsel %vm705, %v2918, %v3008
      %v3245 = vsel %vm705, %v2919, %v3010
      %v3248 = vsel %vm705, %v2920, %v3012
      %v3251 = vsel %vm705, %v2921, %v3014
      %v3254 = vsel %vm705, %v2922, %v3016
      %v3257 = vsel %vm705, %v2923, %v3018
      %v3260 = vsel %vm705, %v2924, %v3020
      %v3263 = vsel %vm705, %v2925, %v3022
      %v3266 = vsel %vm705, %v2926, %v3024
      %v3269 = vsel %vm705, %v2927, %v3026
      %v3272 = vsel %vm705, %v2928, %v3028
      %v3275 = vsel %vm705, %v2929, %v3030
      %v3278 = vsel %vm705, %v2930, %v3032
      %v3281 = vsel %vm705, %v2931, %v3034
      %v3284 = vsel %vm705, %v2932, %v3036
      %v3286 = vsel %vm746, %v3239, %v3110
      %v3288 = vsel %vm746, %v3242, %v3112
      %v3290 = vsel %vm746, %v3245, %v3114
      %v3292 = vsel %vm746, %v3248, %v3116
      %v3294 = vsel %vm746, %v3251, %v3118
      %v3296 = vsel %vm746, %v3254, %v3120
      %v3298 = vsel %vm746, %v3257, %v3122
      %v3300 = vsel %vm746, %v3260, %v3124
      %v3302 = vsel %vm746, %v3263, %v3126
      %v3304 = vsel %vm746, %v3266, %v3128
      %v3306 = vsel %vm746, %v3269, %v3130
      %v3308 = vsel %vm746, %v3272, %v3132
      %v3310 = vsel %vm746, %v3275, %v3134
      %v3312 = vsel %vm746, %v3278, %v3136
      %v3314 = vsel %vm746, %v3281, %v3138
      %v3316 = vsel %vm746, %v3284, %v3140
      %v3318 = vsel %vm779, %v3286, %v3206
      %v3320 = vsel %vm779, %v3288, %v3208
      %v3322 = vsel %vm779, %v3290, %v3210
      %v3324 = vsel %vm779, %v3292, %v3212
      %v3326 = vsel %vm779, %v3294, %v3214
      %v3328 = vsel %vm779, %v3296, %v3216
      %v3330 = vsel %vm779, %v3298, %v3218
      %v3332 = vsel %vm779, %v3300, %v3220
      %v3334 = vsel %vm779, %v3302, %v3222
      %v3336 = vsel %vm779, %v3304, %v3224
      %v3338 = vsel %vm779, %v3306, %v3226
      %v3340 = vsel %vm779, %v3308, %v3228
      %v3342 = vsel %vm779, %v3310, %v3230
      %v3344 = vsel %vm779, %v3312, %v3232
      %v3346 = vsel %vm779, %v3314, %v3234
      %v3348 = vsel %vm779, %v3316, %v3236
      %vm3349 = vsmask.f32 6400
      %v3350 = vshrl.u32 %v3318, 16
      %v3352 = vrot.slane %v3350, 1
      %v3353 = vshll.u32 %v3318, 16
      %v3355 = vrot.slane %v3353, 2
      %v3356 = vor.u32 %v3352, %v3355
      %v3357 = vshrl.u32 %v3320, 16
      %v3359 = vrot.slane %v3357, 1
      %v3360 = vshll.u32 %v3320, 16
      %v3362 = vrot.slane %v3360, 2
      %v3363 = vor.u32 %v3359, %v3362
      %v3364 = vsel %vm3349, %v3356, %v3363
      %v3365 = vshrl.u32 %v3322, 16
      %v3367 = vrot.slane %v3365, 1
      %v3368 = vshll.u32 %v3322, 16
      %v3370 = vrot.slane %v3368, 2
      %v3371 = vor.u32 %v3367, %v3370
      %v3372 = vshrl.u32 %v3324, 16
      %v3374 = vrot.slane %v3372, 1
      %v3375 = vshll.u32 %v3324, 16
      %v3377 = vrot.slane %v3375, 2
      %v3378 = vor.u32 %v3374, %v3377
      %v3379 = vsel %vm3349, %v3371, %v3378
      %v3380 = vshrl.u32 %v3326, 16
      %v3382 = vrot.slane %v3380, 1
      %v3383 = vshll.u32 %v3326, 16
      %v3385 = vrot.slane %v3383, 2
      %v3386 = vor.u32 %v3382, %v3385
      %v3387 = vshrl.u32 %v3328, 16
      %v3389 = vrot.slane %v3387, 1
      %v3390 = vshll.u32 %v3328, 16
      %v3392 = vrot.slane %v3390, 2
      %v3393 = vor.u32 %v3389, %v3392
      %v3394 = vsel %vm3349, %v3386, %v3393
      %v3395 = vshrl.u32 %v3330, 16
      %v3397 = vrot.slane %v3395, 1
      %v3398 = vshll.u32 %v3330, 16
      %v3400 = vrot.slane %v3398, 2
      %v3401 = vor.u32 %v3397, %v3400
      %v3402 = vshrl.u32 %v3332, 16
      %v3404 = vrot.slane %v3402, 1
      %v3405 = vshll.u32 %v3332, 16
      %v3407 = vrot.slane %v3405, 2
      %v3408 = vor.u32 %v3404, %v3407
      %v3409 = vsel %vm3349, %v3401, %v3408
      %v3410 = vshrl.u32 %v3334, 16
      %v3412 = vrot.slane %v3410, 1
      %v3413 = vshll.u32 %v3334, 16
      %v3415 = vrot.slane %v3413, 2
      %v3416 = vor.u32 %v3412, %v3415
      %v3417 = vshrl.u32 %v3336, 16
      %v3419 = vrot.slane %v3417, 1
      %v3420 = vshll.u32 %v3336, 16
      %v3422 = vrot.slane %v3420, 2
      %v3423 = vor.u32 %v3419, %v3422
      %v3424 = vsel %vm3349, %v3416, %v3423
      %v3425 = vshrl.u32 %v3338, 16
      %v3427 = vrot.slane %v3425, 1
      %v3428 = vshll.u32 %v3338, 16
      %v3430 = vrot.slane %v3428, 2
      %v3431 = vor.u32 %v3427, %v3430
      %v3432 = vshrl.u32 %v3340, 16
      %v3434 = vrot.slane %v3432, 1
      %v3435 = vshll.u32 %v3340, 16
      %v3437 = vrot.slane %v3435, 2
      %v3438 = vor.u32 %v3434, %v3437
      %v3439 = vsel %vm3349, %v3431, %v3438
      %v3440 = vshrl.u32 %v3342, 16
      %v3442 = vrot.slane %v3440, 1
      %v3443 = vshll.u32 %v3342, 16
      %v3445 = vrot.slane %v3443, 2
      %v3446 = vor.u32 %v3442, %v3445
      %v3447 = vshrl.u32 %v3344, 16
      %v3449 = vrot.slane %v3447, 1
      %v3450 = vshll.u32 %v3344, 16
      %v3452 = vrot.slane %v3450, 2
      %v3453 = vor.u32 %v3449, %v3452
      %v3454 = vsel %vm3349, %v3446, %v3453
      %v3455 = vshrl.u32 %v3346, 16
      %v3457 = vrot.slane %v3455, 1
      %v3458 = vshll.u32 %v3346, 16
      %v3460 = vrot.slane %v3458, 2
      %v3461 = vor.u32 %v3457, %v3460
      %v3462 = vshrl.u32 %v3348, 16
      %v3464 = vrot.slane %v3462, 1
      %v3465 = vshll.u32 %v3348, 16
      %v3467 = vrot.slane %v3465, 2
      %v3468 = vor.u32 %v3464, %v3467
      %v3469 = vsel %vm3349, %v3461, %v3468
      %v3470 = vunpack.c.l.b16 %v3364
      %v3471 = vunpack.c.h.b16 %v3364
      %v3472 = vunpack.c.l.b16 %v3379
      %v3473 = vunpack.c.h.b16 %v3379
      %v3474 = vunpack.c.l.b16 %v3394
      %v3475 = vunpack.c.h.b16 %v3394
      %v3476 = vunpack.c.l.b16 %v3409
      %v3477 = vunpack.c.h.b16 %v3409
      %v3478 = vunpack.c.l.b16 %v3424
      %v3479 = vunpack.c.h.b16 %v3424
      %v3480 = vunpack.c.l.b16 %v3439
      %v3481 = vunpack.c.h.b16 %v3439
      %v3482 = vunpack.c.l.b16 %v3454
      %v3483 = vunpack.c.h.b16 %v3454
      %v3484 = vunpack.c.l.b16 %v3469
      %v3485 = vunpack.c.h.b16 %v3469
      %v3486 = vpack.c.b16 %v3470, %v3470
      %v3487 = vpack.c.b16 %v3471, %v3471
      %v3488 = vpack.c.b16 %v3472, %v3472
      %v3489 = vpack.c.b16 %v3473, %v3473
      %v3490 = vpack.c.b16 %v3474, %v3474
      %v3491 = vpack.c.b16 %v3475, %v3475
      %v3492 = vpack.c.b16 %v3476, %v3476
      %v3493 = vpack.c.b16 %v3477, %v3477
      %v3494 = vpack.c.b16 %v3478, %v3478
      %v3495 = vpack.c.b16 %v3479, %v3479
      %v3496 = vpack.c.b16 %v3480, %v3480
      %v3497 = vpack.c.b16 %v3481, %v3481
      %v3498 = vpack.c.b16 %v3482, %v3482
      %v3499 = vpack.c.b16 %v3483, %v3483
      %v3500 = vpack.c.b16 %v3484, %v3484
      %v3501 = vpack.c.b16 %v3485, %v3485
      %3518 = vst [vmem:[#allocation2 + $0xc] sm:$0xf] %v3486
      %3519 = vst [vmem:[#allocation2 + $0x28] sm:$0xf] %v3487
      %3520 = vst [vmem:[#allocation2 + $0x44] sm:$0xf] %v3488
      %3521 = vst [vmem:[#allocation2 + $0x60] sm:$0xf] %v3489
      %3522 = vst [vmem:[#allocation2 + $0x7c] sm:$0xf] %v3490
      %3523 = vst [vmem:[#allocation2 + $0x98] sm:$0xf] %v3491
      %3524 = vst [vmem:[#allocation2 + $0xb4] sm:$0xf] %v3492
      %3525 = vst [vmem:[#allocation2 + $0xd0] sm:$0xf] %v3493
      %3526 = vst [vmem:[#allocation2 + $0xec] sm:$0xf] %v3494
      %3527 = vst [vmem:[#allocation2 + $0x108] sm:$0xf] %v3495
      %3528 = vst [vmem:[#allocation2 + $0x124] sm:$0xf] %v3496
      %3529 = vst [vmem:[#allocation2 + $0x140] sm:$0xf] %v3497
      %3530 = vst [vmem:[#allocation2 + $0x15c] sm:$0xf] %v3498
      %3531 = vst [vmem:[#allocation2 + $0x178] sm:$0xf] %v3499
      %3532 = vst [vmem:[#allocation2 + $0x194] sm:$0xf] %v3500
      %3533 = vst [vmem:[#allocation2 + $0x1b0] sm:$0xf] %v3501
      %v3534 = vld [vmem:[%s2844] sm:$0xc]
      %v3535 = vld [vmem:[%s2844 + $0x4] sm:$0xf]
      %v3536 = vld [vmem:[%s2844 + $0x8] sm:$0x7]
      %v3537 = vld [vmem:[%s2844 + $0x10] sm:$0xc]
      %v3538 = vld [vmem:[%s2844 + $0x14] sm:$0xf]
      %v3539 = vld [vmem:[%s2844 + $0x18] sm:$0x7]
      %v3540 = vld [vmem:[%s2844 + $0x20] sm:$0xc]
      %v3541 = vld [vmem:[%s2844 + $0x24] sm:$0xf]
      %v3542 = vld [vmem:[%s2844 + $0x28] sm:$0x7]
      %v3543 = vld [vmem:[%s2844 + $0x30] sm:$0xc]
      %v3544 = vld [vmem:[%s2844 + $0x34] sm:$0xf]
      %v3545 = vld [vmem:[%s2844 + $0x38] sm:$0x7]
      %v3546 = vld [vmem:[%s2844 + $0x40] sm:$0xc]
      %v3547 = vld [vmem:[%s2844 + $0x44] sm:$0xf]
      %v3548 = vld [vmem:[%s2844 + $0x48] sm:$0x7]
      %v3549 = vld [vmem:[%s2844 + $0x50] sm:$0xc]
      %v3550 = vld [vmem:[%s2844 + $0x54] sm:$0xf]
      %v3551 = vld [vmem:[%s2844 + $0x58] sm:$0x7]
      %v3552 = vld [vmem:[%s2844 + $0x60] sm:$0xc]
      %v3553 = vld [vmem:[%s2844 + $0x64] sm:$0xf]
      %v3554 = vld [vmem:[%s2844 + $0x68] sm:$0x7]
      %v3555 = vld [vmem:[%s2844 + $0x70] sm:$0xc]
      %v3556 = vld [vmem:[%s2844 + $0x74] sm:$0xf]
      %v3557 = vld [vmem:[%s2844 + $0x78] sm:$0x7]
      %v3558 = vld [vmem:[%s2844] sm:$0x8]
      %v3559 = vld [vmem:[%s2844 + $0x8] sm:$0xf]
      %v3560 = vld [vmem:[%s2844 + $0x10] sm:$0x8]
      %v3561 = vld [vmem:[%s2844 + $0x18] sm:$0xf]
      %v3562 = vld [vmem:[%s2844 + $0x20] sm:$0x8]
      %v3563 = vld [vmem:[%s2844 + $0x28] sm:$0xf]
      %v3564 = vld [vmem:[%s2844 + $0x30] sm:$0x8]
      %v3565 = vld [vmem:[%s2844 + $0x38] sm:$0xf]
      %v3566 = vld [vmem:[%s2844 + $0x40] sm:$0x8]
      %v3567 = vld [vmem:[%s2844 + $0x48] sm:$0xf]
      %v3568 = vld [vmem:[%s2844 + $0x50] sm:$0x8]
      %v3569 = vld [vmem:[%s2844 + $0x58] sm:$0xf]
      %v3570 = vld [vmem:[%s2844 + $0x60] sm:$0x8]
      %v3571 = vld [vmem:[%s2844 + $0x68] sm:$0xf]
      %v3572 = vld [vmem:[%s2844 + $0x70] sm:$0x8]
      %v3573 = vld [vmem:[%s2844 + $0x78] sm:$0xf]
      %s3574 = smul.u32 %s214, 4
      %s3575 = smul.addr %s3574, 4
      %s3576 = scalar_lea.vmem %s195, %s3575
      %v3577 = vld [vmem:[%s3576] sm:$0xf]
      %v3578 = vld [vmem:[%s3576 + $0x4] sm:$0xf]
      %v3579 = vld [vmem:[%s3576 + $0x10] sm:$0xf]
      %v3580 = vld [vmem:[%s3576 + $0x14] sm:$0xf]
      %v3581 = vld [vmem:[%s3576 + $0x20] sm:$0xf]
      %v3582 = vld [vmem:[%s3576 + $0x24] sm:$0xf]
      %v3583 = vld [vmem:[%s3576 + $0x30] sm:$0xf]
      %v3584 = vld [vmem:[%s3576 + $0x34] sm:$0xf]
      %v3585 = vld [vmem:[%s3576 + $0x40] sm:$0xf]
      %v3586 = vld [vmem:[%s3576 + $0x44] sm:$0xf]
      %v3587 = vld [vmem:[%s3576 + $0x50] sm:$0xf]
      %v3588 = vld [vmem:[%s3576 + $0x54] sm:$0xf]
      %v3589 = vld [vmem:[%s3576 + $0x60] sm:$0xf]
      %v3590 = vld [vmem:[%s3576 + $0x64] sm:$0xf]
      %v3591 = vld [vmem:[%s3576 + $0x70] sm:$0xf]
      %v3592 = vld [vmem:[%s3576 + $0x74] sm:$0xf]
      %v3593 = vld [vmem:[%s3576] sm:$0xc]
      %v3594 = vld [vmem:[%s3576 + $0x8] sm:$0x7]
      %v3595 = vld [vmem:[%s3576 + $0x10] sm:$0xc]
      %v3596 = vld [vmem:[%s3576 + $0x18] sm:$0x7]
      %v3597 = vld [vmem:[%s3576 + $0x20] sm:$0xc]
      %v3598 = vld [vmem:[%s3576 + $0x28] sm:$0x7]
      %v3599 = vld [vmem:[%s3576 + $0x30] sm:$0xc]
      %v3600 = vld [vmem:[%s3576 + $0x38] sm:$0x7]
      %v3601 = vld [vmem:[%s3576 + $0x40] sm:$0xc]
      %v3602 = vld [vmem:[%s3576 + $0x48] sm:$0x7]
      %v3603 = vld [vmem:[%s3576 + $0x50] sm:$0xc]
      %v3604 = vld [vmem:[%s3576 + $0x58] sm:$0x7]
      %v3605 = vld [vmem:[%s3576 + $0x60] sm:$0xc]
      %v3606 = vld [vmem:[%s3576 + $0x68] sm:$0x7]
      %v3607 = vld [vmem:[%s3576 + $0x70] sm:$0xc]
      %v3608 = vld [vmem:[%s3576 + $0x78] sm:$0x7]
      %v3633 = vunpack.c.l.b16 %v3534
      %v3634 = vunpack.c.l.b16 %v3535
      %v3635 = vunpack.c.l.b16 %v3536
      %v3636 = vunpack.c.l.b16 %v3537
      %v3637 = vunpack.c.l.b16 %v3538
      %v3638 = vunpack.c.l.b16 %v3539
      %v3639 = vunpack.c.l.b16 %v3540
      %v3640 = vunpack.c.l.b16 %v3541
      %v3641 = vunpack.c.l.b16 %v3542
      %v3642 = vunpack.c.l.b16 %v3543
      %v3643 = vunpack.c.l.b16 %v3544
      %v3644 = vunpack.c.l.b16 %v3545
      %v3645 = vunpack.c.l.b16 %v3546
      %v3646 = vunpack.c.l.b16 %v3547
      %v3647 = vunpack.c.l.b16 %v3548
      %v3648 = vunpack.c.l.b16 %v3549
      %v3649 = vunpack.c.l.b16 %v3550
      %v3650 = vunpack.c.l.b16 %v3551
      %v3651 = vunpack.c.l.b16 %v3552
      %v3652 = vunpack.c.l.b16 %v3553
      %v3653 = vunpack.c.l.b16 %v3554
      %v3654 = vunpack.c.l.b16 %v3555
      %v3655 = vunpack.c.l.b16 %v3556
      %v3656 = vunpack.c.l.b16 %v3557
      %v3657 = vpack.c.b16 %v3634, %v3633
      %v3658 = vpack.c.b16 %v3635, %v3635
      %v3659 = vpack.c.b16 %v3637, %v3636
      %v3660 = vpack.c.b16 %v3638, %v3638
      %v3661 = vpack.c.b16 %v3640, %v3639
      %v3662 = vpack.c.b16 %v3641, %v3641
      %v3663 = vpack.c.b16 %v3643, %v3642
      %v3664 = vpack.c.b16 %v3644, %v3644
      %v3665 = vpack.c.b16 %v3646, %v3645
      %v3666 = vpack.c.b16 %v3647, %v3647
      %v3667 = vpack.c.b16 %v3649, %v3648
      %v3668 = vpack.c.b16 %v3650, %v3650
      %v3669 = vpack.c.b16 %v3652, %v3651
      %v3670 = vpack.c.b16 %v3653, %v3653
      %v3671 = vpack.c.b16 %v3655, %v3654
      %v3672 = vpack.c.b16 %v3656, %v3656
      %v3689 = vunpack.c.l.b16 %v3558
      %v3690 = vunpack.c.l.b16 %v3559
      %v3691 = vunpack.c.l.b16 %v3560
      %v3692 = vunpack.c.l.b16 %v3561
      %v3693 = vunpack.c.l.b16 %v3562
      %v3694 = vunpack.c.l.b16 %v3563
      %v3695 = vunpack.c.l.b16 %v3564
      %v3696 = vunpack.c.l.b16 %v3565
      %v3697 = vunpack.c.l.b16 %v3566
      %v3698 = vunpack.c.l.b16 %v3567
      %v3699 = vunpack.c.l.b16 %v3568
      %v3700 = vunpack.c.l.b16 %v3569
      %v3701 = vunpack.c.l.b16 %v3570
      %v3702 = vunpack.c.l.b16 %v3571
      %v3703 = vunpack.c.l.b16 %v3572
      %v3704 = vunpack.c.l.b16 %v3573
      %v3705 = vpack.c.b16 %v3634, %v3689
      %v3706 = vpack.c.b16 %v3690, %v3690
      %v3707 = vpack.c.b16 %v3637, %v3691
      %v3708 = vpack.c.b16 %v3692, %v3692
      %v3709 = vpack.c.b16 %v3640, %v3693
      %v3710 = vpack.c.b16 %v3694, %v3694
      %v3711 = vpack.c.b16 %v3643, %v3695
      %v3712 = vpack.c.b16 %v3696, %v3696
      %v3713 = vpack.c.b16 %v3646, %v3697
      %v3714 = vpack.c.b16 %v3698, %v3698
      %v3715 = vpack.c.b16 %v3649, %v3699
      %v3716 = vpack.c.b16 %v3700, %v3700
      %v3717 = vpack.c.b16 %v3652, %v3701
      %v3718 = vpack.c.b16 %v3702, %v3702
      %v3719 = vpack.c.b16 %v3655, %v3703
      %v3720 = vpack.c.b16 %v3704, %v3704
      %v3721 = vrot.slane %v3705, 1
      %v3722 = vrot.slane %v3706, 1
      %v3723 = vsel %vm552, %v3721, %v3722
      %v3724 = vrot.slane %v3707, 1
      %v3725 = vrot.slane %v3708, 1
      %v3726 = vsel %vm552, %v3724, %v3725
      %v3727 = vrot.slane %v3709, 1
      %v3728 = vrot.slane %v3710, 1
      %v3729 = vsel %vm552, %v3727, %v3728
      %v3730 = vrot.slane %v3711, 1
      %v3731 = vrot.slane %v3712, 1
      %v3732 = vsel %vm552, %v3730, %v3731
      %v3733 = vrot.slane %v3713, 1
      %v3734 = vrot.slane %v3714, 1
      %v3735 = vsel %vm552, %v3733, %v3734
      %v3736 = vrot.slane %v3715, 1
      %v3737 = vrot.slane %v3716, 1
      %v3738 = vsel %vm552, %v3736, %v3737
      %v3739 = vrot.slane %v3717, 1
      %v3740 = vrot.slane %v3718, 1
      %v3741 = vsel %vm552, %v3739, %v3740
      %v3742 = vrot.slane %v3719, 1
      %v3743 = vrot.slane %v3720, 1
      %v3744 = vsel %vm552, %v3742, %v3743
      %3745 = vrot.lane.b32.xlu0 %v3723, 32
      %v3746 = vpop.permute.xlu0 %3745
      %3747 = vrot.lane.b32.xlu0 %v3722, 32
      %v3748 = vpop.permute.xlu0 %3747
      %3749 = vrot.lane.b32.xlu0 %v3726, 32
      %v3750 = vpop.permute.xlu0 %3749
      %3751 = vrot.lane.b32.xlu0 %v3725, 32
      %v3752 = vpop.permute.xlu0 %3751
      %3753 = vrot.lane.b32.xlu0 %v3729, 32
      %v3754 = vpop.permute.xlu0 %3753
      %3755 = vrot.lane.b32.xlu0 %v3728, 32
      %v3756 = vpop.permute.xlu0 %3755
      %3757 = vrot.lane.b32.xlu0 %v3732, 32
      %v3758 = vpop.permute.xlu0 %3757
      %3759 = vrot.lane.b32.xlu0 %v3731, 32
      %v3760 = vpop.permute.xlu0 %3759
      %3761 = vrot.lane.b32.xlu0 %v3735, 32
      %v3762 = vpop.permute.xlu0 %3761
      %3763 = vrot.lane.b32.xlu0 %v3734, 32
      %v3764 = vpop.permute.xlu0 %3763
      %3765 = vrot.lane.b32.xlu0 %v3738, 32
      %v3766 = vpop.permute.xlu0 %3765
      %3767 = vrot.lane.b32.xlu0 %v3737, 32
      %v3768 = vpop.permute.xlu0 %3767
      %3769 = vrot.lane.b32.xlu0 %v3741, 32
      %v3770 = vpop.permute.xlu0 %3769
      %3771 = vrot.lane.b32.xlu0 %v3740, 32
      %v3772 = vpop.permute.xlu0 %3771
      %3773 = vrot.lane.b32.xlu0 %v3744, 32
      %v3774 = vpop.permute.xlu0 %3773
      %3775 = vrot.lane.b32.xlu0 %v3743, 32
      %v3776 = vpop.permute.xlu0 %3775
      %v3793 = vunpack.c.l.b16 %v3577
      %v3794 = vunpack.c.l.b16 %v3578
      %v3795 = vunpack.c.l.b16 %v3579
      %v3796 = vunpack.c.l.b16 %v3580
      %v3797 = vunpack.c.l.b16 %v3581
      %v3798 = vunpack.c.l.b16 %v3582
      %v3799 = vunpack.c.l.b16 %v3583
      %v3800 = vunpack.c.l.b16 %v3584
      %v3801 = vunpack.c.l.b16 %v3585
      %v3802 = vunpack.c.l.b16 %v3586
      %v3803 = vunpack.c.l.b16 %v3587
      %v3804 = vunpack.c.l.b16 %v3588
      %v3805 = vunpack.c.l.b16 %v3589
      %v3806 = vunpack.c.l.b16 %v3590
      %v3807 = vunpack.c.l.b16 %v3591
      %v3808 = vunpack.c.l.b16 %v3592
      %v3809 = vpack.c.b16 %v3794, %v3793
      %v3810 = vpack.c.b16 %v3796, %v3795
      %v3811 = vpack.c.b16 %v3798, %v3797
      %v3812 = vpack.c.b16 %v3800, %v3799
      %v3813 = vpack.c.b16 %v3802, %v3801
      %v3814 = vpack.c.b16 %v3804, %v3803
      %v3815 = vpack.c.b16 %v3806, %v3805
      %v3816 = vpack.c.b16 %v3808, %v3807
      %v3818 = vshrl.u32 %v3809, 16
      %v3820 = vrot.slane %v3818, 5
      %v3821 = vshll.u32 %v3809, 16
      %v3823 = vrot.slane %v3821, 6
      %v3824 = vor.u32 %v3820, %v3823
      %v3826 = vshrl.u32 %v3810, 16
      %v3828 = vrot.slane %v3826, 5
      %v3829 = vshll.u32 %v3810, 16
      %v3831 = vrot.slane %v3829, 6
      %v3832 = vor.u32 %v3828, %v3831
      %v3834 = vshrl.u32 %v3811, 16
      %v3836 = vrot.slane %v3834, 5
      %v3837 = vshll.u32 %v3811, 16
      %v3839 = vrot.slane %v3837, 6
      %v3840 = vor.u32 %v3836, %v3839
      %v3842 = vshrl.u32 %v3812, 16
      %v3844 = vrot.slane %v3842, 5
      %v3845 = vshll.u32 %v3812, 16
      %v3847 = vrot.slane %v3845, 6
      %v3848 = vor.u32 %v3844, %v3847
      %v3850 = vshrl.u32 %v3813, 16
      %v3852 = vrot.slane %v3850, 5
      %v3853 = vshll.u32 %v3813, 16
      %v3855 = vrot.slane %v3853, 6
      %v3856 = vor.u32 %v3852, %v3855
      %v3858 = vshrl.u32 %v3814, 16
      %v3860 = vrot.slane %v3858, 5
      %v3861 = vshll.u32 %v3814, 16
      %v3863 = vrot.slane %v3861, 6
      %v3864 = vor.u32 %v3860, %v3863
      %v3866 = vshrl.u32 %v3815, 16
      %v3868 = vrot.slane %v3866, 5
      %v3869 = vshll.u32 %v3815, 16
      %v3871 = vrot.slane %v3869, 6
      %v3872 = vor.u32 %v3868, %v3871
      %v3874 = vshrl.u32 %v3816, 16
      %v3876 = vrot.slane %v3874, 5
      %v3877 = vshll.u32 %v3816, 16
      %v3879 = vrot.slane %v3877, 6
      %v3880 = vor.u32 %v3876, %v3879
      %3881 = vrot.lane.b32.xlu0 %v3824, 64
      %v3882 = vpop.permute.xlu0 %3881
      %3883 = vrot.lane.b32.xlu0 %v3832, 64
      %v3884 = vpop.permute.xlu0 %3883
      %3885 = vrot.lane.b32.xlu0 %v3840, 64
      %v3886 = vpop.permute.xlu0 %3885
      %3887 = vrot.lane.b32.xlu0 %v3848, 64
      %v3888 = vpop.permute.xlu0 %3887
      %3889 = vrot.lane.b32.xlu0 %v3856, 64
      %v3890 = vpop.permute.xlu0 %3889
      %3891 = vrot.lane.b32.xlu0 %v3864, 64
      %v3892 = vpop.permute.xlu0 %3891
      %3893 = vrot.lane.b32.xlu0 %v3872, 64
      %v3894 = vpop.permute.xlu0 %3893
      %3895 = vrot.lane.b32.xlu0 %v3880, 64
      %v3896 = vpop.permute.xlu0 %3895
      %v3913 = vunpack.c.l.b16 %v3593
      %v3914 = vunpack.c.l.b16 %v3594
      %v3915 = vunpack.c.l.b16 %v3595
      %v3916 = vunpack.c.l.b16 %v3596
      %v3917 = vunpack.c.l.b16 %v3597
      %v3918 = vunpack.c.l.b16 %v3598
      %v3919 = vunpack.c.l.b16 %v3599
      %v3920 = vunpack.c.l.b16 %v3600
      %v3921 = vunpack.c.l.b16 %v3601
      %v3922 = vunpack.c.l.b16 %v3602
      %v3923 = vunpack.c.l.b16 %v3603
      %v3924 = vunpack.c.l.b16 %v3604
      %v3925 = vunpack.c.l.b16 %v3605
      %v3926 = vunpack.c.l.b16 %v3606
      %v3927 = vunpack.c.l.b16 %v3607
      %v3928 = vunpack.c.l.b16 %v3608
      %v3929 = vpack.c.b16 %v3794, %v3913
      %v3930 = vpack.c.b16 %v3914, %v3914
      %v3931 = vpack.c.b16 %v3796, %v3915
      %v3932 = vpack.c.b16 %v3916, %v3916
      %v3933 = vpack.c.b16 %v3798, %v3917
      %v3934 = vpack.c.b16 %v3918, %v3918
      %v3935 = vpack.c.b16 %v3800, %v3919
      %v3936 = vpack.c.b16 %v3920, %v3920
      %v3937 = vpack.c.b16 %v3802, %v3921
      %v3938 = vpack.c.b16 %v3922, %v3922
      %v3939 = vpack.c.b16 %v3804, %v3923
      %v3940 = vpack.c.b16 %v3924, %v3924
      %v3941 = vpack.c.b16 %v3806, %v3925
      %v3942 = vpack.c.b16 %v3926, %v3926
      %v3943 = vpack.c.b16 %v3808, %v3927
      %v3944 = vpack.c.b16 %v3928, %v3928
      %3945 = vrot.lane.b32.xlu0 %v3929, 96
      %v3946 = vpop.permute.xlu0 %3945
      %3947 = vrot.lane.b32.xlu0 %v3930, 96
      %v3948 = vpop.permute.xlu0 %3947
      %3949 = vrot.lane.b32.xlu0 %v3931, 96
      %v3950 = vpop.permute.xlu0 %3949
      %3951 = vrot.lane.b32.xlu0 %v3932, 96
      %v3952 = vpop.permute.xlu0 %3951
      %3953 = vrot.lane.b32.xlu0 %v3933, 96
      %v3954 = vpop.permute.xlu0 %3953
      %3955 = vrot.lane.b32.xlu0 %v3934, 96
      %v3956 = vpop.permute.xlu0 %3955
      %3957 = vrot.lane.b32.xlu0 %v3935, 96
      %v3958 = vpop.permute.xlu0 %3957
      %3959 = vrot.lane.b32.xlu0 %v3936, 96
      %v3960 = vpop.permute.xlu0 %3959
      %3961 = vrot.lane.b32.xlu0 %v3937, 96
      %v3962 = vpop.permute.xlu0 %3961
      %3963 = vrot.lane.b32.xlu0 %v3938, 96
      %v3964 = vpop.permute.xlu0 %3963
      %3965 = vrot.lane.b32.xlu0 %v3939, 96
      %v3966 = vpop.permute.xlu0 %3965
      %3967 = vrot.lane.b32.xlu0 %v3940, 96
      %v3968 = vpop.permute.xlu0 %3967
      %3969 = vrot.lane.b32.xlu0 %v3941, 96
      %v3970 = vpop.permute.xlu0 %3969
      %3971 = vrot.lane.b32.xlu0 %v3942, 96
      %v3972 = vpop.permute.xlu0 %3971
      %3973 = vrot.lane.b32.xlu0 %v3943, 96
      %v3974 = vpop.permute.xlu0 %3973
      %3975 = vrot.lane.b32.xlu0 %v3944, 96
      %v3976 = vpop.permute.xlu0 %3975
      %v3979 = vsel %vm705, %v3657, %v3746
      %v3982 = vsel %vm705, %v3658, %v3748
      %v3985 = vsel %vm705, %v3659, %v3750
      %v3988 = vsel %vm705, %v3660, %v3752
      %v3991 = vsel %vm705, %v3661, %v3754
      %v3994 = vsel %vm705, %v3662, %v3756
      %v3997 = vsel %vm705, %v3663, %v3758
      %v4000 = vsel %vm705, %v3664, %v3760
      %v4003 = vsel %vm705, %v3665, %v3762
      %v4006 = vsel %vm705, %v3666, %v3764
      %v4009 = vsel %vm705, %v3667, %v3766
      %v4012 = vsel %vm705, %v3668, %v3768
      %v4015 = vsel %vm705, %v3669, %v3770
      %v4018 = vsel %vm705, %v3670, %v3772
      %v4021 = vsel %vm705, %v3671, %v3774
      %v4024 = vsel %vm705, %v3672, %v3776
      %v4026 = vsel %vm746, %v3979, %v3882
      %v4027 = vsel %vm746, %v3982, %v3882
      %v4029 = vsel %vm746, %v3985, %v3884
      %v4030 = vsel %vm746, %v3988, %v3884
      %v4032 = vsel %vm746, %v3991, %v3886
      %v4033 = vsel %vm746, %v3994, %v3886
      %v4035 = vsel %vm746, %v3997, %v3888
      %v4036 = vsel %vm746, %v4000, %v3888
      %v4038 = vsel %vm746, %v4003, %v3890
      %v4039 = vsel %vm746, %v4006, %v3890
      %v4041 = vsel %vm746, %v4009, %v3892
      %v4042 = vsel %vm746, %v4012, %v3892
      %v4044 = vsel %vm746, %v4015, %v3894
      %v4045 = vsel %vm746, %v4018, %v3894
      %v4047 = vsel %vm746, %v4021, %v3896
      %v4048 = vsel %vm746, %v4024, %v3896
      %v4050 = vsel %vm779, %v4026, %v3946
      %v4052 = vsel %vm779, %v4027, %v3948
      %v4054 = vsel %vm779, %v4029, %v3950
      %v4056 = vsel %vm779, %v4030, %v3952
      %v4058 = vsel %vm779, %v4032, %v3954
      %v4060 = vsel %vm779, %v4033, %v3956
      %v4062 = vsel %vm779, %v4035, %v3958
      %v4064 = vsel %vm779, %v4036, %v3960
      %v4066 = vsel %vm779, %v4038, %v3962
      %v4068 = vsel %vm779, %v4039, %v3964
      %v4070 = vsel %vm779, %v4041, %v3966
      %v4072 = vsel %vm779, %v4042, %v3968
      %v4074 = vsel %vm779, %v4044, %v3970
      %v4076 = vsel %vm779, %v4045, %v3972
      %v4078 = vsel %vm779, %v4047, %v3974
      %v4080 = vsel %vm779, %v4048, %v3976
      %v4081 = vshrl.u32 %v4050, 16
      %v4083 = vrot.slane %v4081, 2
      %v4084 = vshll.u32 %v4050, 16
      %v4086 = vrot.slane %v4084, 3
      %v4087 = vor.u32 %v4083, %v4086
      %v4088 = vshrl.u32 %v4052, 16
      %v4090 = vrot.slane %v4088, 2
      %v4091 = vshll.u32 %v4052, 16
      %v4093 = vrot.slane %v4091, 3
      %v4094 = vor.u32 %v4090, %v4093
      %v4095 = vsel %vm1602, %v4087, %v4094
      %v4096 = vshrl.u32 %v4054, 16
      %v4098 = vrot.slane %v4096, 2
      %v4099 = vshll.u32 %v4054, 16
      %v4101 = vrot.slane %v4099, 3
      %v4102 = vor.u32 %v4098, %v4101
      %v4103 = vshrl.u32 %v4056, 16
      %v4105 = vrot.slane %v4103, 2
      %v4106 = vshll.u32 %v4056, 16
      %v4108 = vrot.slane %v4106, 3
      %v4109 = vor.u32 %v4105, %v4108
      %v4110 = vsel %vm1602, %v4102, %v4109
      %v4111 = vshrl.u32 %v4058, 16
      %v4113 = vrot.slane %v4111, 2
      %v4114 = vshll.u32 %v4058, 16
      %v4116 = vrot.slane %v4114, 3
      %v4117 = vor.u32 %v4113, %v4116
      %v4118 = vshrl.u32 %v4060, 16
      %v4120 = vrot.slane %v4118, 2
      %v4121 = vshll.u32 %v4060, 16
      %v4123 = vrot.slane %v4121, 3
      %v4124 = vor.u32 %v4120, %v4123
      %v4125 = vsel %vm1602, %v4117, %v4124
      %v4126 = vshrl.u32 %v4062, 16
      %v4128 = vrot.slane %v4126, 2
      %v4129 = vshll.u32 %v4062, 16
      %v4131 = vrot.slane %v4129, 3
      %v4132 = vor.u32 %v4128, %v4131
      %v4133 = vshrl.u32 %v4064, 16
      %v4135 = vrot.slane %v4133, 2
      %v4136 = vshll.u32 %v4064, 16
      %v4138 = vrot.slane %v4136, 3
      %v4139 = vor.u32 %v4135, %v4138
      %v4140 = vsel %vm1602, %v4132, %v4139
      %v4141 = vshrl.u32 %v4066, 16
      %v4143 = vrot.slane %v4141, 2
      %v4144 = vshll.u32 %v4066, 16
      %v4146 = vrot.slane %v4144, 3
      %v4147 = vor.u32 %v4143, %v4146
      %v4148 = vshrl.u32 %v4068, 16
      %v4150 = vrot.slane %v4148, 2
      %v4151 = vshll.u32 %v4068, 16
      %v4153 = vrot.slane %v4151, 3
      %v4154 = vor.u32 %v4150, %v4153
      %v4155 = vsel %vm1602, %v4147, %v4154
      %v4156 = vshrl.u32 %v4070, 16
      %v4158 = vrot.slane %v4156, 2
      %v4159 = vshll.u32 %v4070, 16
      %v4161 = vrot.slane %v4159, 3
      %v4162 = vor.u32 %v4158, %v4161
      %v4163 = vshrl.u32 %v4072, 16
      %v4165 = vrot.slane %v4163, 2
      %v4166 = vshll.u32 %v4072, 16
      %v4168 = vrot.slane %v4166, 3
      %v4169 = vor.u32 %v4165, %v4168
      %v4170 = vsel %vm1602, %v4162, %v4169
      %v4171 = vshrl.u32 %v4074, 16
      %v4173 = vrot.slane %v4171, 2
      %v4174 = vshll.u32 %v4074, 16
      %v4176 = vrot.slane %v4174, 3
      %v4177 = vor.u32 %v4173, %v4176
      %v4178 = vshrl.u32 %v4076, 16
      %v4180 = vrot.slane %v4178, 2
      %v4181 = vshll.u32 %v4076, 16
      %v4183 = vrot.slane %v4181, 3
      %v4184 = vor.u32 %v4180, %v4183
      %v4185 = vsel %vm1602, %v4177, %v4184
      %v4186 = vshrl.u32 %v4078, 16
      %v4188 = vrot.slane %v4186, 2
      %v4189 = vshll.u32 %v4078, 16
      %v4191 = vrot.slane %v4189, 3
      %v4192 = vor.u32 %v4188, %v4191
      %v4193 = vshrl.u32 %v4080, 16
      %v4195 = vrot.slane %v4193, 2
      %v4196 = vshll.u32 %v4080, 16
      %v4198 = vrot.slane %v4196, 3
      %v4199 = vor.u32 %v4195, %v4198
      %v4200 = vsel %vm1602, %v4192, %v4199
      %v4201 = vunpack.c.l.b16 %v4095
      %v4202 = vunpack.c.h.b16 %v4095
      %v4203 = vunpack.c.l.b16 %v4110
      %v4204 = vunpack.c.h.b16 %v4110
      %v4205 = vunpack.c.l.b16 %v4125
      %v4206 = vunpack.c.h.b16 %v4125
      %v4207 = vunpack.c.l.b16 %v4140
      %v4208 = vunpack.c.h.b16 %v4140
      %v4209 = vunpack.c.l.b16 %v4155
      %v4210 = vunpack.c.h.b16 %v4155
      %v4211 = vunpack.c.l.b16 %v4170
      %v4212 = vunpack.c.h.b16 %v4170
      %v4213 = vunpack.c.l.b16 %v4185
      %v4214 = vunpack.c.h.b16 %v4185
      %v4215 = vunpack.c.l.b16 %v4200
      %v4216 = vunpack.c.h.b16 %v4200
      %v4217 = vpack.c.b16 %v4201, %v4201
      %v4218 = vpack.c.b16 %v4202, %v4202
      %v4219 = vpack.c.b16 %v4203, %v4203
      %v4220 = vpack.c.b16 %v4204, %v4204
      %v4221 = vpack.c.b16 %v4205, %v4205
      %v4222 = vpack.c.b16 %v4206, %v4206
      %v4223 = vpack.c.b16 %v4207, %v4207
      %v4224 = vpack.c.b16 %v4208, %v4208
      %v4225 = vpack.c.b16 %v4209, %v4209
      %v4226 = vpack.c.b16 %v4210, %v4210
      %v4227 = vpack.c.b16 %v4211, %v4211
      %v4228 = vpack.c.b16 %v4212, %v4212
      %v4229 = vpack.c.b16 %v4213, %v4213
      %v4230 = vpack.c.b16 %v4214, %v4214
      %v4231 = vpack.c.b16 %v4215, %v4215
      %v4232 = vpack.c.b16 %v4216, %v4216
      %4249 = vst [vmem:[#allocation2 + $0x10] sm:$0xf] %v4217
      %4250 = vst [vmem:[#allocation2 + $0x2c] sm:$0xf] %v4218
      %4251 = vst [vmem:[#allocation2 + $0x48] sm:$0xf] %v4219
      %4252 = vst [vmem:[#allocation2 + $0x64] sm:$0xf] %v4220
      %4253 = vst [vmem:[#allocation2 + $0x80] sm:$0xf] %v4221
      %4254 = vst [vmem:[#allocation2 + $0x9c] sm:$0xf] %v4222
      %4255 = vst [vmem:[#allocation2 + $0xb8] sm:$0xf] %v4223
      %4256 = vst [vmem:[#allocation2 + $0xd4] sm:$0xf] %v4224
      %4257 = vst [vmem:[#allocation2 + $0xf0] sm:$0xf] %v4225
      %4258 = vst [vmem:[#allocation2 + $0x10c] sm:$0xf] %v4226
      %4259 = vst [vmem:[#allocation2 + $0x128] sm:$0xf] %v4227
      %4260 = vst [vmem:[#allocation2 + $0x144] sm:$0xf] %v4228
      %4261 = vst [vmem:[#allocation2 + $0x160] sm:$0xf] %v4229
      %4262 = vst [vmem:[#allocation2 + $0x17c] sm:$0xf] %v4230
      %4263 = vst [vmem:[#allocation2 + $0x198] sm:$0xf] %v4231
      %4264 = vst [vmem:[#allocation2 + $0x1b4] sm:$0xf] %v4232
      %v4265 = vld [vmem:[%s3576 + $0x4] sm:$0xe]
      %v4266 = vld [vmem:[%s3576 + $0x8] sm:$0xf]
      %v4267 = vld [vmem:[%s3576 + $0xc] sm:$0x1]
      %v4268 = vld [vmem:[%s3576 + $0x14] sm:$0xe]
      %v4269 = vld [vmem:[%s3576 + $0x18] sm:$0xf]
      %v4270 = vld [vmem:[%s3576 + $0x1c] sm:$0x1]
      %v4271 = vld [vmem:[%s3576 + $0x24] sm:$0xe]
      %v4272 = vld [vmem:[%s3576 + $0x28] sm:$0xf]
      %v4273 = vld [vmem:[%s3576 + $0x2c] sm:$0x1]
      %v4274 = vld [vmem:[%s3576 + $0x34] sm:$0xe]
      %v4275 = vld [vmem:[%s3576 + $0x38] sm:$0xf]
      %v4276 = vld [vmem:[%s3576 + $0x3c] sm:$0x1]
      %v4277 = vld [vmem:[%s3576 + $0x44] sm:$0xe]
      %v4278 = vld [vmem:[%s3576 + $0x48] sm:$0xf]
      %v4279 = vld [vmem:[%s3576 + $0x4c] sm:$0x1]
      %v4280 = vld [vmem:[%s3576 + $0x54] sm:$0xe]
      %v4281 = vld [vmem:[%s3576 + $0x58] sm:$0xf]
      %v4282 = vld [vmem:[%s3576 + $0x5c] sm:$0x1]
      %v4283 = vld [vmem:[%s3576 + $0x64] sm:$0xe]
      %v4284 = vld [vmem:[%s3576 + $0x68] sm:$0xf]
      %v4285 = vld [vmem:[%s3576 + $0x6c] sm:$0x1]
      %v4286 = vld [vmem:[%s3576 + $0x74] sm:$0xe]
      %v4287 = vld [vmem:[%s3576 + $0x78] sm:$0xf]
      %v4288 = vld [vmem:[%s3576 + $0x7c] sm:$0x1]
      %v4289 = vld [vmem:[%s262] sm:$0xf]
      %v4290 = vld [vmem:[%s262 + $0x4] sm:$0xf]
      %v4291 = vld [vmem:[%s262 + $0x10] sm:$0xf]
      %v4292 = vld [vmem:[%s262 + $0x14] sm:$0xf]
      %v4293 = vld [vmem:[%s262 + $0x20] sm:$0xf]
      %v4294 = vld [vmem:[%s262 + $0x24] sm:$0xf]
      %v4295 = vld [vmem:[%s262 + $0x30] sm:$0xf]
      %v4296 = vld [vmem:[%s262 + $0x34] sm:$0xf]
      %v4297 = vld [vmem:[%s262 + $0x40] sm:$0xf]
      %v4298 = vld [vmem:[%s262 + $0x44] sm:$0xf]
      %v4299 = vld [vmem:[%s262 + $0x50] sm:$0xf]
      %v4300 = vld [vmem:[%s262 + $0x54] sm:$0xf]
      %v4301 = vld [vmem:[%s262 + $0x60] sm:$0xf]
      %v4302 = vld [vmem:[%s262 + $0x64] sm:$0xf]
      %v4303 = vld [vmem:[%s262 + $0x70] sm:$0xf]
      %v4304 = vld [vmem:[%s262 + $0x74] sm:$0xf]
      %v4305 = vld [vmem:[%s262] sm:$0xc]
      %v4306 = vld [vmem:[%s262 + $0x8] sm:$0x7]
      %v4307 = vld [vmem:[%s262 + $0x10] sm:$0xc]
      %v4308 = vld [vmem:[%s262 + $0x18] sm:$0x7]
      %v4309 = vld [vmem:[%s262 + $0x20] sm:$0xc]
      %v4310 = vld [vmem:[%s262 + $0x28] sm:$0x7]
      %v4311 = vld [vmem:[%s262 + $0x30] sm:$0xc]
      %v4312 = vld [vmem:[%s262 + $0x38] sm:$0x7]
      %v4313 = vld [vmem:[%s262 + $0x40] sm:$0xc]
      %v4314 = vld [vmem:[%s262 + $0x48] sm:$0x7]
      %v4315 = vld [vmem:[%s262 + $0x50] sm:$0xc]
      %v4316 = vld [vmem:[%s262 + $0x58] sm:$0x7]
      %v4317 = vld [vmem:[%s262 + $0x60] sm:$0xc]
      %v4318 = vld [vmem:[%s262 + $0x68] sm:$0x7]
      %v4319 = vld [vmem:[%s262 + $0x70] sm:$0xc]
      %v4320 = vld [vmem:[%s262 + $0x78] sm:$0x7]
      %v4321 = vld [vmem:[%s262 + $0x4] sm:$0xe]
      %v4322 = vld [vmem:[%s262 + $0x8] sm:$0xf]
      %v4323 = vld [vmem:[%s262 + $0xc] sm:$0x1]
      %v4324 = vld [vmem:[%s262 + $0x14] sm:$0xe]
      %v4325 = vld [vmem:[%s262 + $0x18] sm:$0xf]
      %v4326 = vld [vmem:[%s262 + $0x1c] sm:$0x1]
      %v4327 = vld [vmem:[%s262 + $0x24] sm:$0xe]
      %v4328 = vld [vmem:[%s262 + $0x28] sm:$0xf]
      %v4329 = vld [vmem:[%s262 + $0x2c] sm:$0x1]
      %v4330 = vld [vmem:[%s262 + $0x34] sm:$0xe]
      %v4331 = vld [vmem:[%s262 + $0x38] sm:$0xf]
      %v4332 = vld [vmem:[%s262 + $0x3c] sm:$0x1]
      %v4333 = vld [vmem:[%s262 + $0x44] sm:$0xe]
      %v4334 = vld [vmem:[%s262 + $0x48] sm:$0xf]
      %v4335 = vld [vmem:[%s262 + $0x4c] sm:$0x1]
      %v4336 = vld [vmem:[%s262 + $0x54] sm:$0xe]
      %v4337 = vld [vmem:[%s262 + $0x58] sm:$0xf]
      %v4338 = vld [vmem:[%s262 + $0x5c] sm:$0x1]
      %v4339 = vld [vmem:[%s262 + $0x64] sm:$0xe]
      %v4340 = vld [vmem:[%s262 + $0x68] sm:$0xf]
      %v4341 = vld [vmem:[%s262 + $0x6c] sm:$0x1]
      %v4342 = vld [vmem:[%s262 + $0x74] sm:$0xe]
      %v4343 = vld [vmem:[%s262 + $0x78] sm:$0xf]
      %v4344 = vld [vmem:[%s262 + $0x7c] sm:$0x1]
      %v4369 = vunpack.c.l.b16 %v4265
      %v4370 = vunpack.c.l.b16 %v4266
      %v4371 = vunpack.c.l.b16 %v4267
      %v4372 = vunpack.c.l.b16 %v4268
      %v4373 = vunpack.c.l.b16 %v4269
      %v4374 = vunpack.c.l.b16 %v4270
      %v4375 = vunpack.c.l.b16 %v4271
      %v4376 = vunpack.c.l.b16 %v4272
      %v4377 = vunpack.c.l.b16 %v4273
      %v4378 = vunpack.c.l.b16 %v4274
      %v4379 = vunpack.c.l.b16 %v4275
      %v4380 = vunpack.c.l.b16 %v4276
      %v4381 = vunpack.c.l.b16 %v4277
      %v4382 = vunpack.c.l.b16 %v4278
      %v4383 = vunpack.c.l.b16 %v4279
      %v4384 = vunpack.c.l.b16 %v4280
      %v4385 = vunpack.c.l.b16 %v4281
      %v4386 = vunpack.c.l.b16 %v4282
      %v4387 = vunpack.c.l.b16 %v4283
      %v4388 = vunpack.c.l.b16 %v4284
      %v4389 = vunpack.c.l.b16 %v4285
      %v4390 = vunpack.c.l.b16 %v4286
      %v4391 = vunpack.c.l.b16 %v4287
      %v4392 = vunpack.c.l.b16 %v4288
      %v4393 = vpack.c.b16 %v4370, %v4369
      %v4394 = vpack.c.b16 %v4371, %v4371
      %v4395 = vpack.c.b16 %v4373, %v4372
      %v4396 = vpack.c.b16 %v4374, %v4374
      %v4397 = vpack.c.b16 %v4376, %v4375
      %v4398 = vpack.c.b16 %v4377, %v4377
      %v4399 = vpack.c.b16 %v4379, %v4378
      %v4400 = vpack.c.b16 %v4380, %v4380
      %v4401 = vpack.c.b16 %v4382, %v4381
      %v4402 = vpack.c.b16 %v4383, %v4383
      %v4403 = vpack.c.b16 %v4385, %v4384
      %v4404 = vpack.c.b16 %v4386, %v4386
      %v4405 = vpack.c.b16 %v4388, %v4387
      %v4406 = vpack.c.b16 %v4389, %v4389
      %v4407 = vpack.c.b16 %v4391, %v4390
      %v4408 = vpack.c.b16 %v4392, %v4392
      %v4425 = vunpack.c.l.b16 %v4289
      %v4426 = vunpack.c.l.b16 %v4290
      %v4427 = vunpack.c.l.b16 %v4291
      %v4428 = vunpack.c.l.b16 %v4292
      %v4429 = vunpack.c.l.b16 %v4293
      %v4430 = vunpack.c.l.b16 %v4294
      %v4431 = vunpack.c.l.b16 %v4295
      %v4432 = vunpack.c.l.b16 %v4296
      %v4433 = vunpack.c.l.b16 %v4297
      %v4434 = vunpack.c.l.b16 %v4298
      %v4435 = vunpack.c.l.b16 %v4299
      %v4436 = vunpack.c.l.b16 %v4300
      %v4437 = vunpack.c.l.b16 %v4301
      %v4438 = vunpack.c.l.b16 %v4302
      %v4439 = vunpack.c.l.b16 %v4303
      %v4440 = vunpack.c.l.b16 %v4304
      %v4441 = vpack.c.b16 %v4426, %v4425
      %v4442 = vpack.c.b16 %v4428, %v4427
      %v4443 = vpack.c.b16 %v4430, %v4429
      %v4444 = vpack.c.b16 %v4432, %v4431
      %v4445 = vpack.c.b16 %v4434, %v4433
      %v4446 = vpack.c.b16 %v4436, %v4435
      %v4447 = vpack.c.b16 %v4438, %v4437
      %v4448 = vpack.c.b16 %v4440, %v4439
      %v4449 = vrot.slane %v4441, 7
      %v4450 = vrot.slane %v4442, 7
      %v4451 = vrot.slane %v4443, 7
      %v4452 = vrot.slane %v4444, 7
      %v4453 = vrot.slane %v4445, 7
      %v4454 = vrot.slane %v4446, 7
      %v4455 = vrot.slane %v4447, 7
      %v4456 = vrot.slane %v4448, 7
      %4457 = vrot.lane.b32.xlu0 %v4449, 32
      %v4458 = vpop.permute.xlu0 %4457
      %4459 = vrot.lane.b32.xlu0 %v4450, 32
      %v4460 = vpop.permute.xlu0 %4459
      %4461 = vrot.lane.b32.xlu0 %v4451, 32
      %v4462 = vpop.permute.xlu0 %4461
      %4463 = vrot.lane.b32.xlu0 %v4452, 32
      %v4464 = vpop.permute.xlu0 %4463
      %4465 = vrot.lane.b32.xlu0 %v4453, 32
      %v4466 = vpop.permute.xlu0 %4465
      %4467 = vrot.lane.b32.xlu0 %v4454, 32
      %v4468 = vpop.permute.xlu0 %4467
      %4469 = vrot.lane.b32.xlu0 %v4455, 32
      %v4470 = vpop.permute.xlu0 %4469
      %4471 = vrot.lane.b32.xlu0 %v4456, 32
      %v4472 = vpop.permute.xlu0 %4471
      %v4489 = vunpack.c.l.b16 %v4305
      %v4490 = vunpack.c.l.b16 %v4306
      %v4491 = vunpack.c.l.b16 %v4307
      %v4492 = vunpack.c.l.b16 %v4308
      %v4493 = vunpack.c.l.b16 %v4309
      %v4494 = vunpack.c.l.b16 %v4310
      %v4495 = vunpack.c.l.b16 %v4311
      %v4496 = vunpack.c.l.b16 %v4312
      %v4497 = vunpack.c.l.b16 %v4313
      %v4498 = vunpack.c.l.b16 %v4314
      %v4499 = vunpack.c.l.b16 %v4315
      %v4500 = vunpack.c.l.b16 %v4316
      %v4501 = vunpack.c.l.b16 %v4317
      %v4502 = vunpack.c.l.b16 %v4318
      %v4503 = vunpack.c.l.b16 %v4319
      %v4504 = vunpack.c.l.b16 %v4320
      %v4505 = vpack.c.b16 %v4426, %v4489
      %v4506 = vpack.c.b16 %v4490, %v4490
      %v4507 = vpack.c.b16 %v4428, %v4491
      %v4508 = vpack.c.b16 %v4492, %v4492
      %v4509 = vpack.c.b16 %v4430, %v4493
      %v4510 = vpack.c.b16 %v4494, %v4494
      %v4511 = vpack.c.b16 %v4432, %v4495
      %v4512 = vpack.c.b16 %v4496, %v4496
      %v4513 = vpack.c.b16 %v4434, %v4497
      %v4514 = vpack.c.b16 %v4498, %v4498
      %v4515 = vpack.c.b16 %v4436, %v4499
      %v4516 = vpack.c.b16 %v4500, %v4500
      %v4517 = vpack.c.b16 %v4438, %v4501
      %v4518 = vpack.c.b16 %v4502, %v4502
      %v4519 = vpack.c.b16 %v4440, %v4503
      %v4520 = vpack.c.b16 %v4504, %v4504
      %v4522 = vshrl.u32 %v4505, 16
      %v4524 = vrot.slane %v4522, 1
      %v4525 = vshll.u32 %v4505, 16
      %v4527 = vrot.slane %v4525, 2
      %v4528 = vor.u32 %v4524, %v4527
      %v4530 = vshrl.u32 %v4506, 16
      %v4532 = vrot.slane %v4530, 1
      %v4533 = vshll.u32 %v4506, 16
      %v4535 = vrot.slane %v4533, 2
      %v4536 = vor.u32 %v4532, %v4535
      %v4537 = vsel %vm3349, %v4528, %v4536
      %v4539 = vshrl.u32 %v4507, 16
      %v4541 = vrot.slane %v4539, 1
      %v4542 = vshll.u32 %v4507, 16
      %v4544 = vrot.slane %v4542, 2
      %v4545 = vor.u32 %v4541, %v4544
      %v4547 = vshrl.u32 %v4508, 16
      %v4549 = vrot.slane %v4547, 1
      %v4550 = vshll.u32 %v4508, 16
      %v4552 = vrot.slane %v4550, 2
      %v4553 = vor.u32 %v4549, %v4552
      %v4554 = vsel %vm3349, %v4545, %v4553
      %v4556 = vshrl.u32 %v4509, 16
      %v4558 = vrot.slane %v4556, 1
      %v4559 = vshll.u32 %v4509, 16
      %v4561 = vrot.slane %v4559, 2
      %v4562 = vor.u32 %v4558, %v4561
      %v4564 = vshrl.u32 %v4510, 16
      %v4566 = vrot.slane %v4564, 1
      %v4567 = vshll.u32 %v4510, 16
      %v4569 = vrot.slane %v4567, 2
      %v4570 = vor.u32 %v4566, %v4569
      %v4571 = vsel %vm3349, %v4562, %v4570
      %v4573 = vshrl.u32 %v4511, 16
      %v4575 = vrot.slane %v4573, 1
      %v4576 = vshll.u32 %v4511, 16
      %v4578 = vrot.slane %v4576, 2
      %v4579 = vor.u32 %v4575, %v4578
      %v4581 = vshrl.u32 %v4512, 16
      %v4583 = vrot.slane %v4581, 1
      %v4584 = vshll.u32 %v4512, 16
      %v4586 = vrot.slane %v4584, 2
      %v4587 = vor.u32 %v4583, %v4586
      %v4588 = vsel %vm3349, %v4579, %v4587
      %v4590 = vshrl.u32 %v4513, 16
      %v4592 = vrot.slane %v4590, 1
      %v4593 = vshll.u32 %v4513, 16
      %v4595 = vrot.slane %v4593, 2
      %v4596 = vor.u32 %v4592, %v4595
      %v4598 = vshrl.u32 %v4514, 16
      %v4600 = vrot.slane %v4598, 1
      %v4601 = vshll.u32 %v4514, 16
      %v4603 = vrot.slane %v4601, 2
      %v4604 = vor.u32 %v4600, %v4603
      %v4605 = vsel %vm3349, %v4596, %v4604
      %v4607 = vshrl.u32 %v4515, 16
      %v4609 = vrot.slane %v4607, 1
      %v4610 = vshll.u32 %v4515, 16
      %v4612 = vrot.slane %v4610, 2
      %v4613 = vor.u32 %v4609, %v4612
      %v4615 = vshrl.u32 %v4516, 16
      %v4617 = vrot.slane %v4615, 1
      %v4618 = vshll.u32 %v4516, 16
      %v4620 = vrot.slane %v4618, 2
      %v4621 = vor.u32 %v4617, %v4620
      %v4622 = vsel %vm3349, %v4613, %v4621
      %v4624 = vshrl.u32 %v4517, 16
      %v4626 = vrot.slane %v4624, 1
      %v4627 = vshll.u32 %v4517, 16
      %v4629 = vrot.slane %v4627, 2
      %v4630 = vor.u32 %v4626, %v4629
      %v4632 = vshrl.u32 %v4518, 16
      %v4634 = vrot.slane %v4632, 1
      %v4635 = vshll.u32 %v4518, 16
      %v4637 = vrot.slane %v4635, 2
      %v4638 = vor.u32 %v4634, %v4637
      %v4639 = vsel %vm3349, %v4630, %v4638
      %v4641 = vshrl.u32 %v4519, 16
      %v4643 = vrot.slane %v4641, 1
      %v4644 = vshll.u32 %v4519, 16
      %v4646 = vrot.slane %v4644, 2
      %v4647 = vor.u32 %v4643, %v4646
      %v4649 = vshrl.u32 %v4520, 16
      %v4651 = vrot.slane %v4649, 1
      %v4652 = vshll.u32 %v4520, 16
      %v4654 = vrot.slane %v4652, 2
      %v4655 = vor.u32 %v4651, %v4654
      %v4656 = vsel %vm3349, %v4647, %v4655
      %4657 = vrot.lane.b32.xlu0 %v4537, 64
      %v4658 = vpop.permute.xlu0 %4657
      %4659 = vrot.lane.b32.xlu0 %v4536, 64
      %v4660 = vpop.permute.xlu0 %4659
      %4661 = vrot.lane.b32.xlu0 %v4554, 64
      %v4662 = vpop.permute.xlu0 %4661
      %4663 = vrot.lane.b32.xlu0 %v4553, 64
      %v4664 = vpop.permute.xlu0 %4663
      %4665 = vrot.lane.b32.xlu0 %v4571, 64
      %v4666 = vpop.permute.xlu0 %4665
      %4667 = vrot.lane.b32.xlu0 %v4570, 64
      %v4668 = vpop.permute.xlu0 %4667
      %4669 = vrot.lane.b32.xlu0 %v4588, 64
      %v4670 = vpop.permute.xlu0 %4669
      %4671 = vrot.lane.b32.xlu0 %v4587, 64
      %v4672 = vpop.permute.xlu0 %4671
      %4673 = vrot.lane.b32.xlu0 %v4605, 64
      %v4674 = vpop.permute.xlu0 %4673
      %4675 = vrot.lane.b32.xlu0 %v4604, 64
      %v4676 = vpop.permute.xlu0 %4675
      %4677 = vrot.lane.b32.xlu0 %v4622, 64
      %v4678 = vpop.permute.xlu0 %4677
      %4679 = vrot.lane.b32.xlu0 %v4621, 64
      %v4680 = vpop.permute.xlu0 %4679
      %4681 = vrot.lane.b32.xlu0 %v4639, 64
      %v4682 = vpop.permute.xlu0 %4681
      %4683 = vrot.lane.b32.xlu0 %v4638, 64
      %v4684 = vpop.permute.xlu0 %4683
      %4685 = vrot.lane.b32.xlu0 %v4656, 64
      %v4686 = vpop.permute.xlu0 %4685
      %4687 = vrot.lane.b32.xlu0 %v4655, 64
      %v4688 = vpop.permute.xlu0 %4687
      %v4713 = vunpack.c.l.b16 %v4321
      %v4714 = vunpack.c.l.b16 %v4322
      %v4715 = vunpack.c.l.b16 %v4323
      %v4716 = vunpack.c.l.b16 %v4324
      %v4717 = vunpack.c.l.b16 %v4325
      %v4718 = vunpack.c.l.b16 %v4326
      %v4719 = vunpack.c.l.b16 %v4327
      %v4720 = vunpack.c.l.b16 %v4328
      %v4721 = vunpack.c.l.b16 %v4329
      %v4722 = vunpack.c.l.b16 %v4330
      %v4723 = vunpack.c.l.b16 %v4331
      %v4724 = vunpack.c.l.b16 %v4332
      %v4725 = vunpack.c.l.b16 %v4333
      %v4726 = vunpack.c.l.b16 %v4334
      %v4727 = vunpack.c.l.b16 %v4335
      %v4728 = vunpack.c.l.b16 %v4336
      %v4729 = vunpack.c.l.b16 %v4337
      %v4730 = vunpack.c.l.b16 %v4338
      %v4731 = vunpack.c.l.b16 %v4339
      %v4732 = vunpack.c.l.b16 %v4340
      %v4733 = vunpack.c.l.b16 %v4341
      %v4734 = vunpack.c.l.b16 %v4342
      %v4735 = vunpack.c.l.b16 %v4343
      %v4736 = vunpack.c.l.b16 %v4344
      %v4737 = vpack.c.b16 %v4714, %v4713
      %v4738 = vpack.c.b16 %v4715, %v4715
      %v4739 = vpack.c.b16 %v4717, %v4716
      %v4740 = vpack.c.b16 %v4718, %v4718
      %v4741 = vpack.c.b16 %v4720, %v4719
      %v4742 = vpack.c.b16 %v4721, %v4721
      %v4743 = vpack.c.b16 %v4723, %v4722
      %v4744 = vpack.c.b16 %v4724, %v4724
      %v4745 = vpack.c.b16 %v4726, %v4725
      %v4746 = vpack.c.b16 %v4727, %v4727
      %v4747 = vpack.c.b16 %v4729, %v4728
      %v4748 = vpack.c.b16 %v4730, %v4730
      %v4749 = vpack.c.b16 %v4732, %v4731
      %v4750 = vpack.c.b16 %v4733, %v4733
      %v4751 = vpack.c.b16 %v4735, %v4734
      %v4752 = vpack.c.b16 %v4736, %v4736
      %4753 = vrot.lane.b32.xlu0 %v4737, 96
      %v4754 = vpop.permute.xlu0 %4753
      %4755 = vrot.lane.b32.xlu0 %v4738, 96
      %v4756 = vpop.permute.xlu0 %4755
      %4757 = vrot.lane.b32.xlu0 %v4739, 96
      %v4758 = vpop.permute.xlu0 %4757
      %4759 = vrot.lane.b32.xlu0 %v4740, 96
      %v4760 = vpop.permute.xlu0 %4759
      %4761 = vrot.lane.b32.xlu0 %v4741, 96
      %v4762 = vpop.permute.xlu0 %4761
      %4763 = vrot.lane.b32.xlu0 %v4742, 96
      %v4764 = vpop.permute.xlu0 %4763
      %4765 = vrot.lane.b32.xlu0 %v4743, 96
      %v4766 = vpop.permute.xlu0 %4765
      %4767 = vrot.lane.b32.xlu0 %v4744, 96
      %v4768 = vpop.permute.xlu0 %4767
      %4769 = vrot.lane.b32.xlu0 %v4745, 96
      %v4770 = vpop.permute.xlu0 %4769
      %4771 = vrot.lane.b32.xlu0 %v4746, 96
      %v4772 = vpop.permute.xlu0 %4771
      %4773 = vrot.lane.b32.xlu0 %v4747, 96
      %v4774 = vpop.permute.xlu0 %4773
      %4775 = vrot.lane.b32.xlu0 %v4748, 96
      %v4776 = vpop.permute.xlu0 %4775
      %4777 = vrot.lane.b32.xlu0 %v4749, 96
      %v4778 = vpop.permute.xlu0 %4777
      %4779 = vrot.lane.b32.xlu0 %v4750, 96
      %v4780 = vpop.permute.xlu0 %4779
      %4781 = vrot.lane.b32.xlu0 %v4751, 96
      %v4782 = vpop.permute.xlu0 %4781
      %4783 = vrot.lane.b32.xlu0 %v4752, 96
      %v4784 = vpop.permute.xlu0 %4783
      %v4787 = vsel %vm705, %v4393, %v4458
      %v4789 = vsel %vm705, %v4394, %v4458
      %v4792 = vsel %vm705, %v4395, %v4460
      %v4794 = vsel %vm705, %v4396, %v4460
      %v4797 = vsel %vm705, %v4397, %v4462
      %v4799 = vsel %vm705, %v4398, %v4462
      %v4802 = vsel %vm705, %v4399, %v4464
      %v4804 = vsel %vm705, %v4400, %v4464
      %v4807 = vsel %vm705, %v4401, %v4466
      %v4809 = vsel %vm705, %v4402, %v4466
      %v4812 = vsel %vm705, %v4403, %v4468
      %v4814 = vsel %vm705, %v4404, %v4468
      %v4817 = vsel %vm705, %v4405, %v4470
      %v4819 = vsel %vm705, %v4406, %v4470
      %v4822 = vsel %vm705, %v4407, %v4472
      %v4824 = vsel %vm705, %v4408, %v4472
      %v4826 = vsel %vm746, %v4787, %v4658
      %v4828 = vsel %vm746, %v4789, %v4660
      %v4830 = vsel %vm746, %v4792, %v4662
      %v4832 = vsel %vm746, %v4794, %v4664
      %v4834 = vsel %vm746, %v4797, %v4666
      %v4836 = vsel %vm746, %v4799, %v4668
      %v4838 = vsel %vm746, %v4802, %v4670
      %v4840 = vsel %vm746, %v4804, %v4672
      %v4842 = vsel %vm746, %v4807, %v4674
      %v4844 = vsel %vm746, %v4809, %v4676
      %v4846 = vsel %vm746, %v4812, %v4678
      %v4848 = vsel %vm746, %v4814, %v4680
      %v4850 = vsel %vm746, %v4817, %v4682
      %v4852 = vsel %vm746, %v4819, %v4684
      %v4854 = vsel %vm746, %v4822, %v4686
      %v4856 = vsel %vm746, %v4824, %v4688
      %v4858 = vsel %vm779, %v4826, %v4754
      %v4860 = vsel %vm779, %v4828, %v4756
      %v4862 = vsel %vm779, %v4830, %v4758
      %v4864 = vsel %vm779, %v4832, %v4760
      %v4866 = vsel %vm779, %v4834, %v4762
      %v4868 = vsel %vm779, %v4836, %v4764
      %v4870 = vsel %vm779, %v4838, %v4766
      %v4872 = vsel %vm779, %v4840, %v4768
      %v4874 = vsel %vm779, %v4842, %v4770
      %v4876 = vsel %vm779, %v4844, %v4772
      %v4878 = vsel %vm779, %v4846, %v4774
      %v4880 = vsel %vm779, %v4848, %v4776
      %v4882 = vsel %vm779, %v4850, %v4778
      %v4884 = vsel %vm779, %v4852, %v4780
      %v4886 = vsel %vm779, %v4854, %v4782
      %v4888 = vsel %vm779, %v4856, %v4784
      %v4905 = vrot.slane %v4858, 1
      %v4906 = vrot.slane %v4860, 1
      %v4907 = vsel %vm552, %v4905, %v4906
      %v4908 = vrot.slane %v4862, 1
      %v4909 = vrot.slane %v4864, 1
      %v4910 = vsel %vm552, %v4908, %v4909
      %v4911 = vrot.slane %v4866, 1
      %v4912 = vrot.slane %v4868, 1
      %v4913 = vsel %vm552, %v4911, %v4912
      %v4914 = vrot.slane %v4870, 1
      %v4915 = vrot.slane %v4872, 1
      %v4916 = vsel %vm552, %v4914, %v4915
      %v4917 = vrot.slane %v4874, 1
      %v4918 = vrot.slane %v4876, 1
      %v4919 = vsel %vm552, %v4917, %v4918
      %v4920 = vrot.slane %v4878, 1
      %v4921 = vrot.slane %v4880, 1
      %v4922 = vsel %vm552, %v4920, %v4921
      %v4923 = vrot.slane %v4882, 1
      %v4924 = vrot.slane %v4884, 1
      %v4925 = vsel %vm552, %v4923, %v4924
      %v4926 = vrot.slane %v4886, 1
      %v4927 = vrot.slane %v4888, 1
      %v4928 = vsel %vm552, %v4926, %v4927
      %v4929 = vunpack.c.l.b16 %v4907
      %v4930 = vunpack.c.h.b16 %v4907
      %v4931 = vunpack.c.l.b16 %v4910
      %v4932 = vunpack.c.h.b16 %v4910
      %v4933 = vunpack.c.l.b16 %v4913
      %v4934 = vunpack.c.h.b16 %v4913
      %v4935 = vunpack.c.l.b16 %v4916
      %v4936 = vunpack.c.h.b16 %v4916
      %v4937 = vunpack.c.l.b16 %v4919
      %v4938 = vunpack.c.h.b16 %v4919
      %v4939 = vunpack.c.l.b16 %v4922
      %v4940 = vunpack.c.h.b16 %v4922
      %v4941 = vunpack.c.l.b16 %v4925
      %v4942 = vunpack.c.h.b16 %v4925
      %v4943 = vunpack.c.l.b16 %v4928
      %v4944 = vunpack.c.h.b16 %v4928
      %v4945 = vpack.c.b16 %v4929, %v4929
      %v4946 = vpack.c.b16 %v4930, %v4930
      %v4947 = vpack.c.b16 %v4931, %v4931
      %v4948 = vpack.c.b16 %v4932, %v4932
      %v4949 = vpack.c.b16 %v4933, %v4933
      %v4950 = vpack.c.b16 %v4934, %v4934
      %v4951 = vpack.c.b16 %v4935, %v4935
      %v4952 = vpack.c.b16 %v4936, %v4936
      %v4953 = vpack.c.b16 %v4937, %v4937
      %v4954 = vpack.c.b16 %v4938, %v4938
      %v4955 = vpack.c.b16 %v4939, %v4939
      %v4956 = vpack.c.b16 %v4940, %v4940
      %v4957 = vpack.c.b16 %v4941, %v4941
      %v4958 = vpack.c.b16 %v4942, %v4942
      %v4959 = vpack.c.b16 %v4943, %v4943
      %v4960 = vpack.c.b16 %v4944, %v4944
      %4977 = vst [vmem:[#allocation2 + $0x14] sm:$0xf] %v4945
      %4978 = vst [vmem:[#allocation2 + $0x30] sm:$0xf] %v4946
      %4979 = vst [vmem:[#allocation2 + $0x4c] sm:$0xf] %v4947
      %4980 = vst [vmem:[#allocation2 + $0x68] sm:$0xf] %v4948
      %4981 = vst [vmem:[#allocation2 + $0x84] sm:$0xf] %v4949
      %4982 = vst [vmem:[#allocation2 + $0xa0] sm:$0xf] %v4950
      %4983 = vst [vmem:[#allocation2 + $0xbc] sm:$0xf] %v4951
      %4984 = vst [vmem:[#allocation2 + $0xd8] sm:$0xf] %v4952
      %4985 = vst [vmem:[#allocation2 + $0xf4] sm:$0xf] %v4953
      %4986 = vst [vmem:[#allocation2 + $0x110] sm:$0xf] %v4954
      %4987 = vst [vmem:[#allocation2 + $0x12c] sm:$0xf] %v4955
      %4988 = vst [vmem:[#allocation2 + $0x148] sm:$0xf] %v4956
      %4989 = vst [vmem:[#allocation2 + $0x164] sm:$0xf] %v4957
      %4990 = vst [vmem:[#allocation2 + $0x180] sm:$0xf] %v4958
      %4991 = vst [vmem:[#allocation2 + $0x19c] sm:$0xf] %v4959
      %4992 = vst [vmem:[#allocation2 + $0x1b8] sm:$0xf] %v4960
      %s4993 = sadd.s32 %s214, 10
      %s4994 = smul.u32 %s4993, 4
      %s4995 = smul.addr %s4994, 4
      %s4996 = scalar_lea.vmem %s195, %s4995
      %v4997 = vld [vmem:[%s4996] sm:$0xf]
      %v4998 = vld [vmem:[%s4996 + $0x4] sm:$0xf]
      %v4999 = vld [vmem:[%s4996 + $0x10] sm:$0xf]
      %v5000 = vld [vmem:[%s4996 + $0x14] sm:$0xf]
      %v5001 = vld [vmem:[%s4996 + $0x20] sm:$0xf]
      %v5002 = vld [vmem:[%s4996 + $0x24] sm:$0xf]
      %v5003 = vld [vmem:[%s4996 + $0x30] sm:$0xf]
      %v5004 = vld [vmem:[%s4996 + $0x34] sm:$0xf]
      %v5005 = vld [vmem:[%s4996 + $0x40] sm:$0xf]
      %v5006 = vld [vmem:[%s4996 + $0x44] sm:$0xf]
      %v5007 = vld [vmem:[%s4996 + $0x50] sm:$0xf]
      %v5008 = vld [vmem:[%s4996 + $0x54] sm:$0xf]
      %v5009 = vld [vmem:[%s4996 + $0x60] sm:$0xf]
      %v5010 = vld [vmem:[%s4996 + $0x64] sm:$0xf]
      %v5011 = vld [vmem:[%s4996 + $0x70] sm:$0xf]
      %v5012 = vld [vmem:[%s4996 + $0x74] sm:$0xf]
      %v5013 = vld [vmem:[%s4996] sm:$0xc]
      %v5014 = vld [vmem:[%s4996 + $0x8] sm:$0x7]
      %v5015 = vld [vmem:[%s4996 + $0x10] sm:$0xc]
      %v5016 = vld [vmem:[%s4996 + $0x18] sm:$0x7]
      %v5017 = vld [vmem:[%s4996 + $0x20] sm:$0xc]
      %v5018 = vld [vmem:[%s4996 + $0x28] sm:$0x7]
      %v5019 = vld [vmem:[%s4996 + $0x30] sm:$0xc]
      %v5020 = vld [vmem:[%s4996 + $0x38] sm:$0x7]
      %v5021 = vld [vmem:[%s4996 + $0x40] sm:$0xc]
      %v5022 = vld [vmem:[%s4996 + $0x48] sm:$0x7]
      %v5023 = vld [vmem:[%s4996 + $0x50] sm:$0xc]
      %v5024 = vld [vmem:[%s4996 + $0x58] sm:$0x7]
      %v5025 = vld [vmem:[%s4996 + $0x60] sm:$0xc]
      %v5026 = vld [vmem:[%s4996 + $0x68] sm:$0x7]
      %v5027 = vld [vmem:[%s4996 + $0x70] sm:$0xc]
      %v5028 = vld [vmem:[%s4996 + $0x78] sm:$0x7]
      %v5029 = vld [vmem:[%s4996 + $0x4] sm:$0xe]
      %v5030 = vld [vmem:[%s4996 + $0x8] sm:$0xf]
      %v5031 = vld [vmem:[%s4996 + $0xc] sm:$0x1]
      %v5032 = vld [vmem:[%s4996 + $0x14] sm:$0xe]
      %v5033 = vld [vmem:[%s4996 + $0x18] sm:$0xf]
      %v5034 = vld [vmem:[%s4996 + $0x1c] sm:$0x1]
      %v5035 = vld [vmem:[%s4996 + $0x24] sm:$0xe]
      %v5036 = vld [vmem:[%s4996 + $0x28] sm:$0xf]
      %v5037 = vld [vmem:[%s4996 + $0x2c] sm:$0x1]
      %v5038 = vld [vmem:[%s4996 + $0x34] sm:$0xe]
      %v5039 = vld [vmem:[%s4996 + $0x38] sm:$0xf]
      %v5040 = vld [vmem:[%s4996 + $0x3c] sm:$0x1]
      %v5041 = vld [vmem:[%s4996 + $0x44] sm:$0xe]
      %v5042 = vld [vmem:[%s4996 + $0x48] sm:$0xf]
      %v5043 = vld [vmem:[%s4996 + $0x4c] sm:$0x1]
      %v5044 = vld [vmem:[%s4996 + $0x54] sm:$0xe]
      %v5045 = vld [vmem:[%s4996 + $0x58] sm:$0xf]
      %v5046 = vld [vmem:[%s4996 + $0x5c] sm:$0x1]
      %v5047 = vld [vmem:[%s4996 + $0x64] sm:$0xe]
      %v5048 = vld [vmem:[%s4996 + $0x68] sm:$0xf]
      %v5049 = vld [vmem:[%s4996 + $0x6c] sm:$0x1]
      %v5050 = vld [vmem:[%s4996 + $0x74] sm:$0xe]
      %v5051 = vld [vmem:[%s4996 + $0x78] sm:$0xf]
      %v5052 = vld [vmem:[%s4996 + $0x7c] sm:$0x1]
      %v5069 = vunpack.c.l.b16 %v4997
      %v5070 = vunpack.c.l.b16 %v4998
      %v5071 = vunpack.c.l.b16 %v4999
      %v5072 = vunpack.c.l.b16 %v5000
      %v5073 = vunpack.c.l.b16 %v5001
      %v5074 = vunpack.c.l.b16 %v5002
      %v5075 = vunpack.c.l.b16 %v5003
      %v5076 = vunpack.c.l.b16 %v5004
      %v5077 = vunpack.c.l.b16 %v5005
      %v5078 = vunpack.c.l.b16 %v5006
      %v5079 = vunpack.c.l.b16 %v5007
      %v5080 = vunpack.c.l.b16 %v5008
      %v5081 = vunpack.c.l.b16 %v5009
      %v5082 = vunpack.c.l.b16 %v5010
      %v5083 = vunpack.c.l.b16 %v5011
      %v5084 = vunpack.c.l.b16 %v5012
      %v5085 = vpack.c.b16 %v5070, %v5069
      %v5086 = vpack.c.b16 %v5072, %v5071
      %v5087 = vpack.c.b16 %v5074, %v5073
      %v5088 = vpack.c.b16 %v5076, %v5075
      %v5089 = vpack.c.b16 %v5078, %v5077
      %v5090 = vpack.c.b16 %v5080, %v5079
      %v5091 = vpack.c.b16 %v5082, %v5081
      %v5092 = vpack.c.b16 %v5084, %v5083
      %v5109 = vunpack.c.l.b16 %v5013
      %v5110 = vunpack.c.l.b16 %v5014
      %v5111 = vunpack.c.l.b16 %v5015
      %v5112 = vunpack.c.l.b16 %v5016
      %v5113 = vunpack.c.l.b16 %v5017
      %v5114 = vunpack.c.l.b16 %v5018
      %v5115 = vunpack.c.l.b16 %v5019
      %v5116 = vunpack.c.l.b16 %v5020
      %v5117 = vunpack.c.l.b16 %v5021
      %v5118 = vunpack.c.l.b16 %v5022
      %v5119 = vunpack.c.l.b16 %v5023
      %v5120 = vunpack.c.l.b16 %v5024
      %v5121 = vunpack.c.l.b16 %v5025
      %v5122 = vunpack.c.l.b16 %v5026
      %v5123 = vunpack.c.l.b16 %v5027
      %v5124 = vunpack.c.l.b16 %v5028
      %v5125 = vpack.c.b16 %v5070, %v5109
      %v5126 = vpack.c.b16 %v5110, %v5110
      %v5127 = vpack.c.b16 %v5072, %v5111
      %v5128 = vpack.c.b16 %v5112, %v5112
      %v5129 = vpack.c.b16 %v5074, %v5113
      %v5130 = vpack.c.b16 %v5114, %v5114
      %v5131 = vpack.c.b16 %v5076, %v5115
      %v5132 = vpack.c.b16 %v5116, %v5116
      %v5133 = vpack.c.b16 %v5078, %v5117
      %v5134 = vpack.c.b16 %v5118, %v5118
      %v5135 = vpack.c.b16 %v5080, %v5119
      %v5136 = vpack.c.b16 %v5120, %v5120
      %v5137 = vpack.c.b16 %v5082, %v5121
      %v5138 = vpack.c.b16 %v5122, %v5122
      %v5139 = vpack.c.b16 %v5084, %v5123
      %v5140 = vpack.c.b16 %v5124, %v5124
      %v5142 = vshrl.u32 %v5125, 16
      %v5144 = vrot.slane %v5142, 2
      %v5145 = vshll.u32 %v5125, 16
      %v5147 = vrot.slane %v5145, 3
      %v5148 = vor.u32 %v5144, %v5147
      %v5150 = vshrl.u32 %v5126, 16
      %v5152 = vrot.slane %v5150, 2
      %v5153 = vshll.u32 %v5126, 16
      %v5155 = vrot.slane %v5153, 3
      %v5156 = vor.u32 %v5152, %v5155
      %v5157 = vsel %vm1602, %v5148, %v5156
      %v5159 = vshrl.u32 %v5127, 16
      %v5161 = vrot.slane %v5159, 2
      %v5162 = vshll.u32 %v5127, 16
      %v5164 = vrot.slane %v5162, 3
      %v5165 = vor.u32 %v5161, %v5164
      %v5167 = vshrl.u32 %v5128, 16
      %v5169 = vrot.slane %v5167, 2
      %v5170 = vshll.u32 %v5128, 16
      %v5172 = vrot.slane %v5170, 3
      %v5173 = vor.u32 %v5169, %v5172
      %v5174 = vsel %vm1602, %v5165, %v5173
      %v5176 = vshrl.u32 %v5129, 16
      %v5178 = vrot.slane %v5176, 2
      %v5179 = vshll.u32 %v5129, 16
      %v5181 = vrot.slane %v5179, 3
      %v5182 = vor.u32 %v5178, %v5181
      %v5184 = vshrl.u32 %v5130, 16
      %v5186 = vrot.slane %v5184, 2
      %v5187 = vshll.u32 %v5130, 16
      %v5189 = vrot.slane %v5187, 3
      %v5190 = vor.u32 %v5186, %v5189
      %v5191 = vsel %vm1602, %v5182, %v5190
      %v5193 = vshrl.u32 %v5131, 16
      %v5195 = vrot.slane %v5193, 2
      %v5196 = vshll.u32 %v5131, 16
      %v5198 = vrot.slane %v5196, 3
      %v5199 = vor.u32 %v5195, %v5198
      %v5201 = vshrl.u32 %v5132, 16
      %v5203 = vrot.slane %v5201, 2
      %v5204 = vshll.u32 %v5132, 16
      %v5206 = vrot.slane %v5204, 3
      %v5207 = vor.u32 %v5203, %v5206
      %v5208 = vsel %vm1602, %v5199, %v5207
      %v5210 = vshrl.u32 %v5133, 16
      %v5212 = vrot.slane %v5210, 2
      %v5213 = vshll.u32 %v5133, 16
      %v5215 = vrot.slane %v5213, 3
      %v5216 = vor.u32 %v5212, %v5215
      %v5218 = vshrl.u32 %v5134, 16
      %v5220 = vrot.slane %v5218, 2
      %v5221 = vshll.u32 %v5134, 16
      %v5223 = vrot.slane %v5221, 3
      %v5224 = vor.u32 %v5220, %v5223
      %v5225 = vsel %vm1602, %v5216, %v5224
      %v5227 = vshrl.u32 %v5135, 16
      %v5229 = vrot.slane %v5227, 2
      %v5230 = vshll.u32 %v5135, 16
      %v5232 = vrot.slane %v5230, 3
      %v5233 = vor.u32 %v5229, %v5232
      %v5235 = vshrl.u32 %v5136, 16
      %v5237 = vrot.slane %v5235, 2
      %v5238 = vshll.u32 %v5136, 16
      %v5240 = vrot.slane %v5238, 3
      %v5241 = vor.u32 %v5237, %v5240
      %v5242 = vsel %vm1602, %v5233, %v5241
      %v5244 = vshrl.u32 %v5137, 16
      %v5246 = vrot.slane %v5244, 2
      %v5247 = vshll.u32 %v5137, 16
      %v5249 = vrot.slane %v5247, 3
      %v5250 = vor.u32 %v5246, %v5249
      %v5252 = vshrl.u32 %v5138, 16
      %v5254 = vrot.slane %v5252, 2
      %v5255 = vshll.u32 %v5138, 16
      %v5257 = vrot.slane %v5255, 3
      %v5258 = vor.u32 %v5254, %v5257
      %v5259 = vsel %vm1602, %v5250, %v5258
      %v5261 = vshrl.u32 %v5139, 16
      %v5263 = vrot.slane %v5261, 2
      %v5264 = vshll.u32 %v5139, 16
      %v5266 = vrot.slane %v5264, 3
      %v5267 = vor.u32 %v5263, %v5266
      %v5269 = vshrl.u32 %v5140, 16
      %v5271 = vrot.slane %v5269, 2
      %v5272 = vshll.u32 %v5140, 16
      %v5274 = vrot.slane %v5272, 3
      %v5275 = vor.u32 %v5271, %v5274
      %v5276 = vsel %vm1602, %v5267, %v5275
      %5277 = vrot.lane.b32.xlu0 %v5157, 32
      %v5278 = vpop.permute.xlu0 %5277
      %5279 = vrot.lane.b32.xlu0 %v5174, 32
      %v5280 = vpop.permute.xlu0 %5279
      %5281 = vrot.lane.b32.xlu0 %v5191, 32
      %v5282 = vpop.permute.xlu0 %5281
      %5283 = vrot.lane.b32.xlu0 %v5208, 32
      %v5284 = vpop.permute.xlu0 %5283
      %5285 = vrot.lane.b32.xlu0 %v5225, 32
      %v5286 = vpop.permute.xlu0 %5285
      %5287 = vrot.lane.b32.xlu0 %v5242, 32
      %v5288 = vpop.permute.xlu0 %5287
      %5289 = vrot.lane.b32.xlu0 %v5259, 32
      %v5290 = vpop.permute.xlu0 %5289
      %5291 = vrot.lane.b32.xlu0 %v5276, 32
      %v5292 = vpop.permute.xlu0 %5291
      %v5317 = vunpack.c.l.b16 %v5029
      %v5318 = vunpack.c.l.b16 %v5030
      %v5319 = vunpack.c.l.b16 %v5031
      %v5320 = vunpack.c.l.b16 %v5032
      %v5321 = vunpack.c.l.b16 %v5033
      %v5322 = vunpack.c.l.b16 %v5034
      %v5323 = vunpack.c.l.b16 %v5035
      %v5324 = vunpack.c.l.b16 %v5036
      %v5325 = vunpack.c.l.b16 %v5037
      %v5326 = vunpack.c.l.b16 %v5038
      %v5327 = vunpack.c.l.b16 %v5039
      %v5328 = vunpack.c.l.b16 %v5040
      %v5329 = vunpack.c.l.b16 %v5041
      %v5330 = vunpack.c.l.b16 %v5042
      %v5331 = vunpack.c.l.b16 %v5043
      %v5332 = vunpack.c.l.b16 %v5044
      %v5333 = vunpack.c.l.b16 %v5045
      %v5334 = vunpack.c.l.b16 %v5046
      %v5335 = vunpack.c.l.b16 %v5047
      %v5336 = vunpack.c.l.b16 %v5048
      %v5337 = vunpack.c.l.b16 %v5049
      %v5338 = vunpack.c.l.b16 %v5050
      %v5339 = vunpack.c.l.b16 %v5051
      %v5340 = vunpack.c.l.b16 %v5052
      %v5341 = vpack.c.b16 %v5318, %v5317
      %v5342 = vpack.c.b16 %v5319, %v5319
      %v5343 = vpack.c.b16 %v5321, %v5320
      %v5344 = vpack.c.b16 %v5322, %v5322
      %v5345 = vpack.c.b16 %v5324, %v5323
      %v5346 = vpack.c.b16 %v5325, %v5325
      %v5347 = vpack.c.b16 %v5327, %v5326
      %v5348 = vpack.c.b16 %v5328, %v5328
      %v5349 = vpack.c.b16 %v5330, %v5329
      %v5350 = vpack.c.b16 %v5331, %v5331
      %v5351 = vpack.c.b16 %v5333, %v5332
      %v5352 = vpack.c.b16 %v5334, %v5334
      %v5353 = vpack.c.b16 %v5336, %v5335
      %v5354 = vpack.c.b16 %v5337, %v5337
      %v5355 = vpack.c.b16 %v5339, %v5338
      %v5356 = vpack.c.b16 %v5340, %v5340
      %v5357 = vrot.slane %v5341, 1
      %v5358 = vrot.slane %v5342, 1
      %v5359 = vsel %vm552, %v5357, %v5358
      %v5360 = vrot.slane %v5343, 1
      %v5361 = vrot.slane %v5344, 1
      %v5362 = vsel %vm552, %v5360, %v5361
      %v5363 = vrot.slane %v5345, 1
      %v5364 = vrot.slane %v5346, 1
      %v5365 = vsel %vm552, %v5363, %v5364
      %v5366 = vrot.slane %v5347, 1
      %v5367 = vrot.slane %v5348, 1
      %v5368 = vsel %vm552, %v5366, %v5367
      %v5369 = vrot.slane %v5349, 1
      %v5370 = vrot.slane %v5350, 1
      %v5371 = vsel %vm552, %v5369, %v5370
      %v5372 = vrot.slane %v5351, 1
      %v5373 = vrot.slane %v5352, 1
      %v5374 = vsel %vm552, %v5372, %v5373
      %v5375 = vrot.slane %v5353, 1
      %v5376 = vrot.slane %v5354, 1
      %v5377 = vsel %vm552, %v5375, %v5376
      %v5378 = vrot.slane %v5355, 1
      %v5379 = vrot.slane %v5356, 1
      %v5380 = vsel %vm552, %v5378, %v5379
      %5381 = vrot.lane.b32.xlu0 %v5359, 64
      %v5382 = vpop.permute.xlu0 %5381
      %5383 = vrot.lane.b32.xlu0 %v5362, 64
      %v5384 = vpop.permute.xlu0 %5383
      %5385 = vrot.lane.b32.xlu0 %v5365, 64
      %v5386 = vpop.permute.xlu0 %5385
      %5387 = vrot.lane.b32.xlu0 %v5368, 64
      %v5388 = vpop.permute.xlu0 %5387
      %5389 = vrot.lane.b32.xlu0 %v5371, 64
      %v5390 = vpop.permute.xlu0 %5389
      %5391 = vrot.lane.b32.xlu0 %v5374, 64
      %v5392 = vpop.permute.xlu0 %5391
      %5393 = vrot.lane.b32.xlu0 %v5377, 64
      %v5394 = vpop.permute.xlu0 %5393
      %5395 = vrot.lane.b32.xlu0 %v5380, 64
      %v5396 = vpop.permute.xlu0 %5395
      %v5399 = vsel %vm705, %v5085, %v5278
      %v5402 = vsel %vm705, %v5086, %v5280
      %v5405 = vsel %vm705, %v5087, %v5282
      %v5408 = vsel %vm705, %v5088, %v5284
      %v5411 = vsel %vm705, %v5089, %v5286
      %v5414 = vsel %vm705, %v5090, %v5288
      %v5417 = vsel %vm705, %v5091, %v5290
      %v5420 = vsel %vm705, %v5092, %v5292
      %v5422 = vsel %vm746, %v5399, %v5382
      %v5424 = vsel %vm746, %v5402, %v5384
      %v5426 = vsel %vm746, %v5405, %v5386
      %v5428 = vsel %vm746, %v5408, %v5388
      %v5430 = vsel %vm746, %v5411, %v5390
      %v5432 = vsel %vm746, %v5414, %v5392
      %v5434 = vsel %vm746, %v5417, %v5394
      %v5436 = vsel %vm746, %v5420, %v5396
      %v5438 = vsel %vm779, %v5422, 0
      %v5439 = vsel %vm779, %v5424, 0
      %v5440 = vsel %vm779, %v5426, 0
      %v5441 = vsel %vm779, %v5428, 0
      %v5442 = vsel %vm779, %v5430, 0
      %v5443 = vsel %vm779, %v5432, 0
      %v5444 = vsel %vm779, %v5434, 0
      %v5445 = vsel %vm779, %v5436, 0
      %v5454 = vunpack.c.l.b16 %v5438
      %v5455 = vunpack.c.h.b16 %v5438
      %v5456 = vunpack.c.l.b16 %v5439
      %v5457 = vunpack.c.h.b16 %v5439
      %v5458 = vunpack.c.l.b16 %v5440
      %v5459 = vunpack.c.h.b16 %v5440
      %v5460 = vunpack.c.l.b16 %v5441
      %v5461 = vunpack.c.h.b16 %v5441
      %v5462 = vunpack.c.l.b16 %v5442
      %v5463 = vunpack.c.h.b16 %v5442
      %v5464 = vunpack.c.l.b16 %v5443
      %v5465 = vunpack.c.h.b16 %v5443
      %v5466 = vunpack.c.l.b16 %v5444
      %v5467 = vunpack.c.h.b16 %v5444
      %v5468 = vunpack.c.l.b16 %v5445
      %v5469 = vunpack.c.h.b16 %v5445
      %v5470 = vpack.c.b16 %v5454, %v5454
      %v5471 = vpack.c.b16 %v5455, %v5455
      %v5472 = vpack.c.b16 %v5456, %v5456
      %v5473 = vpack.c.b16 %v5457, %v5457
      %v5474 = vpack.c.b16 %v5458, %v5458
      %v5475 = vpack.c.b16 %v5459, %v5459
      %v5476 = vpack.c.b16 %v5460, %v5460
      %v5477 = vpack.c.b16 %v5461, %v5461
      %v5478 = vpack.c.b16 %v5462, %v5462
      %v5479 = vpack.c.b16 %v5463, %v5463
      %v5480 = vpack.c.b16 %v5464, %v5464
      %v5481 = vpack.c.b16 %v5465, %v5465
      %v5482 = vpack.c.b16 %v5466, %v5466
      %v5483 = vpack.c.b16 %v5467, %v5467
      %v5484 = vpack.c.b16 %v5468, %v5468
      %v5485 = vpack.c.b16 %v5469, %v5469
      %5502 = vst [vmem:[#allocation2 + $0x18] sm:$0xf] %v5470
      %5503 = vst [vmem:[#allocation2 + $0x34] sm:$0xf] %v5471
      %5504 = vst [vmem:[#allocation2 + $0x50] sm:$0xf] %v5472
      %5505 = vst [vmem:[#allocation2 + $0x6c] sm:$0xf] %v5473
      %5506 = vst [vmem:[#allocation2 + $0x88] sm:$0xf] %v5474
      %5507 = vst [vmem:[#allocation2 + $0xa4] sm:$0xf] %v5475
      %5508 = vst [vmem:[#allocation2 + $0xc0] sm:$0xf] %v5476
      %5509 = vst [vmem:[#allocation2 + $0xdc] sm:$0xf] %v5477
      %5510 = vst [vmem:[#allocation2 + $0xf8] sm:$0xf] %v5478
      %5511 = vst [vmem:[#allocation2 + $0x114] sm:$0xf] %v5479
      %5512 = vst [vmem:[#allocation2 + $0x130] sm:$0xf] %v5480
      %5513 = vst [vmem:[#allocation2 + $0x14c] sm:$0xf] %v5481
      %5514 = vst [vmem:[#allocation2 + $0x168] sm:$0xf] %v5482
      %5515 = vst [vmem:[#allocation2 + $0x184] sm:$0xf] %v5483
      %5516 = vst [vmem:[#allocation2 + $0x1a0] sm:$0xf] %v5484
      %5517 = vst [vmem:[#allocation2 + $0x1bc] sm:$0xf] %v5485
      %v5518 = vld [vmem:[#allocation2] sm:$0xff]
      %v5519 = vld [vmem:[#allocation2 + $0x8] sm:$0xff]
      %v5520 = vld [vmem:[#allocation2 + $0x10] sm:$0xff]
      %v5521 = vld [vmem:[#allocation2 + $0x18] sm:$0xf]
      %v5522 = vld [vmem:[#allocation2 + $0x1c] sm:$0xff]
      %v5523 = vld [vmem:[#allocation2 + $0x24] sm:$0xff]
      %v5524 = vld [vmem:[#allocation2 + $0x2c] sm:$0xff]
      %v5525 = vld [vmem:[#allocation2 + $0x34] sm:$0xf]
      %v5526 = vld [vmem:[#allocation2 + $0x38] sm:$0xff]
      %v5527 = vld [vmem:[#allocation2 + $0x40] sm:$0xff]
      %v5528 = vld [vmem:[#allocation2 + $0x48] sm:$0xff]
      %v5529 = vld [vmem:[#allocation2 + $0x50] sm:$0xf]
      %v5530 = vld [vmem:[#allocation2 + $0x54] sm:$0xff]
      %v5531 = vld [vmem:[#allocation2 + $0x5c] sm:$0xff]
      %v5532 = vld [vmem:[#allocation2 + $0x64] sm:$0xff]
      %v5533 = vld [vmem:[#allocation2 + $0x6c] sm:$0xf]
      %v5534 = vld [vmem:[#allocation2 + $0x70] sm:$0xff]
      %v5535 = vld [vmem:[#allocation2 + $0x78] sm:$0xff]
      %v5536 = vld [vmem:[#allocation2 + $0x80] sm:$0xff]
      %v5537 = vld [vmem:[#allocation2 + $0x88] sm:$0xf]
      %v5538 = vld [vmem:[#allocation2 + $0x8c] sm:$0xff]
      %v5539 = vld [vmem:[#allocation2 + $0x94] sm:$0xff]
      %v5540 = vld [vmem:[#allocation2 + $0x9c] sm:$0xff]
      %v5541 = vld [vmem:[#allocation2 + $0xa4] sm:$0xf]
      %v5542 = vld [vmem:[#allocation2 + $0xa8] sm:$0xff]
      %v5543 = vld [vmem:[#allocation2 + $0xb0] sm:$0xff]
      %v5544 = vld [vmem:[#allocation2 + $0xb8] sm:$0xff]
      %v5545 = vld [vmem:[#allocation2 + $0xc0] sm:$0xf]
      %v5546 = vld [vmem:[#allocation2 + $0xc4] sm:$0xff]
      %v5547 = vld [vmem:[#allocation2 + $0xcc] sm:$0xff]
      %v5548 = vld [vmem:[#allocation2 + $0xd4] sm:$0xff]
      %v5549 = vld [vmem:[#allocation2 + $0xdc] sm:$0xf]
      %v5550 = vld [vmem:[#allocation2 + $0xe0] sm:$0xff]
      %v5551 = vld [vmem:[#allocation2 + $0xe8] sm:$0xff]
      %v5552 = vld [vmem:[#allocation2 + $0xf0] sm:$0xff]
      %v5553 = vld [vmem:[#allocation2 + $0xf8] sm:$0xf]
      %v5554 = vld [vmem:[#allocation2 + $0xfc] sm:$0xff]
      %v5555 = vld [vmem:[#allocation2 + $0x104] sm:$0xff]
      %v5556 = vld [vmem:[#allocation2 + $0x10c] sm:$0xff]
      %v5557 = vld [vmem:[#allocation2 + $0x114] sm:$0xf]
      %v5558 = vld [vmem:[#allocation2 + $0x118] sm:$0xff]
      %v5559 = vld [vmem:[#allocation2 + $0x120] sm:$0xff]
      %v5560 = vld [vmem:[#allocation2 + $0x128] sm:$0xff]
      %v5561 = vld [vmem:[#allocation2 + $0x130] sm:$0xf]
      %v5562 = vld [vmem:[#allocation2 + $0x134] sm:$0xff]
      %v5563 = vld [vmem:[#allocation2 + $0x13c] sm:$0xff]
      %v5564 = vld [vmem:[#allocation2 + $0x144] sm:$0xff]
      %v5565 = vld [vmem:[#allocation2 + $0x14c] sm:$0xf]
      %v5566 = vld [vmem:[#allocation2 + $0x150] sm:$0xff]
      %v5567 = vld [vmem:[#allocation2 + $0x158] sm:$0xff]
      %v5568 = vld [vmem:[#allocation2 + $0x160] sm:$0xff]
      %v5569 = vld [vmem:[#allocation2 + $0x168] sm:$0xf]
      %v5570 = vld [vmem:[#allocation2 + $0x16c] sm:$0xff]
      %v5571 = vld [vmem:[#allocation2 + $0x174] sm:$0xff]
      %v5572 = vld [vmem:[#allocation2 + $0x17c] sm:$0xff]
      %v5573 = vld [vmem:[#allocation2 + $0x184] sm:$0xf]
      %v5574 = vld [vmem:[#allocation2 + $0x188] sm:$0xff]
      %v5575 = vld [vmem:[#allocation2 + $0x190] sm:$0xff]
      %v5576 = vld [vmem:[#allocation2 + $0x198] sm:$0xff]
      %v5577 = vld [vmem:[#allocation2 + $0x1a0] sm:$0xf]
      %v5578 = vld [vmem:[#allocation2 + $0x1a4] sm:$0xff]
      %v5579 = vld [vmem:[#allocation2 + $0x1ac] sm:$0xff]
      %v5580 = vld [vmem:[#allocation2 + $0x1b4] sm:$0xff]
      %v5581 = vld [vmem:[#allocation2 + $0x1bc] sm:$0xf]
      %v5582 = vld [vmem:[%s1] sm:$0xf]
      %v5583 = vld [vmem:[%s1 + $0x4] sm:$0xf]
      %v5584 = vld [vmem:[%s1 + $0x8] sm:$0xf]
      %v5585 = vld [vmem:[%s1 + $0xc] sm:$0xf]
      %v5586 = vld [vmem:[%s1 + $0x10] sm:$0xf]
      %v5587 = vld [vmem:[%s1 + $0x14] sm:$0xf]
      %v5588 = vld [vmem:[%s1 + $0x18] sm:$0xf]
      %v5589 = vld [vmem:[%s1 + $0x1c] sm:$0xf]
      %v5590 = vld [vmem:[%s1 + $0x20] sm:$0xf]
      %v5591 = vld [vmem:[%s1 + $0x24] sm:$0xf]
      %v5592 = vld [vmem:[%s1 + $0x28] sm:$0xf]
      %v5593 = vld [vmem:[%s1 + $0x2c] sm:$0xf]
      %v5594 = vld [vmem:[%s1 + $0x30] sm:$0xf]
      %v5595 = vld [vmem:[%s1 + $0x34] sm:$0xf]
      %v5596 = vld [vmem:[%s1 + $0x38] sm:$0xf]
      %v5597 = vld [vmem:[%s1 + $0x3c] sm:$0xf]
      %v5598 = vld [vmem:[%s1 + $0x40] sm:$0xf]
      %v5599 = vld [vmem:[%s1 + $0x44] sm:$0xf]
      %v5600 = vld [vmem:[%s1 + $0x48] sm:$0xf]
      %v5601 = vld [vmem:[%s1 + $0x4c] sm:$0xf]
      %v5602 = vld [vmem:[%s1 + $0x50] sm:$0xf]
      %v5603 = vld [vmem:[%s1 + $0x54] sm:$0xf]
      %v5604 = vld [vmem:[%s1 + $0x58] sm:$0xf]
      %v5605 = vld [vmem:[%s1 + $0x5c] sm:$0xf]
      %v5606 = vld [vmem:[%s1 + $0x60] sm:$0xf]
      %v5607 = vld [vmem:[%s1 + $0x64] sm:$0xf]
      %v5608 = vld [vmem:[%s1 + $0x68] sm:$0xf]
      %v5609 = vld [vmem:[%s1 + $0x6c] sm:$0xf]
      %v5610 = vld [vmem:[%s1 + $0x70] sm:$0xf]
      %v5611 = vld [vmem:[%s1 + $0x74] sm:$0xf]
      %v5612 = vld [vmem:[%s1 + $0x78] sm:$0xf]
      %v5613 = vld [vmem:[%s1 + $0x7c] sm:$0xf]
      %v5614 = vld [vmem:[%s1 + $0x80] sm:$0xf]
      %v5615 = vld [vmem:[%s1 + $0x84] sm:$0xf]
      %v5616 = vld [vmem:[%s1 + $0x88] sm:$0xf]
      %v5617 = vld [vmem:[%s1 + $0x8c] sm:$0xf]
      %v5618 = vld [vmem:[%s1 + $0x90] sm:$0xf]
      %v5619 = vld [vmem:[%s1 + $0x94] sm:$0xf]
      %v5620 = vld [vmem:[%s1 + $0x98] sm:$0xf]
      %v5621 = vld [vmem:[%s1 + $0x9c] sm:$0xf]
      %v5622 = vld [vmem:[%s1 + $0xa0] sm:$0xf]
      %v5623 = vld [vmem:[%s1 + $0xa4] sm:$0xf]
      %v5624 = vld [vmem:[%s1 + $0xa8] sm:$0xf]
      %v5625 = vld [vmem:[%s1 + $0xac] sm:$0xf]
      %v5626 = vld [vmem:[%s1 + $0xb0] sm:$0xf]
      %v5627 = vld [vmem:[%s1 + $0xb4] sm:$0xf]
      %v5628 = vld [vmem:[%s1 + $0xb8] sm:$0xf]
      %v5629 = vld [vmem:[%s1 + $0xbc] sm:$0xf]
      %v5630 = vld [vmem:[%s1 + $0xc0] sm:$0xf]
      %v5631 = vld [vmem:[%s1 + $0xc4] sm:$0xf]
      %v5632 = vld [vmem:[%s1 + $0xc8] sm:$0xf]
      %v5633 = vld [vmem:[%s1 + $0xcc] sm:$0xf]
      %v5634 = vld [vmem:[%s1 + $0xd0] sm:$0xf]
      %v5635 = vld [vmem:[%s1 + $0xd4] sm:$0xf]
      %v5636 = vld [vmem:[%s1 + $0xd8] sm:$0xf]
      %v5637 = vld [vmem:[%s1 + $0xdc] sm:$0xf]
      %v5638 = vld [vmem:[%s1 + $0xe0] sm:$0xf]
      %v5639 = vld [vmem:[%s1 + $0xe4] sm:$0xf]
      %v5640 = vld [vmem:[%s1 + $0xe8] sm:$0xf]
      %v5641 = vld [vmem:[%s1 + $0xec] sm:$0xf]
      %v5642 = vld [vmem:[%s1 + $0xf0] sm:$0xf]
      %v5643 = vld [vmem:[%s1 + $0xf4] sm:$0xf]
      %v5644 = vld [vmem:[%s1 + $0xf8] sm:$0xf]
      %v5645 = vld [vmem:[%s1 + $0xfc] sm:$0xf]
      %v5646 = vld [vmem:[%s1 + $0x100] sm:$0xf]
      %v5647 = vld [vmem:[%s1 + $0x104] sm:$0xf]
      %v5648 = vld [vmem:[%s1 + $0x108] sm:$0xf]
      %v5649 = vld [vmem:[%s1 + $0x10c] sm:$0xf]
      %v5650 = vld [vmem:[%s1 + $0x110] sm:$0xf]
      %v5651 = vld [vmem:[%s1 + $0x114] sm:$0xf]
      %v5652 = vld [vmem:[%s1 + $0x118] sm:$0xf]
      %v5653 = vld [vmem:[%s1 + $0x11c] sm:$0xf]
      %v5654 = vld [vmem:[%s1 + $0x120] sm:$0xf]
      %v5655 = vld [vmem:[%s1 + $0x124] sm:$0xf]
      %v5656 = vld [vmem:[%s1 + $0x128] sm:$0xf]
      %v5657 = vld [vmem:[%s1 + $0x12c] sm:$0xf]
      %v5658 = vld [vmem:[%s1 + $0x130] sm:$0xf]
      %v5659 = vld [vmem:[%s1 + $0x134] sm:$0xf]
      %v5660 = vld [vmem:[%s1 + $0x138] sm:$0xf]
      %v5661 = vld [vmem:[%s1 + $0x13c] sm:$0xf]
      %v5662 = vld [vmem:[%s1 + $0x140] sm:$0xf]
      %v5663 = vld [vmem:[%s1 + $0x144] sm:$0xf]
      %v5664 = vld [vmem:[%s1 + $0x148] sm:$0xf]
      %v5665 = vld [vmem:[%s1 + $0x14c] sm:$0xf]
      %v5666 = vld [vmem:[%s1 + $0x150] sm:$0xf]
      %v5667 = vld [vmem:[%s1 + $0x154] sm:$0xf]
      %v5668 = vld [vmem:[%s1 + $0x158] sm:$0xf]
      %v5669 = vld [vmem:[%s1 + $0x15c] sm:$0xf]
      %v5670 = vld [vmem:[%s1 + $0x160] sm:$0xf]
      %v5671 = vld [vmem:[%s1 + $0x164] sm:$0xf]
      %v5672 = vld [vmem:[%s1 + $0x168] sm:$0xf]
      %v5673 = vld [vmem:[%s1 + $0x16c] sm:$0xf]
      %v5674 = vld [vmem:[%s1 + $0x170] sm:$0xf]
      %v5675 = vld [vmem:[%s1 + $0x174] sm:$0xf]
      %v5676 = vld [vmem:[%s1 + $0x178] sm:$0xf]
      %v5677 = vld [vmem:[%s1 + $0x17c] sm:$0xf]
      %v5678 = vld [vmem:[%s1 + $0x180] sm:$0xf]
      %v5679 = vld [vmem:[%s1 + $0x184] sm:$0xf]
      %v5680 = vld [vmem:[%s1 + $0x188] sm:$0xf]
      %v5681 = vld [vmem:[%s1 + $0x18c] sm:$0xf]
      %v5682 = vld [vmem:[%s1 + $0x190] sm:$0xf]
      %v5683 = vld [vmem:[%s1 + $0x194] sm:$0xf]
      %v5684 = vld [vmem:[%s1 + $0x198] sm:$0xf]
      %v5685 = vld [vmem:[%s1 + $0x19c] sm:$0xf]
      %v5686 = vld [vmem:[%s1 + $0x1a0] sm:$0xf]
      %v5687 = vld [vmem:[%s1 + $0x1a4] sm:$0xf]
      %v5688 = vld [vmem:[%s1 + $0x1a8] sm:$0xf]
      %v5689 = vld [vmem:[%s1 + $0x1ac] sm:$0xf]
      %v5690 = vld [vmem:[%s1 + $0x1b0] sm:$0xf]
      %v5691 = vld [vmem:[%s1 + $0x1b4] sm:$0xf]
      %v5692 = vld [vmem:[%s1 + $0x1b8] sm:$0xf]
      %v5693 = vld [vmem:[%s1 + $0x1bc] sm:$0xf]
      %v5758 = vunpack.c.l.b16 %v5518
      %v5759 = vunpack.c.h.b16 %v5518
      %v5760 = vunpack.c.l.b16 %v5519
      %v5761 = vunpack.c.h.b16 %v5519
      %v5762 = vunpack.c.l.b16 %v5520
      %v5763 = vunpack.c.h.b16 %v5520
      %v5764 = vunpack.c.l.b16 %v5521
      %v5765 = vunpack.c.l.b16 %v5522
      %v5766 = vunpack.c.h.b16 %v5522
      %v5767 = vunpack.c.l.b16 %v5523
      %v5768 = vunpack.c.h.b16 %v5523
      %v5769 = vunpack.c.l.b16 %v5524
      %v5770 = vunpack.c.h.b16 %v5524
      %v5771 = vunpack.c.l.b16 %v5525
      %v5772 = vunpack.c.l.b16 %v5526
      %v5773 = vunpack.c.h.b16 %v5526
      %v5774 = vunpack.c.l.b16 %v5527
      %v5775 = vunpack.c.h.b16 %v5527
      %v5776 = vunpack.c.l.b16 %v5528
      %v5777 = vunpack.c.h.b16 %v5528
      %v5778 = vunpack.c.l.b16 %v5529
      %v5779 = vunpack.c.l.b16 %v5530
      %v5780 = vunpack.c.h.b16 %v5530
      %v5781 = vunpack.c.l.b16 %v5531
      %v5782 = vunpack.c.h.b16 %v5531
      %v5783 = vunpack.c.l.b16 %v5532
      %v5784 = vunpack.c.h.b16 %v5532
      %v5785 = vunpack.c.l.b16 %v5533
      %v5786 = vunpack.c.l.b16 %v5534
      %v5787 = vunpack.c.h.b16 %v5534
      %v5788 = vunpack.c.l.b16 %v5535
      %v5789 = vunpack.c.h.b16 %v5535
      %v5790 = vunpack.c.l.b16 %v5536
      %v5791 = vunpack.c.h.b16 %v5536
      %v5792 = vunpack.c.l.b16 %v5537
      %v5793 = vunpack.c.l.b16 %v5538
      %v5794 = vunpack.c.h.b16 %v5538
      %v5795 = vunpack.c.l.b16 %v5539
      %v5796 = vunpack.c.h.b16 %v5539
      %v5797 = vunpack.c.l.b16 %v5540
      %v5798 = vunpack.c.h.b16 %v5540
      %v5799 = vunpack.c.l.b16 %v5541
      %v5800 = vunpack.c.l.b16 %v5542
      %v5801 = vunpack.c.h.b16 %v5542
      %v5802 = vunpack.c.l.b16 %v5543
      %v5803 = vunpack.c.h.b16 %v5543
      %v5804 = vunpack.c.l.b16 %v5544
      %v5805 = vunpack.c.h.b16 %v5544
      %v5806 = vunpack.c.l.b16 %v5545
      %v5807 = vunpack.c.l.b16 %v5546
      %v5808 = vunpack.c.h.b16 %v5546
      %v5809 = vunpack.c.l.b16 %v5547
      %v5810 = vunpack.c.h.b16 %v5547
      %v5811 = vunpack.c.l.b16 %v5548
      %v5812 = vunpack.c.h.b16 %v5548
      %v5813 = vunpack.c.l.b16 %v5549
      %v5814 = vunpack.c.l.b16 %v5550
      %v5815 = vunpack.c.h.b16 %v5550
      %v5816 = vunpack.c.l.b16 %v5551
      %v5817 = vunpack.c.h.b16 %v5551
      %v5818 = vunpack.c.l.b16 %v5552
      %v5819 = vunpack.c.h.b16 %v5552
      %v5820 = vunpack.c.l.b16 %v5553
      %v5821 = vunpack.c.l.b16 %v5554
      %v5822 = vunpack.c.h.b16 %v5554
      %v5823 = vunpack.c.l.b16 %v5555
      %v5824 = vunpack.c.h.b16 %v5555
      %v5825 = vunpack.c.l.b16 %v5556
      %v5826 = vunpack.c.h.b16 %v5556
      %v5827 = vunpack.c.l.b16 %v5557
      %v5828 = vunpack.c.l.b16 %v5558
      %v5829 = vunpack.c.h.b16 %v5558
      %v5830 = vunpack.c.l.b16 %v5559
      %v5831 = vunpack.c.h.b16 %v5559
      %v5832 = vunpack.c.l.b16 %v5560
      %v5833 = vunpack.c.h.b16 %v5560
      %v5834 = vunpack.c.l.b16 %v5561
      %v5835 = vunpack.c.l.b16 %v5562
      %v5836 = vunpack.c.h.b16 %v5562
      %v5837 = vunpack.c.l.b16 %v5563
      %v5838 = vunpack.c.h.b16 %v5563
      %v5839 = vunpack.c.l.b16 %v5564
      %v5840 = vunpack.c.h.b16 %v5564
      %v5841 = vunpack.c.l.b16 %v5565
      %v5842 = vunpack.c.l.b16 %v5566
      %v5843 = vunpack.c.h.b16 %v5566
      %v5844 = vunpack.c.l.b16 %v5567
      %v5845 = vunpack.c.h.b16 %v5567
      %v5846 = vunpack.c.l.b16 %v5568
      %v5847 = vunpack.c.h.b16 %v5568
      %v5848 = vunpack.c.l.b16 %v5569
      %v5849 = vunpack.c.l.b16 %v5570
      %v5850 = vunpack.c.h.b16 %v5570
      %v5851 = vunpack.c.l.b16 %v5571
      %v5852 = vunpack.c.h.b16 %v5571
      %v5853 = vunpack.c.l.b16 %v5572
      %v5854 = vunpack.c.h.b16 %v5572
      %v5855 = vunpack.c.l.b16 %v5573
      %v5856 = vunpack.c.l.b16 %v5574
      %v5857 = vunpack.c.h.b16 %v5574
      %v5858 = vunpack.c.l.b16 %v5575
      %v5859 = vunpack.c.h.b16 %v5575
      %v5860 = vunpack.c.l.b16 %v5576
      %v5861 = vunpack.c.h.b16 %v5576
      %v5862 = vunpack.c.l.b16 %v5577
      %v5863 = vunpack.c.l.b16 %v5578
      %v5864 = vunpack.c.h.b16 %v5578
      %v5865 = vunpack.c.l.b16 %v5579
      %v5866 = vunpack.c.h.b16 %v5579
      %v5867 = vunpack.c.l.b16 %v5580
      %v5868 = vunpack.c.h.b16 %v5580
      %v5869 = vunpack.c.l.b16 %v5581
      %v5870 = vpack.c.b16 %v5765, %v5758
      %v5871 = vpack.c.b16 %v5766, %v5759
      %v5872 = vpack.c.b16 %v5767, %v5760
      %v5873 = vpack.c.b16 %v5768, %v5761
      %v5874 = vpack.c.b16 %v5769, %v5762
      %v5875 = vpack.c.b16 %v5770, %v5763
      %v5876 = vpack.c.b16 %v5771, %v5764
      %v5877 = vpack.c.b16 %v5779, %v5772
      %v5878 = vpack.c.b16 %v5780, %v5773
      %v5879 = vpack.c.b16 %v5781, %v5774
      %v5880 = vpack.c.b16 %v5782, %v5775
      %v5881 = vpack.c.b16 %v5783, %v5776
      %v5882 = vpack.c.b16 %v5784, %v5777
      %v5883 = vpack.c.b16 %v5785, %v5778
      %v5884 = vpack.c.b16 %v5793, %v5786
      %v5885 = vpack.c.b16 %v5794, %v5787
      %v5886 = vpack.c.b16 %v5795, %v5788
      %v5887 = vpack.c.b16 %v5796, %v5789
      %v5888 = vpack.c.b16 %v5797, %v5790
      %v5889 = vpack.c.b16 %v5798, %v5791
      %v5890 = vpack.c.b16 %v5799, %v5792
      %v5891 = vpack.c.b16 %v5807, %v5800
      %v5892 = vpack.c.b16 %v5808, %v5801
      %v5893 = vpack.c.b16 %v5809, %v5802
      %v5894 = vpack.c.b16 %v5810, %v5803
      %v5895 = vpack.c.b16 %v5811, %v5804
      %v5896 = vpack.c.b16 %v5812, %v5805
      %v5897 = vpack.c.b16 %v5813, %v5806
      %v5898 = vpack.c.b16 %v5821, %v5814
      %v5899 = vpack.c.b16 %v5822, %v5815
      %v5900 = vpack.c.b16 %v5823, %v5816
      %v5901 = vpack.c.b16 %v5824, %v5817
      %v5902 = vpack.c.b16 %v5825, %v5818
      %v5903 = vpack.c.b16 %v5826, %v5819
      %v5904 = vpack.c.b16 %v5827, %v5820
      %v5905 = vpack.c.b16 %v5835, %v5828
      %v5906 = vpack.c.b16 %v5836, %v5829
      %v5907 = vpack.c.b16 %v5837, %v5830
      %v5908 = vpack.c.b16 %v5838, %v5831
      %v5909 = vpack.c.b16 %v5839, %v5832
      %v5910 = vpack.c.b16 %v5840, %v5833
      %v5911 = vpack.c.b16 %v5841, %v5834
      %v5912 = vpack.c.b16 %v5849, %v5842
      %v5913 = vpack.c.b16 %v5850, %v5843
      %v5914 = vpack.c.b16 %v5851, %v5844
      %v5915 = vpack.c.b16 %v5852, %v5845
      %v5916 = vpack.c.b16 %v5853, %v5846
      %v5917 = vpack.c.b16 %v5854, %v5847
      %v5918 = vpack.c.b16 %v5855, %v5848
      %v5919 = vpack.c.b16 %v5863, %v5856
      %v5920 = vpack.c.b16 %v5864, %v5857
      %v5921 = vpack.c.b16 %v5865, %v5858
      %v5922 = vpack.c.b16 %v5866, %v5859
      %v5923 = vpack.c.b16 %v5867, %v5860
      %v5924 = vpack.c.b16 %v5868, %v5861
      %v5925 = vpack.c.b16 %v5869, %v5862
      %v6094 = vunpack.c.l.b16 %v5582
      %v6095 = vunpack.c.l.b16 %v5583
      %v6096 = vunpack.c.l.b16 %v5584
      %v6097 = vunpack.c.l.b16 %v5585
      %v6098 = vunpack.c.l.b16 %v5586
      %v6099 = vunpack.c.l.b16 %v5587
      %v6100 = vunpack.c.l.b16 %v5588
      %v6101 = vunpack.c.l.b16 %v5589
      %v6102 = vunpack.c.l.b16 %v5590
      %v6103 = vunpack.c.l.b16 %v5591
      %v6104 = vunpack.c.l.b16 %v5592
      %v6105 = vunpack.c.l.b16 %v5593
      %v6106 = vunpack.c.l.b16 %v5594
      %v6107 = vunpack.c.l.b16 %v5595
      %v6108 = vunpack.c.l.b16 %v5596
      %v6109 = vunpack.c.l.b16 %v5597
      %v6110 = vunpack.c.l.b16 %v5598
      %v6111 = vunpack.c.l.b16 %v5599
      %v6112 = vunpack.c.l.b16 %v5600
      %v6113 = vunpack.c.l.b16 %v5601
      %v6114 = vunpack.c.l.b16 %v5602
      %v6115 = vunpack.c.l.b16 %v5603
      %v6116 = vunpack.c.l.b16 %v5604
      %v6117 = vunpack.c.l.b16 %v5605
      %v6118 = vunpack.c.l.b16 %v5606
      %v6119 = vunpack.c.l.b16 %v5607
      %v6120 = vunpack.c.l.b16 %v5608
      %v6121 = vunpack.c.l.b16 %v5609
      %v6122 = vunpack.c.l.b16 %v5610
      %v6123 = vunpack.c.l.b16 %v5611
      %v6124 = vunpack.c.l.b16 %v5612
      %v6125 = vunpack.c.l.b16 %v5613
      %v6126 = vunpack.c.l.b16 %v5614
      %v6127 = vunpack.c.l.b16 %v5615
      %v6128 = vunpack.c.l.b16 %v5616
      %v6129 = vunpack.c.l.b16 %v5617
      %v6130 = vunpack.c.l.b16 %v5618
      %v6131 = vunpack.c.l.b16 %v5619
      %v6132 = vunpack.c.l.b16 %v5620
      %v6133 = vunpack.c.l.b16 %v5621
      %v6134 = vunpack.c.l.b16 %v5622
      %v6135 = vunpack.c.l.b16 %v5623
      %v6136 = vunpack.c.l.b16 %v5624
      %v6137 = vunpack.c.l.b16 %v5625
      %v6138 = vunpack.c.l.b16 %v5626
      %v6139 = vunpack.c.l.b16 %v5627
      %v6140 = vunpack.c.l.b16 %v5628
      %v6141 = vunpack.c.l.b16 %v5629
      %v6142 = vunpack.c.l.b16 %v5630
      %v6143 = vunpack.c.l.b16 %v5631
      %v6144 = vunpack.c.l.b16 %v5632
      %v6145 = vunpack.c.l.b16 %v5633
      %v6146 = vunpack.c.l.b16 %v5634
      %v6147 = vunpack.c.l.b16 %v5635
      %v6148 = vunpack.c.l.b16 %v5636
      %v6149 = vunpack.c.l.b16 %v5637
      %v6150 = vunpack.c.l.b16 %v5638
      %v6151 = vunpack.c.l.b16 %v5639
      %v6152 = vunpack.c.l.b16 %v5640
      %v6153 = vunpack.c.l.b16 %v5641
      %v6154 = vunpack.c.l.b16 %v5642
      %v6155 = vunpack.c.l.b16 %v5643
      %v6156 = vunpack.c.l.b16 %v5644
      %v6157 = vunpack.c.l.b16 %v5645
      %v6158 = vunpack.c.l.b16 %v5646
      %v6159 = vunpack.c.l.b16 %v5647
      %v6160 = vunpack.c.l.b16 %v5648
      %v6161 = vunpack.c.l.b16 %v5649
      %v6162 = vunpack.c.l.b16 %v5650
      %v6163 = vunpack.c.l.b16 %v5651
      %v6164 = vunpack.c.l.b16 %v5652
      %v6165 = vunpack.c.l.b16 %v5653
      %v6166 = vunpack.c.l.b16 %v5654
      %v6167 = vunpack.c.l.b16 %v5655
      %v6168 = vunpack.c.l.b16 %v5656
      %v6169 = vunpack.c.l.b16 %v5657
      %v6170 = vunpack.c.l.b16 %v5658
      %v6171 = vunpack.c.l.b16 %v5659
      %v6172 = vunpack.c.l.b16 %v5660
      %v6173 = vunpack.c.l.b16 %v5661
      %v6174 = vunpack.c.l.b16 %v5662
      %v6175 = vunpack.c.l.b16 %v5663
      %v6176 = vunpack.c.l.b16 %v5664
      %v6177 = vunpack.c.l.b16 %v5665
      %v6178 = vunpack.c.l.b16 %v5666
      %v6179 = vunpack.c.l.b16 %v5667
      %v6180 = vunpack.c.l.b16 %v5668
      %v6181 = vunpack.c.l.b16 %v5669
      %v6182 = vunpack.c.l.b16 %v5670
      %v6183 = vunpack.c.l.b16 %v5671
      %v6184 = vunpack.c.l.b16 %v5672
      %v6185 = vunpack.c.l.b16 %v5673
      %v6186 = vunpack.c.l.b16 %v5674
      %v6187 = vunpack.c.l.b16 %v5675
      %v6188 = vunpack.c.l.b16 %v5676
      %v6189 = vunpack.c.l.b16 %v5677
      %v6190 = vunpack.c.l.b16 %v5678
      %v6191 = vunpack.c.l.b16 %v5679
      %v6192 = vunpack.c.l.b16 %v5680
      %v6193 = vunpack.c.l.b16 %v5681
      %v6194 = vunpack.c.l.b16 %v5682
      %v6195 = vunpack.c.l.b16 %v5683
      %v6196 = vunpack.c.l.b16 %v5684
      %v6197 = vunpack.c.l.b16 %v5685
      %v6198 = vunpack.c.l.b16 %v5686
      %v6199 = vunpack.c.l.b16 %v5687
      %v6200 = vunpack.c.l.b16 %v5688
      %v6201 = vunpack.c.l.b16 %v5689
      %v6202 = vunpack.c.l.b16 %v5690
      %v6203 = vunpack.c.l.b16 %v5691
      %v6204 = vunpack.c.l.b16 %v5692
      %v6205 = vunpack.c.l.b16 %v5693
      %v6206 = vpack.c.b16 %v6095, %v6094
      %v6207 = vpack.c.b16 %v6097, %v6096
      %v6208 = vpack.c.b16 %v6099, %v6098
      %v6209 = vpack.c.b16 %v6101, %v6100
      %v6210 = vpack.c.b16 %v6103, %v6102
      %v6211 = vpack.c.b16 %v6105, %v6104
      %v6212 = vpack.c.b16 %v6107, %v6106
      %v6213 = vpack.c.b16 %v6109, %v6108
      %v6214 = vpack.c.b16 %v6111, %v6110
      %v6215 = vpack.c.b16 %v6113, %v6112
      %v6216 = vpack.c.b16 %v6115, %v6114
      %v6217 = vpack.c.b16 %v6117, %v6116
      %v6218 = vpack.c.b16 %v6119, %v6118
      %v6219 = vpack.c.b16 %v6121, %v6120
      %v6220 = vpack.c.b16 %v6123, %v6122
      %v6221 = vpack.c.b16 %v6125, %v6124
      %v6222 = vpack.c.b16 %v6127, %v6126
      %v6223 = vpack.c.b16 %v6129, %v6128
      %v6224 = vpack.c.b16 %v6131, %v6130
      %v6225 = vpack.c.b16 %v6133, %v6132
      %v6226 = vpack.c.b16 %v6135, %v6134
      %v6227 = vpack.c.b16 %v6137, %v6136
      %v6228 = vpack.c.b16 %v6139, %v6138
      %v6229 = vpack.c.b16 %v6141, %v6140
      %v6230 = vpack.c.b16 %v6143, %v6142
      %v6231 = vpack.c.b16 %v6145, %v6144
      %v6232 = vpack.c.b16 %v6147, %v6146
      %v6233 = vpack.c.b16 %v6149, %v6148
      %v6234 = vpack.c.b16 %v6151, %v6150
      %v6235 = vpack.c.b16 %v6153, %v6152
      %v6236 = vpack.c.b16 %v6155, %v6154
      %v6237 = vpack.c.b16 %v6157, %v6156
      %v6238 = vpack.c.b16 %v6159, %v6158
      %v6239 = vpack.c.b16 %v6161, %v6160
      %v6240 = vpack.c.b16 %v6163, %v6162
      %v6241 = vpack.c.b16 %v6165, %v6164
      %v6242 = vpack.c.b16 %v6167, %v6166
      %v6243 = vpack.c.b16 %v6169, %v6168
      %v6244 = vpack.c.b16 %v6171, %v6170
      %v6245 = vpack.c.b16 %v6173, %v6172
      %v6246 = vpack.c.b16 %v6175, %v6174
      %v6247 = vpack.c.b16 %v6177, %v6176
      %v6248 = vpack.c.b16 %v6179, %v6178
      %v6249 = vpack.c.b16 %v6181, %v6180
      %v6250 = vpack.c.b16 %v6183, %v6182
      %v6251 = vpack.c.b16 %v6185, %v6184
      %v6252 = vpack.c.b16 %v6187, %v6186
      %v6253 = vpack.c.b16 %v6189, %v6188
      %v6254 = vpack.c.b16 %v6191, %v6190
      %v6255 = vpack.c.b16 %v6193, %v6192
      %v6256 = vpack.c.b16 %v6195, %v6194
      %v6257 = vpack.c.b16 %v6197, %v6196
      %v6258 = vpack.c.b16 %v6199, %v6198
      %v6259 = vpack.c.b16 %v6201, %v6200
      %v6260 = vpack.c.b16 %v6203, %v6202
      %v6261 = vpack.c.b16 %v6205, %v6204
      %6318 = vmatprep.subr.bf16.mxu0 0
      %6319 = vmatpush1.bf16.msra.mxu0 %v6213
      %6320 = vmatprep.subr.bf16.mxu0 0
      %6321 = vmatpush1.bf16.msra.mxu0 %v6212
      %6322 = vmatprep.subr.bf16.mxu0 0
      %6323 = vmatpush1.bf16.msra.mxu0 %v6211
      %6324 = vmatprep.subr.bf16.mxu0 0
      %6325 = vmatpush1.bf16.msra.mxu0 %v6210
      %6326 = vmatprep.subr.bf16.mxu0 0
      %6327 = vmatpush1.bf16.msra.mxu0 %v6209
      %6328 = vmatprep.subr.bf16.mxu0 0
      %6329 = vmatpush1.bf16.msra.mxu0 %v6208
      %6330 = vmatprep.subr.bf16.mxu0 0
      %6331 = vmatpush1.bf16.msra.mxu0 %v6207
      %6332 = vmatprep.subr.bf16.mxu0 0
      %6333 = vmatpush1.bf16.msra.mxu0 %v6206
      %6334 = vmatprep.subr.bf16.mxu0 0
      %6335 = vmatpush2.bf16.msra.mxu0 %v6221
      %6336 = vmatprep.subr.bf16.mxu0 0
      %6337 = vmatpush2.bf16.msra.mxu0 %v6220
      %6338 = vmatprep.subr.bf16.mxu0 0
      %6339 = vmatpush2.bf16.msra.mxu0 %v6219
      %6340 = vmatprep.subr.bf16.mxu0 0
      %6341 = vmatpush2.bf16.msra.mxu0 %v6218
      %6342 = vmatprep.subr.bf16.mxu0 0
      %6343 = vmatpush2.bf16.msra.mxu0 %v6217
      %6344 = vmatprep.subr.bf16.mxu0 0
      %6345 = vmatpush2.bf16.msra.mxu0 %v6216
      %6346 = vmatprep.subr.bf16.mxu0 0
      %6347 = vmatpush2.bf16.msra.mxu0 %v6215
      %6348 = vmatprep.subr.bf16.mxu0 0
      %6349 = vmatpush2.bf16.msra.mxu0 %v6214
      %6350 = vmatprep.mubr.bf16.mxu0 %v5871
      %6351 = vmatmul.mubr.bf16.gmra.mxu0 %v5870
      %v6352 = vpop.f32.mrf.mxu0
      %v6353 = vadd.f32 0.0, %v6352
      %v6354 = vpop.f32.mrf.mxu0
      %v6355 = vpop.f32.mrf.mxu0
      %v6356 = vadd.f32 0.0, %v6355
      %v6357 = vpop.f32.mrf.mxu0
      %6358 = vmatprep.mubr.bf16.mxu0 %v5878
      %6359 = vmatmul.mubr.bf16.gmra.mxu0 %v5877
      %v6360 = vpop.f32.mrf.mxu0
      %v6361 = vadd.f32 0.0, %v6360
      %v6362 = vpop.f32.mrf.mxu0
      %v6363 = vpop.f32.mrf.mxu0
      %v6364 = vadd.f32 0.0, %v6363
      %v6365 = vpop.f32.mrf.mxu0
      %6366 = vmatprep.mubr.bf16.mxu0 %v5885
      %6367 = vmatmul.mubr.bf16.gmra.mxu0 %v5884
      %v6368 = vpop.f32.mrf.mxu0
      %v6369 = vadd.f32 0.0, %v6368
      %v6370 = vpop.f32.mrf.mxu0
      %v6371 = vpop.f32.mrf.mxu0
      %v6372 = vadd.f32 0.0, %v6371
      %v6373 = vpop.f32.mrf.mxu0
      %6374 = vmatprep.mubr.bf16.mxu0 %v5892
      %6375 = vmatmul.mubr.bf16.gmra.mxu0 %v5891
      %v6376 = vpop.f32.mrf.mxu0
      %v6377 = vadd.f32 0.0, %v6376
      %v6378 = vpop.f32.mrf.mxu0
      %v6379 = vpop.f32.mrf.mxu0
      %v6380 = vadd.f32 0.0, %v6379
      %v6381 = vpop.f32.mrf.mxu0
      %6382 = vmatprep.mubr.bf16.mxu0 %v5899
      %6383 = vmatmul.mubr.bf16.gmra.mxu0 %v5898
      %v6384 = vpop.f32.mrf.mxu0
      %v6385 = vadd.f32 0.0, %v6384
      %v6386 = vpop.f32.mrf.mxu0
      %v6387 = vpop.f32.mrf.mxu0
      %v6388 = vadd.f32 0.0, %v6387
      %v6389 = vpop.f32.mrf.mxu0
      %6390 = vmatprep.mubr.bf16.mxu0 %v5906
      %6391 = vmatmul.mubr.bf16.gmra.mxu0 %v5905
      %v6392 = vpop.f32.mrf.mxu0
      %v6393 = vadd.f32 0.0, %v6392
      %v6394 = vpop.f32.mrf.mxu0
      %v6395 = vpop.f32.mrf.mxu0
      %v6396 = vadd.f32 0.0, %v6395
      %v6397 = vpop.f32.mrf.mxu0
      %6398 = vmatprep.mubr.bf16.mxu0 %v5913
      %6399 = vmatmul.mubr.bf16.gmra.mxu0 %v5912
      %v6400 = vpop.f32.mrf.mxu0
      %v6401 = vadd.f32 0.0, %v6400
      %v6402 = vpop.f32.mrf.mxu0
      %v6403 = vpop.f32.mrf.mxu0
      %v6404 = vadd.f32 0.0, %v6403
      %v6405 = vpop.f32.mrf.mxu0
      %6406 = vmatprep.mubr.bf16.mxu0 %v5920
      %6407 = vmatmul.mubr.bf16.gmra.mxu0 %v5919
      %v6408 = vpop.f32.mrf.mxu0
      %v6409 = vadd.f32 0.0, %v6408
      %v6410 = vpop.f32.mrf.mxu0
      %v6411 = vpop.f32.mrf.mxu0
      %v6412 = vadd.f32 0.0, %v6411
      %v6413 = vpop.f32.mrf.mxu0
      %6414 = vdwg.mxu0
      %6415 = vmatprep.subr.bf16.mxu0 0
      %6416 = vmatpush1.bf16.msra.mxu0 %v6229
      %6417 = vmatprep.subr.bf16.mxu0 0
      %6418 = vmatpush1.bf16.msra.mxu0 %v6228
      %6419 = vmatprep.subr.bf16.mxu0 0
      %6420 = vmatpush1.bf16.msra.mxu0 %v6227
      %6421 = vmatprep.subr.bf16.mxu0 0
      %6422 = vmatpush1.bf16.msra.mxu0 %v6226
      %6423 = vmatprep.subr.bf16.mxu0 0
      %6424 = vmatpush1.bf16.msra.mxu0 %v6225
      %6425 = vmatprep.subr.bf16.mxu0 0
      %6426 = vmatpush1.bf16.msra.mxu0 %v6224
      %6427 = vmatprep.subr.bf16.mxu0 0
      %6428 = vmatpush1.bf16.msra.mxu0 %v6223
      %6429 = vmatprep.subr.bf16.mxu0 0
      %6430 = vmatpush1.bf16.msra.mxu0 %v6222
      %6431 = vmatprep.subr.bf16.mxu0 0
      %6432 = vmatpush2.bf16.msra.mxu0 %v6237
      %6433 = vmatprep.subr.bf16.mxu0 0
      %6434 = vmatpush2.bf16.msra.mxu0 %v6236
      %6435 = vmatprep.subr.bf16.mxu0 0
      %6436 = vmatpush2.bf16.msra.mxu0 %v6235
      %6437 = vmatprep.subr.bf16.mxu0 0
      %6438 = vmatpush2.bf16.msra.mxu0 %v6234
      %6439 = vmatprep.subr.bf16.mxu0 0
      %6440 = vmatpush2.bf16.msra.mxu0 %v6233
      %6441 = vmatprep.subr.bf16.mxu0 0
      %6442 = vmatpush2.bf16.msra.mxu0 %v6232
      %6443 = vmatprep.subr.bf16.mxu0 0
      %6444 = vmatpush2.bf16.msra.mxu0 %v6231
      %6445 = vmatprep.subr.bf16.mxu0 0
      %6446 = vmatpush2.bf16.msra.mxu0 %v6230
      %6447 = vmatprep.mubr.bf16.mxu0 %v5873
      %6448 = vmatmul.mubr.bf16.gmra.mxu0 %v5872
      %v6449 = vpop.f32.mrf.mxu0
      %v6450 = vadd.f32 %v6353, %v6449
      %v6451 = vpop.f32.mrf.mxu0
      %v6452 = vpop.f32.mrf.mxu0
      %v6453 = vadd.f32 %v6356, %v6452
      %v6454 = vpop.f32.mrf.mxu0
      %6455 = vmatprep.mubr.bf16.mxu0 %v5880
      %6456 = vmatmul.mubr.bf16.gmra.mxu0 %v5879
      %v6457 = vpop.f32.mrf.mxu0
      %v6458 = vadd.f32 %v6361, %v6457
      %v6459 = vpop.f32.mrf.mxu0
      %v6460 = vpop.f32.mrf.mxu0
      %v6461 = vadd.f32 %v6364, %v6460
      %v6462 = vpop.f32.mrf.mxu0
      %6463 = vmatprep.mubr.bf16.mxu0 %v5887
      %6464 = vmatmul.mubr.bf16.gmra.mxu0 %v5886
      %v6465 = vpop.f32.mrf.mxu0
      %v6466 = vadd.f32 %v6369, %v6465
      %v6467 = vpop.f32.mrf.mxu0
      %v6468 = vpop.f32.mrf.mxu0
      %v6469 = vadd.f32 %v6372, %v6468
      %v6470 = vpop.f32.mrf.mxu0
      %6471 = vmatprep.mubr.bf16.mxu0 %v5894
      %6472 = vmatmul.mubr.bf16.gmra.mxu0 %v5893
      %v6473 = vpop.f32.mrf.mxu0
      %v6474 = vadd.f32 %v6377, %v6473
      %v6475 = vpop.f32.mrf.mxu0
      %v6476 = vpop.f32.mrf.mxu0
      %v6477 = vadd.f32 %v6380, %v6476
      %v6478 = vpop.f32.mrf.mxu0
      %6479 = vmatprep.mubr.bf16.mxu0 %v5901
      %6480 = vmatmul.mubr.bf16.gmra.mxu0 %v5900
      %v6481 = vpop.f32.mrf.mxu0
      %v6482 = vadd.f32 %v6385, %v6481
      %v6483 = vpop.f32.mrf.mxu0
      %v6484 = vpop.f32.mrf.mxu0
      %v6485 = vadd.f32 %v6388, %v6484
      %v6486 = vpop.f32.mrf.mxu0
      %6487 = vmatprep.mubr.bf16.mxu0 %v5908
      %6488 = vmatmul.mubr.bf16.gmra.mxu0 %v5907
      %v6489 = vpop.f32.mrf.mxu0
      %v6490 = vadd.f32 %v6393, %v6489
      %v6491 = vpop.f32.mrf.mxu0
      %v6492 = vpop.f32.mrf.mxu0
      %v6493 = vadd.f32 %v6396, %v6492
      %v6494 = vpop.f32.mrf.mxu0
      %6495 = vmatprep.mubr.bf16.mxu0 %v5915
      %6496 = vmatmul.mubr.bf16.gmra.mxu0 %v5914
      %v6497 = vpop.f32.mrf.mxu0
      %v6498 = vadd.f32 %v6401, %v6497
      %v6499 = vpop.f32.mrf.mxu0
      %v6500 = vpop.f32.mrf.mxu0
      %v6501 = vadd.f32 %v6404, %v6500
      %v6502 = vpop.f32.mrf.mxu0
      %6503 = vmatprep.mubr.bf16.mxu0 %v5922
      %6504 = vmatmul.mubr.bf16.gmra.mxu0 %v5921
      %v6505 = vpop.f32.mrf.mxu0
      %v6506 = vadd.f32 %v6409, %v6505
      %v6507 = vpop.f32.mrf.mxu0
      %v6508 = vpop.f32.mrf.mxu0
      %v6509 = vadd.f32 %v6412, %v6508
      %v6510 = vpop.f32.mrf.mxu0
      %6511 = vdwg.mxu0
      %6512 = vmatprep.subr.bf16.mxu0 0
      %6513 = vmatpush1.bf16.msra.mxu0 %v6245
      %6514 = vmatprep.subr.bf16.mxu0 0
      %6515 = vmatpush1.bf16.msra.mxu0 %v6244
      %6516 = vmatprep.subr.bf16.mxu0 0
      %6517 = vmatpush1.bf16.msra.mxu0 %v6243
      %6518 = vmatprep.subr.bf16.mxu0 0
      %6519 = vmatpush1.bf16.msra.mxu0 %v6242
      %6520 = vmatprep.subr.bf16.mxu0 0
      %6521 = vmatpush1.bf16.msra.mxu0 %v6241
      %6522 = vmatprep.subr.bf16.mxu0 0
      %6523 = vmatpush1.bf16.msra.mxu0 %v6240
      %6524 = vmatprep.subr.bf16.mxu0 0
      %6525 = vmatpush1.bf16.msra.mxu0 %v6239
      %6526 = vmatprep.subr.bf16.mxu0 0
      %6527 = vmatpush1.bf16.msra.mxu0 %v6238
      %6528 = vmatprep.subr.bf16.mxu0 0
      %6529 = vmatpush2.bf16.msra.mxu0 %v6253
      %6530 = vmatprep.subr.bf16.mxu0 0
      %6531 = vmatpush2.bf16.msra.mxu0 %v6252
      %6532 = vmatprep.subr.bf16.mxu0 0
      %6533 = vmatpush2.bf16.msra.mxu0 %v6251
      %6534 = vmatprep.subr.bf16.mxu0 0
      %6535 = vmatpush2.bf16.msra.mxu0 %v6250
      %6536 = vmatprep.subr.bf16.mxu0 0
      %6537 = vmatpush2.bf16.msra.mxu0 %v6249
      %6538 = vmatprep.subr.bf16.mxu0 0
      %6539 = vmatpush2.bf16.msra.mxu0 %v6248
      %6540 = vmatprep.subr.bf16.mxu0 0
      %6541 = vmatpush2.bf16.msra.mxu0 %v6247
      %6542 = vmatprep.subr.bf16.mxu0 0
      %6543 = vmatpush2.bf16.msra.mxu0 %v6246
      %6544 = vmatprep.mubr.bf16.mxu0 %v5875
      %6545 = vmatmul.mubr.bf16.gmra.mxu0 %v5874
      %v6546 = vpop.f32.mrf.mxu0
      %v6547 = vadd.f32 %v6450, %v6546
      %v6548 = vpop.f32.mrf.mxu0
      %v6549 = vpop.f32.mrf.mxu0
      %v6550 = vadd.f32 %v6453, %v6549
      %v6551 = vpop.f32.mrf.mxu0
      %6552 = vmatprep.mubr.bf16.mxu0 %v5882
      %6553 = vmatmul.mubr.bf16.gmra.mxu0 %v5881
      %v6554 = vpop.f32.mrf.mxu0
      %v6555 = vadd.f32 %v6458, %v6554
      %v6556 = vpop.f32.mrf.mxu0
      %v6557 = vpop.f32.mrf.mxu0
      %v6558 = vadd.f32 %v6461, %v6557
      %v6559 = vpop.f32.mrf.mxu0
      %6560 = vmatprep.mubr.bf16.mxu0 %v5889
      %6561 = vmatmul.mubr.bf16.gmra.mxu0 %v5888
      %v6562 = vpop.f32.mrf.mxu0
      %v6563 = vadd.f32 %v6466, %v6562
      %v6564 = vpop.f32.mrf.mxu0
      %v6565 = vpop.f32.mrf.mxu0
      %v6566 = vadd.f32 %v6469, %v6565
      %v6567 = vpop.f32.mrf.mxu0
      %6568 = vmatprep.mubr.bf16.mxu0 %v5896
      %6569 = vmatmul.mubr.bf16.gmra.mxu0 %v5895
      %v6570 = vpop.f32.mrf.mxu0
      %v6571 = vadd.f32 %v6474, %v6570
      %v6572 = vpop.f32.mrf.mxu0
      %v6573 = vpop.f32.mrf.mxu0
      %v6574 = vadd.f32 %v6477, %v6573
      %v6575 = vpop.f32.mrf.mxu0
      %6576 = vmatprep.mubr.bf16.mxu0 %v5903
      %6577 = vmatmul.mubr.bf16.gmra.mxu0 %v5902
      %v6578 = vpop.f32.mrf.mxu0
      %v6579 = vadd.f32 %v6482, %v6578
      %v6580 = vpop.f32.mrf.mxu0
      %v6581 = vpop.f32.mrf.mxu0
      %v6582 = vadd.f32 %v6485, %v6581
      %v6583 = vpop.f32.mrf.mxu0
      %6584 = vmatprep.mubr.bf16.mxu0 %v5910
      %6585 = vmatmul.mubr.bf16.gmra.mxu0 %v5909
      %v6586 = vpop.f32.mrf.mxu0
      %v6587 = vadd.f32 %v6490, %v6586
      %v6588 = vpop.f32.mrf.mxu0
      %v6589 = vpop.f32.mrf.mxu0
      %v6590 = vadd.f32 %v6493, %v6589
      %v6591 = vpop.f32.mrf.mxu0
      %6592 = vmatprep.mubr.bf16.mxu0 %v5917
      %6593 = vmatmul.mubr.bf16.gmra.mxu0 %v5916
      %v6594 = vpop.f32.mrf.mxu0
      %v6595 = vadd.f32 %v6498, %v6594
      %v6596 = vpop.f32.mrf.mxu0
      %v6597 = vpop.f32.mrf.mxu0
      %v6598 = vadd.f32 %v6501, %v6597
      %v6599 = vpop.f32.mrf.mxu0
      %6600 = vmatprep.mubr.bf16.mxu0 %v5924
      %6601 = vmatmul.mubr.bf16.gmra.mxu0 %v5923
      %v6602 = vpop.f32.mrf.mxu0
      %v6603 = vadd.f32 %v6506, %v6602
      %v6604 = vpop.f32.mrf.mxu0
      %v6605 = vpop.f32.mrf.mxu0
      %v6606 = vadd.f32 %v6509, %v6605
      %v6607 = vpop.f32.mrf.mxu0
      %6608 = vdwg.mxu0
      %6609 = vmatprep.subr.bf16.mxu0 0
      %6610 = vmatpush1.bf16.msra.mxu0 %v6261
      %6611 = vmatprep.subr.bf16.mxu0 0
      %6612 = vmatpush1.bf16.msra.mxu0 %v6260
      %6613 = vmatprep.subr.bf16.mxu0 0
      %6614 = vmatpush1.bf16.msra.mxu0 %v6259
      %6615 = vmatprep.subr.bf16.mxu0 0
      %6616 = vmatpush1.bf16.msra.mxu0 %v6258
      %6617 = vmatprep.subr.bf16.mxu0 0
      %6618 = vmatpush1.bf16.msra.mxu0 %v6257
      %6619 = vmatprep.subr.bf16.mxu0 0
      %6620 = vmatpush1.bf16.msra.mxu0 %v6256
      %6621 = vmatprep.subr.bf16.mxu0 0
      %6622 = vmatpush1.bf16.msra.mxu0 %v6255
      %6623 = vmatprep.subr.bf16.mxu0 0
      %6624 = vmatpush1.bf16.msra.mxu0 %v6254
      %6625 = vmatprep.subr.bf16.mxu0 0
      %6626 = vmatpush2.bf16.msra.mxu0 0
      %6627 = vmatprep.subr.bf16.mxu0 0
      %6628 = vmatpush2.bf16.msra.mxu0 0
      %6629 = vmatprep.subr.bf16.mxu0 0
      %6630 = vmatpush2.bf16.msra.mxu0 0
      %6631 = vmatprep.subr.bf16.mxu0 0
      %6632 = vmatpush2.bf16.msra.mxu0 0
      %6633 = vmatprep.subr.bf16.mxu0 0
      %6634 = vmatpush2.bf16.msra.mxu0 0
      %6635 = vmatprep.subr.bf16.mxu0 0
      %6636 = vmatpush2.bf16.msra.mxu0 0
      %6637 = vmatprep.subr.bf16.mxu0 0
      %6638 = vmatpush2.bf16.msra.mxu0 0
      %6639 = vmatprep.subr.bf16.mxu0 0
      %6640 = vmatpush2.bf16.msra.mxu0 0
      %6641 = vmatprep.mubr.bf16.mxu0 0
      %6642 = vmatmul.mubr.bf16.gmra.mxu0 %v5876
      %v6643 = vpop.f32.mrf.mxu0
      %v6644 = vadd.f32 %v6547, %v6643
      %v6645 = vpop.f32.mrf.mxu0
      %v6646 = vpop.f32.mrf.mxu0
      %v6647 = vadd.f32 %v6550, %v6646
      %v6648 = vpop.f32.mrf.mxu0
      %6649 = vmatprep.mubr.bf16.mxu0 0
      %6650 = vmatmul.mubr.bf16.gmra.mxu0 %v5883
      %v6651 = vpop.f32.mrf.mxu0
      %v6652 = vadd.f32 %v6555, %v6651
      %v6653 = vpop.f32.mrf.mxu0
      %v6654 = vpop.f32.mrf.mxu0
      %v6655 = vadd.f32 %v6558, %v6654
      %v6656 = vpop.f32.mrf.mxu0
      %6657 = vmatprep.mubr.bf16.mxu0 0
      %6658 = vmatmul.mubr.bf16.gmra.mxu0 %v5890
      %v6659 = vpop.f32.mrf.mxu0
      %v6660 = vadd.f32 %v6563, %v6659
      %v6661 = vpop.f32.mrf.mxu0
      %v6662 = vpop.f32.mrf.mxu0
      %v6663 = vadd.f32 %v6566, %v6662
      %v6664 = vpop.f32.mrf.mxu0
      %6665 = vmatprep.mubr.bf16.mxu0 0
      %6666 = vmatmul.mubr.bf16.gmra.mxu0 %v5897
      %v6667 = vpop.f32.mrf.mxu0
      %v6668 = vadd.f32 %v6571, %v6667
      %v6669 = vpop.f32.mrf.mxu0
      %v6670 = vpop.f32.mrf.mxu0
      %v6671 = vadd.f32 %v6574, %v6670
      %v6672 = vpop.f32.mrf.mxu0
      %6673 = vmatprep.mubr.bf16.mxu0 0
      %6674 = vmatmul.mubr.bf16.gmra.mxu0 %v5904
      %v6675 = vpop.f32.mrf.mxu0
      %v6676 = vadd.f32 %v6579, %v6675
      %v6677 = vpop.f32.mrf.mxu0
      %v6678 = vpop.f32.mrf.mxu0
      %v6679 = vadd.f32 %v6582, %v6678
      %v6680 = vpop.f32.mrf.mxu0
      %6681 = vmatprep.mubr.bf16.mxu0 0
      %6682 = vmatmul.mubr.bf16.gmra.mxu0 %v5911
      %v6683 = vpop.f32.mrf.mxu0
      %v6684 = vadd.f32 %v6587, %v6683
      %v6685 = vpop.f32.mrf.mxu0
      %v6686 = vpop.f32.mrf.mxu0
      %v6687 = vadd.f32 %v6590, %v6686
      %v6688 = vpop.f32.mrf.mxu0
      %6689 = vmatprep.mubr.bf16.mxu0 0
      %6690 = vmatmul.mubr.bf16.gmra.mxu0 %v5918
      %v6691 = vpop.f32.mrf.mxu0
      %v6692 = vadd.f32 %v6595, %v6691
      %v6693 = vpop.f32.mrf.mxu0
      %v6694 = vpop.f32.mrf.mxu0
      %v6695 = vadd.f32 %v6598, %v6694
      %v6696 = vpop.f32.mrf.mxu0
      %6697 = vmatprep.mubr.bf16.mxu0 0
      %6698 = vmatmul.mubr.bf16.gmra.mxu0 %v5925
      %v6699 = vpop.f32.mrf.mxu0
      %v6700 = vadd.f32 %v6603, %v6699
      %v6701 = vpop.f32.mrf.mxu0
      %v6702 = vpop.f32.mrf.mxu0
      %v6703 = vadd.f32 %v6606, %v6702
      %v6704 = vpop.f32.mrf.mxu0
      %6705 = vdwg.mxu0
      %6706 = vst.msk [vmem:[%s204] sm:$0xff] %vm705, %v6644
      %6707 = vst.msk [vmem:[%s204 + $0x8] sm:$0xff] %vm705, %v6647
      %6708 = vst.msk [vmem:[%s204 + $0x10] sm:$0xff] %vm705, %v6652
      %6709 = vst.msk [vmem:[%s204 + $0x18] sm:$0xff] %vm705, %v6655
      %6710 = vst.msk [vmem:[%s204 + $0x20] sm:$0xff] %vm705, %v6660
      %6711 = vst.msk [vmem:[%s204 + $0x28] sm:$0xff] %vm705, %v6663
      %6712 = vst.msk [vmem:[%s204 + $0x30] sm:$0xff] %vm705, %v6668
      %6713 = vst.msk [vmem:[%s204 + $0x38] sm:$0xff] %vm705, %v6671
      %6714 = vst.msk [vmem:[%s204 + $0x40] sm:$0xff] %vm705, %v6676
      %6715 = vst.msk [vmem:[%s204 + $0x48] sm:$0xff] %vm705, %v6679
      %6716 = vst.msk [vmem:[%s204 + $0x50] sm:$0xff] %vm705, %v6684
      %6717 = vst.msk [vmem:[%s204 + $0x58] sm:$0xff] %vm705, %v6687
      %6718 = vst.msk [vmem:[%s204 + $0x60] sm:$0xff] %vm705, %v6692
      %6719 = vst.msk [vmem:[%s204 + $0x68] sm:$0xff] %vm705, %v6695
      %6720 = vst.msk [vmem:[%s204 + $0x70] sm:$0xff] %vm705, %v6700
      %6721 = vst.msk [vmem:[%s204 + $0x78] sm:$0xff] %vm705, %v6703
      %v6722 = vsel %vm705, %v6644, 0.0
      %v6723 = vsel %vm705, %v6647, 0.0
      %v6724 = vadd.f32 %v6722, %v6723
      %v6725 = vsel %vm705, %v6652, 0.0
      %v6726 = vadd.f32 %v6724, %v6725
      %v6727 = vsel %vm705, %v6655, 0.0
      %v6728 = vadd.f32 %v6726, %v6727
      %v6729 = vsel %vm705, %v6660, 0.0
      %v6730 = vadd.f32 %v6728, %v6729
      %v6731 = vsel %vm705, %v6663, 0.0
      %v6732 = vadd.f32 %v6730, %v6731
      %v6733 = vsel %vm705, %v6668, 0.0
      %v6734 = vadd.f32 %v6732, %v6733
      %v6735 = vsel %vm705, %v6671, 0.0
      %v6736 = vadd.f32 %v6734, %v6735
      %v6737 = vsel %vm705, %v6676, 0.0
      %v6738 = vadd.f32 %v6736, %v6737
      %v6739 = vsel %vm705, %v6679, 0.0
      %v6740 = vadd.f32 %v6738, %v6739
      %v6741 = vsel %vm705, %v6684, 0.0
      %v6742 = vadd.f32 %v6740, %v6741
      %v6743 = vsel %vm705, %v6687, 0.0
      %v6744 = vadd.f32 %v6742, %v6743
      %v6745 = vsel %vm705, %v6692, 0.0
      %v6746 = vadd.f32 %v6744, %v6745
      %v6747 = vsel %vm705, %v6695, 0.0
      %v6748 = vadd.f32 %v6746, %v6747
      %v6749 = vsel %vm705, %v6700, 0.0
      %v6750 = vadd.f32 %v6748, %v6749
      %v6751 = vsel %vm705, %v6703, 0.0
      %v6752 = vadd.f32 %v6750, %v6751
      %v6753 = vrot.slane %v6752, 4
      %v6754 = vadd.f32 %v6752, %v6753
      %v6755 = vrot.slane %v6754, 2
      %v6756 = vadd.f32 %v6754, %v6755
      %v6757 = vrot.slane %v6756, 1
      %v6758 = vadd.f32 %v6756, %v6757
      %v6759 = vadd.f32 %v6758, 0.0
      %v6760 = vmul.f32 %v6644, %v6644
      %v6761 = vmul.f32 %v6647, %v6647
      %v6762 = vmul.f32 %v6652, %v6652
      %v6763 = vmul.f32 %v6655, %v6655
      %v6764 = vmul.f32 %v6660, %v6660
      %v6765 = vmul.f32 %v6663, %v6663
      %v6766 = vmul.f32 %v6668, %v6668
      %v6767 = vmul.f32 %v6671, %v6671
      %v6768 = vmul.f32 %v6676, %v6676
      %v6769 = vmul.f32 %v6679, %v6679
      %v6770 = vmul.f32 %v6684, %v6684
      %v6771 = vmul.f32 %v6687, %v6687
      %v6772 = vmul.f32 %v6692, %v6692
      %v6773 = vmul.f32 %v6695, %v6695
      %v6774 = vmul.f32 %v6700, %v6700
      %v6775 = vmul.f32 %v6703, %v6703
      %v6776 = vsel %vm705, %v6760, 0.0
      %v6777 = vsel %vm705, %v6761, 0.0
      %v6778 = vadd.f32 %v6776, %v6777
      %v6779 = vsel %vm705, %v6762, 0.0
      %v6780 = vadd.f32 %v6778, %v6779
      %v6781 = vsel %vm705, %v6763, 0.0
      %v6782 = vadd.f32 %v6780, %v6781
      %v6783 = vsel %vm705, %v6764, 0.0
      %v6784 = vadd.f32 %v6782, %v6783
      %v6785 = vsel %vm705, %v6765, 0.0
      %v6786 = vadd.f32 %v6784, %v6785
      %v6787 = vsel %vm705, %v6766, 0.0
      %v6788 = vadd.f32 %v6786, %v6787
      %v6789 = vsel %vm705, %v6767, 0.0
      %v6790 = vadd.f32 %v6788, %v6789
      %v6791 = vsel %vm705, %v6768, 0.0
      %v6792 = vadd.f32 %v6790, %v6791
      %v6793 = vsel %vm705, %v6769, 0.0
      %v6794 = vadd.f32 %v6792, %v6793
      %v6795 = vsel %vm705, %v6770, 0.0
      %v6796 = vadd.f32 %v6794, %v6795
      %v6797 = vsel %vm705, %v6771, 0.0
      %v6798 = vadd.f32 %v6796, %v6797
      %v6799 = vsel %vm705, %v6772, 0.0
      %v6800 = vadd.f32 %v6798, %v6799
      %v6801 = vsel %vm705, %v6773, 0.0
      %v6802 = vadd.f32 %v6800, %v6801
      %v6803 = vsel %vm705, %v6774, 0.0
      %v6804 = vadd.f32 %v6802, %v6803
      %v6805 = vsel %vm705, %v6775, 0.0
      %v6806 = vadd.f32 %v6804, %v6805
      %v6807 = vrot.slane %v6806, 4
      %v6808 = vadd.f32 %v6806, %v6807
      %v6809 = vrot.slane %v6808, 2
      %v6810 = vadd.f32 %v6808, %v6809
      %v6811 = vrot.slane %v6810, 1
      %v6812 = vadd.f32 %v6810, %v6811
      %v6813 = vadd.f32 %v6812, 0.0
      %s6814 = sadd.s32 %s214, 8
      %s6815 = sadd.s32 %s214, 12
      %s6816 = smul.u32 %s6815, 4
      %s6817 = smul.addr %s6816, 4
      %s6818 = scalar_lea.vmem %s195, %s6817
      %v6819 = vld [vmem:[%s6818] sm:$0xc]
      %v6820 = vld [vmem:[%s6818 + $0x4] sm:$0xf]
      %v6821 = vld [vmem:[%s6818 + $0x8] sm:$0x3]
      %v6822 = vld [vmem:[%s6818 + $0x10] sm:$0xc]
      %v6823 = vld [vmem:[%s6818 + $0x14] sm:$0xf]
      %v6824 = vld [vmem:[%s6818 + $0x18] sm:$0x3]
      %v6825 = vld [vmem:[%s6818 + $0x20] sm:$0xc]
      %v6826 = vld [vmem:[%s6818 + $0x24] sm:$0xf]
      %v6827 = vld [vmem:[%s6818 + $0x28] sm:$0x3]
      %v6828 = vld [vmem:[%s6818 + $0x30] sm:$0xc]
      %v6829 = vld [vmem:[%s6818 + $0x34] sm:$0xf]
      %v6830 = vld [vmem:[%s6818 + $0x38] sm:$0x3]
      %v6831 = vld [vmem:[%s6818 + $0x40] sm:$0xc]
      %v6832 = vld [vmem:[%s6818 + $0x44] sm:$0xf]
      %v6833 = vld [vmem:[%s6818 + $0x48] sm:$0x3]
      %v6834 = vld [vmem:[%s6818 + $0x50] sm:$0xc]
      %v6835 = vld [vmem:[%s6818 + $0x54] sm:$0xf]
      %v6836 = vld [vmem:[%s6818 + $0x58] sm:$0x3]
      %v6837 = vld [vmem:[%s6818 + $0x60] sm:$0xc]
      %v6838 = vld [vmem:[%s6818 + $0x64] sm:$0xf]
      %v6839 = vld [vmem:[%s6818 + $0x68] sm:$0x3]
      %v6840 = vld [vmem:[%s6818 + $0x70] sm:$0xc]
      %v6841 = vld [vmem:[%s6818 + $0x74] sm:$0xf]
      %v6842 = vld [vmem:[%s6818 + $0x78] sm:$0x3]
      %v6843 = vld [vmem:[%s6818 + $0x8] sm:$0x7]
      %v6844 = vld [vmem:[%s6818 + $0x18] sm:$0x7]
      %v6845 = vld [vmem:[%s6818 + $0x28] sm:$0x7]
      %v6846 = vld [vmem:[%s6818 + $0x38] sm:$0x7]
      %v6847 = vld [vmem:[%s6818 + $0x48] sm:$0x7]
      %v6848 = vld [vmem:[%s6818 + $0x58] sm:$0x7]
      %v6849 = vld [vmem:[%s6818 + $0x68] sm:$0x7]
      %v6850 = vld [vmem:[%s6818 + $0x78] sm:$0x7]
      %v6851 = vld [vmem:[%s6818] sm:$0x8]
      %v6852 = vld [vmem:[%s6818 + $0x10] sm:$0x8]
      %v6853 = vld [vmem:[%s6818 + $0x20] sm:$0x8]
      %v6854 = vld [vmem:[%s6818 + $0x30] sm:$0x8]
      %v6855 = vld [vmem:[%s6818 + $0x40] sm:$0x8]
      %v6856 = vld [vmem:[%s6818 + $0x50] sm:$0x8]
      %v6857 = vld [vmem:[%s6818 + $0x60] sm:$0x8]
      %v6858 = vld [vmem:[%s6818 + $0x70] sm:$0x8]
      %s6859 = sadd.s32 %s214, 13
      %s6860 = smul.u32 %s6859, 4
      %s6861 = smul.addr %s6860, 4
      %s6862 = scalar_lea.vmem %s195, %s6861
      %v6863 = vld [vmem:[%s6862] sm:$0xc]
      %v6864 = vld [vmem:[%s6862 + $0x4] sm:$0xf]
      %v6865 = vld [vmem:[%s6862 + $0x8] sm:$0x3]
      %v6866 = vld [vmem:[%s6862 + $0x10] sm:$0xc]
      %v6867 = vld [vmem:[%s6862 + $0x14] sm:$0xf]
      %v6868 = vld [vmem:[%s6862 + $0x18] sm:$0x3]
      %v6869 = vld [vmem:[%s6862 + $0x20] sm:$0xc]
      %v6870 = vld [vmem:[%s6862 + $0x24] sm:$0xf]
      %v6871 = vld [vmem:[%s6862 + $0x28] sm:$0x3]
      %v6872 = vld [vmem:[%s6862 + $0x30] sm:$0xc]
      %v6873 = vld [vmem:[%s6862 + $0x34] sm:$0xf]
      %v6874 = vld [vmem:[%s6862 + $0x38] sm:$0x3]
      %v6875 = vld [vmem:[%s6862 + $0x40] sm:$0xc]
      %v6876 = vld [vmem:[%s6862 + $0x44] sm:$0xf]
      %v6877 = vld [vmem:[%s6862 + $0x48] sm:$0x3]
      %v6878 = vld [vmem:[%s6862 + $0x50] sm:$0xc]
      %v6879 = vld [vmem:[%s6862 + $0x54] sm:$0xf]
      %v6880 = vld [vmem:[%s6862 + $0x58] sm:$0x3]
      %v6881 = vld [vmem:[%s6862 + $0x60] sm:$0xc]
      %v6882 = vld [vmem:[%s6862 + $0x64] sm:$0xf]
      %v6883 = vld [vmem:[%s6862 + $0x68] sm:$0x3]
      %v6884 = vld [vmem:[%s6862 + $0x70] sm:$0xc]
      %v6885 = vld [vmem:[%s6862 + $0x74] sm:$0xf]
      %v6886 = vld [vmem:[%s6862 + $0x78] sm:$0x3]
      %v6911 = vunpack.c.l.b16 %v6819
      %v6912 = vunpack.c.l.b16 %v6820
      %v6913 = vunpack.c.l.b16 %v6821
      %v6914 = vunpack.c.l.b16 %v6822
      %v6915 = vunpack.c.l.b16 %v6823
      %v6916 = vunpack.c.l.b16 %v6824
      %v6917 = vunpack.c.l.b16 %v6825
      %v6918 = vunpack.c.l.b16 %v6826
      %v6919 = vunpack.c.l.b16 %v6827
      %v6920 = vunpack.c.l.b16 %v6828
      %v6921 = vunpack.c.l.b16 %v6829
      %v6922 = vunpack.c.l.b16 %v6830
      %v6923 = vunpack.c.l.b16 %v6831
      %v6924 = vunpack.c.l.b16 %v6832
      %v6925 = vunpack.c.l.b16 %v6833
      %v6926 = vunpack.c.l.b16 %v6834
      %v6927 = vunpack.c.l.b16 %v6835
      %v6928 = vunpack.c.l.b16 %v6836
      %v6929 = vunpack.c.l.b16 %v6837
      %v6930 = vunpack.c.l.b16 %v6838
      %v6931 = vunpack.c.l.b16 %v6839
      %v6932 = vunpack.c.l.b16 %v6840
      %v6933 = vunpack.c.l.b16 %v6841
      %v6934 = vunpack.c.l.b16 %v6842
      %v6935 = vpack.c.b16 %v6912, %v6911
      %v6936 = vpack.c.b16 %v6913, %v6913
      %v6937 = vpack.c.b16 %v6915, %v6914
      %v6938 = vpack.c.b16 %v6916, %v6916
      %v6939 = vpack.c.b16 %v6918, %v6917
      %v6940 = vpack.c.b16 %v6919, %v6919
      %v6941 = vpack.c.b16 %v6921, %v6920
      %v6942 = vpack.c.b16 %v6922, %v6922
      %v6943 = vpack.c.b16 %v6924, %v6923
      %v6944 = vpack.c.b16 %v6925, %v6925
      %v6945 = vpack.c.b16 %v6927, %v6926
      %v6946 = vpack.c.b16 %v6928, %v6928
      %v6947 = vpack.c.b16 %v6930, %v6929
      %v6948 = vpack.c.b16 %v6931, %v6931
      %v6949 = vpack.c.b16 %v6933, %v6932
      %v6950 = vpack.c.b16 %v6934, %v6934
      %v6959 = vunpack.c.l.b16 %v6843
      %v6960 = vunpack.c.l.b16 %v6844
      %v6961 = vunpack.c.l.b16 %v6845
      %v6962 = vunpack.c.l.b16 %v6846
      %v6963 = vunpack.c.l.b16 %v6847
      %v6964 = vunpack.c.l.b16 %v6848
      %v6965 = vunpack.c.l.b16 %v6849
      %v6966 = vunpack.c.l.b16 %v6850
      %v6967 = vpack.c.b16 %v6959, %v6959
      %v6968 = vpack.c.b16 %v6960, %v6960
      %v6969 = vpack.c.b16 %v6961, %v6961
      %v6970 = vpack.c.b16 %v6962, %v6962
      %v6971 = vpack.c.b16 %v6963, %v6963
      %v6972 = vpack.c.b16 %v6964, %v6964
      %v6973 = vpack.c.b16 %v6965, %v6965
      %v6974 = vpack.c.b16 %v6966, %v6966
      %v6976 = vshrl.u32 %v6935, 16
      %v6978 = vshll.u32 %v6935, 16
      %v6980 = vrot.slane %v6978, 1
      %v6981 = vor.u32 %v6976, %v6980
      %v6983 = vshll.u32 %v6967, 16
      %v6985 = vrot.slane %v6983, 1
      %v6986 = vsel %vm375, %v6981, %v6985
      %v6987 = vshrl.u32 %v6967, 16
      %v6989 = vor.u32 %v6987, %v6985
      %v6991 = vshrl.u32 %v6937, 16
      %v6993 = vshll.u32 %v6937, 16
      %v6995 = vrot.slane %v6993, 1
      %v6996 = vor.u32 %v6991, %v6995
      %v6998 = vshll.u32 %v6968, 16
      %v7000 = vrot.slane %v6998, 1
      %v7001 = vsel %vm375, %v6996, %v7000
      %v7002 = vshrl.u32 %v6968, 16
      %v7004 = vor.u32 %v7002, %v7000
      %v7006 = vshrl.u32 %v6939, 16
      %v7008 = vshll.u32 %v6939, 16
      %v7010 = vrot.slane %v7008, 1
      %v7011 = vor.u32 %v7006, %v7010
      %v7013 = vshll.u32 %v6969, 16
      %v7015 = vrot.slane %v7013, 1
      %v7016 = vsel %vm375, %v7011, %v7015
      %v7017 = vshrl.u32 %v6969, 16
      %v7019 = vor.u32 %v7017, %v7015
      %v7021 = vshrl.u32 %v6941, 16
      %v7023 = vshll.u32 %v6941, 16
      %v7025 = vrot.slane %v7023, 1
      %v7026 = vor.u32 %v7021, %v7025
      %v7028 = vshll.u32 %v6970, 16
      %v7030 = vrot.slane %v7028, 1
      %v7031 = vsel %vm375, %v7026, %v7030
      %v7032 = vshrl.u32 %v6970, 16
      %v7034 = vor.u32 %v7032, %v7030
      %v7036 = vshrl.u32 %v6943, 16
      %v7038 = vshll.u32 %v6943, 16
      %v7040 = vrot.slane %v7038, 1
      %v7041 = vor.u32 %v7036, %v7040
      %v7043 = vshll.u32 %v6971, 16
      %v7045 = vrot.slane %v7043, 1
      %v7046 = vsel %vm375, %v7041, %v7045
      %v7047 = vshrl.u32 %v6971, 16
      %v7049 = vor.u32 %v7047, %v7045
      %v7051 = vshrl.u32 %v6945, 16
      %v7053 = vshll.u32 %v6945, 16
      %v7055 = vrot.slane %v7053, 1
      %v7056 = vor.u32 %v7051, %v7055
      %v7058 = vshll.u32 %v6972, 16
      %v7060 = vrot.slane %v7058, 1
      %v7061 = vsel %vm375, %v7056, %v7060
      %v7062 = vshrl.u32 %v6972, 16
      %v7064 = vor.u32 %v7062, %v7060
      %v7066 = vshrl.u32 %v6947, 16
      %v7068 = vshll.u32 %v6947, 16
      %v7070 = vrot.slane %v7068, 1
      %v7071 = vor.u32 %v7066, %v7070
      %v7073 = vshll.u32 %v6973, 16
      %v7075 = vrot.slane %v7073, 1
      %v7076 = vsel %vm375, %v7071, %v7075
      %v7077 = vshrl.u32 %v6973, 16
      %v7079 = vor.u32 %v7077, %v7075
      %v7081 = vshrl.u32 %v6949, 16
      %v7083 = vshll.u32 %v6949, 16
      %v7085 = vrot.slane %v7083, 1
      %v7086 = vor.u32 %v7081, %v7085
      %v7088 = vshll.u32 %v6974, 16
      %v7090 = vrot.slane %v7088, 1
      %v7091 = vsel %vm375, %v7086, %v7090
      %v7092 = vshrl.u32 %v6974, 16
      %v7094 = vor.u32 %v7092, %v7090
      %7095 = vrot.lane.b32.xlu0 %v6986, 32
      %v7096 = vpop.permute.xlu0 %7095
      %7097 = vrot.lane.b32.xlu0 %v6989, 32
      %v7098 = vpop.permute.xlu0 %7097
      %7099 = vrot.lane.b32.xlu0 %v7001, 32
      %v7100 = vpop.permute.xlu0 %7099
      %7101 = vrot.lane.b32.xlu0 %v7004, 32
      %v7102 = vpop.permute.xlu0 %7101
      %7103 = vrot.lane.b32.xlu0 %v7016, 32
      %v7104 = vpop.permute.xlu0 %7103
      %7105 = vrot.lane.b32.xlu0 %v7019, 32
      %v7106 = vpop.permute.xlu0 %7105
      %7107 = vrot.lane.b32.xlu0 %v7031, 32
      %v7108 = vpop.permute.xlu0 %7107
      %7109 = vrot.lane.b32.xlu0 %v7034, 32
      %v7110 = vpop.permute.xlu0 %7109
      %7111 = vrot.lane.b32.xlu0 %v7046, 32
      %v7112 = vpop.permute.xlu0 %7111
      %7113 = vrot.lane.b32.xlu0 %v7049, 32
      %v7114 = vpop.permute.xlu0 %7113
      %7115 = vrot.lane.b32.xlu0 %v7061, 32
      %v7116 = vpop.permute.xlu0 %7115
      %7117 = vrot.lane.b32.xlu0 %v7064, 32
      %v7118 = vpop.permute.xlu0 %7117
      %7119 = vrot.lane.b32.xlu0 %v7076, 32
      %v7120 = vpop.permute.xlu0 %7119
      %7121 = vrot.lane.b32.xlu0 %v7079, 32
      %v7122 = vpop.permute.xlu0 %7121
      %7123 = vrot.lane.b32.xlu0 %v7091, 32
      %v7124 = vpop.permute.xlu0 %7123
      %7125 = vrot.lane.b32.xlu0 %v7094, 32
      %v7126 = vpop.permute.xlu0 %7125
      %v7135 = vunpack.c.l.b16 %v6851
      %v7136 = vunpack.c.l.b16 %v6852
      %v7137 = vunpack.c.l.b16 %v6853
      %v7138 = vunpack.c.l.b16 %v6854
      %v7139 = vunpack.c.l.b16 %v6855
      %v7140 = vunpack.c.l.b16 %v6856
      %v7141 = vunpack.c.l.b16 %v6857
      %v7142 = vunpack.c.l.b16 %v6858
      %v7143 = vpack.c.b16 %v6912, %v7135
      %v7144 = vpack.c.b16 %v6915, %v7136
      %v7145 = vpack.c.b16 %v6918, %v7137
      %v7146 = vpack.c.b16 %v6921, %v7138
      %v7147 = vpack.c.b16 %v6924, %v7139
      %v7148 = vpack.c.b16 %v6927, %v7140
      %v7149 = vpack.c.b16 %v6930, %v7141
      %v7150 = vpack.c.b16 %v6933, %v7142
      %v7151 = vrot.slane %v7143, 1
      %v7152 = vrot.slane %v6967, 1
      %v7153 = vsel %vm552, %v7151, %v7152
      %v7154 = vrot.slane %v7144, 1
      %v7155 = vrot.slane %v6968, 1
      %v7156 = vsel %vm552, %v7154, %v7155
      %v7157 = vrot.slane %v7145, 1
      %v7158 = vrot.slane %v6969, 1
      %v7159 = vsel %vm552, %v7157, %v7158
      %v7160 = vrot.slane %v7146, 1
      %v7161 = vrot.slane %v6970, 1
      %v7162 = vsel %vm552, %v7160, %v7161
      %v7163 = vrot.slane %v7147, 1
      %v7164 = vrot.slane %v6971, 1
      %v7165 = vsel %vm552, %v7163, %v7164
      %v7166 = vrot.slane %v7148, 1
      %v7167 = vrot.slane %v6972, 1
      %v7168 = vsel %vm552, %v7166, %v7167
      %v7169 = vrot.slane %v7149, 1
      %v7170 = vrot.slane %v6973, 1
      %v7171 = vsel %vm552, %v7169, %v7170
      %v7172 = vrot.slane %v7150, 1
      %v7173 = vrot.slane %v6974, 1
      %v7174 = vsel %vm552, %v7172, %v7173
      %7175 = vrot.lane.b32.xlu0 %v7153, 64
      %v7176 = vpop.permute.xlu0 %7175
      %7177 = vrot.lane.b32.xlu0 %v7152, 64
      %v7178 = vpop.permute.xlu0 %7177
      %7179 = vrot.lane.b32.xlu0 %v7156, 64
      %v7180 = vpop.permute.xlu0 %7179
      %7181 = vrot.lane.b32.xlu0 %v7155, 64
      %v7182 = vpop.permute.xlu0 %7181
      %7183 = vrot.lane.b32.xlu0 %v7159, 64
      %v7184 = vpop.permute.xlu0 %7183
      %7185 = vrot.lane.b32.xlu0 %v7158, 64
      %v7186 = vpop.permute.xlu0 %7185
      %7187 = vrot.lane.b32.xlu0 %v7162, 64
      %v7188 = vpop.permute.xlu0 %7187
      %7189 = vrot.lane.b32.xlu0 %v7161, 64
      %v7190 = vpop.permute.xlu0 %7189
      %7191 = vrot.lane.b32.xlu0 %v7165, 64
      %v7192 = vpop.permute.xlu0 %7191
      %7193 = vrot.lane.b32.xlu0 %v7164, 64
      %v7194 = vpop.permute.xlu0 %7193
      %7195 = vrot.lane.b32.xlu0 %v7168, 64
      %v7196 = vpop.permute.xlu0 %7195
      %7197 = vrot.lane.b32.xlu0 %v7167, 64
      %v7198 = vpop.permute.xlu0 %7197
      %7199 = vrot.lane.b32.xlu0 %v7171, 64
      %v7200 = vpop.permute.xlu0 %7199
      %7201 = vrot.lane.b32.xlu0 %v7170, 64
      %v7202 = vpop.permute.xlu0 %7201
      %7203 = vrot.lane.b32.xlu0 %v7174, 64
      %v7204 = vpop.permute.xlu0 %7203
      %7205 = vrot.lane.b32.xlu0 %v7173, 64
      %v7206 = vpop.permute.xlu0 %7205
      %v7231 = vunpack.c.l.b16 %v6863
      %v7232 = vunpack.c.l.b16 %v6864
      %v7233 = vunpack.c.l.b16 %v6865
      %v7234 = vunpack.c.l.b16 %v6866
      %v7235 = vunpack.c.l.b16 %v6867
      %v7236 = vunpack.c.l.b16 %v6868
      %v7237 = vunpack.c.l.b16 %v6869
      %v7238 = vunpack.c.l.b16 %v6870
      %v7239 = vunpack.c.l.b16 %v6871
      %v7240 = vunpack.c.l.b16 %v6872
      %v7241 = vunpack.c.l.b16 %v6873
      %v7242 = vunpack.c.l.b16 %v6874
      %v7243 = vunpack.c.l.b16 %v6875
      %v7244 = vunpack.c.l.b16 %v6876
      %v7245 = vunpack.c.l.b16 %v6877
      %v7246 = vunpack.c.l.b16 %v6878
      %v7247 = vunpack.c.l.b16 %v6879
      %v7248 = vunpack.c.l.b16 %v6880
      %v7249 = vunpack.c.l.b16 %v6881
      %v7250 = vunpack.c.l.b16 %v6882
      %v7251 = vunpack.c.l.b16 %v6883
      %v7252 = vunpack.c.l.b16 %v6884
      %v7253 = vunpack.c.l.b16 %v6885
      %v7254 = vunpack.c.l.b16 %v6886
      %v7255 = vpack.c.b16 %v7232, %v7231
      %v7256 = vpack.c.b16 %v7233, %v7233
      %v7257 = vpack.c.b16 %v7235, %v7234
      %v7258 = vpack.c.b16 %v7236, %v7236
      %v7259 = vpack.c.b16 %v7238, %v7237
      %v7260 = vpack.c.b16 %v7239, %v7239
      %v7261 = vpack.c.b16 %v7241, %v7240
      %v7262 = vpack.c.b16 %v7242, %v7242
      %v7263 = vpack.c.b16 %v7244, %v7243
      %v7264 = vpack.c.b16 %v7245, %v7245
      %v7265 = vpack.c.b16 %v7247, %v7246
      %v7266 = vpack.c.b16 %v7248, %v7248
      %v7267 = vpack.c.b16 %v7250, %v7249
      %v7268 = vpack.c.b16 %v7251, %v7251
      %v7269 = vpack.c.b16 %v7253, %v7252
      %v7270 = vpack.c.b16 %v7254, %v7254
      %7271 = vrot.lane.b32.xlu0 %v7255, 96
      %v7272 = vpop.permute.xlu0 %7271
      %7273 = vrot.lane.b32.xlu0 %v7256, 96
      %v7274 = vpop.permute.xlu0 %7273
      %7275 = vrot.lane.b32.xlu0 %v7257, 96
      %v7276 = vpop.permute.xlu0 %7275
      %7277 = vrot.lane.b32.xlu0 %v7258, 96
      %v7278 = vpop.permute.xlu0 %7277
      %7279 = vrot.lane.b32.xlu0 %v7259, 96
      %v7280 = vpop.permute.xlu0 %7279
      %7281 = vrot.lane.b32.xlu0 %v7260, 96
      %v7282 = vpop.permute.xlu0 %7281
      %7283 = vrot.lane.b32.xlu0 %v7261, 96
      %v7284 = vpop.permute.xlu0 %7283
      %7285 = vrot.lane.b32.xlu0 %v7262, 96
      %v7286 = vpop.permute.xlu0 %7285
      %7287 = vrot.lane.b32.xlu0 %v7263, 96
      %v7288 = vpop.permute.xlu0 %7287
      %7289 = vrot.lane.b32.xlu0 %v7264, 96
      %v7290 = vpop.permute.xlu0 %7289
      %7291 = vrot.lane.b32.xlu0 %v7265, 96
      %v7292 = vpop.permute.xlu0 %7291
      %7293 = vrot.lane.b32.xlu0 %v7266, 96
      %v7294 = vpop.permute.xlu0 %7293
      %7295 = vrot.lane.b32.xlu0 %v7267, 96
      %v7296 = vpop.permute.xlu0 %7295
      %7297 = vrot.lane.b32.xlu0 %v7268, 96
      %v7298 = vpop.permute.xlu0 %7297
      %7299 = vrot.lane.b32.xlu0 %v7269, 96
      %v7300 = vpop.permute.xlu0 %7299
      %7301 = vrot.lane.b32.xlu0 %v7270, 96
      %v7302 = vpop.permute.xlu0 %7301
      %v7304 = vsel %vm705, %v6935, %v7096
      %v7307 = vsel %vm705, %v6936, %v7098
      %v7309 = vsel %vm705, %v6937, %v7100
      %v7312 = vsel %vm705, %v6938, %v7102
      %v7314 = vsel %vm705, %v6939, %v7104
      %v7317 = vsel %vm705, %v6940, %v7106
      %v7319 = vsel %vm705, %v6941, %v7108
      %v7322 = vsel %vm705, %v6942, %v7110
      %v7324 = vsel %vm705, %v6943, %v7112
      %v7327 = vsel %vm705, %v6944, %v7114
      %v7329 = vsel %vm705, %v6945, %v7116
      %v7332 = vsel %vm705, %v6946, %v7118
      %v7334 = vsel %vm705, %v6947, %v7120
      %v7337 = vsel %vm705, %v6948, %v7122
      %v7339 = vsel %vm705, %v6949, %v7124
      %v7342 = vsel %vm705, %v6950, %v7126
      %v7344 = vsel %vm746, %v7304, %v7176
      %v7346 = vsel %vm746, %v7307, %v7178
      %v7348 = vsel %vm746, %v7309, %v7180
      %v7350 = vsel %vm746, %v7312, %v7182
      %v7352 = vsel %vm746, %v7314, %v7184
      %v7354 = vsel %vm746, %v7317, %v7186
      %v7356 = vsel %vm746, %v7319, %v7188
      %v7358 = vsel %vm746, %v7322, %v7190
      %v7360 = vsel %vm746, %v7324, %v7192
      %v7362 = vsel %vm746, %v7327, %v7194
      %v7364 = vsel %vm746, %v7329, %v7196
      %v7366 = vsel %vm746, %v7332, %v7198
      %v7368 = vsel %vm746, %v7334, %v7200
      %v7370 = vsel %vm746, %v7337, %v7202
      %v7372 = vsel %vm746, %v7339, %v7204
      %v7374 = vsel %vm746, %v7342, %v7206
      %v7376 = vsel %vm779, %v7344, %v7272
      %v7378 = vsel %vm779, %v7346, %v7274
      %v7380 = vsel %vm779, %v7348, %v7276
      %v7382 = vsel %vm779, %v7350, %v7278
      %v7384 = vsel %vm779, %v7352, %v7280
      %v7386 = vsel %vm779, %v7354, %v7282
      %v7388 = vsel %vm779, %v7356, %v7284
      %v7390 = vsel %vm779, %v7358, %v7286
      %v7392 = vsel %vm779, %v7360, %v7288
      %v7394 = vsel %vm779, %v7362, %v7290
      %v7396 = vsel %vm779, %v7364, %v7292
      %v7398 = vsel %vm779, %v7366, %v7294
      %v7400 = vsel %vm779, %v7368, %v7296
      %v7402 = vsel %vm779, %v7370, %v7298
      %v7404 = vsel %vm779, %v7372, %v7300
      %v7406 = vsel %vm779, %v7374, %v7302
      %v7423 = vrot.slane %v7376, 2
      %v7424 = vrot.slane %v7378, 2
      %v7425 = vsel %vm828, %v7423, %v7424
      %v7426 = vrot.slane %v7380, 2
      %v7427 = vrot.slane %v7382, 2
      %v7428 = vsel %vm828, %v7426, %v7427
      %v7429 = vrot.slane %v7384, 2
      %v7430 = vrot.slane %v7386, 2
      %v7431 = vsel %vm828, %v7429, %v7430
      %v7432 = vrot.slane %v7388, 2
      %v7433 = vrot.slane %v7390, 2
      %v7434 = vsel %vm828, %v7432, %v7433
      %v7435 = vrot.slane %v7392, 2
      %v7436 = vrot.slane %v7394, 2
      %v7437 = vsel %vm828, %v7435, %v7436
      %v7438 = vrot.slane %v7396, 2
      %v7439 = vrot.slane %v7398, 2
      %v7440 = vsel %vm828, %v7438, %v7439
      %v7441 = vrot.slane %v7400, 2
      %v7442 = vrot.slane %v7402, 2
      %v7443 = vsel %vm828, %v7441, %v7442
      %v7444 = vrot.slane %v7404, 2
      %v7445 = vrot.slane %v7406, 2
      %v7446 = vsel %vm828, %v7444, %v7445
      %v7447 = vunpack.c.l.b16 %v7425
      %v7448 = vunpack.c.h.b16 %v7425
      %v7449 = vunpack.c.l.b16 %v7428
      %v7450 = vunpack.c.h.b16 %v7428
      %v7451 = vunpack.c.l.b16 %v7431
      %v7452 = vunpack.c.h.b16 %v7431
      %v7453 = vunpack.c.l.b16 %v7434
      %v7454 = vunpack.c.h.b16 %v7434
      %v7455 = vunpack.c.l.b16 %v7437
      %v7456 = vunpack.c.h.b16 %v7437
      %v7457 = vunpack.c.l.b16 %v7440
      %v7458 = vunpack.c.h.b16 %v7440
      %v7459 = vunpack.c.l.b16 %v7443
      %v7460 = vunpack.c.h.b16 %v7443
      %v7461 = vunpack.c.l.b16 %v7446
      %v7462 = vunpack.c.h.b16 %v7446
      %v7463 = vpack.c.b16 %v7447, %v7447
      %v7464 = vpack.c.b16 %v7448, %v7448
      %v7465 = vpack.c.b16 %v7449, %v7449
      %v7466 = vpack.c.b16 %v7450, %v7450
      %v7467 = vpack.c.b16 %v7451, %v7451
      %v7468 = vpack.c.b16 %v7452, %v7452
      %v7469 = vpack.c.b16 %v7453, %v7453
      %v7470 = vpack.c.b16 %v7454, %v7454
      %v7471 = vpack.c.b16 %v7455, %v7455
      %v7472 = vpack.c.b16 %v7456, %v7456
      %v7473 = vpack.c.b16 %v7457, %v7457
      %v7474 = vpack.c.b16 %v7458, %v7458
      %v7475 = vpack.c.b16 %v7459, %v7459
      %v7476 = vpack.c.b16 %v7460, %v7460
      %v7477 = vpack.c.b16 %v7461, %v7461
      %v7478 = vpack.c.b16 %v7462, %v7462
      %7495 = vst [vmem:[#allocation3] sm:$0xf] %v7463
      %7496 = vst [vmem:[#allocation3 + $0x1c] sm:$0xf] %v7464
      %7497 = vst [vmem:[#allocation3 + $0x38] sm:$0xf] %v7465
      %7498 = vst [vmem:[#allocation3 + $0x54] sm:$0xf] %v7466
      %7499 = vst [vmem:[#allocation3 + $0x70] sm:$0xf] %v7467
      %7500 = vst [vmem:[#allocation3 + $0x8c] sm:$0xf] %v7468
      %7501 = vst [vmem:[#allocation3 + $0xa8] sm:$0xf] %v7469
      %7502 = vst [vmem:[#allocation3 + $0xc4] sm:$0xf] %v7470
      %7503 = vst [vmem:[#allocation3 + $0xe0] sm:$0xf] %v7471
      %7504 = vst [vmem:[#allocation3 + $0xfc] sm:$0xf] %v7472
      %7505 = vst [vmem:[#allocation3 + $0x118] sm:$0xf] %v7473
      %7506 = vst [vmem:[#allocation3 + $0x134] sm:$0xf] %v7474
      %7507 = vst [vmem:[#allocation3 + $0x150] sm:$0xf] %v7475
      %7508 = vst [vmem:[#allocation3 + $0x16c] sm:$0xf] %v7476
      %7509 = vst [vmem:[#allocation3 + $0x188] sm:$0xf] %v7477
      %7510 = vst [vmem:[#allocation3 + $0x1a4] sm:$0xf] %v7478
      %v7511 = vld [vmem:[%s6862] sm:$0xc]
      %v7512 = vld [vmem:[%s6862 + $0x4] sm:$0xf]
      %v7513 = vld [vmem:[%s6862 + $0x8] sm:$0x7]
      %v7514 = vld [vmem:[%s6862 + $0x10] sm:$0xc]
      %v7515 = vld [vmem:[%s6862 + $0x14] sm:$0xf]
      %v7516 = vld [vmem:[%s6862 + $0x18] sm:$0x7]
      %v7517 = vld [vmem:[%s6862 + $0x20] sm:$0xc]
      %v7518 = vld [vmem:[%s6862 + $0x24] sm:$0xf]
      %v7519 = vld [vmem:[%s6862 + $0x28] sm:$0x7]
      %v7520 = vld [vmem:[%s6862 + $0x30] sm:$0xc]
      %v7521 = vld [vmem:[%s6862 + $0x34] sm:$0xf]
      %v7522 = vld [vmem:[%s6862 + $0x38] sm:$0x7]
      %v7523 = vld [vmem:[%s6862 + $0x40] sm:$0xc]
      %v7524 = vld [vmem:[%s6862 + $0x44] sm:$0xf]
      %v7525 = vld [vmem:[%s6862 + $0x48] sm:$0x7]
      %v7526 = vld [vmem:[%s6862 + $0x50] sm:$0xc]
      %v7527 = vld [vmem:[%s6862 + $0x54] sm:$0xf]
      %v7528 = vld [vmem:[%s6862 + $0x58] sm:$0x7]
      %v7529 = vld [vmem:[%s6862 + $0x60] sm:$0xc]
      %v7530 = vld [vmem:[%s6862 + $0x64] sm:$0xf]
      %v7531 = vld [vmem:[%s6862 + $0x68] sm:$0x7]
      %v7532 = vld [vmem:[%s6862 + $0x70] sm:$0xc]
      %v7533 = vld [vmem:[%s6862 + $0x74] sm:$0xf]
      %v7534 = vld [vmem:[%s6862 + $0x78] sm:$0x7]
      %v7535 = vld [vmem:[%s6862] sm:$0x8]
      %v7536 = vld [vmem:[%s6862 + $0x10] sm:$0x8]
      %v7537 = vld [vmem:[%s6862 + $0x20] sm:$0x8]
      %v7538 = vld [vmem:[%s6862 + $0x30] sm:$0x8]
      %v7539 = vld [vmem:[%s6862 + $0x40] sm:$0x8]
      %v7540 = vld [vmem:[%s6862 + $0x50] sm:$0x8]
      %v7541 = vld [vmem:[%s6862 + $0x60] sm:$0x8]
      %v7542 = vld [vmem:[%s6862 + $0x70] sm:$0x8]
      %s7543 = sadd.s32 %s214, 14
      %s7544 = smul.u32 %s7543, 4
      %s7545 = smul.addr %s7544, 4
      %s7546 = scalar_lea.vmem %s195, %s7545
      %v7547 = vld [vmem:[%s7546] sm:$0xc]
      %v7548 = vld [vmem:[%s7546 + $0x4] sm:$0xf]
      %v7549 = vld [vmem:[%s7546 + $0x8] sm:$0x3]
      %v7550 = vld [vmem:[%s7546 + $0x10] sm:$0xc]
      %v7551 = vld [vmem:[%s7546 + $0x14] sm:$0xf]
      %v7552 = vld [vmem:[%s7546 + $0x18] sm:$0x3]
      %v7553 = vld [vmem:[%s7546 + $0x20] sm:$0xc]
      %v7554 = vld [vmem:[%s7546 + $0x24] sm:$0xf]
      %v7555 = vld [vmem:[%s7546 + $0x28] sm:$0x3]
      %v7556 = vld [vmem:[%s7546 + $0x30] sm:$0xc]
      %v7557 = vld [vmem:[%s7546 + $0x34] sm:$0xf]
      %v7558 = vld [vmem:[%s7546 + $0x38] sm:$0x3]
      %v7559 = vld [vmem:[%s7546 + $0x40] sm:$0xc]
      %v7560 = vld [vmem:[%s7546 + $0x44] sm:$0xf]
      %v7561 = vld [vmem:[%s7546 + $0x48] sm:$0x3]
      %v7562 = vld [vmem:[%s7546 + $0x50] sm:$0xc]
      %v7563 = vld [vmem:[%s7546 + $0x54] sm:$0xf]
      %v7564 = vld [vmem:[%s7546 + $0x58] sm:$0x3]
      %v7565 = vld [vmem:[%s7546 + $0x60] sm:$0xc]
      %v7566 = vld [vmem:[%s7546 + $0x64] sm:$0xf]
      %v7567 = vld [vmem:[%s7546 + $0x68] sm:$0x3]
      %v7568 = vld [vmem:[%s7546 + $0x70] sm:$0xc]
      %v7569 = vld [vmem:[%s7546 + $0x74] sm:$0xf]
      %v7570 = vld [vmem:[%s7546 + $0x78] sm:$0x3]
      %v7571 = vld [vmem:[%s7546 + $0x8] sm:$0x7]
      %v7572 = vld [vmem:[%s7546 + $0x18] sm:$0x7]
      %v7573 = vld [vmem:[%s7546 + $0x28] sm:$0x7]
      %v7574 = vld [vmem:[%s7546 + $0x38] sm:$0x7]
      %v7575 = vld [vmem:[%s7546 + $0x48] sm:$0x7]
      %v7576 = vld [vmem:[%s7546 + $0x58] sm:$0x7]
      %v7577 = vld [vmem:[%s7546 + $0x68] sm:$0x7]
      %v7578 = vld [vmem:[%s7546 + $0x78] sm:$0x7]
      %v7603 = vunpack.c.l.b16 %v7511
      %v7604 = vunpack.c.l.b16 %v7512
      %v7605 = vunpack.c.l.b16 %v7513
      %v7606 = vunpack.c.l.b16 %v7514
      %v7607 = vunpack.c.l.b16 %v7515
      %v7608 = vunpack.c.l.b16 %v7516
      %v7609 = vunpack.c.l.b16 %v7517
      %v7610 = vunpack.c.l.b16 %v7518
      %v7611 = vunpack.c.l.b16 %v7519
      %v7612 = vunpack.c.l.b16 %v7520
      %v7613 = vunpack.c.l.b16 %v7521
      %v7614 = vunpack.c.l.b16 %v7522
      %v7615 = vunpack.c.l.b16 %v7523
      %v7616 = vunpack.c.l.b16 %v7524
      %v7617 = vunpack.c.l.b16 %v7525
      %v7618 = vunpack.c.l.b16 %v7526
      %v7619 = vunpack.c.l.b16 %v7527
      %v7620 = vunpack.c.l.b16 %v7528
      %v7621 = vunpack.c.l.b16 %v7529
      %v7622 = vunpack.c.l.b16 %v7530
      %v7623 = vunpack.c.l.b16 %v7531
      %v7624 = vunpack.c.l.b16 %v7532
      %v7625 = vunpack.c.l.b16 %v7533
      %v7626 = vunpack.c.l.b16 %v7534
      %v7627 = vpack.c.b16 %v7604, %v7603
      %v7628 = vpack.c.b16 %v7605, %v7605
      %v7629 = vpack.c.b16 %v7607, %v7606
      %v7630 = vpack.c.b16 %v7608, %v7608
      %v7631 = vpack.c.b16 %v7610, %v7609
      %v7632 = vpack.c.b16 %v7611, %v7611
      %v7633 = vpack.c.b16 %v7613, %v7612
      %v7634 = vpack.c.b16 %v7614, %v7614
      %v7635 = vpack.c.b16 %v7616, %v7615
      %v7636 = vpack.c.b16 %v7617, %v7617
      %v7637 = vpack.c.b16 %v7619, %v7618
      %v7638 = vpack.c.b16 %v7620, %v7620
      %v7639 = vpack.c.b16 %v7622, %v7621
      %v7640 = vpack.c.b16 %v7623, %v7623
      %v7641 = vpack.c.b16 %v7625, %v7624
      %v7642 = vpack.c.b16 %v7626, %v7626
      %v7651 = vunpack.c.l.b16 %v7535
      %v7652 = vunpack.c.l.b16 %v7536
      %v7653 = vunpack.c.l.b16 %v7537
      %v7654 = vunpack.c.l.b16 %v7538
      %v7655 = vunpack.c.l.b16 %v7539
      %v7656 = vunpack.c.l.b16 %v7540
      %v7657 = vunpack.c.l.b16 %v7541
      %v7658 = vunpack.c.l.b16 %v7542
      %v7659 = vpack.c.b16 %v7604, %v7651
      %v7660 = vpack.c.b16 %v7607, %v7652
      %v7661 = vpack.c.b16 %v7610, %v7653
      %v7662 = vpack.c.b16 %v7613, %v7654
      %v7663 = vpack.c.b16 %v7616, %v7655
      %v7664 = vpack.c.b16 %v7619, %v7656
      %v7665 = vpack.c.b16 %v7622, %v7657
      %v7666 = vpack.c.b16 %v7625, %v7658
      %v7668 = vshrl.u32 %v7659, 16
      %v7670 = vshll.u32 %v7659, 16
      %v7672 = vrot.slane %v7670, 1
      %v7673 = vor.u32 %v7668, %v7672
      %v7675 = vshll.u32 %v7628, 16
      %v7677 = vrot.slane %v7675, 1
      %v7678 = vsel %vm375, %v7673, %v7677
      %v7679 = vshrl.u32 %v7628, 16
      %v7681 = vor.u32 %v7679, %v7677
      %v7683 = vshrl.u32 %v7660, 16
      %v7685 = vshll.u32 %v7660, 16
      %v7687 = vrot.slane %v7685, 1
      %v7688 = vor.u32 %v7683, %v7687
      %v7690 = vshll.u32 %v7630, 16
      %v7692 = vrot.slane %v7690, 1
      %v7693 = vsel %vm375, %v7688, %v7692
      %v7694 = vshrl.u32 %v7630, 16
      %v7696 = vor.u32 %v7694, %v7692
      %v7698 = vshrl.u32 %v7661, 16
      %v7700 = vshll.u32 %v7661, 16
      %v7702 = vrot.slane %v7700, 1
      %v7703 = vor.u32 %v7698, %v7702
      %v7705 = vshll.u32 %v7632, 16
      %v7707 = vrot.slane %v7705, 1
      %v7708 = vsel %vm375, %v7703, %v7707
      %v7709 = vshrl.u32 %v7632, 16
      %v7711 = vor.u32 %v7709, %v7707
      %v7713 = vshrl.u32 %v7662, 16
      %v7715 = vshll.u32 %v7662, 16
      %v7717 = vrot.slane %v7715, 1
      %v7718 = vor.u32 %v7713, %v7717
      %v7720 = vshll.u32 %v7634, 16
      %v7722 = vrot.slane %v7720, 1
      %v7723 = vsel %vm375, %v7718, %v7722
      %v7724 = vshrl.u32 %v7634, 16
      %v7726 = vor.u32 %v7724, %v7722
      %v7728 = vshrl.u32 %v7663, 16
      %v7730 = vshll.u32 %v7663, 16
      %v7732 = vrot.slane %v7730, 1
      %v7733 = vor.u32 %v7728, %v7732
      %v7735 = vshll.u32 %v7636, 16
      %v7737 = vrot.slane %v7735, 1
      %v7738 = vsel %vm375, %v7733, %v7737
      %v7739 = vshrl.u32 %v7636, 16
      %v7741 = vor.u32 %v7739, %v7737
      %v7743 = vshrl.u32 %v7664, 16
      %v7745 = vshll.u32 %v7664, 16
      %v7747 = vrot.slane %v7745, 1
      %v7748 = vor.u32 %v7743, %v7747
      %v7750 = vshll.u32 %v7638, 16
      %v7752 = vrot.slane %v7750, 1
      %v7753 = vsel %vm375, %v7748, %v7752
      %v7754 = vshrl.u32 %v7638, 16
      %v7756 = vor.u32 %v7754, %v7752
      %v7758 = vshrl.u32 %v7665, 16
      %v7760 = vshll.u32 %v7665, 16
      %v7762 = vrot.slane %v7760, 1
      %v7763 = vor.u32 %v7758, %v7762
      %v7765 = vshll.u32 %v7640, 16
      %v7767 = vrot.slane %v7765, 1
      %v7768 = vsel %vm375, %v7763, %v7767
      %v7769 = vshrl.u32 %v7640, 16
      %v7771 = vor.u32 %v7769, %v7767
      %v7773 = vshrl.u32 %v7666, 16
      %v7775 = vshll.u32 %v7666, 16
      %v7777 = vrot.slane %v7775, 1
      %v7778 = vor.u32 %v7773, %v7777
      %v7780 = vshll.u32 %v7642, 16
      %v7782 = vrot.slane %v7780, 1
      %v7783 = vsel %vm375, %v7778, %v7782
      %v7784 = vshrl.u32 %v7642, 16
      %v7786 = vor.u32 %v7784, %v7782
      %7787 = vrot.lane.b32.xlu0 %v7678, 32
      %v7788 = vpop.permute.xlu0 %7787
      %7789 = vrot.lane.b32.xlu0 %v7681, 32
      %v7790 = vpop.permute.xlu0 %7789
      %7791 = vrot.lane.b32.xlu0 %v7693, 32
      %v7792 = vpop.permute.xlu0 %7791
      %7793 = vrot.lane.b32.xlu0 %v7696, 32
      %v7794 = vpop.permute.xlu0 %7793
      %7795 = vrot.lane.b32.xlu0 %v7708, 32
      %v7796 = vpop.permute.xlu0 %7795
      %7797 = vrot.lane.b32.xlu0 %v7711, 32
      %v7798 = vpop.permute.xlu0 %7797
      %7799 = vrot.lane.b32.xlu0 %v7723, 32
      %v7800 = vpop.permute.xlu0 %7799
      %7801 = vrot.lane.b32.xlu0 %v7726, 32
      %v7802 = vpop.permute.xlu0 %7801
      %7803 = vrot.lane.b32.xlu0 %v7738, 32
      %v7804 = vpop.permute.xlu0 %7803
      %7805 = vrot.lane.b32.xlu0 %v7741, 32
      %v7806 = vpop.permute.xlu0 %7805
      %7807 = vrot.lane.b32.xlu0 %v7753, 32
      %v7808 = vpop.permute.xlu0 %7807
      %7809 = vrot.lane.b32.xlu0 %v7756, 32
      %v7810 = vpop.permute.xlu0 %7809
      %7811 = vrot.lane.b32.xlu0 %v7768, 32
      %v7812 = vpop.permute.xlu0 %7811
      %7813 = vrot.lane.b32.xlu0 %v7771, 32
      %v7814 = vpop.permute.xlu0 %7813
      %7815 = vrot.lane.b32.xlu0 %v7783, 32
      %v7816 = vpop.permute.xlu0 %7815
      %7817 = vrot.lane.b32.xlu0 %v7786, 32
      %v7818 = vpop.permute.xlu0 %7817
      %v7843 = vunpack.c.l.b16 %v7547
      %v7844 = vunpack.c.l.b16 %v7548
      %v7845 = vunpack.c.l.b16 %v7549
      %v7846 = vunpack.c.l.b16 %v7550
      %v7847 = vunpack.c.l.b16 %v7551
      %v7848 = vunpack.c.l.b16 %v7552
      %v7849 = vunpack.c.l.b16 %v7553
      %v7850 = vunpack.c.l.b16 %v7554
      %v7851 = vunpack.c.l.b16 %v7555
      %v7852 = vunpack.c.l.b16 %v7556
      %v7853 = vunpack.c.l.b16 %v7557
      %v7854 = vunpack.c.l.b16 %v7558
      %v7855 = vunpack.c.l.b16 %v7559
      %v7856 = vunpack.c.l.b16 %v7560
      %v7857 = vunpack.c.l.b16 %v7561
      %v7858 = vunpack.c.l.b16 %v7562
      %v7859 = vunpack.c.l.b16 %v7563
      %v7860 = vunpack.c.l.b16 %v7564
      %v7861 = vunpack.c.l.b16 %v7565
      %v7862 = vunpack.c.l.b16 %v7566
      %v7863 = vunpack.c.l.b16 %v7567
      %v7864 = vunpack.c.l.b16 %v7568
      %v7865 = vunpack.c.l.b16 %v7569
      %v7866 = vunpack.c.l.b16 %v7570
      %v7867 = vpack.c.b16 %v7844, %v7843
      %v7868 = vpack.c.b16 %v7845, %v7845
      %v7869 = vpack.c.b16 %v7847, %v7846
      %v7870 = vpack.c.b16 %v7848, %v7848
      %v7871 = vpack.c.b16 %v7850, %v7849
      %v7872 = vpack.c.b16 %v7851, %v7851
      %v7873 = vpack.c.b16 %v7853, %v7852
      %v7874 = vpack.c.b16 %v7854, %v7854
      %v7875 = vpack.c.b16 %v7856, %v7855
      %v7876 = vpack.c.b16 %v7857, %v7857
      %v7877 = vpack.c.b16 %v7859, %v7858
      %v7878 = vpack.c.b16 %v7860, %v7860
      %v7879 = vpack.c.b16 %v7862, %v7861
      %v7880 = vpack.c.b16 %v7863, %v7863
      %v7881 = vpack.c.b16 %v7865, %v7864
      %v7882 = vpack.c.b16 %v7866, %v7866
      %v7884 = vshrl.u32 %v7867, 16
      %v7886 = vrot.slane %v7884, 7
      %v7887 = vshll.u32 %v7867, 16
      %v7889 = vor.u32 %v7886, %v7887
      %v7891 = vshrl.u32 %v7868, 16
      %v7893 = vrot.slane %v7891, 7
      %v7894 = vshll.u32 %v7868, 16
      %v7896 = vor.u32 %v7893, %v7894
      %v7897 = vsel %vm1289, %v7886, %v7896
      %v7899 = vshrl.u32 %v7869, 16
      %v7901 = vrot.slane %v7899, 7
      %v7902 = vshll.u32 %v7869, 16
      %v7904 = vor.u32 %v7901, %v7902
      %v7906 = vshrl.u32 %v7870, 16
      %v7908 = vrot.slane %v7906, 7
      %v7909 = vshll.u32 %v7870, 16
      %v7911 = vor.u32 %v7908, %v7909
      %v7912 = vsel %vm1289, %v7901, %v7911
      %v7914 = vshrl.u32 %v7871, 16
      %v7916 = vrot.slane %v7914, 7
      %v7917 = vshll.u32 %v7871, 16
      %v7919 = vor.u32 %v7916, %v7917
      %v7921 = vshrl.u32 %v7872, 16
      %v7923 = vrot.slane %v7921, 7
      %v7924 = vshll.u32 %v7872, 16
      %v7926 = vor.u32 %v7923, %v7924
      %v7927 = vsel %vm1289, %v7916, %v7926
      %v7929 = vshrl.u32 %v7873, 16
      %v7931 = vrot.slane %v7929, 7
      %v7932 = vshll.u32 %v7873, 16
      %v7934 = vor.u32 %v7931, %v7932
      %v7936 = vshrl.u32 %v7874, 16
      %v7938 = vrot.slane %v7936, 7
      %v7939 = vshll.u32 %v7874, 16
      %v7941 = vor.u32 %v7938, %v7939
      %v7942 = vsel %vm1289, %v7931, %v7941
      %v7944 = vshrl.u32 %v7875, 16
      %v7946 = vrot.slane %v7944, 7
      %v7947 = vshll.u32 %v7875, 16
      %v7949 = vor.u32 %v7946, %v7947
      %v7951 = vshrl.u32 %v7876, 16
      %v7953 = vrot.slane %v7951, 7
      %v7954 = vshll.u32 %v7876, 16
      %v7956 = vor.u32 %v7953, %v7954
      %v7957 = vsel %vm1289, %v7946, %v7956
      %v7959 = vshrl.u32 %v7877, 16
      %v7961 = vrot.slane %v7959, 7
      %v7962 = vshll.u32 %v7877, 16
      %v7964 = vor.u32 %v7961, %v7962
      %v7966 = vshrl.u32 %v7878, 16
      %v7968 = vrot.slane %v7966, 7
      %v7969 = vshll.u32 %v7878, 16
      %v7971 = vor.u32 %v7968, %v7969
      %v7972 = vsel %vm1289, %v7961, %v7971
      %v7974 = vshrl.u32 %v7879, 16
      %v7976 = vrot.slane %v7974, 7
      %v7977 = vshll.u32 %v7879, 16
      %v7979 = vor.u32 %v7976, %v7977
      %v7981 = vshrl.u32 %v7880, 16
      %v7983 = vrot.slane %v7981, 7
      %v7984 = vshll.u32 %v7880, 16
      %v7986 = vor.u32 %v7983, %v7984
      %v7987 = vsel %vm1289, %v7976, %v7986
      %v7989 = vshrl.u32 %v7881, 16
      %v7991 = vrot.slane %v7989, 7
      %v7992 = vshll.u32 %v7881, 16
      %v7994 = vor.u32 %v7991, %v7992
      %v7996 = vshrl.u32 %v7882, 16
      %v7998 = vrot.slane %v7996, 7
      %v7999 = vshll.u32 %v7882, 16
      %v8001 = vor.u32 %v7998, %v7999
      %v8002 = vsel %vm1289, %v7991, %v8001
      %8003 = vrot.lane.b32.xlu0 %v7889, 64
      %v8004 = vpop.permute.xlu0 %8003
      %8005 = vrot.lane.b32.xlu0 %v7897, 64
      %v8006 = vpop.permute.xlu0 %8005
      %8007 = vrot.lane.b32.xlu0 %v7904, 64
      %v8008 = vpop.permute.xlu0 %8007
      %8009 = vrot.lane.b32.xlu0 %v7912, 64
      %v8010 = vpop.permute.xlu0 %8009
      %8011 = vrot.lane.b32.xlu0 %v7919, 64
      %v8012 = vpop.permute.xlu0 %8011
      %8013 = vrot.lane.b32.xlu0 %v7927, 64
      %v8014 = vpop.permute.xlu0 %8013
      %8015 = vrot.lane.b32.xlu0 %v7934, 64
      %v8016 = vpop.permute.xlu0 %8015
      %8017 = vrot.lane.b32.xlu0 %v7942, 64
      %v8018 = vpop.permute.xlu0 %8017
      %8019 = vrot.lane.b32.xlu0 %v7949, 64
      %v8020 = vpop.permute.xlu0 %8019
      %8021 = vrot.lane.b32.xlu0 %v7957, 64
      %v8022 = vpop.permute.xlu0 %8021
      %8023 = vrot.lane.b32.xlu0 %v7964, 64
      %v8024 = vpop.permute.xlu0 %8023
      %8025 = vrot.lane.b32.xlu0 %v7972, 64
      %v8026 = vpop.permute.xlu0 %8025
      %8027 = vrot.lane.b32.xlu0 %v7979, 64
      %v8028 = vpop.permute.xlu0 %8027
      %8029 = vrot.lane.b32.xlu0 %v7987, 64
      %v8030 = vpop.permute.xlu0 %8029
      %8031 = vrot.lane.b32.xlu0 %v7994, 64
      %v8032 = vpop.permute.xlu0 %8031
      %8033 = vrot.lane.b32.xlu0 %v8002, 64
      %v8034 = vpop.permute.xlu0 %8033
      %v8043 = vunpack.c.l.b16 %v7571
      %v8044 = vunpack.c.l.b16 %v7572
      %v8045 = vunpack.c.l.b16 %v7573
      %v8046 = vunpack.c.l.b16 %v7574
      %v8047 = vunpack.c.l.b16 %v7575
      %v8048 = vunpack.c.l.b16 %v7576
      %v8049 = vunpack.c.l.b16 %v7577
      %v8050 = vunpack.c.l.b16 %v7578
      %v8051 = vpack.c.b16 %v8043, %v8043
      %v8052 = vpack.c.b16 %v8044, %v8044
      %v8053 = vpack.c.b16 %v8045, %v8045
      %v8054 = vpack.c.b16 %v8046, %v8046
      %v8055 = vpack.c.b16 %v8047, %v8047
      %v8056 = vpack.c.b16 %v8048, %v8048
      %v8057 = vpack.c.b16 %v8049, %v8049
      %v8058 = vpack.c.b16 %v8050, %v8050
      %8059 = vrot.lane.b32.xlu0 %v7867, 96
      %v8060 = vpop.permute.xlu0 %8059
      %8061 = vrot.lane.b32.xlu0 %v8051, 96
      %v8062 = vpop.permute.xlu0 %8061
      %8063 = vrot.lane.b32.xlu0 %v7869, 96
      %v8064 = vpop.permute.xlu0 %8063
      %8065 = vrot.lane.b32.xlu0 %v8052, 96
      %v8066 = vpop.permute.xlu0 %8065
      %8067 = vrot.lane.b32.xlu0 %v7871, 96
      %v8068 = vpop.permute.xlu0 %8067
      %8069 = vrot.lane.b32.xlu0 %v8053, 96
      %v8070 = vpop.permute.xlu0 %8069
      %8071 = vrot.lane.b32.xlu0 %v7873, 96
      %v8072 = vpop.permute.xlu0 %8071
      %8073 = vrot.lane.b32.xlu0 %v8054, 96
      %v8074 = vpop.permute.xlu0 %8073
      %8075 = vrot.lane.b32.xlu0 %v7875, 96
      %v8076 = vpop.permute.xlu0 %8075
      %8077 = vrot.lane.b32.xlu0 %v8055, 96
      %v8078 = vpop.permute.xlu0 %8077
      %8079 = vrot.lane.b32.xlu0 %v7877, 96
      %v8080 = vpop.permute.xlu0 %8079
      %8081 = vrot.lane.b32.xlu0 %v8056, 96
      %v8082 = vpop.permute.xlu0 %8081
      %8083 = vrot.lane.b32.xlu0 %v7879, 96
      %v8084 = vpop.permute.xlu0 %8083
      %8085 = vrot.lane.b32.xlu0 %v8057, 96
      %v8086 = vpop.permute.xlu0 %8085
      %8087 = vrot.lane.b32.xlu0 %v7881, 96
      %v8088 = vpop.permute.xlu0 %8087
      %8089 = vrot.lane.b32.xlu0 %v8058, 96
      %v8090 = vpop.permute.xlu0 %8089
      %v8093 = vsel %vm705, %v7627, %v7788
      %v8095 = vsel %vm705, %v7628, %v7790
      %v8098 = vsel %vm705, %v7629, %v7792
      %v8100 = vsel %vm705, %v7630, %v7794
      %v8103 = vsel %vm705, %v7631, %v7796
      %v8105 = vsel %vm705, %v7632, %v7798
      %v8108 = vsel %vm705, %v7633, %v7800
      %v8110 = vsel %vm705, %v7634, %v7802
      %v8113 = vsel %vm705, %v7635, %v7804
      %v8115 = vsel %vm705, %v7636, %v7806
      %v8118 = vsel %vm705, %v7637, %v7808
      %v8120 = vsel %vm705, %v7638, %v7810
      %v8123 = vsel %vm705, %v7639, %v7812
      %v8125 = vsel %vm705, %v7640, %v7814
      %v8128 = vsel %vm705, %v7641, %v7816
      %v8130 = vsel %vm705, %v7642, %v7818
      %v8132 = vsel %vm746, %v8093, %v8004
      %v8134 = vsel %vm746, %v8095, %v8006
      %v8136 = vsel %vm746, %v8098, %v8008
      %v8138 = vsel %vm746, %v8100, %v8010
      %v8140 = vsel %vm746, %v8103, %v8012
      %v8142 = vsel %vm746, %v8105, %v8014
      %v8144 = vsel %vm746, %v8108, %v8016
      %v8146 = vsel %vm746, %v8110, %v8018
      %v8148 = vsel %vm746, %v8113, %v8020
      %v8150 = vsel %vm746, %v8115, %v8022
      %v8152 = vsel %vm746, %v8118, %v8024
      %v8154 = vsel %vm746, %v8120, %v8026
      %v8156 = vsel %vm746, %v8123, %v8028
      %v8158 = vsel %vm746, %v8125, %v8030
      %v8160 = vsel %vm746, %v8128, %v8032
      %v8162 = vsel %vm746, %v8130, %v8034
      %v8164 = vsel %vm779, %v8132, %v8060
      %v8166 = vsel %vm779, %v8134, %v8062
      %v8168 = vsel %vm779, %v8136, %v8064
      %v8170 = vsel %vm779, %v8138, %v8066
      %v8172 = vsel %vm779, %v8140, %v8068
      %v8174 = vsel %vm779, %v8142, %v8070
      %v8176 = vsel %vm779, %v8144, %v8072
      %v8178 = vsel %vm779, %v8146, %v8074
      %v8180 = vsel %vm779, %v8148, %v8076
      %v8182 = vsel %vm779, %v8150, %v8078
      %v8184 = vsel %vm779, %v8152, %v8080
      %v8186 = vsel %vm779, %v8154, %v8082
      %v8188 = vsel %vm779, %v8156, %v8084
      %v8190 = vsel %vm779, %v8158, %v8086
      %v8192 = vsel %vm779, %v8160, %v8088
      %v8194 = vsel %vm779, %v8162, %v8090
      %v8195 = vshrl.u32 %v8164, 16
      %v8197 = vrot.slane %v8195, 2
      %v8198 = vshll.u32 %v8164, 16
      %v8200 = vrot.slane %v8198, 3
      %v8201 = vor.u32 %v8197, %v8200
      %v8202 = vshrl.u32 %v8166, 16
      %v8204 = vrot.slane %v8202, 2
      %v8205 = vshll.u32 %v8166, 16
      %v8207 = vrot.slane %v8205, 3
      %v8208 = vor.u32 %v8204, %v8207
      %v8209 = vsel %vm1602, %v8201, %v8208
      %v8210 = vshrl.u32 %v8168, 16
      %v8212 = vrot.slane %v8210, 2
      %v8213 = vshll.u32 %v8168, 16
      %v8215 = vrot.slane %v8213, 3
      %v8216 = vor.u32 %v8212, %v8215
      %v8217 = vshrl.u32 %v8170, 16
      %v8219 = vrot.slane %v8217, 2
      %v8220 = vshll.u32 %v8170, 16
      %v8222 = vrot.slane %v8220, 3
      %v8223 = vor.u32 %v8219, %v8222
      %v8224 = vsel %vm1602, %v8216, %v8223
      %v8225 = vshrl.u32 %v8172, 16
      %v8227 = vrot.slane %v8225, 2
      %v8228 = vshll.u32 %v8172, 16
      %v8230 = vrot.slane %v8228, 3
      %v8231 = vor.u32 %v8227, %v8230
      %v8232 = vshrl.u32 %v8174, 16
      %v8234 = vrot.slane %v8232, 2
      %v8235 = vshll.u32 %v8174, 16
      %v8237 = vrot.slane %v8235, 3
      %v8238 = vor.u32 %v8234, %v8237
      %v8239 = vsel %vm1602, %v8231, %v8238
      %v8240 = vshrl.u32 %v8176, 16
      %v8242 = vrot.slane %v8240, 2
      %v8243 = vshll.u32 %v8176, 16
      %v8245 = vrot.slane %v8243, 3
      %v8246 = vor.u32 %v8242, %v8245
      %v8247 = vshrl.u32 %v8178, 16
      %v8249 = vrot.slane %v8247, 2
      %v8250 = vshll.u32 %v8178, 16
      %v8252 = vrot.slane %v8250, 3
      %v8253 = vor.u32 %v8249, %v8252
      %v8254 = vsel %vm1602, %v8246, %v8253
      %v8255 = vshrl.u32 %v8180, 16
      %v8257 = vrot.slane %v8255, 2
      %v8258 = vshll.u32 %v8180, 16
      %v8260 = vrot.slane %v8258, 3
      %v8261 = vor.u32 %v8257, %v8260
      %v8262 = vshrl.u32 %v8182, 16
      %v8264 = vrot.slane %v8262, 2
      %v8265 = vshll.u32 %v8182, 16
      %v8267 = vrot.slane %v8265, 3
      %v8268 = vor.u32 %v8264, %v8267
      %v8269 = vsel %vm1602, %v8261, %v8268
      %v8270 = vshrl.u32 %v8184, 16
      %v8272 = vrot.slane %v8270, 2
      %v8273 = vshll.u32 %v8184, 16
      %v8275 = vrot.slane %v8273, 3
      %v8276 = vor.u32 %v8272, %v8275
      %v8277 = vshrl.u32 %v8186, 16
      %v8279 = vrot.slane %v8277, 2
      %v8280 = vshll.u32 %v8186, 16
      %v8282 = vrot.slane %v8280, 3
      %v8283 = vor.u32 %v8279, %v8282
      %v8284 = vsel %vm1602, %v8276, %v8283
      %v8285 = vshrl.u32 %v8188, 16
      %v8287 = vrot.slane %v8285, 2
      %v8288 = vshll.u32 %v8188, 16
      %v8290 = vrot.slane %v8288, 3
      %v8291 = vor.u32 %v8287, %v8290
      %v8292 = vshrl.u32 %v8190, 16
      %v8294 = vrot.slane %v8292, 2
      %v8295 = vshll.u32 %v8190, 16
      %v8297 = vrot.slane %v8295, 3
      %v8298 = vor.u32 %v8294, %v8297
      %v8299 = vsel %vm1602, %v8291, %v8298
      %v8300 = vshrl.u32 %v8192, 16
      %v8302 = vrot.slane %v8300, 2
      %v8303 = vshll.u32 %v8192, 16
      %v8305 = vrot.slane %v8303, 3
      %v8306 = vor.u32 %v8302, %v8305
      %v8307 = vshrl.u32 %v8194, 16
      %v8309 = vrot.slane %v8307, 2
      %v8310 = vshll.u32 %v8194, 16
      %v8312 = vrot.slane %v8310, 3
      %v8313 = vor.u32 %v8309, %v8312
      %v8314 = vsel %vm1602, %v8306, %v8313
      %v8315 = vunpack.c.l.b16 %v8209
      %v8316 = vunpack.c.h.b16 %v8209
      %v8317 = vunpack.c.l.b16 %v8224
      %v8318 = vunpack.c.h.b16 %v8224
      %v8319 = vunpack.c.l.b16 %v8239
      %v8320 = vunpack.c.h.b16 %v8239
      %v8321 = vunpack.c.l.b16 %v8254
      %v8322 = vunpack.c.h.b16 %v8254
      %v8323 = vunpack.c.l.b16 %v8269
      %v8324 = vunpack.c.h.b16 %v8269
      %v8325 = vunpack.c.l.b16 %v8284
      %v8326 = vunpack.c.h.b16 %v8284
      %v8327 = vunpack.c.l.b16 %v8299
      %v8328 = vunpack.c.h.b16 %v8299
      %v8329 = vunpack.c.l.b16 %v8314
      %v8330 = vunpack.c.h.b16 %v8314
      %v8331 = vpack.c.b16 %v8315, %v8315
      %v8332 = vpack.c.b16 %v8316, %v8316
      %v8333 = vpack.c.b16 %v8317, %v8317
      %v8334 = vpack.c.b16 %v8318, %v8318
      %v8335 = vpack.c.b16 %v8319, %v8319
      %v8336 = vpack.c.b16 %v8320, %v8320
      %v8337 = vpack.c.b16 %v8321, %v8321
      %v8338 = vpack.c.b16 %v8322, %v8322
      %v8339 = vpack.c.b16 %v8323, %v8323
      %v8340 = vpack.c.b16 %v8324, %v8324
      %v8341 = vpack.c.b16 %v8325, %v8325
      %v8342 = vpack.c.b16 %v8326, %v8326
      %v8343 = vpack.c.b16 %v8327, %v8327
      %v8344 = vpack.c.b16 %v8328, %v8328
      %v8345 = vpack.c.b16 %v8329, %v8329
      %v8346 = vpack.c.b16 %v8330, %v8330
      %8363 = vst [vmem:[#allocation3 + $0x4] sm:$0xf] %v8331
      %8364 = vst [vmem:[#allocation3 + $0x20] sm:$0xf] %v8332
      %8365 = vst [vmem:[#allocation3 + $0x3c] sm:$0xf] %v8333
      %8366 = vst [vmem:[#allocation3 + $0x58] sm:$0xf] %v8334
      %8367 = vst [vmem:[#allocation3 + $0x74] sm:$0xf] %v8335
      %8368 = vst [vmem:[#allocation3 + $0x90] sm:$0xf] %v8336
      %8369 = vst [vmem:[#allocation3 + $0xac] sm:$0xf] %v8337
      %8370 = vst [vmem:[#allocation3 + $0xc8] sm:$0xf] %v8338
      %8371 = vst [vmem:[#allocation3 + $0xe4] sm:$0xf] %v8339
      %8372 = vst [vmem:[#allocation3 + $0x100] sm:$0xf] %v8340
      %8373 = vst [vmem:[#allocation3 + $0x11c] sm:$0xf] %v8341
      %8374 = vst [vmem:[#allocation3 + $0x138] sm:$0xf] %v8342
      %8375 = vst [vmem:[#allocation3 + $0x154] sm:$0xf] %v8343
      %8376 = vst [vmem:[#allocation3 + $0x170] sm:$0xf] %v8344
      %8377 = vst [vmem:[#allocation3 + $0x18c] sm:$0xf] %v8345
      %8378 = vst [vmem:[#allocation3 + $0x1a8] sm:$0xf] %v8346
      %v8379 = vld [vmem:[%s7546] sm:$0x8]
      %v8380 = vld [vmem:[%s7546 + $0x4] sm:$0xf]
      %v8381 = vld [vmem:[%s7546 + $0x8] sm:$0x7]
      %v8382 = vld [vmem:[%s7546 + $0x10] sm:$0x8]
      %v8383 = vld [vmem:[%s7546 + $0x14] sm:$0xf]
      %v8384 = vld [vmem:[%s7546 + $0x18] sm:$0x7]
      %v8385 = vld [vmem:[%s7546 + $0x20] sm:$0x8]
      %v8386 = vld [vmem:[%s7546 + $0x24] sm:$0xf]
      %v8387 = vld [vmem:[%s7546 + $0x28] sm:$0x7]
      %v8388 = vld [vmem:[%s7546 + $0x30] sm:$0x8]
      %v8389 = vld [vmem:[%s7546 + $0x34] sm:$0xf]
      %v8390 = vld [vmem:[%s7546 + $0x38] sm:$0x7]
      %v8391 = vld [vmem:[%s7546 + $0x40] sm:$0x8]
      %v8392 = vld [vmem:[%s7546 + $0x44] sm:$0xf]
      %v8393 = vld [vmem:[%s7546 + $0x48] sm:$0x7]
      %v8394 = vld [vmem:[%s7546 + $0x50] sm:$0x8]
      %v8395 = vld [vmem:[%s7546 + $0x54] sm:$0xf]
      %v8396 = vld [vmem:[%s7546 + $0x58] sm:$0x7]
      %v8397 = vld [vmem:[%s7546 + $0x60] sm:$0x8]
      %v8398 = vld [vmem:[%s7546 + $0x64] sm:$0xf]
      %v8399 = vld [vmem:[%s7546 + $0x68] sm:$0x7]
      %v8400 = vld [vmem:[%s7546 + $0x70] sm:$0x8]
      %v8401 = vld [vmem:[%s7546 + $0x74] sm:$0xf]
      %v8402 = vld [vmem:[%s7546 + $0x78] sm:$0x7]
      %s8403 = sadd.s32 %s214, 11
      %s8404 = smul.u32 %s8403, 4
      %s8405 = smul.addr %s8404, 4
      %s8406 = scalar_lea.vmem %s195, %s8405
      %v8407 = vld [vmem:[%s8406] sm:$0xe]
      %v8408 = vld [vmem:[%s8406 + $0x4] sm:$0xf]
      %v8409 = vld [vmem:[%s8406 + $0x8] sm:$0x3]
      %v8410 = vld [vmem:[%s8406 + $0x10] sm:$0xe]
      %v8411 = vld [vmem:[%s8406 + $0x14] sm:$0xf]
      %v8412 = vld [vmem:[%s8406 + $0x18] sm:$0x3]
      %v8413 = vld [vmem:[%s8406 + $0x20] sm:$0xe]
      %v8414 = vld [vmem:[%s8406 + $0x24] sm:$0xf]
      %v8415 = vld [vmem:[%s8406 + $0x28] sm:$0x3]
      %v8416 = vld [vmem:[%s8406 + $0x30] sm:$0xe]
      %v8417 = vld [vmem:[%s8406 + $0x34] sm:$0xf]
      %v8418 = vld [vmem:[%s8406 + $0x38] sm:$0x3]
      %v8419 = vld [vmem:[%s8406 + $0x40] sm:$0xe]
      %v8420 = vld [vmem:[%s8406 + $0x44] sm:$0xf]
      %v8421 = vld [vmem:[%s8406 + $0x48] sm:$0x3]
      %v8422 = vld [vmem:[%s8406 + $0x50] sm:$0xe]
      %v8423 = vld [vmem:[%s8406 + $0x54] sm:$0xf]
      %v8424 = vld [vmem:[%s8406 + $0x58] sm:$0x3]
      %v8425 = vld [vmem:[%s8406 + $0x60] sm:$0xe]
      %v8426 = vld [vmem:[%s8406 + $0x64] sm:$0xf]
      %v8427 = vld [vmem:[%s8406 + $0x68] sm:$0x3]
      %v8428 = vld [vmem:[%s8406 + $0x70] sm:$0xe]
      %v8429 = vld [vmem:[%s8406 + $0x74] sm:$0xf]
      %v8430 = vld [vmem:[%s8406 + $0x78] sm:$0x3]
      %v8431 = vld [vmem:[%s8406] sm:$0xc]
      %v8432 = vld [vmem:[%s8406 + $0x8] sm:$0x7]
      %v8433 = vld [vmem:[%s8406 + $0x10] sm:$0xc]
      %v8434 = vld [vmem:[%s8406 + $0x18] sm:$0x7]
      %v8435 = vld [vmem:[%s8406 + $0x20] sm:$0xc]
      %v8436 = vld [vmem:[%s8406 + $0x28] sm:$0x7]
      %v8437 = vld [vmem:[%s8406 + $0x30] sm:$0xc]
      %v8438 = vld [vmem:[%s8406 + $0x38] sm:$0x7]
      %v8439 = vld [vmem:[%s8406 + $0x40] sm:$0xc]
      %v8440 = vld [vmem:[%s8406 + $0x48] sm:$0x7]
      %v8441 = vld [vmem:[%s8406 + $0x50] sm:$0xc]
      %v8442 = vld [vmem:[%s8406 + $0x58] sm:$0x7]
      %v8443 = vld [vmem:[%s8406 + $0x60] sm:$0xc]
      %v8444 = vld [vmem:[%s8406 + $0x68] sm:$0x7]
      %v8445 = vld [vmem:[%s8406 + $0x70] sm:$0xc]
      %v8446 = vld [vmem:[%s8406 + $0x78] sm:$0x7]
      %v8447 = vld [vmem:[%s8406] sm:$0x8]
      %v8448 = vld [vmem:[%s8406 + $0x8] sm:$0xf]
      %v8449 = vld [vmem:[%s8406 + $0x10] sm:$0x8]
      %v8450 = vld [vmem:[%s8406 + $0x18] sm:$0xf]
      %v8451 = vld [vmem:[%s8406 + $0x20] sm:$0x8]
      %v8452 = vld [vmem:[%s8406 + $0x28] sm:$0xf]
      %v8453 = vld [vmem:[%s8406 + $0x30] sm:$0x8]
      %v8454 = vld [vmem:[%s8406 + $0x38] sm:$0xf]
      %v8455 = vld [vmem:[%s8406 + $0x40] sm:$0x8]
      %v8456 = vld [vmem:[%s8406 + $0x48] sm:$0xf]
      %v8457 = vld [vmem:[%s8406 + $0x50] sm:$0x8]
      %v8458 = vld [vmem:[%s8406 + $0x58] sm:$0xf]
      %v8459 = vld [vmem:[%s8406 + $0x60] sm:$0x8]
      %v8460 = vld [vmem:[%s8406 + $0x68] sm:$0xf]
      %v8461 = vld [vmem:[%s8406 + $0x70] sm:$0x8]
      %v8462 = vld [vmem:[%s8406 + $0x78] sm:$0xf]
      %v8487 = vunpack.c.l.b16 %v8379
      %v8488 = vunpack.c.l.b16 %v8380
      %v8489 = vunpack.c.l.b16 %v8381
      %v8490 = vunpack.c.l.b16 %v8382
      %v8491 = vunpack.c.l.b16 %v8383
      %v8492 = vunpack.c.l.b16 %v8384
      %v8493 = vunpack.c.l.b16 %v8385
      %v8494 = vunpack.c.l.b16 %v8386
      %v8495 = vunpack.c.l.b16 %v8387
      %v8496 = vunpack.c.l.b16 %v8388
      %v8497 = vunpack.c.l.b16 %v8389
      %v8498 = vunpack.c.l.b16 %v8390
      %v8499 = vunpack.c.l.b16 %v8391
      %v8500 = vunpack.c.l.b16 %v8392
      %v8501 = vunpack.c.l.b16 %v8393
      %v8502 = vunpack.c.l.b16 %v8394
      %v8503 = vunpack.c.l.b16 %v8395
      %v8504 = vunpack.c.l.b16 %v8396
      %v8505 = vunpack.c.l.b16 %v8397
      %v8506 = vunpack.c.l.b16 %v8398
      %v8507 = vunpack.c.l.b16 %v8399
      %v8508 = vunpack.c.l.b16 %v8400
      %v8509 = vunpack.c.l.b16 %v8401
      %v8510 = vunpack.c.l.b16 %v8402
      %v8511 = vpack.c.b16 %v8488, %v8487
      %v8512 = vpack.c.b16 %v8489, %v8489
      %v8513 = vpack.c.b16 %v8491, %v8490
      %v8514 = vpack.c.b16 %v8492, %v8492
      %v8515 = vpack.c.b16 %v8494, %v8493
      %v8516 = vpack.c.b16 %v8495, %v8495
      %v8517 = vpack.c.b16 %v8497, %v8496
      %v8518 = vpack.c.b16 %v8498, %v8498
      %v8519 = vpack.c.b16 %v8500, %v8499
      %v8520 = vpack.c.b16 %v8501, %v8501
      %v8521 = vpack.c.b16 %v8503, %v8502
      %v8522 = vpack.c.b16 %v8504, %v8504
      %v8523 = vpack.c.b16 %v8506, %v8505
      %v8524 = vpack.c.b16 %v8507, %v8507
      %v8525 = vpack.c.b16 %v8509, %v8508
      %v8526 = vpack.c.b16 %v8510, %v8510
      %v8551 = vunpack.c.l.b16 %v8407
      %v8552 = vunpack.c.l.b16 %v8408
      %v8553 = vunpack.c.l.b16 %v8409
      %v8554 = vunpack.c.l.b16 %v8410
      %v8555 = vunpack.c.l.b16 %v8411
      %v8556 = vunpack.c.l.b16 %v8412
      %v8557 = vunpack.c.l.b16 %v8413
      %v8558 = vunpack.c.l.b16 %v8414
      %v8559 = vunpack.c.l.b16 %v8415
      %v8560 = vunpack.c.l.b16 %v8416
      %v8561 = vunpack.c.l.b16 %v8417
      %v8562 = vunpack.c.l.b16 %v8418
      %v8563 = vunpack.c.l.b16 %v8419
      %v8564 = vunpack.c.l.b16 %v8420
      %v8565 = vunpack.c.l.b16 %v8421
      %v8566 = vunpack.c.l.b16 %v8422
      %v8567 = vunpack.c.l.b16 %v8423
      %v8568 = vunpack.c.l.b16 %v8424
      %v8569 = vunpack.c.l.b16 %v8425
      %v8570 = vunpack.c.l.b16 %v8426
      %v8571 = vunpack.c.l.b16 %v8427
      %v8572 = vunpack.c.l.b16 %v8428
      %v8573 = vunpack.c.l.b16 %v8429
      %v8574 = vunpack.c.l.b16 %v8430
      %v8575 = vpack.c.b16 %v8552, %v8551
      %v8576 = vpack.c.b16 %v8553, %v8553
      %v8577 = vpack.c.b16 %v8555, %v8554
      %v8578 = vpack.c.b16 %v8556, %v8556
      %v8579 = vpack.c.b16 %v8558, %v8557
      %v8580 = vpack.c.b16 %v8559, %v8559
      %v8581 = vpack.c.b16 %v8561, %v8560
      %v8582 = vpack.c.b16 %v8562, %v8562
      %v8583 = vpack.c.b16 %v8564, %v8563
      %v8584 = vpack.c.b16 %v8565, %v8565
      %v8585 = vpack.c.b16 %v8567, %v8566
      %v8586 = vpack.c.b16 %v8568, %v8568
      %v8587 = vpack.c.b16 %v8570, %v8569
      %v8588 = vpack.c.b16 %v8571, %v8571
      %v8589 = vpack.c.b16 %v8573, %v8572
      %v8590 = vpack.c.b16 %v8574, %v8574
      %v8592 = vshrl.u32 %v8575, 16
      %v8594 = vrot.slane %v8592, 6
      %v8595 = vshll.u32 %v8575, 16
      %v8597 = vrot.slane %v8595, 7
      %v8598 = vor.u32 %v8594, %v8597
      %v8600 = vshrl.u32 %v8576, 16
      %v8602 = vrot.slane %v8600, 6
      %v8603 = vshll.u32 %v8576, 16
      %v8605 = vrot.slane %v8603, 7
      %v8606 = vor.u32 %v8602, %v8605
      %v8607 = vsel %vm1999, %v8598, %v8606
      %v8609 = vshrl.u32 %v8577, 16
      %v8611 = vrot.slane %v8609, 6
      %v8612 = vshll.u32 %v8577, 16
      %v8614 = vrot.slane %v8612, 7
      %v8615 = vor.u32 %v8611, %v8614
      %v8617 = vshrl.u32 %v8578, 16
      %v8619 = vrot.slane %v8617, 6
      %v8620 = vshll.u32 %v8578, 16
      %v8622 = vrot.slane %v8620, 7
      %v8623 = vor.u32 %v8619, %v8622
      %v8624 = vsel %vm1999, %v8615, %v8623
      %v8626 = vshrl.u32 %v8579, 16
      %v8628 = vrot.slane %v8626, 6
      %v8629 = vshll.u32 %v8579, 16
      %v8631 = vrot.slane %v8629, 7
      %v8632 = vor.u32 %v8628, %v8631
      %v8634 = vshrl.u32 %v8580, 16
      %v8636 = vrot.slane %v8634, 6
      %v8637 = vshll.u32 %v8580, 16
      %v8639 = vrot.slane %v8637, 7
      %v8640 = vor.u32 %v8636, %v8639
      %v8641 = vsel %vm1999, %v8632, %v8640
      %v8643 = vshrl.u32 %v8581, 16
      %v8645 = vrot.slane %v8643, 6
      %v8646 = vshll.u32 %v8581, 16
      %v8648 = vrot.slane %v8646, 7
      %v8649 = vor.u32 %v8645, %v8648
      %v8651 = vshrl.u32 %v8582, 16
      %v8653 = vrot.slane %v8651, 6
      %v8654 = vshll.u32 %v8582, 16
      %v8656 = vrot.slane %v8654, 7
      %v8657 = vor.u32 %v8653, %v8656
      %v8658 = vsel %vm1999, %v8649, %v8657
      %v8660 = vshrl.u32 %v8583, 16
      %v8662 = vrot.slane %v8660, 6
      %v8663 = vshll.u32 %v8583, 16
      %v8665 = vrot.slane %v8663, 7
      %v8666 = vor.u32 %v8662, %v8665
      %v8668 = vshrl.u32 %v8584, 16
      %v8670 = vrot.slane %v8668, 6
      %v8671 = vshll.u32 %v8584, 16
      %v8673 = vrot.slane %v8671, 7
      %v8674 = vor.u32 %v8670, %v8673
      %v8675 = vsel %vm1999, %v8666, %v8674
      %v8677 = vshrl.u32 %v8585, 16
      %v8679 = vrot.slane %v8677, 6
      %v8680 = vshll.u32 %v8585, 16
      %v8682 = vrot.slane %v8680, 7
      %v8683 = vor.u32 %v8679, %v8682
      %v8685 = vshrl.u32 %v8586, 16
      %v8687 = vrot.slane %v8685, 6
      %v8688 = vshll.u32 %v8586, 16
      %v8690 = vrot.slane %v8688, 7
      %v8691 = vor.u32 %v8687, %v8690
      %v8692 = vsel %vm1999, %v8683, %v8691
      %v8694 = vshrl.u32 %v8587, 16
      %v8696 = vrot.slane %v8694, 6
      %v8697 = vshll.u32 %v8587, 16
      %v8699 = vrot.slane %v8697, 7
      %v8700 = vor.u32 %v8696, %v8699
      %v8702 = vshrl.u32 %v8588, 16
      %v8704 = vrot.slane %v8702, 6
      %v8705 = vshll.u32 %v8588, 16
      %v8707 = vrot.slane %v8705, 7
      %v8708 = vor.u32 %v8704, %v8707
      %v8709 = vsel %vm1999, %v8700, %v8708
      %v8711 = vshrl.u32 %v8589, 16
      %v8713 = vrot.slane %v8711, 6
      %v8714 = vshll.u32 %v8589, 16
      %v8716 = vrot.slane %v8714, 7
      %v8717 = vor.u32 %v8713, %v8716
      %v8719 = vshrl.u32 %v8590, 16
      %v8721 = vrot.slane %v8719, 6
      %v8722 = vshll.u32 %v8590, 16
      %v8724 = vrot.slane %v8722, 7
      %v8725 = vor.u32 %v8721, %v8724
      %v8726 = vsel %vm1999, %v8717, %v8725
      %8727 = vrot.lane.b32.xlu0 %v8598, 32
      %v8728 = vpop.permute.xlu0 %8727
      %8729 = vrot.lane.b32.xlu0 %v8607, 32
      %v8730 = vpop.permute.xlu0 %8729
      %8731 = vrot.lane.b32.xlu0 %v8615, 32
      %v8732 = vpop.permute.xlu0 %8731
      %8733 = vrot.lane.b32.xlu0 %v8624, 32
      %v8734 = vpop.permute.xlu0 %8733
      %8735 = vrot.lane.b32.xlu0 %v8632, 32
      %v8736 = vpop.permute.xlu0 %8735
      %8737 = vrot.lane.b32.xlu0 %v8641, 32
      %v8738 = vpop.permute.xlu0 %8737
      %8739 = vrot.lane.b32.xlu0 %v8649, 32
      %v8740 = vpop.permute.xlu0 %8739
      %8741 = vrot.lane.b32.xlu0 %v8658, 32
      %v8742 = vpop.permute.xlu0 %8741
      %8743 = vrot.lane.b32.xlu0 %v8666, 32
      %v8744 = vpop.permute.xlu0 %8743
      %8745 = vrot.lane.b32.xlu0 %v8675, 32
      %v8746 = vpop.permute.xlu0 %8745
      %8747 = vrot.lane.b32.xlu0 %v8683, 32
      %v8748 = vpop.permute.xlu0 %8747
      %8749 = vrot.lane.b32.xlu0 %v8692, 32
      %v8750 = vpop.permute.xlu0 %8749
      %8751 = vrot.lane.b32.xlu0 %v8700, 32
      %v8752 = vpop.permute.xlu0 %8751
      %8753 = vrot.lane.b32.xlu0 %v8709, 32
      %v8754 = vpop.permute.xlu0 %8753
      %8755 = vrot.lane.b32.xlu0 %v8717, 32
      %v8756 = vpop.permute.xlu0 %8755
      %8757 = vrot.lane.b32.xlu0 %v8726, 32
      %v8758 = vpop.permute.xlu0 %8757
      %v8775 = vunpack.c.l.b16 %v8431
      %v8776 = vunpack.c.l.b16 %v8432
      %v8777 = vunpack.c.l.b16 %v8433
      %v8778 = vunpack.c.l.b16 %v8434
      %v8779 = vunpack.c.l.b16 %v8435
      %v8780 = vunpack.c.l.b16 %v8436
      %v8781 = vunpack.c.l.b16 %v8437
      %v8782 = vunpack.c.l.b16 %v8438
      %v8783 = vunpack.c.l.b16 %v8439
      %v8784 = vunpack.c.l.b16 %v8440
      %v8785 = vunpack.c.l.b16 %v8441
      %v8786 = vunpack.c.l.b16 %v8442
      %v8787 = vunpack.c.l.b16 %v8443
      %v8788 = vunpack.c.l.b16 %v8444
      %v8789 = vunpack.c.l.b16 %v8445
      %v8790 = vunpack.c.l.b16 %v8446
      %v8791 = vpack.c.b16 %v8552, %v8775
      %v8792 = vpack.c.b16 %v8776, %v8776
      %v8793 = vpack.c.b16 %v8555, %v8777
      %v8794 = vpack.c.b16 %v8778, %v8778
      %v8795 = vpack.c.b16 %v8558, %v8779
      %v8796 = vpack.c.b16 %v8780, %v8780
      %v8797 = vpack.c.b16 %v8561, %v8781
      %v8798 = vpack.c.b16 %v8782, %v8782
      %v8799 = vpack.c.b16 %v8564, %v8783
      %v8800 = vpack.c.b16 %v8784, %v8784
      %v8801 = vpack.c.b16 %v8567, %v8785
      %v8802 = vpack.c.b16 %v8786, %v8786
      %v8803 = vpack.c.b16 %v8570, %v8787
      %v8804 = vpack.c.b16 %v8788, %v8788
      %v8805 = vpack.c.b16 %v8573, %v8789
      %v8806 = vpack.c.b16 %v8790, %v8790
      %v8808 = vshrl.u32 %v8791, 16
      %v8810 = vrot.slane %v8808, 7
      %v8811 = vshll.u32 %v8791, 16
      %v8813 = vor.u32 %v8810, %v8811
      %v8815 = vshrl.u32 %v8792, 16
      %v8817 = vrot.slane %v8815, 7
      %v8818 = vshll.u32 %v8792, 16
      %v8820 = vor.u32 %v8817, %v8818
      %v8821 = vsel %vm1289, %v8810, %v8820
      %v8823 = vshrl.u32 %v8793, 16
      %v8825 = vrot.slane %v8823, 7
      %v8826 = vshll.u32 %v8793, 16
      %v8828 = vor.u32 %v8825, %v8826
      %v8830 = vshrl.u32 %v8794, 16
      %v8832 = vrot.slane %v8830, 7
      %v8833 = vshll.u32 %v8794, 16
      %v8835 = vor.u32 %v8832, %v8833
      %v8836 = vsel %vm1289, %v8825, %v8835
      %v8838 = vshrl.u32 %v8795, 16
      %v8840 = vrot.slane %v8838, 7
      %v8841 = vshll.u32 %v8795, 16
      %v8843 = vor.u32 %v8840, %v8841
      %v8845 = vshrl.u32 %v8796, 16
      %v8847 = vrot.slane %v8845, 7
      %v8848 = vshll.u32 %v8796, 16
      %v8850 = vor.u32 %v8847, %v8848
      %v8851 = vsel %vm1289, %v8840, %v8850
      %v8853 = vshrl.u32 %v8797, 16
      %v8855 = vrot.slane %v8853, 7
      %v8856 = vshll.u32 %v8797, 16
      %v8858 = vor.u32 %v8855, %v8856
      %v8860 = vshrl.u32 %v8798, 16
      %v8862 = vrot.slane %v8860, 7
      %v8863 = vshll.u32 %v8798, 16
      %v8865 = vor.u32 %v8862, %v8863
      %v8866 = vsel %vm1289, %v8855, %v8865
      %v8868 = vshrl.u32 %v8799, 16
      %v8870 = vrot.slane %v8868, 7
      %v8871 = vshll.u32 %v8799, 16
      %v8873 = vor.u32 %v8870, %v8871
      %v8875 = vshrl.u32 %v8800, 16
      %v8877 = vrot.slane %v8875, 7
      %v8878 = vshll.u32 %v8800, 16
      %v8880 = vor.u32 %v8877, %v8878
      %v8881 = vsel %vm1289, %v8870, %v8880
      %v8883 = vshrl.u32 %v8801, 16
      %v8885 = vrot.slane %v8883, 7
      %v8886 = vshll.u32 %v8801, 16
      %v8888 = vor.u32 %v8885, %v8886
      %v8890 = vshrl.u32 %v8802, 16
      %v8892 = vrot.slane %v8890, 7
      %v8893 = vshll.u32 %v8802, 16
      %v8895 = vor.u32 %v8892, %v8893
      %v8896 = vsel %vm1289, %v8885, %v8895
      %v8898 = vshrl.u32 %v8803, 16
      %v8900 = vrot.slane %v8898, 7
      %v8901 = vshll.u32 %v8803, 16
      %v8903 = vor.u32 %v8900, %v8901
      %v8905 = vshrl.u32 %v8804, 16
      %v8907 = vrot.slane %v8905, 7
      %v8908 = vshll.u32 %v8804, 16
      %v8910 = vor.u32 %v8907, %v8908
      %v8911 = vsel %vm1289, %v8900, %v8910
      %v8913 = vshrl.u32 %v8805, 16
      %v8915 = vrot.slane %v8913, 7
      %v8916 = vshll.u32 %v8805, 16
      %v8918 = vor.u32 %v8915, %v8916
      %v8920 = vshrl.u32 %v8806, 16
      %v8922 = vrot.slane %v8920, 7
      %v8923 = vshll.u32 %v8806, 16
      %v8925 = vor.u32 %v8922, %v8923
      %v8926 = vsel %vm1289, %v8915, %v8925
      %8927 = vrot.lane.b32.xlu0 %v8813, 64
      %v8928 = vpop.permute.xlu0 %8927
      %8929 = vrot.lane.b32.xlu0 %v8821, 64
      %v8930 = vpop.permute.xlu0 %8929
      %8931 = vrot.lane.b32.xlu0 %v8828, 64
      %v8932 = vpop.permute.xlu0 %8931
      %8933 = vrot.lane.b32.xlu0 %v8836, 64
      %v8934 = vpop.permute.xlu0 %8933
      %8935 = vrot.lane.b32.xlu0 %v8843, 64
      %v8936 = vpop.permute.xlu0 %8935
      %8937 = vrot.lane.b32.xlu0 %v8851, 64
      %v8938 = vpop.permute.xlu0 %8937
      %8939 = vrot.lane.b32.xlu0 %v8858, 64
      %v8940 = vpop.permute.xlu0 %8939
      %8941 = vrot.lane.b32.xlu0 %v8866, 64
      %v8942 = vpop.permute.xlu0 %8941
      %8943 = vrot.lane.b32.xlu0 %v8873, 64
      %v8944 = vpop.permute.xlu0 %8943
      %8945 = vrot.lane.b32.xlu0 %v8881, 64
      %v8946 = vpop.permute.xlu0 %8945
      %8947 = vrot.lane.b32.xlu0 %v8888, 64
      %v8948 = vpop.permute.xlu0 %8947
      %8949 = vrot.lane.b32.xlu0 %v8896, 64
      %v8950 = vpop.permute.xlu0 %8949
      %8951 = vrot.lane.b32.xlu0 %v8903, 64
      %v8952 = vpop.permute.xlu0 %8951
      %8953 = vrot.lane.b32.xlu0 %v8911, 64
      %v8954 = vpop.permute.xlu0 %8953
      %8955 = vrot.lane.b32.xlu0 %v8918, 64
      %v8956 = vpop.permute.xlu0 %8955
      %8957 = vrot.lane.b32.xlu0 %v8926, 64
      %v8958 = vpop.permute.xlu0 %8957
      %v8975 = vunpack.c.l.b16 %v8447
      %v8976 = vunpack.c.l.b16 %v8448
      %v8977 = vunpack.c.l.b16 %v8449
      %v8978 = vunpack.c.l.b16 %v8450
      %v8979 = vunpack.c.l.b16 %v8451
      %v8980 = vunpack.c.l.b16 %v8452
      %v8981 = vunpack.c.l.b16 %v8453
      %v8982 = vunpack.c.l.b16 %v8454
      %v8983 = vunpack.c.l.b16 %v8455
      %v8984 = vunpack.c.l.b16 %v8456
      %v8985 = vunpack.c.l.b16 %v8457
      %v8986 = vunpack.c.l.b16 %v8458
      %v8987 = vunpack.c.l.b16 %v8459
      %v8988 = vunpack.c.l.b16 %v8460
      %v8989 = vunpack.c.l.b16 %v8461
      %v8990 = vunpack.c.l.b16 %v8462
      %v8991 = vpack.c.b16 %v8552, %v8975
      %v8992 = vpack.c.b16 %v8976, %v8976
      %v8993 = vpack.c.b16 %v8555, %v8977
      %v8994 = vpack.c.b16 %v8978, %v8978
      %v8995 = vpack.c.b16 %v8558, %v8979
      %v8996 = vpack.c.b16 %v8980, %v8980
      %v8997 = vpack.c.b16 %v8561, %v8981
      %v8998 = vpack.c.b16 %v8982, %v8982
      %v8999 = vpack.c.b16 %v8564, %v8983
      %v9000 = vpack.c.b16 %v8984, %v8984
      %v9001 = vpack.c.b16 %v8567, %v8985
      %v9002 = vpack.c.b16 %v8986, %v8986
      %v9003 = vpack.c.b16 %v8570, %v8987
      %v9004 = vpack.c.b16 %v8988, %v8988
      %v9005 = vpack.c.b16 %v8573, %v8989
      %v9006 = vpack.c.b16 %v8990, %v8990
      %v9008 = vshrl.u32 %v8991, 16
      %v9010 = vshll.u32 %v8991, 16
      %v9012 = vrot.slane %v9010, 1
      %v9013 = vor.u32 %v9008, %v9012
      %v9015 = vshll.u32 %v8992, 16
      %v9017 = vrot.slane %v9015, 1
      %v9018 = vsel %vm375, %v9013, %v9017
      %v9019 = vshrl.u32 %v8992, 16
      %v9021 = vor.u32 %v9019, %v9017
      %v9023 = vshrl.u32 %v8993, 16
      %v9025 = vshll.u32 %v8993, 16
      %v9027 = vrot.slane %v9025, 1
      %v9028 = vor.u32 %v9023, %v9027
      %v9030 = vshll.u32 %v8994, 16
      %v9032 = vrot.slane %v9030, 1
      %v9033 = vsel %vm375, %v9028, %v9032
      %v9034 = vshrl.u32 %v8994, 16
      %v9036 = vor.u32 %v9034, %v9032
      %v9038 = vshrl.u32 %v8995, 16
      %v9040 = vshll.u32 %v8995, 16
      %v9042 = vrot.slane %v9040, 1
      %v9043 = vor.u32 %v9038, %v9042
      %v9045 = vshll.u32 %v8996, 16
      %v9047 = vrot.slane %v9045, 1
      %v9048 = vsel %vm375, %v9043, %v9047
      %v9049 = vshrl.u32 %v8996, 16
      %v9051 = vor.u32 %v9049, %v9047
      %v9053 = vshrl.u32 %v8997, 16
      %v9055 = vshll.u32 %v8997, 16
      %v9057 = vrot.slane %v9055, 1
      %v9058 = vor.u32 %v9053, %v9057
      %v9060 = vshll.u32 %v8998, 16
      %v9062 = vrot.slane %v9060, 1
      %v9063 = vsel %vm375, %v9058, %v9062
      %v9064 = vshrl.u32 %v8998, 16
      %v9066 = vor.u32 %v9064, %v9062
      %v9068 = vshrl.u32 %v8999, 16
      %v9070 = vshll.u32 %v8999, 16
      %v9072 = vrot.slane %v9070, 1
      %v9073 = vor.u32 %v9068, %v9072
      %v9075 = vshll.u32 %v9000, 16
      %v9077 = vrot.slane %v9075, 1
      %v9078 = vsel %vm375, %v9073, %v9077
      %v9079 = vshrl.u32 %v9000, 16
      %v9081 = vor.u32 %v9079, %v9077
      %v9083 = vshrl.u32 %v9001, 16
      %v9085 = vshll.u32 %v9001, 16
      %v9087 = vrot.slane %v9085, 1
      %v9088 = vor.u32 %v9083, %v9087
      %v9090 = vshll.u32 %v9002, 16
      %v9092 = vrot.slane %v9090, 1
      %v9093 = vsel %vm375, %v9088, %v9092
      %v9094 = vshrl.u32 %v9002, 16
      %v9096 = vor.u32 %v9094, %v9092
      %v9098 = vshrl.u32 %v9003, 16
      %v9100 = vshll.u32 %v9003, 16
      %v9102 = vrot.slane %v9100, 1
      %v9103 = vor.u32 %v9098, %v9102
      %v9105 = vshll.u32 %v9004, 16
      %v9107 = vrot.slane %v9105, 1
      %v9108 = vsel %vm375, %v9103, %v9107
      %v9109 = vshrl.u32 %v9004, 16
      %v9111 = vor.u32 %v9109, %v9107
      %v9113 = vshrl.u32 %v9005, 16
      %v9115 = vshll.u32 %v9005, 16
      %v9117 = vrot.slane %v9115, 1
      %v9118 = vor.u32 %v9113, %v9117
      %v9120 = vshll.u32 %v9006, 16
      %v9122 = vrot.slane %v9120, 1
      %v9123 = vsel %vm375, %v9118, %v9122
      %v9124 = vshrl.u32 %v9006, 16
      %v9126 = vor.u32 %v9124, %v9122
      %9127 = vrot.lane.b32.xlu0 %v9018, 96
      %v9128 = vpop.permute.xlu0 %9127
      %9129 = vrot.lane.b32.xlu0 %v9021, 96
      %v9130 = vpop.permute.xlu0 %9129
      %9131 = vrot.lane.b32.xlu0 %v9033, 96
      %v9132 = vpop.permute.xlu0 %9131
      %9133 = vrot.lane.b32.xlu0 %v9036, 96
      %v9134 = vpop.permute.xlu0 %9133
      %9135 = vrot.lane.b32.xlu0 %v9048, 96
      %v9136 = vpop.permute.xlu0 %9135
      %9137 = vrot.lane.b32.xlu0 %v9051, 96
      %v9138 = vpop.permute.xlu0 %9137
      %9139 = vrot.lane.b32.xlu0 %v9063, 96
      %v9140 = vpop.permute.xlu0 %9139
      %9141 = vrot.lane.b32.xlu0 %v9066, 96
      %v9142 = vpop.permute.xlu0 %9141
      %9143 = vrot.lane.b32.xlu0 %v9078, 96
      %v9144 = vpop.permute.xlu0 %9143
      %9145 = vrot.lane.b32.xlu0 %v9081, 96
      %v9146 = vpop.permute.xlu0 %9145
      %9147 = vrot.lane.b32.xlu0 %v9093, 96
      %v9148 = vpop.permute.xlu0 %9147
      %9149 = vrot.lane.b32.xlu0 %v9096, 96
      %v9150 = vpop.permute.xlu0 %9149
      %9151 = vrot.lane.b32.xlu0 %v9108, 96
      %v9152 = vpop.permute.xlu0 %9151
      %9153 = vrot.lane.b32.xlu0 %v9111, 96
      %v9154 = vpop.permute.xlu0 %9153
      %9155 = vrot.lane.b32.xlu0 %v9123, 96
      %v9156 = vpop.permute.xlu0 %9155
      %9157 = vrot.lane.b32.xlu0 %v9126, 96
      %v9158 = vpop.permute.xlu0 %9157
      %v9161 = vsel %vm705, %v8511, %v8728
      %v9164 = vsel %vm705, %v8512, %v8730
      %v9167 = vsel %vm705, %v8513, %v8732
      %v9170 = vsel %vm705, %v8514, %v8734
      %v9173 = vsel %vm705, %v8515, %v8736
      %v9176 = vsel %vm705, %v8516, %v8738
      %v9179 = vsel %vm705, %v8517, %v8740
      %v9182 = vsel %vm705, %v8518, %v8742
      %v9185 = vsel %vm705, %v8519, %v8744
      %v9188 = vsel %vm705, %v8520, %v8746
      %v9191 = vsel %vm705, %v8521, %v8748
      %v9194 = vsel %vm705, %v8522, %v8750
      %v9197 = vsel %vm705, %v8523, %v8752
      %v9200 = vsel %vm705, %v8524, %v8754
      %v9203 = vsel %vm705, %v8525, %v8756
      %v9206 = vsel %vm705, %v8526, %v8758
      %v9208 = vsel %vm746, %v9161, %v8928
      %v9210 = vsel %vm746, %v9164, %v8930
      %v9212 = vsel %vm746, %v9167, %v8932
      %v9214 = vsel %vm746, %v9170, %v8934
      %v9216 = vsel %vm746, %v9173, %v8936
      %v9218 = vsel %vm746, %v9176, %v8938
      %v9220 = vsel %vm746, %v9179, %v8940
      %v9222 = vsel %vm746, %v9182, %v8942
      %v9224 = vsel %vm746, %v9185, %v8944
      %v9226 = vsel %vm746, %v9188, %v8946
      %v9228 = vsel %vm746, %v9191, %v8948
      %v9230 = vsel %vm746, %v9194, %v8950
      %v9232 = vsel %vm746, %v9197, %v8952
      %v9234 = vsel %vm746, %v9200, %v8954
      %v9236 = vsel %vm746, %v9203, %v8956
      %v9238 = vsel %vm746, %v9206, %v8958
      %v9240 = vsel %vm779, %v9208, %v9128
      %v9242 = vsel %vm779, %v9210, %v9130
      %v9244 = vsel %vm779, %v9212, %v9132
      %v9246 = vsel %vm779, %v9214, %v9134
      %v9248 = vsel %vm779, %v9216, %v9136
      %v9250 = vsel %vm779, %v9218, %v9138
      %v9252 = vsel %vm779, %v9220, %v9140
      %v9254 = vsel %vm779, %v9222, %v9142
      %v9256 = vsel %vm779, %v9224, %v9144
      %v9258 = vsel %vm779, %v9226, %v9146
      %v9260 = vsel %vm779, %v9228, %v9148
      %v9262 = vsel %vm779, %v9230, %v9150
      %v9264 = vsel %vm779, %v9232, %v9152
      %v9266 = vsel %vm779, %v9234, %v9154
      %v9268 = vsel %vm779, %v9236, %v9156
      %v9270 = vsel %vm779, %v9238, %v9158
      %v9287 = vrot.slane %v9240, 3
      %v9288 = vrot.slane %v9242, 3
      %v9289 = vsel %vm2696, %v9287, %v9288
      %v9290 = vrot.slane %v9244, 3
      %v9291 = vrot.slane %v9246, 3
      %v9292 = vsel %vm2696, %v9290, %v9291
      %v9293 = vrot.slane %v9248, 3
      %v9294 = vrot.slane %v9250, 3
      %v9295 = vsel %vm2696, %v9293, %v9294
      %v9296 = vrot.slane %v9252, 3
      %v9297 = vrot.slane %v9254, 3
      %v9298 = vsel %vm2696, %v9296, %v9297
      %v9299 = vrot.slane %v9256, 3
      %v9300 = vrot.slane %v9258, 3
      %v9301 = vsel %vm2696, %v9299, %v9300
      %v9302 = vrot.slane %v9260, 3
      %v9303 = vrot.slane %v9262, 3
      %v9304 = vsel %vm2696, %v9302, %v9303
      %v9305 = vrot.slane %v9264, 3
      %v9306 = vrot.slane %v9266, 3
      %v9307 = vsel %vm2696, %v9305, %v9306
      %v9308 = vrot.slane %v9268, 3
      %v9309 = vrot.slane %v9270, 3
      %v9310 = vsel %vm2696, %v9308, %v9309
      %v9311 = vunpack.c.l.b16 %v9289
      %v9312 = vunpack.c.h.b16 %v9289
      %v9313 = vunpack.c.l.b16 %v9292
      %v9314 = vunpack.c.h.b16 %v9292
      %v9315 = vunpack.c.l.b16 %v9295
      %v9316 = vunpack.c.h.b16 %v9295
      %v9317 = vunpack.c.l.b16 %v9298
      %v9318 = vunpack.c.h.b16 %v9298
      %v9319 = vunpack.c.l.b16 %v9301
      %v9320 = vunpack.c.h.b16 %v9301
      %v9321 = vunpack.c.l.b16 %v9304
      %v9322 = vunpack.c.h.b16 %v9304
      %v9323 = vunpack.c.l.b16 %v9307
      %v9324 = vunpack.c.h.b16 %v9307
      %v9325 = vunpack.c.l.b16 %v9310
      %v9326 = vunpack.c.h.b16 %v9310
      %v9327 = vpack.c.b16 %v9311, %v9311
      %v9328 = vpack.c.b16 %v9312, %v9312
      %v9329 = vpack.c.b16 %v9313, %v9313
      %v9330 = vpack.c.b16 %v9314, %v9314
      %v9331 = vpack.c.b16 %v9315, %v9315
      %v9332 = vpack.c.b16 %v9316, %v9316
      %v9333 = vpack.c.b16 %v9317, %v9317
      %v9334 = vpack.c.b16 %v9318, %v9318
      %v9335 = vpack.c.b16 %v9319, %v9319
      %v9336 = vpack.c.b16 %v9320, %v9320
      %v9337 = vpack.c.b16 %v9321, %v9321
      %v9338 = vpack.c.b16 %v9322, %v9322
      %v9339 = vpack.c.b16 %v9323, %v9323
      %v9340 = vpack.c.b16 %v9324, %v9324
      %v9341 = vpack.c.b16 %v9325, %v9325
      %v9342 = vpack.c.b16 %v9326, %v9326
      %9359 = vst [vmem:[#allocation3 + $0x8] sm:$0xf] %v9327
      %9360 = vst [vmem:[#allocation3 + $0x24] sm:$0xf] %v9328
      %9361 = vst [vmem:[#allocation3 + $0x40] sm:$0xf] %v9329
      %9362 = vst [vmem:[#allocation3 + $0x5c] sm:$0xf] %v9330
      %9363 = vst [vmem:[#allocation3 + $0x78] sm:$0xf] %v9331
      %9364 = vst [vmem:[#allocation3 + $0x94] sm:$0xf] %v9332
      %9365 = vst [vmem:[#allocation3 + $0xb0] sm:$0xf] %v9333
      %9366 = vst [vmem:[#allocation3 + $0xcc] sm:$0xf] %v9334
      %9367 = vst [vmem:[#allocation3 + $0xe8] sm:$0xf] %v9335
      %9368 = vst [vmem:[#allocation3 + $0x104] sm:$0xf] %v9336
      %9369 = vst [vmem:[#allocation3 + $0x120] sm:$0xf] %v9337
      %9370 = vst [vmem:[#allocation3 + $0x13c] sm:$0xf] %v9338
      %9371 = vst [vmem:[#allocation3 + $0x158] sm:$0xf] %v9339
      %9372 = vst [vmem:[#allocation3 + $0x174] sm:$0xf] %v9340
      %9373 = vst [vmem:[#allocation3 + $0x190] sm:$0xf] %v9341
      %9374 = vst [vmem:[#allocation3 + $0x1ac] sm:$0xf] %v9342
      %v9375 = vld [vmem:[%s6862] sm:$0xe]
      %v9376 = vld [vmem:[%s6862 + $0x4] sm:$0xf]
      %v9377 = vld [vmem:[%s6862 + $0x8] sm:$0x3]
      %v9378 = vld [vmem:[%s6862 + $0x10] sm:$0xe]
      %v9379 = vld [vmem:[%s6862 + $0x14] sm:$0xf]
      %v9380 = vld [vmem:[%s6862 + $0x18] sm:$0x3]
      %v9381 = vld [vmem:[%s6862 + $0x20] sm:$0xe]
      %v9382 = vld [vmem:[%s6862 + $0x24] sm:$0xf]
      %v9383 = vld [vmem:[%s6862 + $0x28] sm:$0x3]
      %v9384 = vld [vmem:[%s6862 + $0x30] sm:$0xe]
      %v9385 = vld [vmem:[%s6862 + $0x34] sm:$0xf]
      %v9386 = vld [vmem:[%s6862 + $0x38] sm:$0x3]
      %v9387 = vld [vmem:[%s6862 + $0x40] sm:$0xe]
      %v9388 = vld [vmem:[%s6862 + $0x44] sm:$0xf]
      %v9389 = vld [vmem:[%s6862 + $0x48] sm:$0x3]
      %v9390 = vld [vmem:[%s6862 + $0x50] sm:$0xe]
      %v9391 = vld [vmem:[%s6862 + $0x54] sm:$0xf]
      %v9392 = vld [vmem:[%s6862 + $0x58] sm:$0x3]
      %v9393 = vld [vmem:[%s6862 + $0x60] sm:$0xe]
      %v9394 = vld [vmem:[%s6862 + $0x64] sm:$0xf]
      %v9395 = vld [vmem:[%s6862 + $0x68] sm:$0x3]
      %v9396 = vld [vmem:[%s6862 + $0x70] sm:$0xe]
      %v9397 = vld [vmem:[%s6862 + $0x74] sm:$0xf]
      %v9398 = vld [vmem:[%s6862 + $0x78] sm:$0x3]
      %v9399 = vld [vmem:[%s6862] sm:$0xc]
      %v9400 = vld [vmem:[%s6862 + $0x8] sm:$0x7]
      %v9401 = vld [vmem:[%s6862 + $0x10] sm:$0xc]
      %v9402 = vld [vmem:[%s6862 + $0x18] sm:$0x7]
      %v9403 = vld [vmem:[%s6862 + $0x20] sm:$0xc]
      %v9404 = vld [vmem:[%s6862 + $0x28] sm:$0x7]
      %v9405 = vld [vmem:[%s6862 + $0x30] sm:$0xc]
      %v9406 = vld [vmem:[%s6862 + $0x38] sm:$0x7]
      %v9407 = vld [vmem:[%s6862 + $0x40] sm:$0xc]
      %v9408 = vld [vmem:[%s6862 + $0x48] sm:$0x7]
      %v9409 = vld [vmem:[%s6862 + $0x50] sm:$0xc]
      %v9410 = vld [vmem:[%s6862 + $0x58] sm:$0x7]
      %v9411 = vld [vmem:[%s6862 + $0x60] sm:$0xc]
      %v9412 = vld [vmem:[%s6862 + $0x68] sm:$0x7]
      %v9413 = vld [vmem:[%s6862 + $0x70] sm:$0xc]
      %v9414 = vld [vmem:[%s6862 + $0x78] sm:$0x7]
      %v9415 = vld [vmem:[%s6862] sm:$0x8]
      %v9416 = vld [vmem:[%s6862 + $0x8] sm:$0xf]
      %v9417 = vld [vmem:[%s6862 + $0x10] sm:$0x8]
      %v9418 = vld [vmem:[%s6862 + $0x18] sm:$0xf]
      %v9419 = vld [vmem:[%s6862 + $0x20] sm:$0x8]
      %v9420 = vld [vmem:[%s6862 + $0x28] sm:$0xf]
      %v9421 = vld [vmem:[%s6862 + $0x30] sm:$0x8]
      %v9422 = vld [vmem:[%s6862 + $0x38] sm:$0xf]
      %v9423 = vld [vmem:[%s6862 + $0x40] sm:$0x8]
      %v9424 = vld [vmem:[%s6862 + $0x48] sm:$0xf]
      %v9425 = vld [vmem:[%s6862 + $0x50] sm:$0x8]
      %v9426 = vld [vmem:[%s6862 + $0x58] sm:$0xf]
      %v9427 = vld [vmem:[%s6862 + $0x60] sm:$0x8]
      %v9428 = vld [vmem:[%s6862 + $0x68] sm:$0xf]
      %v9429 = vld [vmem:[%s6862 + $0x70] sm:$0x8]
      %v9430 = vld [vmem:[%s6862 + $0x78] sm:$0xf]
      %s9431 = sadd.s32 %s214, 15
      %s9432 = smul.u32 %s9431, 4
      %s9433 = smul.addr %s9432, 4
      %s9434 = scalar_lea.vmem %s195, %s9433
      %v9435 = vld [vmem:[%s9434] sm:$0xe]
      %v9436 = vld [vmem:[%s9434 + $0x4] sm:$0xf]
      %v9437 = vld [vmem:[%s9434 + $0x8] sm:$0x3]
      %v9438 = vld [vmem:[%s9434 + $0x10] sm:$0xe]
      %v9439 = vld [vmem:[%s9434 + $0x14] sm:$0xf]
      %v9440 = vld [vmem:[%s9434 + $0x18] sm:$0x3]
      %v9441 = vld [vmem:[%s9434 + $0x20] sm:$0xe]
      %v9442 = vld [vmem:[%s9434 + $0x24] sm:$0xf]
      %v9443 = vld [vmem:[%s9434 + $0x28] sm:$0x3]
      %v9444 = vld [vmem:[%s9434 + $0x30] sm:$0xe]
      %v9445 = vld [vmem:[%s9434 + $0x34] sm:$0xf]
      %v9446 = vld [vmem:[%s9434 + $0x38] sm:$0x3]
      %v9447 = vld [vmem:[%s9434 + $0x40] sm:$0xe]
      %v9448 = vld [vmem:[%s9434 + $0x44] sm:$0xf]
      %v9449 = vld [vmem:[%s9434 + $0x48] sm:$0x3]
      %v9450 = vld [vmem:[%s9434 + $0x50] sm:$0xe]
      %v9451 = vld [vmem:[%s9434 + $0x54] sm:$0xf]
      %v9452 = vld [vmem:[%s9434 + $0x58] sm:$0x3]
      %v9453 = vld [vmem:[%s9434 + $0x60] sm:$0xe]
      %v9454 = vld [vmem:[%s9434 + $0x64] sm:$0xf]
      %v9455 = vld [vmem:[%s9434 + $0x68] sm:$0x3]
      %v9456 = vld [vmem:[%s9434 + $0x70] sm:$0xe]
      %v9457 = vld [vmem:[%s9434 + $0x74] sm:$0xf]
      %v9458 = vld [vmem:[%s9434 + $0x78] sm:$0x3]
      %v9483 = vunpack.c.l.b16 %v9375
      %v9484 = vunpack.c.l.b16 %v9376
      %v9485 = vunpack.c.l.b16 %v9377
      %v9486 = vunpack.c.l.b16 %v9378
      %v9487 = vunpack.c.l.b16 %v9379
      %v9488 = vunpack.c.l.b16 %v9380
      %v9489 = vunpack.c.l.b16 %v9381
      %v9490 = vunpack.c.l.b16 %v9382
      %v9491 = vunpack.c.l.b16 %v9383
      %v9492 = vunpack.c.l.b16 %v9384
      %v9493 = vunpack.c.l.b16 %v9385
      %v9494 = vunpack.c.l.b16 %v9386
      %v9495 = vunpack.c.l.b16 %v9387
      %v9496 = vunpack.c.l.b16 %v9388
      %v9497 = vunpack.c.l.b16 %v9389
      %v9498 = vunpack.c.l.b16 %v9390
      %v9499 = vunpack.c.l.b16 %v9391
      %v9500 = vunpack.c.l.b16 %v9392
      %v9501 = vunpack.c.l.b16 %v9393
      %v9502 = vunpack.c.l.b16 %v9394
      %v9503 = vunpack.c.l.b16 %v9395
      %v9504 = vunpack.c.l.b16 %v9396
      %v9505 = vunpack.c.l.b16 %v9397
      %v9506 = vunpack.c.l.b16 %v9398
      %v9507 = vpack.c.b16 %v9484, %v9483
      %v9508 = vpack.c.b16 %v9485, %v9485
      %v9509 = vpack.c.b16 %v9487, %v9486
      %v9510 = vpack.c.b16 %v9488, %v9488
      %v9511 = vpack.c.b16 %v9490, %v9489
      %v9512 = vpack.c.b16 %v9491, %v9491
      %v9513 = vpack.c.b16 %v9493, %v9492
      %v9514 = vpack.c.b16 %v9494, %v9494
      %v9515 = vpack.c.b16 %v9496, %v9495
      %v9516 = vpack.c.b16 %v9497, %v9497
      %v9517 = vpack.c.b16 %v9499, %v9498
      %v9518 = vpack.c.b16 %v9500, %v9500
      %v9519 = vpack.c.b16 %v9502, %v9501
      %v9520 = vpack.c.b16 %v9503, %v9503
      %v9521 = vpack.c.b16 %v9505, %v9504
      %v9522 = vpack.c.b16 %v9506, %v9506
      %v9539 = vunpack.c.l.b16 %v9399
      %v9540 = vunpack.c.l.b16 %v9400
      %v9541 = vunpack.c.l.b16 %v9401
      %v9542 = vunpack.c.l.b16 %v9402
      %v9543 = vunpack.c.l.b16 %v9403
      %v9544 = vunpack.c.l.b16 %v9404
      %v9545 = vunpack.c.l.b16 %v9405
      %v9546 = vunpack.c.l.b16 %v9406
      %v9547 = vunpack.c.l.b16 %v9407
      %v9548 = vunpack.c.l.b16 %v9408
      %v9549 = vunpack.c.l.b16 %v9409
      %v9550 = vunpack.c.l.b16 %v9410
      %v9551 = vunpack.c.l.b16 %v9411
      %v9552 = vunpack.c.l.b16 %v9412
      %v9553 = vunpack.c.l.b16 %v9413
      %v9554 = vunpack.c.l.b16 %v9414
      %v9555 = vpack.c.b16 %v9484, %v9539
      %v9556 = vpack.c.b16 %v9540, %v9540
      %v9557 = vpack.c.b16 %v9487, %v9541
      %v9558 = vpack.c.b16 %v9542, %v9542
      %v9559 = vpack.c.b16 %v9490, %v9543
      %v9560 = vpack.c.b16 %v9544, %v9544
      %v9561 = vpack.c.b16 %v9493, %v9545
      %v9562 = vpack.c.b16 %v9546, %v9546
      %v9563 = vpack.c.b16 %v9496, %v9547
      %v9564 = vpack.c.b16 %v9548, %v9548
      %v9565 = vpack.c.b16 %v9499, %v9549
      %v9566 = vpack.c.b16 %v9550, %v9550
      %v9567 = vpack.c.b16 %v9502, %v9551
      %v9568 = vpack.c.b16 %v9552, %v9552
      %v9569 = vpack.c.b16 %v9505, %v9553
      %v9570 = vpack.c.b16 %v9554, %v9554
      %v9571 = vrot.slane %v9555, 1
      %v9572 = vrot.slane %v9556, 1
      %v9573 = vsel %vm552, %v9571, %v9572
      %v9574 = vrot.slane %v9557, 1
      %v9575 = vrot.slane %v9558, 1
      %v9576 = vsel %vm552, %v9574, %v9575
      %v9577 = vrot.slane %v9559, 1
      %v9578 = vrot.slane %v9560, 1
      %v9579 = vsel %vm552, %v9577, %v9578
      %v9580 = vrot.slane %v9561, 1
      %v9581 = vrot.slane %v9562, 1
      %v9582 = vsel %vm552, %v9580, %v9581
      %v9583 = vrot.slane %v9563, 1
      %v9584 = vrot.slane %v9564, 1
      %v9585 = vsel %vm552, %v9583, %v9584
      %v9586 = vrot.slane %v9565, 1
      %v9587 = vrot.slane %v9566, 1
      %v9588 = vsel %vm552, %v9586, %v9587
      %v9589 = vrot.slane %v9567, 1
      %v9590 = vrot.slane %v9568, 1
      %v9591 = vsel %vm552, %v9589, %v9590
      %v9592 = vrot.slane %v9569, 1
      %v9593 = vrot.slane %v9570, 1
      %v9594 = vsel %vm552, %v9592, %v9593
      %9595 = vrot.lane.b32.xlu0 %v9573, 32
      %v9596 = vpop.permute.xlu0 %9595
      %9597 = vrot.lane.b32.xlu0 %v9572, 32
      %v9598 = vpop.permute.xlu0 %9597
      %9599 = vrot.lane.b32.xlu0 %v9576, 32
      %v9600 = vpop.permute.xlu0 %9599
      %9601 = vrot.lane.b32.xlu0 %v9575, 32
      %v9602 = vpop.permute.xlu0 %9601
      %9603 = vrot.lane.b32.xlu0 %v9579, 32
      %v9604 = vpop.permute.xlu0 %9603
      %9605 = vrot.lane.b32.xlu0 %v9578, 32
      %v9606 = vpop.permute.xlu0 %9605
      %9607 = vrot.lane.b32.xlu0 %v9582, 32
      %v9608 = vpop.permute.xlu0 %9607
      %9609 = vrot.lane.b32.xlu0 %v9581, 32
      %v9610 = vpop.permute.xlu0 %9609
      %9611 = vrot.lane.b32.xlu0 %v9585, 32
      %v9612 = vpop.permute.xlu0 %9611
      %9613 = vrot.lane.b32.xlu0 %v9584, 32
      %v9614 = vpop.permute.xlu0 %9613
      %9615 = vrot.lane.b32.xlu0 %v9588, 32
      %v9616 = vpop.permute.xlu0 %9615
      %9617 = vrot.lane.b32.xlu0 %v9587, 32
      %v9618 = vpop.permute.xlu0 %9617
      %9619 = vrot.lane.b32.xlu0 %v9591, 32
      %v9620 = vpop.permute.xlu0 %9619
      %9621 = vrot.lane.b32.xlu0 %v9590, 32
      %v9622 = vpop.permute.xlu0 %9621
      %9623 = vrot.lane.b32.xlu0 %v9594, 32
      %v9624 = vpop.permute.xlu0 %9623
      %9625 = vrot.lane.b32.xlu0 %v9593, 32
      %v9626 = vpop.permute.xlu0 %9625
      %v9643 = vunpack.c.l.b16 %v9415
      %v9644 = vunpack.c.l.b16 %v9416
      %v9645 = vunpack.c.l.b16 %v9417
      %v9646 = vunpack.c.l.b16 %v9418
      %v9647 = vunpack.c.l.b16 %v9419
      %v9648 = vunpack.c.l.b16 %v9420
      %v9649 = vunpack.c.l.b16 %v9421
      %v9650 = vunpack.c.l.b16 %v9422
      %v9651 = vunpack.c.l.b16 %v9423
      %v9652 = vunpack.c.l.b16 %v9424
      %v9653 = vunpack.c.l.b16 %v9425
      %v9654 = vunpack.c.l.b16 %v9426
      %v9655 = vunpack.c.l.b16 %v9427
      %v9656 = vunpack.c.l.b16 %v9428
      %v9657 = vunpack.c.l.b16 %v9429
      %v9658 = vunpack.c.l.b16 %v9430
      %v9659 = vpack.c.b16 %v9484, %v9643
      %v9660 = vpack.c.b16 %v9644, %v9644
      %v9661 = vpack.c.b16 %v9487, %v9645
      %v9662 = vpack.c.b16 %v9646, %v9646
      %v9663 = vpack.c.b16 %v9490, %v9647
      %v9664 = vpack.c.b16 %v9648, %v9648
      %v9665 = vpack.c.b16 %v9493, %v9649
      %v9666 = vpack.c.b16 %v9650, %v9650
      %v9667 = vpack.c.b16 %v9496, %v9651
      %v9668 = vpack.c.b16 %v9652, %v9652
      %v9669 = vpack.c.b16 %v9499, %v9653
      %v9670 = vpack.c.b16 %v9654, %v9654
      %v9671 = vpack.c.b16 %v9502, %v9655
      %v9672 = vpack.c.b16 %v9656, %v9656
      %v9673 = vpack.c.b16 %v9505, %v9657
      %v9674 = vpack.c.b16 %v9658, %v9658
      %v9675 = vrot.slane %v9659, 2
      %v9676 = vrot.slane %v9660, 2
      %v9677 = vsel %vm828, %v9675, %v9676
      %v9678 = vrot.slane %v9661, 2
      %v9679 = vrot.slane %v9662, 2
      %v9680 = vsel %vm828, %v9678, %v9679
      %v9681 = vrot.slane %v9663, 2
      %v9682 = vrot.slane %v9664, 2
      %v9683 = vsel %vm828, %v9681, %v9682
      %v9684 = vrot.slane %v9665, 2
      %v9685 = vrot.slane %v9666, 2
      %v9686 = vsel %vm828, %v9684, %v9685
      %v9687 = vrot.slane %v9667, 2
      %v9688 = vrot.slane %v9668, 2
      %v9689 = vsel %vm828, %v9687, %v9688
      %v9690 = vrot.slane %v9669, 2
      %v9691 = vrot.slane %v9670, 2
      %v9692 = vsel %vm828, %v9690, %v9691
      %v9693 = vrot.slane %v9671, 2
      %v9694 = vrot.slane %v9672, 2
      %v9695 = vsel %vm828, %v9693, %v9694
      %v9696 = vrot.slane %v9673, 2
      %v9697 = vrot.slane %v9674, 2
      %v9698 = vsel %vm828, %v9696, %v9697
      %9699 = vrot.lane.b32.xlu0 %v9677, 64
      %v9700 = vpop.permute.xlu0 %9699
      %9701 = vrot.lane.b32.xlu0 %v9676, 64
      %v9702 = vpop.permute.xlu0 %9701
      %9703 = vrot.lane.b32.xlu0 %v9680, 64
      %v9704 = vpop.permute.xlu0 %9703
      %9705 = vrot.lane.b32.xlu0 %v9679, 64
      %v9706 = vpop.permute.xlu0 %9705
      %9707 = vrot.lane.b32.xlu0 %v9683, 64
      %v9708 = vpop.permute.xlu0 %9707
      %9709 = vrot.lane.b32.xlu0 %v9682, 64
      %v9710 = vpop.permute.xlu0 %9709
      %9711 = vrot.lane.b32.xlu0 %v9686, 64
      %v9712 = vpop.permute.xlu0 %9711
      %9713 = vrot.lane.b32.xlu0 %v9685, 64
      %v9714 = vpop.permute.xlu0 %9713
      %9715 = vrot.lane.b32.xlu0 %v9689, 64
      %v9716 = vpop.permute.xlu0 %9715
      %9717 = vrot.lane.b32.xlu0 %v9688, 64
      %v9718 = vpop.permute.xlu0 %9717
      %9719 = vrot.lane.b32.xlu0 %v9692, 64
      %v9720 = vpop.permute.xlu0 %9719
      %9721 = vrot.lane.b32.xlu0 %v9691, 64
      %v9722 = vpop.permute.xlu0 %9721
      %9723 = vrot.lane.b32.xlu0 %v9695, 64
      %v9724 = vpop.permute.xlu0 %9723
      %9725 = vrot.lane.b32.xlu0 %v9694, 64
      %v9726 = vpop.permute.xlu0 %9725
      %9727 = vrot.lane.b32.xlu0 %v9698, 64
      %v9728 = vpop.permute.xlu0 %9727
      %9729 = vrot.lane.b32.xlu0 %v9697, 64
      %v9730 = vpop.permute.xlu0 %9729
      %v9755 = vunpack.c.l.b16 %v9435
      %v9756 = vunpack.c.l.b16 %v9436
      %v9757 = vunpack.c.l.b16 %v9437
      %v9758 = vunpack.c.l.b16 %v9438
      %v9759 = vunpack.c.l.b16 %v9439
      %v9760 = vunpack.c.l.b16 %v9440
      %v9761 = vunpack.c.l.b16 %v9441
      %v9762 = vunpack.c.l.b16 %v9442
      %v9763 = vunpack.c.l.b16 %v9443
      %v9764 = vunpack.c.l.b16 %v9444
      %v9765 = vunpack.c.l.b16 %v9445
      %v9766 = vunpack.c.l.b16 %v9446
      %v9767 = vunpack.c.l.b16 %v9447
      %v9768 = vunpack.c.l.b16 %v9448
      %v9769 = vunpack.c.l.b16 %v9449
      %v9770 = vunpack.c.l.b16 %v9450
      %v9771 = vunpack.c.l.b16 %v9451
      %v9772 = vunpack.c.l.b16 %v9452
      %v9773 = vunpack.c.l.b16 %v9453
      %v9774 = vunpack.c.l.b16 %v9454
      %v9775 = vunpack.c.l.b16 %v9455
      %v9776 = vunpack.c.l.b16 %v9456
      %v9777 = vunpack.c.l.b16 %v9457
      %v9778 = vunpack.c.l.b16 %v9458
      %v9779 = vpack.c.b16 %v9756, %v9755
      %v9780 = vpack.c.b16 %v9757, %v9757
      %v9781 = vpack.c.b16 %v9759, %v9758
      %v9782 = vpack.c.b16 %v9760, %v9760
      %v9783 = vpack.c.b16 %v9762, %v9761
      %v9784 = vpack.c.b16 %v9763, %v9763
      %v9785 = vpack.c.b16 %v9765, %v9764
      %v9786 = vpack.c.b16 %v9766, %v9766
      %v9787 = vpack.c.b16 %v9768, %v9767
      %v9788 = vpack.c.b16 %v9769, %v9769
      %v9789 = vpack.c.b16 %v9771, %v9770
      %v9790 = vpack.c.b16 %v9772, %v9772
      %v9791 = vpack.c.b16 %v9774, %v9773
      %v9792 = vpack.c.b16 %v9775, %v9775
      %v9793 = vpack.c.b16 %v9777, %v9776
      %v9794 = vpack.c.b16 %v9778, %v9778
      %9795 = vrot.lane.b32.xlu0 %v9779, 96
      %v9796 = vpop.permute.xlu0 %9795
      %9797 = vrot.lane.b32.xlu0 %v9780, 96
      %v9798 = vpop.permute.xlu0 %9797
      %9799 = vrot.lane.b32.xlu0 %v9781, 96
      %v9800 = vpop.permute.xlu0 %9799
      %9801 = vrot.lane.b32.xlu0 %v9782, 96
      %v9802 = vpop.permute.xlu0 %9801
      %9803 = vrot.lane.b32.xlu0 %v9783, 96
      %v9804 = vpop.permute.xlu0 %9803
      %9805 = vrot.lane.b32.xlu0 %v9784, 96
      %v9806 = vpop.permute.xlu0 %9805
      %9807 = vrot.lane.b32.xlu0 %v9785, 96
      %v9808 = vpop.permute.xlu0 %9807
      %9809 = vrot.lane.b32.xlu0 %v9786, 96
      %v9810 = vpop.permute.xlu0 %9809
      %9811 = vrot.lane.b32.xlu0 %v9787, 96
      %v9812 = vpop.permute.xlu0 %9811
      %9813 = vrot.lane.b32.xlu0 %v9788, 96
      %v9814 = vpop.permute.xlu0 %9813
      %9815 = vrot.lane.b32.xlu0 %v9789, 96
      %v9816 = vpop.permute.xlu0 %9815
      %9817 = vrot.lane.b32.xlu0 %v9790, 96
      %v9818 = vpop.permute.xlu0 %9817
      %9819 = vrot.lane.b32.xlu0 %v9791, 96
      %v9820 = vpop.permute.xlu0 %9819
      %9821 = vrot.lane.b32.xlu0 %v9792, 96
      %v9822 = vpop.permute.xlu0 %9821
      %9823 = vrot.lane.b32.xlu0 %v9793, 96
      %v9824 = vpop.permute.xlu0 %9823
      %9825 = vrot.lane.b32.xlu0 %v9794, 96
      %v9826 = vpop.permute.xlu0 %9825
      %v9829 = vsel %vm705, %v9507, %v9596
      %v9832 = vsel %vm705, %v9508, %v9598
      %v9835 = vsel %vm705, %v9509, %v9600
      %v9838 = vsel %vm705, %v9510, %v9602
      %v9841 = vsel %vm705, %v9511, %v9604
      %v9844 = vsel %vm705, %v9512, %v9606
      %v9847 = vsel %vm705, %v9513, %v9608
      %v9850 = vsel %vm705, %v9514, %v9610
      %v9853 = vsel %vm705, %v9515, %v9612
      %v9856 = vsel %vm705, %v9516, %v9614
      %v9859 = vsel %vm705, %v9517, %v9616
      %v9862 = vsel %vm705, %v9518, %v9618
      %v9865 = vsel %vm705, %v9519, %v9620
      %v9868 = vsel %vm705, %v9520, %v9622
      %v9871 = vsel %vm705, %v9521, %v9624
      %v9874 = vsel %vm705, %v9522, %v9626
      %v9876 = vsel %vm746, %v9829, %v9700
      %v9878 = vsel %vm746, %v9832, %v9702
      %v9880 = vsel %vm746, %v9835, %v9704
      %v9882 = vsel %vm746, %v9838, %v9706
      %v9884 = vsel %vm746, %v9841, %v9708
      %v9886 = vsel %vm746, %v9844, %v9710
      %v9888 = vsel %vm746, %v9847, %v9712
      %v9890 = vsel %vm746, %v9850, %v9714
      %v9892 = vsel %vm746, %v9853, %v9716
      %v9894 = vsel %vm746, %v9856, %v9718
      %v9896 = vsel %vm746, %v9859, %v9720
      %v9898 = vsel %vm746, %v9862, %v9722
      %v9900 = vsel %vm746, %v9865, %v9724
      %v9902 = vsel %vm746, %v9868, %v9726
      %v9904 = vsel %vm746, %v9871, %v9728
      %v9906 = vsel %vm746, %v9874, %v9730
      %v9908 = vsel %vm779, %v9876, %v9796
      %v9910 = vsel %vm779, %v9878, %v9798
      %v9912 = vsel %vm779, %v9880, %v9800
      %v9914 = vsel %vm779, %v9882, %v9802
      %v9916 = vsel %vm779, %v9884, %v9804
      %v9918 = vsel %vm779, %v9886, %v9806
      %v9920 = vsel %vm779, %v9888, %v9808
      %v9922 = vsel %vm779, %v9890, %v9810
      %v9924 = vsel %vm779, %v9892, %v9812
      %v9926 = vsel %vm779, %v9894, %v9814
      %v9928 = vsel %vm779, %v9896, %v9816
      %v9930 = vsel %vm779, %v9898, %v9818
      %v9932 = vsel %vm779, %v9900, %v9820
      %v9934 = vsel %vm779, %v9902, %v9822
      %v9936 = vsel %vm779, %v9904, %v9824
      %v9938 = vsel %vm779, %v9906, %v9826
      %v9939 = vshrl.u32 %v9908, 16
      %v9941 = vrot.slane %v9939, 1
      %v9942 = vshll.u32 %v9908, 16
      %v9944 = vrot.slane %v9942, 2
      %v9945 = vor.u32 %v9941, %v9944
      %v9946 = vshrl.u32 %v9910, 16
      %v9948 = vrot.slane %v9946, 1
      %v9949 = vshll.u32 %v9910, 16
      %v9951 = vrot.slane %v9949, 2
      %v9952 = vor.u32 %v9948, %v9951
      %v9953 = vsel %vm3349, %v9945, %v9952
      %v9954 = vshrl.u32 %v9912, 16
      %v9956 = vrot.slane %v9954, 1
      %v9957 = vshll.u32 %v9912, 16
      %v9959 = vrot.slane %v9957, 2
      %v9960 = vor.u32 %v9956, %v9959
      %v9961 = vshrl.u32 %v9914, 16
      %v9963 = vrot.slane %v9961, 1
      %v9964 = vshll.u32 %v9914, 16
      %v9966 = vrot.slane %v9964, 2
      %v9967 = vor.u32 %v9963, %v9966
      %v9968 = vsel %vm3349, %v9960, %v9967
      %v9969 = vshrl.u32 %v9916, 16
      %v9971 = vrot.slane %v9969, 1
      %v9972 = vshll.u32 %v9916, 16
      %v9974 = vrot.slane %v9972, 2
      %v9975 = vor.u32 %v9971, %v9974
      %v9976 = vshrl.u32 %v9918, 16
      %v9978 = vrot.slane %v9976, 1
      %v9979 = vshll.u32 %v9918, 16
      %v9981 = vrot.slane %v9979, 2
      %v9982 = vor.u32 %v9978, %v9981
      %v9983 = vsel %vm3349, %v9975, %v9982
      %v9984 = vshrl.u32 %v9920, 16
      %v9986 = vrot.slane %v9984, 1
      %v9987 = vshll.u32 %v9920, 16
      %v9989 = vrot.slane %v9987, 2
      %v9990 = vor.u32 %v9986, %v9989
      %v9991 = vshrl.u32 %v9922, 16
      %v9993 = vrot.slane %v9991, 1
      %v9994 = vshll.u32 %v9922, 16
      %v9996 = vrot.slane %v9994, 2
      %v9997 = vor.u32 %v9993, %v9996
      %v9998 = vsel %vm3349, %v9990, %v9997
      %v9999 = vshrl.u32 %v9924, 16
      %v10001 = vrot.slane %v9999, 1
      %v10002 = vshll.u32 %v9924, 16
      %v10004 = vrot.slane %v10002, 2
      %v10005 = vor.u32 %v10001, %v10004
      %v10006 = vshrl.u32 %v9926, 16
      %v10008 = vrot.slane %v10006, 1
      %v10009 = vshll.u32 %v9926, 16
      %v10011 = vrot.slane %v10009, 2
      %v10012 = vor.u32 %v10008, %v10011
      %v10013 = vsel %vm3349, %v10005, %v10012
      %v10014 = vshrl.u32 %v9928, 16
      %v10016 = vrot.slane %v10014, 1
      %v10017 = vshll.u32 %v9928, 16
      %v10019 = vrot.slane %v10017, 2
      %v10020 = vor.u32 %v10016, %v10019
      %v10021 = vshrl.u32 %v9930, 16
      %v10023 = vrot.slane %v10021, 1
      %v10024 = vshll.u32 %v9930, 16
      %v10026 = vrot.slane %v10024, 2
      %v10027 = vor.u32 %v10023, %v10026
      %v10028 = vsel %vm3349, %v10020, %v10027
      %v10029 = vshrl.u32 %v9932, 16
      %v10031 = vrot.slane %v10029, 1
      %v10032 = vshll.u32 %v9932, 16
      %v10034 = vrot.slane %v10032, 2
      %v10035 = vor.u32 %v10031, %v10034
      %v10036 = vshrl.u32 %v9934, 16
      %v10038 = vrot.slane %v10036, 1
      %v10039 = vshll.u32 %v9934, 16
      %v10041 = vrot.slane %v10039, 2
      %v10042 = vor.u32 %v10038, %v10041
      %v10043 = vsel %vm3349, %v10035, %v10042
      %v10044 = vshrl.u32 %v9936, 16
      %v10046 = vrot.slane %v10044, 1
      %v10047 = vshll.u32 %v9936, 16
      %v10049 = vrot.slane %v10047, 2
      %v10050 = vor.u32 %v10046, %v10049
      %v10051 = vshrl.u32 %v9938, 16
      %v10053 = vrot.slane %v10051, 1
      %v10054 = vshll.u32 %v9938, 16
      %v10056 = vrot.slane %v10054, 2
      %v10057 = vor.u32 %v10053, %v10056
      %v10058 = vsel %vm3349, %v10050, %v10057
      %v10059 = vunpack.c.l.b16 %v9953
      %v10060 = vunpack.c.h.b16 %v9953
      %v10061 = vunpack.c.l.b16 %v9968
      %v10062 = vunpack.c.h.b16 %v9968
      %v10063 = vunpack.c.l.b16 %v9983
      %v10064 = vunpack.c.h.b16 %v9983
      %v10065 = vunpack.c.l.b16 %v9998
      %v10066 = vunpack.c.h.b16 %v9998
      %v10067 = vunpack.c.l.b16 %v10013
      %v10068 = vunpack.c.h.b16 %v10013
      %v10069 = vunpack.c.l.b16 %v10028
      %v10070 = vunpack.c.h.b16 %v10028
      %v10071 = vunpack.c.l.b16 %v10043
      %v10072 = vunpack.c.h.b16 %v10043
      %v10073 = vunpack.c.l.b16 %v10058
      %v10074 = vunpack.c.h.b16 %v10058
      %v10075 = vpack.c.b16 %v10059, %v10059
      %v10076 = vpack.c.b16 %v10060, %v10060
      %v10077 = vpack.c.b16 %v10061, %v10061
      %v10078 = vpack.c.b16 %v10062, %v10062
      %v10079 = vpack.c.b16 %v10063, %v10063
      %v10080 = vpack.c.b16 %v10064, %v10064
      %v10081 = vpack.c.b16 %v10065, %v10065
      %v10082 = vpack.c.b16 %v10066, %v10066
      %v10083 = vpack.c.b16 %v10067, %v10067
      %v10084 = vpack.c.b16 %v10068, %v10068
      %v10085 = vpack.c.b16 %v10069, %v10069
      %v10086 = vpack.c.b16 %v10070, %v10070
      %v10087 = vpack.c.b16 %v10071, %v10071
      %v10088 = vpack.c.b16 %v10072, %v10072
      %v10089 = vpack.c.b16 %v10073, %v10073
      %v10090 = vpack.c.b16 %v10074, %v10074
      %10107 = vst [vmem:[#allocation3 + $0xc] sm:$0xf] %v10075
      %10108 = vst [vmem:[#allocation3 + $0x28] sm:$0xf] %v10076
      %10109 = vst [vmem:[#allocation3 + $0x44] sm:$0xf] %v10077
      %10110 = vst [vmem:[#allocation3 + $0x60] sm:$0xf] %v10078
      %10111 = vst [vmem:[#allocation3 + $0x7c] sm:$0xf] %v10079
      %10112 = vst [vmem:[#allocation3 + $0x98] sm:$0xf] %v10080
      %10113 = vst [vmem:[#allocation3 + $0xb4] sm:$0xf] %v10081
      %10114 = vst [vmem:[#allocation3 + $0xd0] sm:$0xf] %v10082
      %10115 = vst [vmem:[#allocation3 + $0xec] sm:$0xf] %v10083
      %10116 = vst [vmem:[#allocation3 + $0x108] sm:$0xf] %v10084
      %10117 = vst [vmem:[#allocation3 + $0x124] sm:$0xf] %v10085
      %10118 = vst [vmem:[#allocation3 + $0x140] sm:$0xf] %v10086
      %10119 = vst [vmem:[#allocation3 + $0x15c] sm:$0xf] %v10087
      %10120 = vst [vmem:[#allocation3 + $0x178] sm:$0xf] %v10088
      %10121 = vst [vmem:[#allocation3 + $0x194] sm:$0xf] %v10089
      %10122 = vst [vmem:[#allocation3 + $0x1b0] sm:$0xf] %v10090
      %v10123 = vld [vmem:[%s9434] sm:$0xc]
      %v10124 = vld [vmem:[%s9434 + $0x4] sm:$0xf]
      %v10125 = vld [vmem:[%s9434 + $0x8] sm:$0x7]
      %v10126 = vld [vmem:[%s9434 + $0x10] sm:$0xc]
      %v10127 = vld [vmem:[%s9434 + $0x14] sm:$0xf]
      %v10128 = vld [vmem:[%s9434 + $0x18] sm:$0x7]
      %v10129 = vld [vmem:[%s9434 + $0x20] sm:$0xc]
      %v10130 = vld [vmem:[%s9434 + $0x24] sm:$0xf]
      %v10131 = vld [vmem:[%s9434 + $0x28] sm:$0x7]
      %v10132 = vld [vmem:[%s9434 + $0x30] sm:$0xc]
      %v10133 = vld [vmem:[%s9434 + $0x34] sm:$0xf]
      %v10134 = vld [vmem:[%s9434 + $0x38] sm:$0x7]
      %v10135 = vld [vmem:[%s9434 + $0x40] sm:$0xc]
      %v10136 = vld [vmem:[%s9434 + $0x44] sm:$0xf]
      %v10137 = vld [vmem:[%s9434 + $0x48] sm:$0x7]
      %v10138 = vld [vmem:[%s9434 + $0x50] sm:$0xc]
      %v10139 = vld [vmem:[%s9434 + $0x54] sm:$0xf]
      %v10140 = vld [vmem:[%s9434 + $0x58] sm:$0x7]
      %v10141 = vld [vmem:[%s9434 + $0x60] sm:$0xc]
      %v10142 = vld [vmem:[%s9434 + $0x64] sm:$0xf]
      %v10143 = vld [vmem:[%s9434 + $0x68] sm:$0x7]
      %v10144 = vld [vmem:[%s9434 + $0x70] sm:$0xc]
      %v10145 = vld [vmem:[%s9434 + $0x74] sm:$0xf]
      %v10146 = vld [vmem:[%s9434 + $0x78] sm:$0x7]
      %v10147 = vld [vmem:[%s9434] sm:$0x8]
      %v10148 = vld [vmem:[%s9434 + $0x8] sm:$0xf]
      %v10149 = vld [vmem:[%s9434 + $0x10] sm:$0x8]
      %v10150 = vld [vmem:[%s9434 + $0x18] sm:$0xf]
      %v10151 = vld [vmem:[%s9434 + $0x20] sm:$0x8]
      %v10152 = vld [vmem:[%s9434 + $0x28] sm:$0xf]
      %v10153 = vld [vmem:[%s9434 + $0x30] sm:$0x8]
      %v10154 = vld [vmem:[%s9434 + $0x38] sm:$0xf]
      %v10155 = vld [vmem:[%s9434 + $0x40] sm:$0x8]
      %v10156 = vld [vmem:[%s9434 + $0x48] sm:$0xf]
      %v10157 = vld [vmem:[%s9434 + $0x50] sm:$0x8]
      %v10158 = vld [vmem:[%s9434 + $0x58] sm:$0xf]
      %v10159 = vld [vmem:[%s9434 + $0x60] sm:$0x8]
      %v10160 = vld [vmem:[%s9434 + $0x68] sm:$0xf]
      %v10161 = vld [vmem:[%s9434 + $0x70] sm:$0x8]
      %v10162 = vld [vmem:[%s9434 + $0x78] sm:$0xf]
      %s10163 = smul.u32 %s6814, 4
      %s10164 = smul.addr %s10163, 4
      %s10165 = scalar_lea.vmem %s195, %s10164
      %v10166 = vld [vmem:[%s10165] sm:$0xf]
      %v10167 = vld [vmem:[%s10165 + $0x4] sm:$0xf]
      %v10168 = vld [vmem:[%s10165 + $0x10] sm:$0xf]
      %v10169 = vld [vmem:[%s10165 + $0x14] sm:$0xf]
      %v10170 = vld [vmem:[%s10165 + $0x20] sm:$0xf]
      %v10171 = vld [vmem:[%s10165 + $0x24] sm:$0xf]
      %v10172 = vld [vmem:[%s10165 + $0x30] sm:$0xf]
      %v10173 = vld [vmem:[%s10165 + $0x34] sm:$0xf]
      %v10174 = vld [vmem:[%s10165 + $0x40] sm:$0xf]
      %v10175 = vld [vmem:[%s10165 + $0x44] sm:$0xf]
      %v10176 = vld [vmem:[%s10165 + $0x50] sm:$0xf]
      %v10177 = vld [vmem:[%s10165 + $0x54] sm:$0xf]
      %v10178 = vld [vmem:[%s10165 + $0x60] sm:$0xf]
      %v10179 = vld [vmem:[%s10165 + $0x64] sm:$0xf]
      %v10180 = vld [vmem:[%s10165 + $0x70] sm:$0xf]
      %v10181 = vld [vmem:[%s10165 + $0x74] sm:$0xf]
      %v10182 = vld [vmem:[%s10165] sm:$0xc]
      %v10183 = vld [vmem:[%s10165 + $0x8] sm:$0x7]
      %v10184 = vld [vmem:[%s10165 + $0x10] sm:$0xc]
      %v10185 = vld [vmem:[%s10165 + $0x18] sm:$0x7]
      %v10186 = vld [vmem:[%s10165 + $0x20] sm:$0xc]
      %v10187 = vld [vmem:[%s10165 + $0x28] sm:$0x7]
      %v10188 = vld [vmem:[%s10165 + $0x30] sm:$0xc]
      %v10189 = vld [vmem:[%s10165 + $0x38] sm:$0x7]
      %v10190 = vld [vmem:[%s10165 + $0x40] sm:$0xc]
      %v10191 = vld [vmem:[%s10165 + $0x48] sm:$0x7]
      %v10192 = vld [vmem:[%s10165 + $0x50] sm:$0xc]
      %v10193 = vld [vmem:[%s10165 + $0x58] sm:$0x7]
      %v10194 = vld [vmem:[%s10165 + $0x60] sm:$0xc]
      %v10195 = vld [vmem:[%s10165 + $0x68] sm:$0x7]
      %v10196 = vld [vmem:[%s10165 + $0x70] sm:$0xc]
      %v10197 = vld [vmem:[%s10165 + $0x78] sm:$0x7]
      %v10222 = vunpack.c.l.b16 %v10123
      %v10223 = vunpack.c.l.b16 %v10124
      %v10224 = vunpack.c.l.b16 %v10125
      %v10225 = vunpack.c.l.b16 %v10126
      %v10226 = vunpack.c.l.b16 %v10127
      %v10227 = vunpack.c.l.b16 %v10128
      %v10228 = vunpack.c.l.b16 %v10129
      %v10229 = vunpack.c.l.b16 %v10130
      %v10230 = vunpack.c.l.b16 %v10131
      %v10231 = vunpack.c.l.b16 %v10132
      %v10232 = vunpack.c.l.b16 %v10133
      %v10233 = vunpack.c.l.b16 %v10134
      %v10234 = vunpack.c.l.b16 %v10135
      %v10235 = vunpack.c.l.b16 %v10136
      %v10236 = vunpack.c.l.b16 %v10137
      %v10237 = vunpack.c.l.b16 %v10138
      %v10238 = vunpack.c.l.b16 %v10139
      %v10239 = vunpack.c.l.b16 %v10140
      %v10240 = vunpack.c.l.b16 %v10141
      %v10241 = vunpack.c.l.b16 %v10142
      %v10242 = vunpack.c.l.b16 %v10143
      %v10243 = vunpack.c.l.b16 %v10144
      %v10244 = vunpack.c.l.b16 %v10145
      %v10245 = vunpack.c.l.b16 %v10146
      %v10246 = vpack.c.b16 %v10223, %v10222
      %v10247 = vpack.c.b16 %v10224, %v10224
      %v10248 = vpack.c.b16 %v10226, %v10225
      %v10249 = vpack.c.b16 %v10227, %v10227
      %v10250 = vpack.c.b16 %v10229, %v10228
      %v10251 = vpack.c.b16 %v10230, %v10230
      %v10252 = vpack.c.b16 %v10232, %v10231
      %v10253 = vpack.c.b16 %v10233, %v10233
      %v10254 = vpack.c.b16 %v10235, %v10234
      %v10255 = vpack.c.b16 %v10236, %v10236
      %v10256 = vpack.c.b16 %v10238, %v10237
      %v10257 = vpack.c.b16 %v10239, %v10239
      %v10258 = vpack.c.b16 %v10241, %v10240
      %v10259 = vpack.c.b16 %v10242, %v10242
      %v10260 = vpack.c.b16 %v10244, %v10243
      %v10261 = vpack.c.b16 %v10245, %v10245
      %v10278 = vunpack.c.l.b16 %v10147
      %v10279 = vunpack.c.l.b16 %v10148
      %v10280 = vunpack.c.l.b16 %v10149
      %v10281 = vunpack.c.l.b16 %v10150
      %v10282 = vunpack.c.l.b16 %v10151
      %v10283 = vunpack.c.l.b16 %v10152
      %v10284 = vunpack.c.l.b16 %v10153
      %v10285 = vunpack.c.l.b16 %v10154
      %v10286 = vunpack.c.l.b16 %v10155
      %v10287 = vunpack.c.l.b16 %v10156
      %v10288 = vunpack.c.l.b16 %v10157
      %v10289 = vunpack.c.l.b16 %v10158
      %v10290 = vunpack.c.l.b16 %v10159
      %v10291 = vunpack.c.l.b16 %v10160
      %v10292 = vunpack.c.l.b16 %v10161
      %v10293 = vunpack.c.l.b16 %v10162
      %v10294 = vpack.c.b16 %v10223, %v10278
      %v10295 = vpack.c.b16 %v10279, %v10279
      %v10296 = vpack.c.b16 %v10226, %v10280
      %v10297 = vpack.c.b16 %v10281, %v10281
      %v10298 = vpack.c.b16 %v10229, %v10282
      %v10299 = vpack.c.b16 %v10283, %v10283
      %v10300 = vpack.c.b16 %v10232, %v10284
      %v10301 = vpack.c.b16 %v10285, %v10285
      %v10302 = vpack.c.b16 %v10235, %v10286
      %v10303 = vpack.c.b16 %v10287, %v10287
      %v10304 = vpack.c.b16 %v10238, %v10288
      %v10305 = vpack.c.b16 %v10289, %v10289
      %v10306 = vpack.c.b16 %v10241, %v10290
      %v10307 = vpack.c.b16 %v10291, %v10291
      %v10308 = vpack.c.b16 %v10244, %v10292
      %v10309 = vpack.c.b16 %v10293, %v10293
      %v10310 = vrot.slane %v10294, 1
      %v10311 = vrot.slane %v10295, 1
      %v10312 = vsel %vm552, %v10310, %v10311
      %v10313 = vrot.slane %v10296, 1
      %v10314 = vrot.slane %v10297, 1
      %v10315 = vsel %vm552, %v10313, %v10314
      %v10316 = vrot.slane %v10298, 1
      %v10317 = vrot.slane %v10299, 1
      %v10318 = vsel %vm552, %v10316, %v10317
      %v10319 = vrot.slane %v10300, 1
      %v10320 = vrot.slane %v10301, 1
      %v10321 = vsel %vm552, %v10319, %v10320
      %v10322 = vrot.slane %v10302, 1
      %v10323 = vrot.slane %v10303, 1
      %v10324 = vsel %vm552, %v10322, %v10323
      %v10325 = vrot.slane %v10304, 1
      %v10326 = vrot.slane %v10305, 1
      %v10327 = vsel %vm552, %v10325, %v10326
      %v10328 = vrot.slane %v10306, 1
      %v10329 = vrot.slane %v10307, 1
      %v10330 = vsel %vm552, %v10328, %v10329
      %v10331 = vrot.slane %v10308, 1
      %v10332 = vrot.slane %v10309, 1
      %v10333 = vsel %vm552, %v10331, %v10332
      %10334 = vrot.lane.b32.xlu0 %v10312, 32
      %v10335 = vpop.permute.xlu0 %10334
      %10336 = vrot.lane.b32.xlu0 %v10311, 32
      %v10337 = vpop.permute.xlu0 %10336
      %10338 = vrot.lane.b32.xlu0 %v10315, 32
      %v10339 = vpop.permute.xlu0 %10338
      %10340 = vrot.lane.b32.xlu0 %v10314, 32
      %v10341 = vpop.permute.xlu0 %10340
      %10342 = vrot.lane.b32.xlu0 %v10318, 32
      %v10343 = vpop.permute.xlu0 %10342
      %10344 = vrot.lane.b32.xlu0 %v10317, 32
      %v10345 = vpop.permute.xlu0 %10344
      %10346 = vrot.lane.b32.xlu0 %v10321, 32
      %v10347 = vpop.permute.xlu0 %10346
      %10348 = vrot.lane.b32.xlu0 %v10320, 32
      %v10349 = vpop.permute.xlu0 %10348
      %10350 = vrot.lane.b32.xlu0 %v10324, 32
      %v10351 = vpop.permute.xlu0 %10350
      %10352 = vrot.lane.b32.xlu0 %v10323, 32
      %v10353 = vpop.permute.xlu0 %10352
      %10354 = vrot.lane.b32.xlu0 %v10327, 32
      %v10355 = vpop.permute.xlu0 %10354
      %10356 = vrot.lane.b32.xlu0 %v10326, 32
      %v10357 = vpop.permute.xlu0 %10356
      %10358 = vrot.lane.b32.xlu0 %v10330, 32
      %v10359 = vpop.permute.xlu0 %10358
      %10360 = vrot.lane.b32.xlu0 %v10329, 32
      %v10361 = vpop.permute.xlu0 %10360
      %10362 = vrot.lane.b32.xlu0 %v10333, 32
      %v10363 = vpop.permute.xlu0 %10362
      %10364 = vrot.lane.b32.xlu0 %v10332, 32
      %v10365 = vpop.permute.xlu0 %10364
      %v10382 = vunpack.c.l.b16 %v10166
      %v10383 = vunpack.c.l.b16 %v10167
      %v10384 = vunpack.c.l.b16 %v10168
      %v10385 = vunpack.c.l.b16 %v10169
      %v10386 = vunpack.c.l.b16 %v10170
      %v10387 = vunpack.c.l.b16 %v10171
      %v10388 = vunpack.c.l.b16 %v10172
      %v10389 = vunpack.c.l.b16 %v10173
      %v10390 = vunpack.c.l.b16 %v10174
      %v10391 = vunpack.c.l.b16 %v10175
      %v10392 = vunpack.c.l.b16 %v10176
      %v10393 = vunpack.c.l.b16 %v10177
      %v10394 = vunpack.c.l.b16 %v10178
      %v10395 = vunpack.c.l.b16 %v10179
      %v10396 = vunpack.c.l.b16 %v10180
      %v10397 = vunpack.c.l.b16 %v10181
      %v10398 = vpack.c.b16 %v10383, %v10382
      %v10399 = vpack.c.b16 %v10385, %v10384
      %v10400 = vpack.c.b16 %v10387, %v10386
      %v10401 = vpack.c.b16 %v10389, %v10388
      %v10402 = vpack.c.b16 %v10391, %v10390
      %v10403 = vpack.c.b16 %v10393, %v10392
      %v10404 = vpack.c.b16 %v10395, %v10394
      %v10405 = vpack.c.b16 %v10397, %v10396
      %v10407 = vshrl.u32 %v10398, 16
      %v10409 = vrot.slane %v10407, 5
      %v10410 = vshll.u32 %v10398, 16
      %v10412 = vrot.slane %v10410, 6
      %v10413 = vor.u32 %v10409, %v10412
      %v10415 = vshrl.u32 %v10399, 16
      %v10417 = vrot.slane %v10415, 5
      %v10418 = vshll.u32 %v10399, 16
      %v10420 = vrot.slane %v10418, 6
      %v10421 = vor.u32 %v10417, %v10420
      %v10423 = vshrl.u32 %v10400, 16
      %v10425 = vrot.slane %v10423, 5
      %v10426 = vshll.u32 %v10400, 16
      %v10428 = vrot.slane %v10426, 6
      %v10429 = vor.u32 %v10425, %v10428
      %v10431 = vshrl.u32 %v10401, 16
      %v10433 = vrot.slane %v10431, 5
      %v10434 = vshll.u32 %v10401, 16
      %v10436 = vrot.slane %v10434, 6
      %v10437 = vor.u32 %v10433, %v10436
      %v10439 = vshrl.u32 %v10402, 16
      %v10441 = vrot.slane %v10439, 5
      %v10442 = vshll.u32 %v10402, 16
      %v10444 = vrot.slane %v10442, 6
      %v10445 = vor.u32 %v10441, %v10444
      %v10447 = vshrl.u32 %v10403, 16
      %v10449 = vrot.slane %v10447, 5
      %v10450 = vshll.u32 %v10403, 16
      %v10452 = vrot.slane %v10450, 6
      %v10453 = vor.u32 %v10449, %v10452
      %v10455 = vshrl.u32 %v10404, 16
      %v10457 = vrot.slane %v10455, 5
      %v10458 = vshll.u32 %v10404, 16
      %v10460 = vrot.slane %v10458, 6
      %v10461 = vor.u32 %v10457, %v10460
      %v10463 = vshrl.u32 %v10405, 16
      %v10465 = vrot.slane %v10463, 5
      %v10466 = vshll.u32 %v10405, 16
      %v10468 = vrot.slane %v10466, 6
      %v10469 = vor.u32 %v10465, %v10468
      %10470 = vrot.lane.b32.xlu0 %v10413, 64
      %v10471 = vpop.permute.xlu0 %10470
      %10472 = vrot.lane.b32.xlu0 %v10421, 64
      %v10473 = vpop.permute.xlu0 %10472
      %10474 = vrot.lane.b32.xlu0 %v10429, 64
      %v10475 = vpop.permute.xlu0 %10474
      %10476 = vrot.lane.b32.xlu0 %v10437, 64
      %v10477 = vpop.permute.xlu0 %10476
      %10478 = vrot.lane.b32.xlu0 %v10445, 64
      %v10479 = vpop.permute.xlu0 %10478
      %10480 = vrot.lane.b32.xlu0 %v10453, 64
      %v10481 = vpop.permute.xlu0 %10480
      %10482 = vrot.lane.b32.xlu0 %v10461, 64
      %v10483 = vpop.permute.xlu0 %10482
      %10484 = vrot.lane.b32.xlu0 %v10469, 64
      %v10485 = vpop.permute.xlu0 %10484
      %v10502 = vunpack.c.l.b16 %v10182
      %v10503 = vunpack.c.l.b16 %v10183
      %v10504 = vunpack.c.l.b16 %v10184
      %v10505 = vunpack.c.l.b16 %v10185
      %v10506 = vunpack.c.l.b16 %v10186
      %v10507 = vunpack.c.l.b16 %v10187
      %v10508 = vunpack.c.l.b16 %v10188
      %v10509 = vunpack.c.l.b16 %v10189
      %v10510 = vunpack.c.l.b16 %v10190
      %v10511 = vunpack.c.l.b16 %v10191
      %v10512 = vunpack.c.l.b16 %v10192
      %v10513 = vunpack.c.l.b16 %v10193
      %v10514 = vunpack.c.l.b16 %v10194
      %v10515 = vunpack.c.l.b16 %v10195
      %v10516 = vunpack.c.l.b16 %v10196
      %v10517 = vunpack.c.l.b16 %v10197
      %v10518 = vpack.c.b16 %v10383, %v10502
      %v10519 = vpack.c.b16 %v10503, %v10503
      %v10520 = vpack.c.b16 %v10385, %v10504
      %v10521 = vpack.c.b16 %v10505, %v10505
      %v10522 = vpack.c.b16 %v10387, %v10506
      %v10523 = vpack.c.b16 %v10507, %v10507
      %v10524 = vpack.c.b16 %v10389, %v10508
      %v10525 = vpack.c.b16 %v10509, %v10509
      %v10526 = vpack.c.b16 %v10391, %v10510
      %v10527 = vpack.c.b16 %v10511, %v10511
      %v10528 = vpack.c.b16 %v10393, %v10512
      %v10529 = vpack.c.b16 %v10513, %v10513
      %v10530 = vpack.c.b16 %v10395, %v10514
      %v10531 = vpack.c.b16 %v10515, %v10515
      %v10532 = vpack.c.b16 %v10397, %v10516
      %v10533 = vpack.c.b16 %v10517, %v10517
      %10534 = vrot.lane.b32.xlu0 %v10518, 96
      %v10535 = vpop.permute.xlu0 %10534
      %10536 = vrot.lane.b32.xlu0 %v10519, 96
      %v10537 = vpop.permute.xlu0 %10536
      %10538 = vrot.lane.b32.xlu0 %v10520, 96
      %v10539 = vpop.permute.xlu0 %10538
      %10540 = vrot.lane.b32.xlu0 %v10521, 96
      %v10541 = vpop.permute.xlu0 %10540
      %10542 = vrot.lane.b32.xlu0 %v10522, 96
      %v10543 = vpop.permute.xlu0 %10542
      %10544 = vrot.lane.b32.xlu0 %v10523, 96
      %v10545 = vpop.permute.xlu0 %10544
      %10546 = vrot.lane.b32.xlu0 %v10524, 96
      %v10547 = vpop.permute.xlu0 %10546
      %10548 = vrot.lane.b32.xlu0 %v10525, 96
      %v10549 = vpop.permute.xlu0 %10548
      %10550 = vrot.lane.b32.xlu0 %v10526, 96
      %v10551 = vpop.permute.xlu0 %10550
      %10552 = vrot.lane.b32.xlu0 %v10527, 96
      %v10553 = vpop.permute.xlu0 %10552
      %10554 = vrot.lane.b32.xlu0 %v10528, 96
      %v10555 = vpop.permute.xlu0 %10554
      %10556 = vrot.lane.b32.xlu0 %v10529, 96
      %v10557 = vpop.permute.xlu0 %10556
      %10558 = vrot.lane.b32.xlu0 %v10530, 96
      %v10559 = vpop.permute.xlu0 %10558
      %10560 = vrot.lane.b32.xlu0 %v10531, 96
      %v10561 = vpop.permute.xlu0 %10560
      %10562 = vrot.lane.b32.xlu0 %v10532, 96
      %v10563 = vpop.permute.xlu0 %10562
      %10564 = vrot.lane.b32.xlu0 %v10533, 96
      %v10565 = vpop.permute.xlu0 %10564
      %v10568 = vsel %vm705, %v10246, %v10335
      %v10571 = vsel %vm705, %v10247, %v10337
      %v10574 = vsel %vm705, %v10248, %v10339
      %v10577 = vsel %vm705, %v10249, %v10341
      %v10580 = vsel %vm705, %v10250, %v10343
      %v10583 = vsel %vm705, %v10251, %v10345
      %v10586 = vsel %vm705, %v10252, %v10347
      %v10589 = vsel %vm705, %v10253, %v10349
      %v10592 = vsel %vm705, %v10254, %v10351
      %v10595 = vsel %vm705, %v10255, %v10353
      %v10598 = vsel %vm705, %v10256, %v10355
      %v10601 = vsel %vm705, %v10257, %v10357
      %v10604 = vsel %vm705, %v10258, %v10359
      %v10607 = vsel %vm705, %v10259, %v10361
      %v10610 = vsel %vm705, %v10260, %v10363
      %v10613 = vsel %vm705, %v10261, %v10365
      %v10615 = vsel %vm746, %v10568, %v10471
      %v10616 = vsel %vm746, %v10571, %v10471
      %v10618 = vsel %vm746, %v10574, %v10473
      %v10619 = vsel %vm746, %v10577, %v10473
      %v10621 = vsel %vm746, %v10580, %v10475
      %v10622 = vsel %vm746, %v10583, %v10475
      %v10624 = vsel %vm746, %v10586, %v10477
      %v10625 = vsel %vm746, %v10589, %v10477
      %v10627 = vsel %vm746, %v10592, %v10479
      %v10628 = vsel %vm746, %v10595, %v10479
      %v10630 = vsel %vm746, %v10598, %v10481
      %v10631 = vsel %vm746, %v10601, %v10481
      %v10633 = vsel %vm746, %v10604, %v10483
      %v10634 = vsel %vm746, %v10607, %v10483
      %v10636 = vsel %vm746, %v10610, %v10485
      %v10637 = vsel %vm746, %v10613, %v10485
      %v10639 = vsel %vm779, %v10615, %v10535
      %v10641 = vsel %vm779, %v10616, %v10537
      %v10643 = vsel %vm779, %v10618, %v10539
      %v10645 = vsel %vm779, %v10619, %v10541
      %v10647 = vsel %vm779, %v10621, %v10543
      %v10649 = vsel %vm779, %v10622, %v10545
      %v10651 = vsel %vm779, %v10624, %v10547
      %v10653 = vsel %vm779, %v10625, %v10549
      %v10655 = vsel %vm779, %v10627, %v10551
      %v10657 = vsel %vm779, %v10628, %v10553
      %v10659 = vsel %vm779, %v10630, %v10555
      %v10661 = vsel %vm779, %v10631, %v10557
      %v10663 = vsel %vm779, %v10633, %v10559
      %v10665 = vsel %vm779, %v10634, %v10561
      %v10667 = vsel %vm779, %v10636, %v10563
      %v10669 = vsel %vm779, %v10637, %v10565
      %v10670 = vshrl.u32 %v10639, 16
      %v10672 = vrot.slane %v10670, 2
      %v10673 = vshll.u32 %v10639, 16
      %v10675 = vrot.slane %v10673, 3
      %v10676 = vor.u32 %v10672, %v10675
      %v10677 = vshrl.u32 %v10641, 16
      %v10679 = vrot.slane %v10677, 2
      %v10680 = vshll.u32 %v10641, 16
      %v10682 = vrot.slane %v10680, 3
      %v10683 = vor.u32 %v10679, %v10682
      %v10684 = vsel %vm1602, %v10676, %v10683
      %v10685 = vshrl.u32 %v10643, 16
      %v10687 = vrot.slane %v10685, 2
      %v10688 = vshll.u32 %v10643, 16
      %v10690 = vrot.slane %v10688, 3
      %v10691 = vor.u32 %v10687, %v10690
      %v10692 = vshrl.u32 %v10645, 16
      %v10694 = vrot.slane %v10692, 2
      %v10695 = vshll.u32 %v10645, 16
      %v10697 = vrot.slane %v10695, 3
      %v10698 = vor.u32 %v10694, %v10697
      %v10699 = vsel %vm1602, %v10691, %v10698
      %v10700 = vshrl.u32 %v10647, 16
      %v10702 = vrot.slane %v10700, 2
      %v10703 = vshll.u32 %v10647, 16
      %v10705 = vrot.slane %v10703, 3
      %v10706 = vor.u32 %v10702, %v10705
      %v10707 = vshrl.u32 %v10649, 16
      %v10709 = vrot.slane %v10707, 2
      %v10710 = vshll.u32 %v10649, 16
      %v10712 = vrot.slane %v10710, 3
      %v10713 = vor.u32 %v10709, %v10712
      %v10714 = vsel %vm1602, %v10706, %v10713
      %v10715 = vshrl.u32 %v10651, 16
      %v10717 = vrot.slane %v10715, 2
      %v10718 = vshll.u32 %v10651, 16
      %v10720 = vrot.slane %v10718, 3
      %v10721 = vor.u32 %v10717, %v10720
      %v10722 = vshrl.u32 %v10653, 16
      %v10724 = vrot.slane %v10722, 2
      %v10725 = vshll.u32 %v10653, 16
      %v10727 = vrot.slane %v10725, 3
      %v10728 = vor.u32 %v10724, %v10727
      %v10729 = vsel %vm1602, %v10721, %v10728
      %v10730 = vshrl.u32 %v10655, 16
      %v10732 = vrot.slane %v10730, 2
      %v10733 = vshll.u32 %v10655, 16
      %v10735 = vrot.slane %v10733, 3
      %v10736 = vor.u32 %v10732, %v10735
      %v10737 = vshrl.u32 %v10657, 16
      %v10739 = vrot.slane %v10737, 2
      %v10740 = vshll.u32 %v10657, 16
      %v10742 = vrot.slane %v10740, 3
      %v10743 = vor.u32 %v10739, %v10742
      %v10744 = vsel %vm1602, %v10736, %v10743
      %v10745 = vshrl.u32 %v10659, 16
      %v10747 = vrot.slane %v10745, 2
      %v10748 = vshll.u32 %v10659, 16
      %v10750 = vrot.slane %v10748, 3
      %v10751 = vor.u32 %v10747, %v10750
      %v10752 = vshrl.u32 %v10661, 16
      %v10754 = vrot.slane %v10752, 2
      %v10755 = vshll.u32 %v10661, 16
      %v10757 = vrot.slane %v10755, 3
      %v10758 = vor.u32 %v10754, %v10757
      %v10759 = vsel %vm1602, %v10751, %v10758
      %v10760 = vshrl.u32 %v10663, 16
      %v10762 = vrot.slane %v10760, 2
      %v10763 = vshll.u32 %v10663, 16
      %v10765 = vrot.slane %v10763, 3
      %v10766 = vor.u32 %v10762, %v10765
      %v10767 = vshrl.u32 %v10665, 16
      %v10769 = vrot.slane %v10767, 2
      %v10770 = vshll.u32 %v10665, 16
      %v10772 = vrot.slane %v10770, 3
      %v10773 = vor.u32 %v10769, %v10772
      %v10774 = vsel %vm1602, %v10766, %v10773
      %v10775 = vshrl.u32 %v10667, 16
      %v10777 = vrot.slane %v10775, 2
      %v10778 = vshll.u32 %v10667, 16
      %v10780 = vrot.slane %v10778, 3
      %v10781 = vor.u32 %v10777, %v10780
      %v10782 = vshrl.u32 %v10669, 16
      %v10784 = vrot.slane %v10782, 2
      %v10785 = vshll.u32 %v10669, 16
      %v10787 = vrot.slane %v10785, 3
      %v10788 = vor.u32 %v10784, %v10787
      %v10789 = vsel %vm1602, %v10781, %v10788
      %v10790 = vunpack.c.l.b16 %v10684
      %v10791 = vunpack.c.h.b16 %v10684
      %v10792 = vunpack.c.l.b16 %v10699
      %v10793 = vunpack.c.h.b16 %v10699
      %v10794 = vunpack.c.l.b16 %v10714
      %v10795 = vunpack.c.h.b16 %v10714
      %v10796 = vunpack.c.l.b16 %v10729
      %v10797 = vunpack.c.h.b16 %v10729
      %v10798 = vunpack.c.l.b16 %v10744
      %v10799 = vunpack.c.h.b16 %v10744
      %v10800 = vunpack.c.l.b16 %v10759
      %v10801 = vunpack.c.h.b16 %v10759
      %v10802 = vunpack.c.l.b16 %v10774
      %v10803 = vunpack.c.h.b16 %v10774
      %v10804 = vunpack.c.l.b16 %v10789
      %v10805 = vunpack.c.h.b16 %v10789
      %v10806 = vpack.c.b16 %v10790, %v10790
      %v10807 = vpack.c.b16 %v10791, %v10791
      %v10808 = vpack.c.b16 %v10792, %v10792
      %v10809 = vpack.c.b16 %v10793, %v10793
      %v10810 = vpack.c.b16 %v10794, %v10794
      %v10811 = vpack.c.b16 %v10795, %v10795
      %v10812 = vpack.c.b16 %v10796, %v10796
      %v10813 = vpack.c.b16 %v10797, %v10797
      %v10814 = vpack.c.b16 %v10798, %v10798
      %v10815 = vpack.c.b16 %v10799, %v10799
      %v10816 = vpack.c.b16 %v10800, %v10800
      %v10817 = vpack.c.b16 %v10801, %v10801
      %v10818 = vpack.c.b16 %v10802, %v10802
      %v10819 = vpack.c.b16 %v10803, %v10803
      %v10820 = vpack.c.b16 %v10804, %v10804
      %v10821 = vpack.c.b16 %v10805, %v10805
      %10838 = vst [vmem:[#allocation3 + $0x10] sm:$0xf] %v10806
      %10839 = vst [vmem:[#allocation3 + $0x2c] sm:$0xf] %v10807
      %10840 = vst [vmem:[#allocation3 + $0x48] sm:$0xf] %v10808
      %10841 = vst [vmem:[#allocation3 + $0x64] sm:$0xf] %v10809
      %10842 = vst [vmem:[#allocation3 + $0x80] sm:$0xf] %v10810
      %10843 = vst [vmem:[#allocation3 + $0x9c] sm:$0xf] %v10811
      %10844 = vst [vmem:[#allocation3 + $0xb8] sm:$0xf] %v10812
      %10845 = vst [vmem:[#allocation3 + $0xd4] sm:$0xf] %v10813
      %10846 = vst [vmem:[#allocation3 + $0xf0] sm:$0xf] %v10814
      %10847 = vst [vmem:[#allocation3 + $0x10c] sm:$0xf] %v10815
      %10848 = vst [vmem:[#allocation3 + $0x128] sm:$0xf] %v10816
      %10849 = vst [vmem:[#allocation3 + $0x144] sm:$0xf] %v10817
      %10850 = vst [vmem:[#allocation3 + $0x160] sm:$0xf] %v10818
      %10851 = vst [vmem:[#allocation3 + $0x17c] sm:$0xf] %v10819
      %10852 = vst [vmem:[#allocation3 + $0x198] sm:$0xf] %v10820
      %10853 = vst [vmem:[#allocation3 + $0x1b4] sm:$0xf] %v10821
      %v10854 = vld [vmem:[%s10165 + $0x4] sm:$0xe]
      %v10855 = vld [vmem:[%s10165 + $0x8] sm:$0xf]
      %v10856 = vld [vmem:[%s10165 + $0xc] sm:$0x1]
      %v10857 = vld [vmem:[%s10165 + $0x14] sm:$0xe]
      %v10858 = vld [vmem:[%s10165 + $0x18] sm:$0xf]
      %v10859 = vld [vmem:[%s10165 + $0x1c] sm:$0x1]
      %v10860 = vld [vmem:[%s10165 + $0x24] sm:$0xe]
      %v10861 = vld [vmem:[%s10165 + $0x28] sm:$0xf]
      %v10862 = vld [vmem:[%s10165 + $0x2c] sm:$0x1]
      %v10863 = vld [vmem:[%s10165 + $0x34] sm:$0xe]
      %v10864 = vld [vmem:[%s10165 + $0x38] sm:$0xf]
      %v10865 = vld [vmem:[%s10165 + $0x3c] sm:$0x1]
      %v10866 = vld [vmem:[%s10165 + $0x44] sm:$0xe]
      %v10867 = vld [vmem:[%s10165 + $0x48] sm:$0xf]
      %v10868 = vld [vmem:[%s10165 + $0x4c] sm:$0x1]
      %v10869 = vld [vmem:[%s10165 + $0x54] sm:$0xe]
      %v10870 = vld [vmem:[%s10165 + $0x58] sm:$0xf]
      %v10871 = vld [vmem:[%s10165 + $0x5c] sm:$0x1]
      %v10872 = vld [vmem:[%s10165 + $0x64] sm:$0xe]
      %v10873 = vld [vmem:[%s10165 + $0x68] sm:$0xf]
      %v10874 = vld [vmem:[%s10165 + $0x6c] sm:$0x1]
      %v10875 = vld [vmem:[%s10165 + $0x74] sm:$0xe]
      %v10876 = vld [vmem:[%s10165 + $0x78] sm:$0xf]
      %v10877 = vld [vmem:[%s10165 + $0x7c] sm:$0x1]
      %v10878 = vld [vmem:[%s6862] sm:$0xf]
      %v10879 = vld [vmem:[%s6862 + $0x4] sm:$0xf]
      %v10880 = vld [vmem:[%s6862 + $0x10] sm:$0xf]
      %v10881 = vld [vmem:[%s6862 + $0x14] sm:$0xf]
      %v10882 = vld [vmem:[%s6862 + $0x20] sm:$0xf]
      %v10883 = vld [vmem:[%s6862 + $0x24] sm:$0xf]
      %v10884 = vld [vmem:[%s6862 + $0x30] sm:$0xf]
      %v10885 = vld [vmem:[%s6862 + $0x34] sm:$0xf]
      %v10886 = vld [vmem:[%s6862 + $0x40] sm:$0xf]
      %v10887 = vld [vmem:[%s6862 + $0x44] sm:$0xf]
      %v10888 = vld [vmem:[%s6862 + $0x50] sm:$0xf]
      %v10889 = vld [vmem:[%s6862 + $0x54] sm:$0xf]
      %v10890 = vld [vmem:[%s6862 + $0x60] sm:$0xf]
      %v10891 = vld [vmem:[%s6862 + $0x64] sm:$0xf]
      %v10892 = vld [vmem:[%s6862 + $0x70] sm:$0xf]
      %v10893 = vld [vmem:[%s6862 + $0x74] sm:$0xf]
      %v10894 = vld [vmem:[%s6862] sm:$0xc]
      %v10895 = vld [vmem:[%s6862 + $0x8] sm:$0x7]
      %v10896 = vld [vmem:[%s6862 + $0x10] sm:$0xc]
      %v10897 = vld [vmem:[%s6862 + $0x18] sm:$0x7]
      %v10898 = vld [vmem:[%s6862 + $0x20] sm:$0xc]
      %v10899 = vld [vmem:[%s6862 + $0x28] sm:$0x7]
      %v10900 = vld [vmem:[%s6862 + $0x30] sm:$0xc]
      %v10901 = vld [vmem:[%s6862 + $0x38] sm:$0x7]
      %v10902 = vld [vmem:[%s6862 + $0x40] sm:$0xc]
      %v10903 = vld [vmem:[%s6862 + $0x48] sm:$0x7]
      %v10904 = vld [vmem:[%s6862 + $0x50] sm:$0xc]
      %v10905 = vld [vmem:[%s6862 + $0x58] sm:$0x7]
      %v10906 = vld [vmem:[%s6862 + $0x60] sm:$0xc]
      %v10907 = vld [vmem:[%s6862 + $0x68] sm:$0x7]
      %v10908 = vld [vmem:[%s6862 + $0x70] sm:$0xc]
      %v10909 = vld [vmem:[%s6862 + $0x78] sm:$0x7]
      %v10910 = vld [vmem:[%s6862 + $0x4] sm:$0xe]
      %v10911 = vld [vmem:[%s6862 + $0x8] sm:$0xf]
      %v10912 = vld [vmem:[%s6862 + $0xc] sm:$0x1]
      %v10913 = vld [vmem:[%s6862 + $0x14] sm:$0xe]
      %v10914 = vld [vmem:[%s6862 + $0x18] sm:$0xf]
      %v10915 = vld [vmem:[%s6862 + $0x1c] sm:$0x1]
      %v10916 = vld [vmem:[%s6862 + $0x24] sm:$0xe]
      %v10917 = vld [vmem:[%s6862 + $0x28] sm:$0xf]
      %v10918 = vld [vmem:[%s6862 + $0x2c] sm:$0x1]
      %v10919 = vld [vmem:[%s6862 + $0x34] sm:$0xe]
      %v10920 = vld [vmem:[%s6862 + $0x38] sm:$0xf]
      %v10921 = vld [vmem:[%s6862 + $0x3c] sm:$0x1]
      %v10922 = vld [vmem:[%s6862 + $0x44] sm:$0xe]
      %v10923 = vld [vmem:[%s6862 + $0x48] sm:$0xf]
      %v10924 = vld [vmem:[%s6862 + $0x4c] sm:$0x1]
      %v10925 = vld [vmem:[%s6862 + $0x54] sm:$0xe]
      %v10926 = vld [vmem:[%s6862 + $0x58] sm:$0xf]
      %v10927 = vld [vmem:[%s6862 + $0x5c] sm:$0x1]
      %v10928 = vld [vmem:[%s6862 + $0x64] sm:$0xe]
      %v10929 = vld [vmem:[%s6862 + $0x68] sm:$0xf]
      %v10930 = vld [vmem:[%s6862 + $0x6c] sm:$0x1]
      %v10931 = vld [vmem:[%s6862 + $0x74] sm:$0xe]
      %v10932 = vld [vmem:[%s6862 + $0x78] sm:$0xf]
      %v10933 = vld [vmem:[%s6862 + $0x7c] sm:$0x1]
      %v10958 = vunpack.c.l.b16 %v10854
      %v10959 = vunpack.c.l.b16 %v10855
      %v10960 = vunpack.c.l.b16 %v10856
      %v10961 = vunpack.c.l.b16 %v10857
      %v10962 = vunpack.c.l.b16 %v10858
      %v10963 = vunpack.c.l.b16 %v10859
      %v10964 = vunpack.c.l.b16 %v10860
      %v10965 = vunpack.c.l.b16 %v10861
      %v10966 = vunpack.c.l.b16 %v10862
      %v10967 = vunpack.c.l.b16 %v10863
      %v10968 = vunpack.c.l.b16 %v10864
      %v10969 = vunpack.c.l.b16 %v10865
      %v10970 = vunpack.c.l.b16 %v10866
      %v10971 = vunpack.c.l.b16 %v10867
      %v10972 = vunpack.c.l.b16 %v10868
      %v10973 = vunpack.c.l.b16 %v10869
      %v10974 = vunpack.c.l.b16 %v10870
      %v10975 = vunpack.c.l.b16 %v10871
      %v10976 = vunpack.c.l.b16 %v10872
      %v10977 = vunpack.c.l.b16 %v10873
      %v10978 = vunpack.c.l.b16 %v10874
      %v10979 = vunpack.c.l.b16 %v10875
      %v10980 = vunpack.c.l.b16 %v10876
      %v10981 = vunpack.c.l.b16 %v10877
      %v10982 = vpack.c.b16 %v10959, %v10958
      %v10983 = vpack.c.b16 %v10960, %v10960
      %v10984 = vpack.c.b16 %v10962, %v10961
      %v10985 = vpack.c.b16 %v10963, %v10963
      %v10986 = vpack.c.b16 %v10965, %v10964
      %v10987 = vpack.c.b16 %v10966, %v10966
      %v10988 = vpack.c.b16 %v10968, %v10967
      %v10989 = vpack.c.b16 %v10969, %v10969
      %v10990 = vpack.c.b16 %v10971, %v10970
      %v10991 = vpack.c.b16 %v10972, %v10972
      %v10992 = vpack.c.b16 %v10974, %v10973
      %v10993 = vpack.c.b16 %v10975, %v10975
      %v10994 = vpack.c.b16 %v10977, %v10976
      %v10995 = vpack.c.b16 %v10978, %v10978
      %v10996 = vpack.c.b16 %v10980, %v10979
      %v10997 = vpack.c.b16 %v10981, %v10981
      %v11014 = vunpack.c.l.b16 %v10878
      %v11015 = vunpack.c.l.b16 %v10879
      %v11016 = vunpack.c.l.b16 %v10880
      %v11017 = vunpack.c.l.b16 %v10881
      %v11018 = vunpack.c.l.b16 %v10882
      %v11019 = vunpack.c.l.b16 %v10883
      %v11020 = vunpack.c.l.b16 %v10884
      %v11021 = vunpack.c.l.b16 %v10885
      %v11022 = vunpack.c.l.b16 %v10886
      %v11023 = vunpack.c.l.b16 %v10887
      %v11024 = vunpack.c.l.b16 %v10888
      %v11025 = vunpack.c.l.b16 %v10889
      %v11026 = vunpack.c.l.b16 %v10890
      %v11027 = vunpack.c.l.b16 %v10891
      %v11028 = vunpack.c.l.b16 %v10892
      %v11029 = vunpack.c.l.b16 %v10893
      %v11030 = vpack.c.b16 %v11015, %v11014
      %v11031 = vpack.c.b16 %v11017, %v11016
      %v11032 = vpack.c.b16 %v11019, %v11018
      %v11033 = vpack.c.b16 %v11021, %v11020
      %v11034 = vpack.c.b16 %v11023, %v11022
      %v11035 = vpack.c.b16 %v11025, %v11024
      %v11036 = vpack.c.b16 %v11027, %v11026
      %v11037 = vpack.c.b16 %v11029, %v11028
      %v11038 = vrot.slane %v11030, 7
      %v11039 = vrot.slane %v11031, 7
      %v11040 = vrot.slane %v11032, 7
      %v11041 = vrot.slane %v11033, 7
      %v11042 = vrot.slane %v11034, 7
      %v11043 = vrot.slane %v11035, 7
      %v11044 = vrot.slane %v11036, 7
      %v11045 = vrot.slane %v11037, 7
      %11046 = vrot.lane.b32.xlu0 %v11038, 32
      %v11047 = vpop.permute.xlu0 %11046
      %11048 = vrot.lane.b32.xlu0 %v11039, 32
      %v11049 = vpop.permute.xlu0 %11048
      %11050 = vrot.lane.b32.xlu0 %v11040, 32
      %v11051 = vpop.permute.xlu0 %11050
      %11052 = vrot.lane.b32.xlu0 %v11041, 32
      %v11053 = vpop.permute.xlu0 %11052
      %11054 = vrot.lane.b32.xlu0 %v11042, 32
      %v11055 = vpop.permute.xlu0 %11054
      %11056 = vrot.lane.b32.xlu0 %v11043, 32
      %v11057 = vpop.permute.xlu0 %11056
      %11058 = vrot.lane.b32.xlu0 %v11044, 32
      %v11059 = vpop.permute.xlu0 %11058
      %11060 = vrot.lane.b32.xlu0 %v11045, 32
      %v11061 = vpop.permute.xlu0 %11060
      %v11078 = vunpack.c.l.b16 %v10894
      %v11079 = vunpack.c.l.b16 %v10895
      %v11080 = vunpack.c.l.b16 %v10896
      %v11081 = vunpack.c.l.b16 %v10897
      %v11082 = vunpack.c.l.b16 %v10898
      %v11083 = vunpack.c.l.b16 %v10899
      %v11084 = vunpack.c.l.b16 %v10900
      %v11085 = vunpack.c.l.b16 %v10901
      %v11086 = vunpack.c.l.b16 %v10902
      %v11087 = vunpack.c.l.b16 %v10903
      %v11088 = vunpack.c.l.b16 %v10904
      %v11089 = vunpack.c.l.b16 %v10905
      %v11090 = vunpack.c.l.b16 %v10906
      %v11091 = vunpack.c.l.b16 %v10907
      %v11092 = vunpack.c.l.b16 %v10908
      %v11093 = vunpack.c.l.b16 %v10909
      %v11094 = vpack.c.b16 %v11015, %v11078
      %v11095 = vpack.c.b16 %v11079, %v11079
      %v11096 = vpack.c.b16 %v11017, %v11080
      %v11097 = vpack.c.b16 %v11081, %v11081
      %v11098 = vpack.c.b16 %v11019, %v11082
      %v11099 = vpack.c.b16 %v11083, %v11083
      %v11100 = vpack.c.b16 %v11021, %v11084
      %v11101 = vpack.c.b16 %v11085, %v11085
      %v11102 = vpack.c.b16 %v11023, %v11086
      %v11103 = vpack.c.b16 %v11087, %v11087
      %v11104 = vpack.c.b16 %v11025, %v11088
      %v11105 = vpack.c.b16 %v11089, %v11089
      %v11106 = vpack.c.b16 %v11027, %v11090
      %v11107 = vpack.c.b16 %v11091, %v11091
      %v11108 = vpack.c.b16 %v11029, %v11092
      %v11109 = vpack.c.b16 %v11093, %v11093
      %v11111 = vshrl.u32 %v11094, 16
      %v11113 = vrot.slane %v11111, 1
      %v11114 = vshll.u32 %v11094, 16
      %v11116 = vrot.slane %v11114, 2
      %v11117 = vor.u32 %v11113, %v11116
      %v11119 = vshrl.u32 %v11095, 16
      %v11121 = vrot.slane %v11119, 1
      %v11122 = vshll.u32 %v11095, 16
      %v11124 = vrot.slane %v11122, 2
      %v11125 = vor.u32 %v11121, %v11124
      %v11126 = vsel %vm3349, %v11117, %v11125
      %v11128 = vshrl.u32 %v11096, 16
      %v11130 = vrot.slane %v11128, 1
      %v11131 = vshll.u32 %v11096, 16
      %v11133 = vrot.slane %v11131, 2
      %v11134 = vor.u32 %v11130, %v11133
      %v11136 = vshrl.u32 %v11097, 16
      %v11138 = vrot.slane %v11136, 1
      %v11139 = vshll.u32 %v11097, 16
      %v11141 = vrot.slane %v11139, 2
      %v11142 = vor.u32 %v11138, %v11141
      %v11143 = vsel %vm3349, %v11134, %v11142
      %v11145 = vshrl.u32 %v11098, 16
      %v11147 = vrot.slane %v11145, 1
      %v11148 = vshll.u32 %v11098, 16
      %v11150 = vrot.slane %v11148, 2
      %v11151 = vor.u32 %v11147, %v11150
      %v11153 = vshrl.u32 %v11099, 16
      %v11155 = vrot.slane %v11153, 1
      %v11156 = vshll.u32 %v11099, 16
      %v11158 = vrot.slane %v11156, 2
      %v11159 = vor.u32 %v11155, %v11158
      %v11160 = vsel %vm3349, %v11151, %v11159
      %v11162 = vshrl.u32 %v11100, 16
      %v11164 = vrot.slane %v11162, 1
      %v11165 = vshll.u32 %v11100, 16
      %v11167 = vrot.slane %v11165, 2
      %v11168 = vor.u32 %v11164, %v11167
      %v11170 = vshrl.u32 %v11101, 16
      %v11172 = vrot.slane %v11170, 1
      %v11173 = vshll.u32 %v11101, 16
      %v11175 = vrot.slane %v11173, 2
      %v11176 = vor.u32 %v11172, %v11175
      %v11177 = vsel %vm3349, %v11168, %v11176
      %v11179 = vshrl.u32 %v11102, 16
      %v11181 = vrot.slane %v11179, 1
      %v11182 = vshll.u32 %v11102, 16
      %v11184 = vrot.slane %v11182, 2
      %v11185 = vor.u32 %v11181, %v11184
      %v11187 = vshrl.u32 %v11103, 16
      %v11189 = vrot.slane %v11187, 1
      %v11190 = vshll.u32 %v11103, 16
      %v11192 = vrot.slane %v11190, 2
      %v11193 = vor.u32 %v11189, %v11192
      %v11194 = vsel %vm3349, %v11185, %v11193
      %v11196 = vshrl.u32 %v11104, 16
      %v11198 = vrot.slane %v11196, 1
      %v11199 = vshll.u32 %v11104, 16
      %v11201 = vrot.slane %v11199, 2
      %v11202 = vor.u32 %v11198, %v11201
      %v11204 = vshrl.u32 %v11105, 16
      %v11206 = vrot.slane %v11204, 1
      %v11207 = vshll.u32 %v11105, 16
      %v11209 = vrot.slane %v11207, 2
      %v11210 = vor.u32 %v11206, %v11209
      %v11211 = vsel %vm3349, %v11202, %v11210
      %v11213 = vshrl.u32 %v11106, 16
      %v11215 = vrot.slane %v11213, 1
      %v11216 = vshll.u32 %v11106, 16
      %v11218 = vrot.slane %v11216, 2
      %v11219 = vor.u32 %v11215, %v11218
      %v11221 = vshrl.u32 %v11107, 16
      %v11223 = vrot.slane %v11221, 1
      %v11224 = vshll.u32 %v11107, 16
      %v11226 = vrot.slane %v11224, 2
      %v11227 = vor.u32 %v11223, %v11226
      %v11228 = vsel %vm3349, %v11219, %v11227
      %v11230 = vshrl.u32 %v11108, 16
      %v11232 = vrot.slane %v11230, 1
      %v11233 = vshll.u32 %v11108, 16
      %v11235 = vrot.slane %v11233, 2
      %v11236 = vor.u32 %v11232, %v11235
      %v11238 = vshrl.u32 %v11109, 16
      %v11240 = vrot.slane %v11238, 1
      %v11241 = vshll.u32 %v11109, 16
      %v11243 = vrot.slane %v11241, 2
      %v11244 = vor.u32 %v11240, %v11243
      %v11245 = vsel %vm3349, %v11236, %v11244
      %11246 = vrot.lane.b32.xlu0 %v11126, 64
      %v11247 = vpop.permute.xlu0 %11246
      %11248 = vrot.lane.b32.xlu0 %v11125, 64
      %v11249 = vpop.permute.xlu0 %11248
      %11250 = vrot.lane.b32.xlu0 %v11143, 64
      %v11251 = vpop.permute.xlu0 %11250
      %11252 = vrot.lane.b32.xlu0 %v11142, 64
      %v11253 = vpop.permute.xlu0 %11252
      %11254 = vrot.lane.b32.xlu0 %v11160, 64
      %v11255 = vpop.permute.xlu0 %11254
      %11256 = vrot.lane.b32.xlu0 %v11159, 64
      %v11257 = vpop.permute.xlu0 %11256
      %11258 = vrot.lane.b32.xlu0 %v11177, 64
      %v11259 = vpop.permute.xlu0 %11258
      %11260 = vrot.lane.b32.xlu0 %v11176, 64
      %v11261 = vpop.permute.xlu0 %11260
      %11262 = vrot.lane.b32.xlu0 %v11194, 64
      %v11263 = vpop.permute.xlu0 %11262
      %11264 = vrot.lane.b32.xlu0 %v11193, 64
      %v11265 = vpop.permute.xlu0 %11264
      %11266 = vrot.lane.b32.xlu0 %v11211, 64
      %v11267 = vpop.permute.xlu0 %11266
      %11268 = vrot.lane.b32.xlu0 %v11210, 64
      %v11269 = vpop.permute.xlu0 %11268
      %11270 = vrot.lane.b32.xlu0 %v11228, 64
      %v11271 = vpop.permute.xlu0 %11270
      %11272 = vrot.lane.b32.xlu0 %v11227, 64
      %v11273 = vpop.permute.xlu0 %11272
      %11274 = vrot.lane.b32.xlu0 %v11245, 64
      %v11275 = vpop.permute.xlu0 %11274
      %11276 = vrot.lane.b32.xlu0 %v11244, 64
      %v11277 = vpop.permute.xlu0 %11276
      %v11302 = vunpack.c.l.b16 %v10910
      %v11303 = vunpack.c.l.b16 %v10911
      %v11304 = vunpack.c.l.b16 %v10912
      %v11305 = vunpack.c.l.b16 %v10913
      %v11306 = vunpack.c.l.b16 %v10914
      %v11307 = vunpack.c.l.b16 %v10915
      %v11308 = vunpack.c.l.b16 %v10916
      %v11309 = vunpack.c.l.b16 %v10917
      %v11310 = vunpack.c.l.b16 %v10918
      %v11311 = vunpack.c.l.b16 %v10919
      %v11312 = vunpack.c.l.b16 %v10920
      %v11313 = vunpack.c.l.b16 %v10921
      %v11314 = vunpack.c.l.b16 %v10922
      %v11315 = vunpack.c.l.b16 %v10923
      %v11316 = vunpack.c.l.b16 %v10924
      %v11317 = vunpack.c.l.b16 %v10925
      %v11318 = vunpack.c.l.b16 %v10926
      %v11319 = vunpack.c.l.b16 %v10927
      %v11320 = vunpack.c.l.b16 %v10928
      %v11321 = vunpack.c.l.b16 %v10929
      %v11322 = vunpack.c.l.b16 %v10930
      %v11323 = vunpack.c.l.b16 %v10931
      %v11324 = vunpack.c.l.b16 %v10932
      %v11325 = vunpack.c.l.b16 %v10933
      %v11326 = vpack.c.b16 %v11303, %v11302
      %v11327 = vpack.c.b16 %v11304, %v11304
      %v11328 = vpack.c.b16 %v11306, %v11305
      %v11329 = vpack.c.b16 %v11307, %v11307
      %v11330 = vpack.c.b16 %v11309, %v11308
      %v11331 = vpack.c.b16 %v11310, %v11310
      %v11332 = vpack.c.b16 %v11312, %v11311
      %v11333 = vpack.c.b16 %v11313, %v11313
      %v11334 = vpack.c.b16 %v11315, %v11314
      %v11335 = vpack.c.b16 %v11316, %v11316
      %v11336 = vpack.c.b16 %v11318, %v11317
      %v11337 = vpack.c.b16 %v11319, %v11319
      %v11338 = vpack.c.b16 %v11321, %v11320
      %v11339 = vpack.c.b16 %v11322, %v11322
      %v11340 = vpack.c.b16 %v11324, %v11323
      %v11341 = vpack.c.b16 %v11325, %v11325
      %11342 = vrot.lane.b32.xlu0 %v11326, 96
      %v11343 = vpop.permute.xlu0 %11342
      %11344 = vrot.lane.b32.xlu0 %v11327, 96
      %v11345 = vpop.permute.xlu0 %11344
      %11346 = vrot.lane.b32.xlu0 %v11328, 96
      %v11347 = vpop.permute.xlu0 %11346
      %11348 = vrot.lane.b32.xlu0 %v11329, 96
      %v11349 = vpop.permute.xlu0 %11348
      %11350 = vrot.lane.b32.xlu0 %v11330, 96
      %v11351 = vpop.permute.xlu0 %11350
      %11352 = vrot.lane.b32.xlu0 %v11331, 96
      %v11353 = vpop.permute.xlu0 %11352
      %11354 = vrot.lane.b32.xlu0 %v11332, 96
      %v11355 = vpop.permute.xlu0 %11354
      %11356 = vrot.lane.b32.xlu0 %v11333, 96
      %v11357 = vpop.permute.xlu0 %11356
      %11358 = vrot.lane.b32.xlu0 %v11334, 96
      %v11359 = vpop.permute.xlu0 %11358
      %11360 = vrot.lane.b32.xlu0 %v11335, 96
      %v11361 = vpop.permute.xlu0 %11360
      %11362 = vrot.lane.b32.xlu0 %v11336, 96
      %v11363 = vpop.permute.xlu0 %11362
      %11364 = vrot.lane.b32.xlu0 %v11337, 96
      %v11365 = vpop.permute.xlu0 %11364
      %11366 = vrot.lane.b32.xlu0 %v11338, 96
      %v11367 = vpop.permute.xlu0 %11366
      %11368 = vrot.lane.b32.xlu0 %v11339, 96
      %v11369 = vpop.permute.xlu0 %11368
      %11370 = vrot.lane.b32.xlu0 %v11340, 96
      %v11371 = vpop.permute.xlu0 %11370
      %11372 = vrot.lane.b32.xlu0 %v11341, 96
      %v11373 = vpop.permute.xlu0 %11372
      %v11376 = vsel %vm705, %v10982, %v11047
      %v11378 = vsel %vm705, %v10983, %v11047
      %v11381 = vsel %vm705, %v10984, %v11049
      %v11383 = vsel %vm705, %v10985, %v11049
      %v11386 = vsel %vm705, %v10986, %v11051
      %v11388 = vsel %vm705, %v10987, %v11051
      %v11391 = vsel %vm705, %v10988, %v11053
      %v11393 = vsel %vm705, %v10989, %v11053
      %v11396 = vsel %vm705, %v10990, %v11055
      %v11398 = vsel %vm705, %v10991, %v11055
      %v11401 = vsel %vm705, %v10992, %v11057
      %v11403 = vsel %vm705, %v10993, %v11057
      %v11406 = vsel %vm705, %v10994, %v11059
      %v11408 = vsel %vm705, %v10995, %v11059
      %v11411 = vsel %vm705, %v10996, %v11061
      %v11413 = vsel %vm705, %v10997, %v11061
      %v11415 = vsel %vm746, %v11376, %v11247
      %v11417 = vsel %vm746, %v11378, %v11249
      %v11419 = vsel %vm746, %v11381, %v11251
      %v11421 = vsel %vm746, %v11383, %v11253
      %v11423 = vsel %vm746, %v11386, %v11255
      %v11425 = vsel %vm746, %v11388, %v11257
      %v11427 = vsel %vm746, %v11391, %v11259
      %v11429 = vsel %vm746, %v11393, %v11261
      %v11431 = vsel %vm746, %v11396, %v11263
      %v11433 = vsel %vm746, %v11398, %v11265
      %v11435 = vsel %vm746, %v11401, %v11267
      %v11437 = vsel %vm746, %v11403, %v11269
      %v11439 = vsel %vm746, %v11406, %v11271
      %v11441 = vsel %vm746, %v11408, %v11273
      %v11443 = vsel %vm746, %v11411, %v11275
      %v11445 = vsel %vm746, %v11413, %v11277
      %v11447 = vsel %vm779, %v11415, %v11343
      %v11449 = vsel %vm779, %v11417, %v11345
      %v11451 = vsel %vm779, %v11419, %v11347
      %v11453 = vsel %vm779, %v11421, %v11349
      %v11455 = vsel %vm779, %v11423, %v11351
      %v11457 = vsel %vm779, %v11425, %v11353
      %v11459 = vsel %vm779, %v11427, %v11355
      %v11461 = vsel %vm779, %v11429, %v11357
      %v11463 = vsel %vm779, %v11431, %v11359
      %v11465 = vsel %vm779, %v11433, %v11361
      %v11467 = vsel %vm779, %v11435, %v11363
      %v11469 = vsel %vm779, %v11437, %v11365
      %v11471 = vsel %vm779, %v11439, %v11367
      %v11473 = vsel %vm779, %v11441, %v11369
      %v11475 = vsel %vm779, %v11443, %v11371
      %v11477 = vsel %vm779, %v11445, %v11373
      %v11494 = vrot.slane %v11447, 1
      %v11495 = vrot.slane %v11449, 1
      %v11496 = vsel %vm552, %v11494, %v11495
      %v11497 = vrot.slane %v11451, 1
      %v11498 = vrot.slane %v11453, 1
      %v11499 = vsel %vm552, %v11497, %v11498
      %v11500 = vrot.slane %v11455, 1
      %v11501 = vrot.slane %v11457, 1
      %v11502 = vsel %vm552, %v11500, %v11501
      %v11503 = vrot.slane %v11459, 1
      %v11504 = vrot.slane %v11461, 1
      %v11505 = vsel %vm552, %v11503, %v11504
      %v11506 = vrot.slane %v11463, 1
      %v11507 = vrot.slane %v11465, 1
      %v11508 = vsel %vm552, %v11506, %v11507
      %v11509 = vrot.slane %v11467, 1
      %v11510 = vrot.slane %v11469, 1
      %v11511 = vsel %vm552, %v11509, %v11510
      %v11512 = vrot.slane %v11471, 1
      %v11513 = vrot.slane %v11473, 1
      %v11514 = vsel %vm552, %v11512, %v11513
      %v11515 = vrot.slane %v11475, 1
      %v11516 = vrot.slane %v11477, 1
      %v11517 = vsel %vm552, %v11515, %v11516
      %v11518 = vunpack.c.l.b16 %v11496
      %v11519 = vunpack.c.h.b16 %v11496
      %v11520 = vunpack.c.l.b16 %v11499
      %v11521 = vunpack.c.h.b16 %v11499
      %v11522 = vunpack.c.l.b16 %v11502
      %v11523 = vunpack.c.h.b16 %v11502
      %v11524 = vunpack.c.l.b16 %v11505
      %v11525 = vunpack.c.h.b16 %v11505
      %v11526 = vunpack.c.l.b16 %v11508
      %v11527 = vunpack.c.h.b16 %v11508
      %v11528 = vunpack.c.l.b16 %v11511
      %v11529 = vunpack.c.h.b16 %v11511
      %v11530 = vunpack.c.l.b16 %v11514
      %v11531 = vunpack.c.h.b16 %v11514
      %v11532 = vunpack.c.l.b16 %v11517
      %v11533 = vunpack.c.h.b16 %v11517
      %v11534 = vpack.c.b16 %v11518, %v11518
      %v11535 = vpack.c.b16 %v11519, %v11519
      %v11536 = vpack.c.b16 %v11520, %v11520
      %v11537 = vpack.c.b16 %v11521, %v11521
      %v11538 = vpack.c.b16 %v11522, %v11522
      %v11539 = vpack.c.b16 %v11523, %v11523
      %v11540 = vpack.c.b16 %v11524, %v11524
      %v11541 = vpack.c.b16 %v11525, %v11525
      %v11542 = vpack.c.b16 %v11526, %v11526
      %v11543 = vpack.c.b16 %v11527, %v11527
      %v11544 = vpack.c.b16 %v11528, %v11528
      %v11545 = vpack.c.b16 %v11529, %v11529
      %v11546 = vpack.c.b16 %v11530, %v11530
      %v11547 = vpack.c.b16 %v11531, %v11531
      %v11548 = vpack.c.b16 %v11532, %v11532
      %v11549 = vpack.c.b16 %v11533, %v11533
      %11566 = vst [vmem:[#allocation3 + $0x14] sm:$0xf] %v11534
      %11567 = vst [vmem:[#allocation3 + $0x30] sm:$0xf] %v11535
      %11568 = vst [vmem:[#allocation3 + $0x4c] sm:$0xf] %v11536
      %11569 = vst [vmem:[#allocation3 + $0x68] sm:$0xf] %v11537
      %11570 = vst [vmem:[#allocation3 + $0x84] sm:$0xf] %v11538
      %11571 = vst [vmem:[#allocation3 + $0xa0] sm:$0xf] %v11539
      %11572 = vst [vmem:[#allocation3 + $0xbc] sm:$0xf] %v11540
      %11573 = vst [vmem:[#allocation3 + $0xd8] sm:$0xf] %v11541
      %11574 = vst [vmem:[#allocation3 + $0xf4] sm:$0xf] %v11542
      %11575 = vst [vmem:[#allocation3 + $0x110] sm:$0xf] %v11543
      %11576 = vst [vmem:[#allocation3 + $0x12c] sm:$0xf] %v11544
      %11577 = vst [vmem:[#allocation3 + $0x148] sm:$0xf] %v11545
      %11578 = vst [vmem:[#allocation3 + $0x164] sm:$0xf] %v11546
      %11579 = vst [vmem:[#allocation3 + $0x180] sm:$0xf] %v11547
      %11580 = vst [vmem:[#allocation3 + $0x19c] sm:$0xf] %v11548
      %11581 = vst [vmem:[#allocation3 + $0x1b8] sm:$0xf] %v11549
      %s11582 = sadd.s32 %s214, 18
      %s11583 = smul.u32 %s11582, 4
      %s11584 = smul.addr %s11583, 4
      %s11585 = scalar_lea.vmem %s195, %s11584
      %v11586 = vld [vmem:[%s11585] sm:$0xf]
      %v11587 = vld [vmem:[%s11585 + $0x4] sm:$0xf]
      %v11588 = vld [vmem:[%s11585 + $0x10] sm:$0xf]
      %v11589 = vld [vmem:[%s11585 + $0x14] sm:$0xf]
      %v11590 = vld [vmem:[%s11585 + $0x20] sm:$0xf]
      %v11591 = vld [vmem:[%s11585 + $0x24] sm:$0xf]
      %v11592 = vld [vmem:[%s11585 + $0x30] sm:$0xf]
      %v11593 = vld [vmem:[%s11585 + $0x34] sm:$0xf]
      %v11594 = vld [vmem:[%s11585 + $0x40] sm:$0xf]
      %v11595 = vld [vmem:[%s11585 + $0x44] sm:$0xf]
      %v11596 = vld [vmem:[%s11585 + $0x50] sm:$0xf]
      %v11597 = vld [vmem:[%s11585 + $0x54] sm:$0xf]
      %v11598 = vld [vmem:[%s11585 + $0x60] sm:$0xf]
      %v11599 = vld [vmem:[%s11585 + $0x64] sm:$0xf]
      %v11600 = vld [vmem:[%s11585 + $0x70] sm:$0xf]
      %v11601 = vld [vmem:[%s11585 + $0x74] sm:$0xf]
      %v11602 = vld [vmem:[%s11585] sm:$0xc]
      %v11603 = vld [vmem:[%s11585 + $0x8] sm:$0x7]
      %v11604 = vld [vmem:[%s11585 + $0x10] sm:$0xc]
      %v11605 = vld [vmem:[%s11585 + $0x18] sm:$0x7]
      %v11606 = vld [vmem:[%s11585 + $0x20] sm:$0xc]
      %v11607 = vld [vmem:[%s11585 + $0x28] sm:$0x7]
      %v11608 = vld [vmem:[%s11585 + $0x30] sm:$0xc]
      %v11609 = vld [vmem:[%s11585 + $0x38] sm:$0x7]
      %v11610 = vld [vmem:[%s11585 + $0x40] sm:$0xc]
      %v11611 = vld [vmem:[%s11585 + $0x48] sm:$0x7]
      %v11612 = vld [vmem:[%s11585 + $0x50] sm:$0xc]
      %v11613 = vld [vmem:[%s11585 + $0x58] sm:$0x7]
      %v11614 = vld [vmem:[%s11585 + $0x60] sm:$0xc]
      %v11615 = vld [vmem:[%s11585 + $0x68] sm:$0x7]
      %v11616 = vld [vmem:[%s11585 + $0x70] sm:$0xc]
      %v11617 = vld [vmem:[%s11585 + $0x78] sm:$0x7]
      %v11618 = vld [vmem:[%s11585 + $0x4] sm:$0xe]
      %v11619 = vld [vmem:[%s11585 + $0x8] sm:$0xf]
      %v11620 = vld [vmem:[%s11585 + $0xc] sm:$0x1]
      %v11621 = vld [vmem:[%s11585 + $0x14] sm:$0xe]
      %v11622 = vld [vmem:[%s11585 + $0x18] sm:$0xf]
      %v11623 = vld [vmem:[%s11585 + $0x1c] sm:$0x1]
      %v11624 = vld [vmem:[%s11585 + $0x24] sm:$0xe]
      %v11625 = vld [vmem:[%s11585 + $0x28] sm:$0xf]
      %v11626 = vld [vmem:[%s11585 + $0x2c] sm:$0x1]
      %v11627 = vld [vmem:[%s11585 + $0x34] sm:$0xe]
      %v11628 = vld [vmem:[%s11585 + $0x38] sm:$0xf]
      %v11629 = vld [vmem:[%s11585 + $0x3c] sm:$0x1]
      %v11630 = vld [vmem:[%s11585 + $0x44] sm:$0xe]
      %v11631 = vld [vmem:[%s11585 + $0x48] sm:$0xf]
      %v11632 = vld [vmem:[%s11585 + $0x4c] sm:$0x1]
      %v11633 = vld [vmem:[%s11585 + $0x54] sm:$0xe]
      %v11634 = vld [vmem:[%s11585 + $0x58] sm:$0xf]
      %v11635 = vld [vmem:[%s11585 + $0x5c] sm:$0x1]
      %v11636 = vld [vmem:[%s11585 + $0x64] sm:$0xe]
      %v11637 = vld [vmem:[%s11585 + $0x68] sm:$0xf]
      %v11638 = vld [vmem:[%s11585 + $0x6c] sm:$0x1]
      %v11639 = vld [vmem:[%s11585 + $0x74] sm:$0xe]
      %v11640 = vld [vmem:[%s11585 + $0x78] sm:$0xf]
      %v11641 = vld [vmem:[%s11585 + $0x7c] sm:$0x1]
      %v11658 = vunpack.c.l.b16 %v11586
      %v11659 = vunpack.c.l.b16 %v11587
      %v11660 = vunpack.c.l.b16 %v11588
      %v11661 = vunpack.c.l.b16 %v11589
      %v11662 = vunpack.c.l.b16 %v11590
      %v11663 = vunpack.c.l.b16 %v11591
      %v11664 = vunpack.c.l.b16 %v11592
      %v11665 = vunpack.c.l.b16 %v11593
      %v11666 = vunpack.c.l.b16 %v11594
      %v11667 = vunpack.c.l.b16 %v11595
      %v11668 = vunpack.c.l.b16 %v11596
      %v11669 = vunpack.c.l.b16 %v11597
      %v11670 = vunpack.c.l.b16 %v11598
      %v11671 = vunpack.c.l.b16 %v11599
      %v11672 = vunpack.c.l.b16 %v11600
      %v11673 = vunpack.c.l.b16 %v11601
      %v11674 = vpack.c.b16 %v11659, %v11658
      %v11675 = vpack.c.b16 %v11661, %v11660
      %v11676 = vpack.c.b16 %v11663, %v11662
      %v11677 = vpack.c.b16 %v11665, %v11664
      %v11678 = vpack.c.b16 %v11667, %v11666
      %v11679 = vpack.c.b16 %v11669, %v11668
      %v11680 = vpack.c.b16 %v11671, %v11670
      %v11681 = vpack.c.b16 %v11673, %v11672
      %v11698 = vunpack.c.l.b16 %v11602
      %v11699 = vunpack.c.l.b16 %v11603
      %v11700 = vunpack.c.l.b16 %v11604
      %v11701 = vunpack.c.l.b16 %v11605
      %v11702 = vunpack.c.l.b16 %v11606
      %v11703 = vunpack.c.l.b16 %v11607
      %v11704 = vunpack.c.l.b16 %v11608
      %v11705 = vunpack.c.l.b16 %v11609
      %v11706 = vunpack.c.l.b16 %v11610
      %v11707 = vunpack.c.l.b16 %v11611
      %v11708 = vunpack.c.l.b16 %v11612
      %v11709 = vunpack.c.l.b16 %v11613
      %v11710 = vunpack.c.l.b16 %v11614
      %v11711 = vunpack.c.l.b16 %v11615
      %v11712 = vunpack.c.l.b16 %v11616
      %v11713 = vunpack.c.l.b16 %v11617
      %v11714 = vpack.c.b16 %v11659, %v11698
      %v11715 = vpack.c.b16 %v11699, %v11699
      %v11716 = vpack.c.b16 %v11661, %v11700
      %v11717 = vpack.c.b16 %v11701, %v11701
      %v11718 = vpack.c.b16 %v11663, %v11702
      %v11719 = vpack.c.b16 %v11703, %v11703
      %v11720 = vpack.c.b16 %v11665, %v11704
      %v11721 = vpack.c.b16 %v11705, %v11705
      %v11722 = vpack.c.b16 %v11667, %v11706
      %v11723 = vpack.c.b16 %v11707, %v11707
      %v11724 = vpack.c.b16 %v11669, %v11708
      %v11725 = vpack.c.b16 %v11709, %v11709
      %v11726 = vpack.c.b16 %v11671, %v11710
      %v11727 = vpack.c.b16 %v11711, %v11711
      %v11728 = vpack.c.b16 %v11673, %v11712
      %v11729 = vpack.c.b16 %v11713, %v11713
      %v11731 = vshrl.u32 %v11714, 16
      %v11733 = vrot.slane %v11731, 2
      %v11734 = vshll.u32 %v11714, 16
      %v11736 = vrot.slane %v11734, 3
      %v11737 = vor.u32 %v11733, %v11736
      %v11739 = vshrl.u32 %v11715, 16
      %v11741 = vrot.slane %v11739, 2
      %v11742 = vshll.u32 %v11715, 16
      %v11744 = vrot.slane %v11742, 3
      %v11745 = vor.u32 %v11741, %v11744
      %v11746 = vsel %vm1602, %v11737, %v11745
      %v11748 = vshrl.u32 %v11716, 16
      %v11750 = vrot.slane %v11748, 2
      %v11751 = vshll.u32 %v11716, 16
      %v11753 = vrot.slane %v11751, 3
      %v11754 = vor.u32 %v11750, %v11753
      %v11756 = vshrl.u32 %v11717, 16
      %v11758 = vrot.slane %v11756, 2
      %v11759 = vshll.u32 %v11717, 16
      %v11761 = vrot.slane %v11759, 3
      %v11762 = vor.u32 %v11758, %v11761
      %v11763 = vsel %vm1602, %v11754, %v11762
      %v11765 = vshrl.u32 %v11718, 16
      %v11767 = vrot.slane %v11765, 2
      %v11768 = vshll.u32 %v11718, 16
      %v11770 = vrot.slane %v11768, 3
      %v11771 = vor.u32 %v11767, %v11770
      %v11773 = vshrl.u32 %v11719, 16
      %v11775 = vrot.slane %v11773, 2
      %v11776 = vshll.u32 %v11719, 16
      %v11778 = vrot.slane %v11776, 3
      %v11779 = vor.u32 %v11775, %v11778
      %v11780 = vsel %vm1602, %v11771, %v11779
      %v11782 = vshrl.u32 %v11720, 16
      %v11784 = vrot.slane %v11782, 2
      %v11785 = vshll.u32 %v11720, 16
      %v11787 = vrot.slane %v11785, 3
      %v11788 = vor.u32 %v11784, %v11787
      %v11790 = vshrl.u32 %v11721, 16
      %v11792 = vrot.slane %v11790, 2
      %v11793 = vshll.u32 %v11721, 16
      %v11795 = vrot.slane %v11793, 3
      %v11796 = vor.u32 %v11792, %v11795
      %v11797 = vsel %vm1602, %v11788, %v11796
      %v11799 = vshrl.u32 %v11722, 16
      %v11801 = vrot.slane %v11799, 2
      %v11802 = vshll.u32 %v11722, 16
      %v11804 = vrot.slane %v11802, 3
      %v11805 = vor.u32 %v11801, %v11804
      %v11807 = vshrl.u32 %v11723, 16
      %v11809 = vrot.slane %v11807, 2
      %v11810 = vshll.u32 %v11723, 16
      %v11812 = vrot.slane %v11810, 3
      %v11813 = vor.u32 %v11809, %v11812
      %v11814 = vsel %vm1602, %v11805, %v11813
      %v11816 = vshrl.u32 %v11724, 16
      %v11818 = vrot.slane %v11816, 2
      %v11819 = vshll.u32 %v11724, 16
      %v11821 = vrot.slane %v11819, 3
      %v11822 = vor.u32 %v11818, %v11821
      %v11824 = vshrl.u32 %v11725, 16
      %v11826 = vrot.slane %v11824, 2
      %v11827 = vshll.u32 %v11725, 16
      %v11829 = vrot.slane %v11827, 3
      %v11830 = vor.u32 %v11826, %v11829
      %v11831 = vsel %vm1602, %v11822, %v11830
      %v11833 = vshrl.u32 %v11726, 16
      %v11835 = vrot.slane %v11833, 2
      %v11836 = vshll.u32 %v11726, 16
      %v11838 = vrot.slane %v11836, 3
      %v11839 = vor.u32 %v11835, %v11838
      %v11841 = vshrl.u32 %v11727, 16
      %v11843 = vrot.slane %v11841, 2
      %v11844 = vshll.u32 %v11727, 16
      %v11846 = vrot.slane %v11844, 3
      %v11847 = vor.u32 %v11843, %v11846
      %v11848 = vsel %vm1602, %v11839, %v11847
      %v11850 = vshrl.u32 %v11728, 16
      %v11852 = vrot.slane %v11850, 2
      %v11853 = vshll.u32 %v11728, 16
      %v11855 = vrot.slane %v11853, 3
      %v11856 = vor.u32 %v11852, %v11855
      %v11858 = vshrl.u32 %v11729, 16
      %v11860 = vrot.slane %v11858, 2
      %v11861 = vshll.u32 %v11729, 16
      %v11863 = vrot.slane %v11861, 3
      %v11864 = vor.u32 %v11860, %v11863
      %v11865 = vsel %vm1602, %v11856, %v11864
      %11866 = vrot.lane.b32.xlu0 %v11746, 32
      %v11867 = vpop.permute.xlu0 %11866
      %11868 = vrot.lane.b32.xlu0 %v11763, 32
      %v11869 = vpop.permute.xlu0 %11868
      %11870 = vrot.lane.b32.xlu0 %v11780, 32
      %v11871 = vpop.permute.xlu0 %11870
      %11872 = vrot.lane.b32.xlu0 %v11797, 32
      %v11873 = vpop.permute.xlu0 %11872
      %11874 = vrot.lane.b32.xlu0 %v11814, 32
      %v11875 = vpop.permute.xlu0 %11874
      %11876 = vrot.lane.b32.xlu0 %v11831, 32
      %v11877 = vpop.permute.xlu0 %11876
      %11878 = vrot.lane.b32.xlu0 %v11848, 32
      %v11879 = vpop.permute.xlu0 %11878
      %11880 = vrot.lane.b32.xlu0 %v11865, 32
      %v11881 = vpop.permute.xlu0 %11880
      %v11906 = vunpack.c.l.b16 %v11618
      %v11907 = vunpack.c.l.b16 %v11619
      %v11908 = vunpack.c.l.b16 %v11620
      %v11909 = vunpack.c.l.b16 %v11621
      %v11910 = vunpack.c.l.b16 %v11622
      %v11911 = vunpack.c.l.b16 %v11623
      %v11912 = vunpack.c.l.b16 %v11624
      %v11913 = vunpack.c.l.b16 %v11625
      %v11914 = vunpack.c.l.b16 %v11626
      %v11915 = vunpack.c.l.b16 %v11627
      %v11916 = vunpack.c.l.b16 %v11628
      %v11917 = vunpack.c.l.b16 %v11629
      %v11918 = vunpack.c.l.b16 %v11630
      %v11919 = vunpack.c.l.b16 %v11631
      %v11920 = vunpack.c.l.b16 %v11632
      %v11921 = vunpack.c.l.b16 %v11633
      %v11922 = vunpack.c.l.b16 %v11634
      %v11923 = vunpack.c.l.b16 %v11635
      %v11924 = vunpack.c.l.b16 %v11636
      %v11925 = vunpack.c.l.b16 %v11637
      %v11926 = vunpack.c.l.b16 %v11638
      %v11927 = vunpack.c.l.b16 %v11639
      %v11928 = vunpack.c.l.b16 %v11640
      %v11929 = vunpack.c.l.b16 %v11641
      %v11930 = vpack.c.b16 %v11907, %v11906
      %v11931 = vpack.c.b16 %v11908, %v11908
      %v11932 = vpack.c.b16 %v11910, %v11909
      %v11933 = vpack.c.b16 %v11911, %v11911
      %v11934 = vpack.c.b16 %v11913, %v11912
      %v11935 = vpack.c.b16 %v11914, %v11914
      %v11936 = vpack.c.b16 %v11916, %v11915
      %v11937 = vpack.c.b16 %v11917, %v11917
      %v11938 = vpack.c.b16 %v11919, %v11918
      %v11939 = vpack.c.b16 %v11920, %v11920
      %v11940 = vpack.c.b16 %v11922, %v11921
      %v11941 = vpack.c.b16 %v11923, %v11923
      %v11942 = vpack.c.b16 %v11925, %v11924
      %v11943 = vpack.c.b16 %v11926, %v11926
      %v11944 = vpack.c.b16 %v11928, %v11927
      %v11945 = vpack.c.b16 %v11929, %v11929
      %v11946 = vrot.slane %v11930, 1
      %v11947 = vrot.slane %v11931, 1
      %v11948 = vsel %vm552, %v11946, %v11947
      %v11949 = vrot.slane %v11932, 1
      %v11950 = vrot.slane %v11933, 1
      %v11951 = vsel %vm552, %v11949, %v11950
      %v11952 = vrot.slane %v11934, 1
      %v11953 = vrot.slane %v11935, 1
      %v11954 = vsel %vm552, %v11952, %v11953
      %v11955 = vrot.slane %v11936, 1
      %v11956 = vrot.slane %v11937, 1
      %v11957 = vsel %vm552, %v11955, %v11956
      %v11958 = vrot.slane %v11938, 1
      %v11959 = vrot.slane %v11939, 1
      %v11960 = vsel %vm552, %v11958, %v11959
      %v11961 = vrot.slane %v11940, 1
      %v11962 = vrot.slane %v11941, 1
      %v11963 = vsel %vm552, %v11961, %v11962
      %v11964 = vrot.slane %v11942, 1
      %v11965 = vrot.slane %v11943, 1
      %v11966 = vsel %vm552, %v11964, %v11965
      %v11967 = vrot.slane %v11944, 1
      %v11968 = vrot.slane %v11945, 1
      %v11969 = vsel %vm552, %v11967, %v11968
      %11970 = vrot.lane.b32.xlu0 %v11948, 64
      %v11971 = vpop.permute.xlu0 %11970
      %11972 = vrot.lane.b32.xlu0 %v11951, 64
      %v11973 = vpop.permute.xlu0 %11972
      %11974 = vrot.lane.b32.xlu0 %v11954, 64
      %v11975 = vpop.permute.xlu0 %11974
      %11976 = vrot.lane.b32.xlu0 %v11957, 64
      %v11977 = vpop.permute.xlu0 %11976
      %11978 = vrot.lane.b32.xlu0 %v11960, 64
      %v11979 = vpop.permute.xlu0 %11978
      %11980 = vrot.lane.b32.xlu0 %v11963, 64
      %v11981 = vpop.permute.xlu0 %11980
      %11982 = vrot.lane.b32.xlu0 %v11966, 64
      %v11983 = vpop.permute.xlu0 %11982
      %11984 = vrot.lane.b32.xlu0 %v11969, 64
      %v11985 = vpop.permute.xlu0 %11984
      %v11988 = vsel %vm705, %v11674, %v11867
      %v11991 = vsel %vm705, %v11675, %v11869
      %v11994 = vsel %vm705, %v11676, %v11871
      %v11997 = vsel %vm705, %v11677, %v11873
      %v12000 = vsel %vm705, %v11678, %v11875
      %v12003 = vsel %vm705, %v11679, %v11877
      %v12006 = vsel %vm705, %v11680, %v11879
      %v12009 = vsel %vm705, %v11681, %v11881
      %v12011 = vsel %vm746, %v11988, %v11971
      %v12013 = vsel %vm746, %v11991, %v11973
      %v12015 = vsel %vm746, %v11994, %v11975
      %v12017 = vsel %vm746, %v11997, %v11977
      %v12019 = vsel %vm746, %v12000, %v11979
      %v12021 = vsel %vm746, %v12003, %v11981
      %v12023 = vsel %vm746, %v12006, %v11983
      %v12025 = vsel %vm746, %v12009, %v11985
      %v12026 = vsel %vm779, %v12011, 0
      %v12027 = vsel %vm779, %v12013, 0
      %v12028 = vsel %vm779, %v12015, 0
      %v12029 = vsel %vm779, %v12017, 0
      %v12030 = vsel %vm779, %v12019, 0
      %v12031 = vsel %vm779, %v12021, 0
      %v12032 = vsel %vm779, %v12023, 0
      %v12033 = vsel %vm779, %v12025, 0
      %v12042 = vunpack.c.l.b16 %v12026
      %v12043 = vunpack.c.h.b16 %v12026
      %v12044 = vunpack.c.l.b16 %v12027
      %v12045 = vunpack.c.h.b16 %v12027
      %v12046 = vunpack.c.l.b16 %v12028
      %v12047 = vunpack.c.h.b16 %v12028
      %v12048 = vunpack.c.l.b16 %v12029
      %v12049 = vunpack.c.h.b16 %v12029
      %v12050 = vunpack.c.l.b16 %v12030
      %v12051 = vunpack.c.h.b16 %v12030
      %v12052 = vunpack.c.l.b16 %v12031
      %v12053 = vunpack.c.h.b16 %v12031
      %v12054 = vunpack.c.l.b16 %v12032
      %v12055 = vunpack.c.h.b16 %v12032
      %v12056 = vunpack.c.l.b16 %v12033
      %v12057 = vunpack.c.h.b16 %v12033
      %v12058 = vpack.c.b16 %v12042, %v12042
      %v12059 = vpack.c.b16 %v12043, %v12043
      %v12060 = vpack.c.b16 %v12044, %v12044
      %v12061 = vpack.c.b16 %v12045, %v12045
      %v12062 = vpack.c.b16 %v12046, %v12046
      %v12063 = vpack.c.b16 %v12047, %v12047
      %v12064 = vpack.c.b16 %v12048, %v12048
      %v12065 = vpack.c.b16 %v12049, %v12049
      %v12066 = vpack.c.b16 %v12050, %v12050
      %v12067 = vpack.c.b16 %v12051, %v12051
      %v12068 = vpack.c.b16 %v12052, %v12052
      %v12069 = vpack.c.b16 %v12053, %v12053
      %v12070 = vpack.c.b16 %v12054, %v12054
      %v12071 = vpack.c.b16 %v12055, %v12055
      %v12072 = vpack.c.b16 %v12056, %v12056
      %v12073 = vpack.c.b16 %v12057, %v12057
      %12090 = vst [vmem:[#allocation3 + $0x18] sm:$0xf] %v12058
      %12091 = vst [vmem:[#allocation3 + $0x34] sm:$0xf] %v12059
      %12092 = vst [vmem:[#allocation3 + $0x50] sm:$0xf] %v12060
      %12093 = vst [vmem:[#allocation3 + $0x6c] sm:$0xf] %v12061
      %12094 = vst [vmem:[#allocation3 + $0x88] sm:$0xf] %v12062
      %12095 = vst [vmem:[#allocation3 + $0xa4] sm:$0xf] %v12063
      %12096 = vst [vmem:[#allocation3 + $0xc0] sm:$0xf] %v12064
      %12097 = vst [vmem:[#allocation3 + $0xdc] sm:$0xf] %v12065
      %12098 = vst [vmem:[#allocation3 + $0xf8] sm:$0xf] %v12066
      %12099 = vst [vmem:[#allocation3 + $0x114] sm:$0xf] %v12067
      %12100 = vst [vmem:[#allocation3 + $0x130] sm:$0xf] %v12068
      %12101 = vst [vmem:[#allocation3 + $0x14c] sm:$0xf] %v12069
      %12102 = vst [vmem:[#allocation3 + $0x168] sm:$0xf] %v12070
      %12103 = vst [vmem:[#allocation3 + $0x184] sm:$0xf] %v12071
      %12104 = vst [vmem:[#allocation3 + $0x1a0] sm:$0xf] %v12072
      %12105 = vst [vmem:[#allocation3 + $0x1bc] sm:$0xf] %v12073
      %v12106 = vld [vmem:[#allocation3] sm:$0xff]
      %v12107 = vld [vmem:[#allocation3 + $0x8] sm:$0xff]
      %v12108 = vld [vmem:[#allocation3 + $0x10] sm:$0xff]
      %v12109 = vld [vmem:[#allocation3 + $0x18] sm:$0xf]
      %v12110 = vld [vmem:[#allocation3 + $0x1c] sm:$0xff]
      %v12111 = vld [vmem:[#allocation3 + $0x24] sm:$0xff]
      %v12112 = vld [vmem:[#allocation3 + $0x2c] sm:$0xff]
      %v12113 = vld [vmem:[#allocation3 + $0x34] sm:$0xf]
      %v12114 = vld [vmem:[#allocation3 + $0x38] sm:$0xff]
      %v12115 = vld [vmem:[#allocation3 + $0x40] sm:$0xff]
      %v12116 = vld [vmem:[#allocation3 + $0x48] sm:$0xff]
      %v12117 = vld [vmem:[#allocation3 + $0x50] sm:$0xf]
      %v12118 = vld [vmem:[#allocation3 + $0x54] sm:$0xff]
      %v12119 = vld [vmem:[#allocation3 + $0x5c] sm:$0xff]
      %v12120 = vld [vmem:[#allocation3 + $0x64] sm:$0xff]
      %v12121 = vld [vmem:[#allocation3 + $0x6c] sm:$0xf]
      %v12122 = vld [vmem:[#allocation3 + $0x70] sm:$0xff]
      %v12123 = vld [vmem:[#allocation3 + $0x78] sm:$0xff]
      %v12124 = vld [vmem:[#allocation3 + $0x80] sm:$0xff]
      %v12125 = vld [vmem:[#allocation3 + $0x88] sm:$0xf]
      %v12126 = vld [vmem:[#allocation3 + $0x8c] sm:$0xff]
      %v12127 = vld [vmem:[#allocation3 + $0x94] sm:$0xff]
      %v12128 = vld [vmem:[#allocation3 + $0x9c] sm:$0xff]
      %v12129 = vld [vmem:[#allocation3 + $0xa4] sm:$0xf]
      %v12130 = vld [vmem:[#allocation3 + $0xa8] sm:$0xff]
      %v12131 = vld [vmem:[#allocation3 + $0xb0] sm:$0xff]
      %v12132 = vld [vmem:[#allocation3 + $0xb8] sm:$0xff]
      %v12133 = vld [vmem:[#allocation3 + $0xc0] sm:$0xf]
      %v12134 = vld [vmem:[#allocation3 + $0xc4] sm:$0xff]
      %v12135 = vld [vmem:[#allocation3 + $0xcc] sm:$0xff]
      %v12136 = vld [vmem:[#allocation3 + $0xd4] sm:$0xff]
      %v12137 = vld [vmem:[#allocation3 + $0xdc] sm:$0xf]
      %v12138 = vld [vmem:[#allocation3 + $0xe0] sm:$0xff]
      %v12139 = vld [vmem:[#allocation3 + $0xe8] sm:$0xff]
      %v12140 = vld [vmem:[#allocation3 + $0xf0] sm:$0xff]
      %v12141 = vld [vmem:[#allocation3 + $0xf8] sm:$0xf]
      %v12142 = vld [vmem:[#allocation3 + $0xfc] sm:$0xff]
      %v12143 = vld [vmem:[#allocation3 + $0x104] sm:$0xff]
      %v12144 = vld [vmem:[#allocation3 + $0x10c] sm:$0xff]
      %v12145 = vld [vmem:[#allocation3 + $0x114] sm:$0xf]
      %v12146 = vld [vmem:[#allocation3 + $0x118] sm:$0xff]
      %v12147 = vld [vmem:[#allocation3 + $0x120] sm:$0xff]
      %v12148 = vld [vmem:[#allocation3 + $0x128] sm:$0xff]
      %v12149 = vld [vmem:[#allocation3 + $0x130] sm:$0xf]
      %v12150 = vld [vmem:[#allocation3 + $0x134] sm:$0xff]
      %v12151 = vld [vmem:[#allocation3 + $0x13c] sm:$0xff]
      %v12152 = vld [vmem:[#allocation3 + $0x144] sm:$0xff]
      %v12153 = vld [vmem:[#allocation3 + $0x14c] sm:$0xf]
      %v12154 = vld [vmem:[#allocation3 + $0x150] sm:$0xff]
      %v12155 = vld [vmem:[#allocation3 + $0x158] sm:$0xff]
      %v12156 = vld [vmem:[#allocation3 + $0x160] sm:$0xff]
      %v12157 = vld [vmem:[#allocation3 + $0x168] sm:$0xf]
      %v12158 = vld [vmem:[#allocation3 + $0x16c] sm:$0xff]
      %v12159 = vld [vmem:[#allocation3 + $0x174] sm:$0xff]
      %v12160 = vld [vmem:[#allocation3 + $0x17c] sm:$0xff]
      %v12161 = vld [vmem:[#allocation3 + $0x184] sm:$0xf]
      %v12162 = vld [vmem:[#allocation3 + $0x188] sm:$0xff]
      %v12163 = vld [vmem:[#allocation3 + $0x190] sm:$0xff]
      %v12164 = vld [vmem:[#allocation3 + $0x198] sm:$0xff]
      %v12165 = vld [vmem:[#allocation3 + $0x1a0] sm:$0xf]
      %v12166 = vld [vmem:[#allocation3 + $0x1a4] sm:$0xff]
      %v12167 = vld [vmem:[#allocation3 + $0x1ac] sm:$0xff]
      %v12168 = vld [vmem:[#allocation3 + $0x1b4] sm:$0xff]
      %v12169 = vld [vmem:[#allocation3 + $0x1bc] sm:$0xf]
      %v12170 = vld [vmem:[%s1] sm:$0xf]
      %v12171 = vld [vmem:[%s1 + $0x4] sm:$0xf]
      %v12172 = vld [vmem:[%s1 + $0x8] sm:$0xf]
      %v12173 = vld [vmem:[%s1 + $0xc] sm:$0xf]
      %v12174 = vld [vmem:[%s1 + $0x10] sm:$0xf]
      %v12175 = vld [vmem:[%s1 + $0x14] sm:$0xf]
      %v12176 = vld [vmem:[%s1 + $0x18] sm:$0xf]
      %v12177 = vld [vmem:[%s1 + $0x1c] sm:$0xf]
      %v12178 = vld [vmem:[%s1 + $0x20] sm:$0xf]
      %v12179 = vld [vmem:[%s1 + $0x24] sm:$0xf]
      %v12180 = vld [vmem:[%s1 + $0x28] sm:$0xf]
      %v12181 = vld [vmem:[%s1 + $0x2c] sm:$0xf]
      %v12182 = vld [vmem:[%s1 + $0x30] sm:$0xf]
      %v12183 = vld [vmem:[%s1 + $0x34] sm:$0xf]
      %v12184 = vld [vmem:[%s1 + $0x38] sm:$0xf]
      %v12185 = vld [vmem:[%s1 + $0x3c] sm:$0xf]
      %v12186 = vld [vmem:[%s1 + $0x40] sm:$0xf]
      %v12187 = vld [vmem:[%s1 + $0x44] sm:$0xf]
      %v12188 = vld [vmem:[%s1 + $0x48] sm:$0xf]
      %v12189 = vld [vmem:[%s1 + $0x4c] sm:$0xf]
      %v12190 = vld [vmem:[%s1 + $0x50] sm:$0xf]
      %v12191 = vld [vmem:[%s1 + $0x54] sm:$0xf]
      %v12192 = vld [vmem:[%s1 + $0x58] sm:$0xf]
      %v12193 = vld [vmem:[%s1 + $0x5c] sm:$0xf]
      %v12194 = vld [vmem:[%s1 + $0x60] sm:$0xf]
      %v12195 = vld [vmem:[%s1 + $0x64] sm:$0xf]
      %v12196 = vld [vmem:[%s1 + $0x68] sm:$0xf]
      %v12197 = vld [vmem:[%s1 + $0x6c] sm:$0xf]
      %v12198 = vld [vmem:[%s1 + $0x70] sm:$0xf]
      %v12199 = vld [vmem:[%s1 + $0x74] sm:$0xf]
      %v12200 = vld [vmem:[%s1 + $0x78] sm:$0xf]
      %v12201 = vld [vmem:[%s1 + $0x7c] sm:$0xf]
      %v12202 = vld [vmem:[%s1 + $0x80] sm:$0xf]
      %v12203 = vld [vmem:[%s1 + $0x84] sm:$0xf]
      %v12204 = vld [vmem:[%s1 + $0x88] sm:$0xf]
      %v12205 = vld [vmem:[%s1 + $0x8c] sm:$0xf]
      %v12206 = vld [vmem:[%s1 + $0x90] sm:$0xf]
      %v12207 = vld [vmem:[%s1 + $0x94] sm:$0xf]
      %v12208 = vld [vmem:[%s1 + $0x98] sm:$0xf]
      %v12209 = vld [vmem:[%s1 + $0x9c] sm:$0xf]
      %v12210 = vld [vmem:[%s1 + $0xa0] sm:$0xf]
      %v12211 = vld [vmem:[%s1 + $0xa4] sm:$0xf]
      %v12212 = vld [vmem:[%s1 + $0xa8] sm:$0xf]
      %v12213 = vld [vmem:[%s1 + $0xac] sm:$0xf]
      %v12214 = vld [vmem:[%s1 + $0xb0] sm:$0xf]
      %v12215 = vld [vmem:[%s1 + $0xb4] sm:$0xf]
      %v12216 = vld [vmem:[%s1 + $0xb8] sm:$0xf]
      %v12217 = vld [vmem:[%s1 + $0xbc] sm:$0xf]
      %v12218 = vld [vmem:[%s1 + $0xc0] sm:$0xf]
      %v12219 = vld [vmem:[%s1 + $0xc4] sm:$0xf]
      %v12220 = vld [vmem:[%s1 + $0xc8] sm:$0xf]
      %v12221 = vld [vmem:[%s1 + $0xcc] sm:$0xf]
      %v12222 = vld [vmem:[%s1 + $0xd0] sm:$0xf]
      %v12223 = vld [vmem:[%s1 + $0xd4] sm:$0xf]
      %v12224 = vld [vmem:[%s1 + $0xd8] sm:$0xf]
      %v12225 = vld [vmem:[%s1 + $0xdc] sm:$0xf]
      %v12226 = vld [vmem:[%s1 + $0xe0] sm:$0xf]
      %v12227 = vld [vmem:[%s1 + $0xe4] sm:$0xf]
      %v12228 = vld [vmem:[%s1 + $0xe8] sm:$0xf]
      %v12229 = vld [vmem:[%s1 + $0xec] sm:$0xf]
      %v12230 = vld [vmem:[%s1 + $0xf0] sm:$0xf]
      %v12231 = vld [vmem:[%s1 + $0xf4] sm:$0xf]
      %v12232 = vld [vmem:[%s1 + $0xf8] sm:$0xf]
      %v12233 = vld [vmem:[%s1 + $0xfc] sm:$0xf]
      %v12234 = vld [vmem:[%s1 + $0x100] sm:$0xf]
      %v12235 = vld [vmem:[%s1 + $0x104] sm:$0xf]
      %v12236 = vld [vmem:[%s1 + $0x108] sm:$0xf]
      %v12237 = vld [vmem:[%s1 + $0x10c] sm:$0xf]
      %v12238 = vld [vmem:[%s1 + $0x110] sm:$0xf]
      %v12239 = vld [vmem:[%s1 + $0x114] sm:$0xf]
      %v12240 = vld [vmem:[%s1 + $0x118] sm:$0xf]
      %v12241 = vld [vmem:[%s1 + $0x11c] sm:$0xf]
      %v12242 = vld [vmem:[%s1 + $0x120] sm:$0xf]
      %v12243 = vld [vmem:[%s1 + $0x124] sm:$0xf]
      %v12244 = vld [vmem:[%s1 + $0x128] sm:$0xf]
      %v12245 = vld [vmem:[%s1 + $0x12c] sm:$0xf]
      %v12246 = vld [vmem:[%s1 + $0x130] sm:$0xf]
      %v12247 = vld [vmem:[%s1 + $0x134] sm:$0xf]
      %v12248 = vld [vmem:[%s1 + $0x138] sm:$0xf]
      %v12249 = vld [vmem:[%s1 + $0x13c] sm:$0xf]
      %v12250 = vld [vmem:[%s1 + $0x140] sm:$0xf]
      %v12251 = vld [vmem:[%s1 + $0x144] sm:$0xf]
      %v12252 = vld [vmem:[%s1 + $0x148] sm:$0xf]
      %v12253 = vld [vmem:[%s1 + $0x14c] sm:$0xf]
      %v12254 = vld [vmem:[%s1 + $0x150] sm:$0xf]
      %v12255 = vld [vmem:[%s1 + $0x154] sm:$0xf]
      %v12256 = vld [vmem:[%s1 + $0x158] sm:$0xf]
      %v12257 = vld [vmem:[%s1 + $0x15c] sm:$0xf]
      %v12258 = vld [vmem:[%s1 + $0x160] sm:$0xf]
      %v12259 = vld [vmem:[%s1 + $0x164] sm:$0xf]
      %v12260 = vld [vmem:[%s1 + $0x168] sm:$0xf]
      %v12261 = vld [vmem:[%s1 + $0x16c] sm:$0xf]
      %v12262 = vld [vmem:[%s1 + $0x170] sm:$0xf]
      %v12263 = vld [vmem:[%s1 + $0x174] sm:$0xf]
      %v12264 = vld [vmem:[%s1 + $0x178] sm:$0xf]
      %v12265 = vld [vmem:[%s1 + $0x17c] sm:$0xf]
      %v12266 = vld [vmem:[%s1 + $0x180] sm:$0xf]
      %v12267 = vld [vmem:[%s1 + $0x184] sm:$0xf]
      %v12268 = vld [vmem:[%s1 + $0x188] sm:$0xf]
      %v12269 = vld [vmem:[%s1 + $0x18c] sm:$0xf]
      %v12270 = vld [vmem:[%s1 + $0x190] sm:$0xf]
      %v12271 = vld [vmem:[%s1 + $0x194] sm:$0xf]
      %v12272 = vld [vmem:[%s1 + $0x198] sm:$0xf]
      %v12273 = vld [vmem:[%s1 + $0x19c] sm:$0xf]
      %v12274 = vld [vmem:[%s1 + $0x1a0] sm:$0xf]
      %v12275 = vld [vmem:[%s1 + $0x1a4] sm:$0xf]
      %v12276 = vld [vmem:[%s1 + $0x1a8] sm:$0xf]
      %v12277 = vld [vmem:[%s1 + $0x1ac] sm:$0xf]
      %v12278 = vld [vmem:[%s1 + $0x1b0] sm:$0xf]
      %v12279 = vld [vmem:[%s1 + $0x1b4] sm:$0xf]
      %v12280 = vld [vmem:[%s1 + $0x1b8] sm:$0xf]
      %v12281 = vld [vmem:[%s1 + $0x1bc] sm:$0xf]
      %v12346 = vunpack.c.l.b16 %v12106
      %v12347 = vunpack.c.h.b16 %v12106
      %v12348 = vunpack.c.l.b16 %v12107
      %v12349 = vunpack.c.h.b16 %v12107
      %v12350 = vunpack.c.l.b16 %v12108
      %v12351 = vunpack.c.h.b16 %v12108
      %v12352 = vunpack.c.l.b16 %v12109
      %v12353 = vunpack.c.l.b16 %v12110
      %v12354 = vunpack.c.h.b16 %v12110
      %v12355 = vunpack.c.l.b16 %v12111
      %v12356 = vunpack.c.h.b16 %v12111
      %v12357 = vunpack.c.l.b16 %v12112
      %v12358 = vunpack.c.h.b16 %v12112
      %v12359 = vunpack.c.l.b16 %v12113
      %v12360 = vunpack.c.l.b16 %v12114
      %v12361 = vunpack.c.h.b16 %v12114
      %v12362 = vunpack.c.l.b16 %v12115
      %v12363 = vunpack.c.h.b16 %v12115
      %v12364 = vunpack.c.l.b16 %v12116
      %v12365 = vunpack.c.h.b16 %v12116
      %v12366 = vunpack.c.l.b16 %v12117
      %v12367 = vunpack.c.l.b16 %v12118
      %v12368 = vunpack.c.h.b16 %v12118
      %v12369 = vunpack.c.l.b16 %v12119
      %v12370 = vunpack.c.h.b16 %v12119
      %v12371 = vunpack.c.l.b16 %v12120
      %v12372 = vunpack.c.h.b16 %v12120
      %v12373 = vunpack.c.l.b16 %v12121
      %v12374 = vunpack.c.l.b16 %v12122
      %v12375 = vunpack.c.h.b16 %v12122
      %v12376 = vunpack.c.l.b16 %v12123
      %v12377 = vunpack.c.h.b16 %v12123
      %v12378 = vunpack.c.l.b16 %v12124
      %v12379 = vunpack.c.h.b16 %v12124
      %v12380 = vunpack.c.l.b16 %v12125
      %v12381 = vunpack.c.l.b16 %v12126
      %v12382 = vunpack.c.h.b16 %v12126
      %v12383 = vunpack.c.l.b16 %v12127
      %v12384 = vunpack.c.h.b16 %v12127
      %v12385 = vunpack.c.l.b16 %v12128
      %v12386 = vunpack.c.h.b16 %v12128
      %v12387 = vunpack.c.l.b16 %v12129
      %v12388 = vunpack.c.l.b16 %v12130
      %v12389 = vunpack.c.h.b16 %v12130
      %v12390 = vunpack.c.l.b16 %v12131
      %v12391 = vunpack.c.h.b16 %v12131
      %v12392 = vunpack.c.l.b16 %v12132
      %v12393 = vunpack.c.h.b16 %v12132
      %v12394 = vunpack.c.l.b16 %v12133
      %v12395 = vunpack.c.l.b16 %v12134
      %v12396 = vunpack.c.h.b16 %v12134
      %v12397 = vunpack.c.l.b16 %v12135
      %v12398 = vunpack.c.h.b16 %v12135
      %v12399 = vunpack.c.l.b16 %v12136
      %v12400 = vunpack.c.h.b16 %v12136
      %v12401 = vunpack.c.l.b16 %v12137
      %v12402 = vunpack.c.l.b16 %v12138
      %v12403 = vunpack.c.h.b16 %v12138
      %v12404 = vunpack.c.l.b16 %v12139
      %v12405 = vunpack.c.h.b16 %v12139
      %v12406 = vunpack.c.l.b16 %v12140
      %v12407 = vunpack.c.h.b16 %v12140
      %v12408 = vunpack.c.l.b16 %v12141
      %v12409 = vunpack.c.l.b16 %v12142
      %v12410 = vunpack.c.h.b16 %v12142
      %v12411 = vunpack.c.l.b16 %v12143
      %v12412 = vunpack.c.h.b16 %v12143
      %v12413 = vunpack.c.l.b16 %v12144
      %v12414 = vunpack.c.h.b16 %v12144
      %v12415 = vunpack.c.l.b16 %v12145
      %v12416 = vunpack.c.l.b16 %v12146
      %v12417 = vunpack.c.h.b16 %v12146
      %v12418 = vunpack.c.l.b16 %v12147
      %v12419 = vunpack.c.h.b16 %v12147
      %v12420 = vunpack.c.l.b16 %v12148
      %v12421 = vunpack.c.h.b16 %v12148
      %v12422 = vunpack.c.l.b16 %v12149
      %v12423 = vunpack.c.l.b16 %v12150
      %v12424 = vunpack.c.h.b16 %v12150
      %v12425 = vunpack.c.l.b16 %v12151
      %v12426 = vunpack.c.h.b16 %v12151
      %v12427 = vunpack.c.l.b16 %v12152
      %v12428 = vunpack.c.h.b16 %v12152
      %v12429 = vunpack.c.l.b16 %v12153
      %v12430 = vunpack.c.l.b16 %v12154
      %v12431 = vunpack.c.h.b16 %v12154
      %v12432 = vunpack.c.l.b16 %v12155
      %v12433 = vunpack.c.h.b16 %v12155
      %v12434 = vunpack.c.l.b16 %v12156
      %v12435 = vunpack.c.h.b16 %v12156
      %v12436 = vunpack.c.l.b16 %v12157
      %v12437 = vunpack.c.l.b16 %v12158
      %v12438 = vunpack.c.h.b16 %v12158
      %v12439 = vunpack.c.l.b16 %v12159
      %v12440 = vunpack.c.h.b16 %v12159
      %v12441 = vunpack.c.l.b16 %v12160
      %v12442 = vunpack.c.h.b16 %v12160
      %v12443 = vunpack.c.l.b16 %v12161
      %v12444 = vunpack.c.l.b16 %v12162
      %v12445 = vunpack.c.h.b16 %v12162
      %v12446 = vunpack.c.l.b16 %v12163
      %v12447 = vunpack.c.h.b16 %v12163
      %v12448 = vunpack.c.l.b16 %v12164
      %v12449 = vunpack.c.h.b16 %v12164
      %v12450 = vunpack.c.l.b16 %v12165
      %v12451 = vunpack.c.l.b16 %v12166
      %v12452 = vunpack.c.h.b16 %v12166
      %v12453 = vunpack.c.l.b16 %v12167
      %v12454 = vunpack.c.h.b16 %v12167
      %v12455 = vunpack.c.l.b16 %v12168
      %v12456 = vunpack.c.h.b16 %v12168
      %v12457 = vunpack.c.l.b16 %v12169
      %v12458 = vpack.c.b16 %v12353, %v12346
      %v12459 = vpack.c.b16 %v12354, %v12347
      %v12460 = vpack.c.b16 %v12355, %v12348
      %v12461 = vpack.c.b16 %v12356, %v12349
      %v12462 = vpack.c.b16 %v12357, %v12350
      %v12463 = vpack.c.b16 %v12358, %v12351
      %v12464 = vpack.c.b16 %v12359, %v12352
      %v12465 = vpack.c.b16 %v12367, %v12360
      %v12466 = vpack.c.b16 %v12368, %v12361
      %v12467 = vpack.c.b16 %v12369, %v12362
      %v12468 = vpack.c.b16 %v12370, %v12363
      %v12469 = vpack.c.b16 %v12371, %v12364
      %v12470 = vpack.c.b16 %v12372, %v12365
      %v12471 = vpack.c.b16 %v12373, %v12366
      %v12472 = vpack.c.b16 %v12381, %v12374
      %v12473 = vpack.c.b16 %v12382, %v12375
      %v12474 = vpack.c.b16 %v12383, %v12376
      %v12475 = vpack.c.b16 %v12384, %v12377
      %v12476 = vpack.c.b16 %v12385, %v12378
      %v12477 = vpack.c.b16 %v12386, %v12379
      %v12478 = vpack.c.b16 %v12387, %v12380
      %v12479 = vpack.c.b16 %v12395, %v12388
      %v12480 = vpack.c.b16 %v12396, %v12389
      %v12481 = vpack.c.b16 %v12397, %v12390
      %v12482 = vpack.c.b16 %v12398, %v12391
      %v12483 = vpack.c.b16 %v12399, %v12392
      %v12484 = vpack.c.b16 %v12400, %v12393
      %v12485 = vpack.c.b16 %v12401, %v12394
      %v12486 = vpack.c.b16 %v12409, %v12402
      %v12487 = vpack.c.b16 %v12410, %v12403
      %v12488 = vpack.c.b16 %v12411, %v12404
      %v12489 = vpack.c.b16 %v12412, %v12405
      %v12490 = vpack.c.b16 %v12413, %v12406
      %v12491 = vpack.c.b16 %v12414, %v12407
      %v12492 = vpack.c.b16 %v12415, %v12408
      %v12493 = vpack.c.b16 %v12423, %v12416
      %v12494 = vpack.c.b16 %v12424, %v12417
      %v12495 = vpack.c.b16 %v12425, %v12418
      %v12496 = vpack.c.b16 %v12426, %v12419
      %v12497 = vpack.c.b16 %v12427, %v12420
      %v12498 = vpack.c.b16 %v12428, %v12421
      %v12499 = vpack.c.b16 %v12429, %v12422
      %v12500 = vpack.c.b16 %v12437, %v12430
      %v12501 = vpack.c.b16 %v12438, %v12431
      %v12502 = vpack.c.b16 %v12439, %v12432
      %v12503 = vpack.c.b16 %v12440, %v12433
      %v12504 = vpack.c.b16 %v12441, %v12434
      %v12505 = vpack.c.b16 %v12442, %v12435
      %v12506 = vpack.c.b16 %v12443, %v12436
      %v12507 = vpack.c.b16 %v12451, %v12444
      %v12508 = vpack.c.b16 %v12452, %v12445
      %v12509 = vpack.c.b16 %v12453, %v12446
      %v12510 = vpack.c.b16 %v12454, %v12447
      %v12511 = vpack.c.b16 %v12455, %v12448
      %v12512 = vpack.c.b16 %v12456, %v12449
      %v12513 = vpack.c.b16 %v12457, %v12450
      %v12682 = vunpack.c.l.b16 %v12170
      %v12683 = vunpack.c.l.b16 %v12171
      %v12684 = vunpack.c.l.b16 %v12172
      %v12685 = vunpack.c.l.b16 %v12173
      %v12686 = vunpack.c.l.b16 %v12174
      %v12687 = vunpack.c.l.b16 %v12175
      %v12688 = vunpack.c.l.b16 %v12176
      %v12689 = vunpack.c.l.b16 %v12177
      %v12690 = vunpack.c.l.b16 %v12178
      %v12691 = vunpack.c.l.b16 %v12179
      %v12692 = vunpack.c.l.b16 %v12180
      %v12693 = vunpack.c.l.b16 %v12181
      %v12694 = vunpack.c.l.b16 %v12182
      %v12695 = vunpack.c.l.b16 %v12183
      %v12696 = vunpack.c.l.b16 %v12184
      %v12697 = vunpack.c.l.b16 %v12185
      %v12698 = vunpack.c.l.b16 %v12186
      %v12699 = vunpack.c.l.b16 %v12187
      %v12700 = vunpack.c.l.b16 %v12188
      %v12701 = vunpack.c.l.b16 %v12189
      %v12702 = vunpack.c.l.b16 %v12190
      %v12703 = vunpack.c.l.b16 %v12191
      %v12704 = vunpack.c.l.b16 %v12192
      %v12705 = vunpack.c.l.b16 %v12193
      %v12706 = vunpack.c.l.b16 %v12194
      %v12707 = vunpack.c.l.b16 %v12195
      %v12708 = vunpack.c.l.b16 %v12196
      %v12709 = vunpack.c.l.b16 %v12197
      %v12710 = vunpack.c.l.b16 %v12198
      %v12711 = vunpack.c.l.b16 %v12199
      %v12712 = vunpack.c.l.b16 %v12200
      %v12713 = vunpack.c.l.b16 %v12201
      %v12714 = vunpack.c.l.b16 %v12202
      %v12715 = vunpack.c.l.b16 %v12203
      %v12716 = vunpack.c.l.b16 %v12204
      %v12717 = vunpack.c.l.b16 %v12205
      %v12718 = vunpack.c.l.b16 %v12206
      %v12719 = vunpack.c.l.b16 %v12207
      %v12720 = vunpack.c.l.b16 %v12208
      %v12721 = vunpack.c.l.b16 %v12209
      %v12722 = vunpack.c.l.b16 %v12210
      %v12723 = vunpack.c.l.b16 %v12211
      %v12724 = vunpack.c.l.b16 %v12212
      %v12725 = vunpack.c.l.b16 %v12213
      %v12726 = vunpack.c.l.b16 %v12214
      %v12727 = vunpack.c.l.b16 %v12215
      %v12728 = vunpack.c.l.b16 %v12216
      %v12729 = vunpack.c.l.b16 %v12217
      %v12730 = vunpack.c.l.b16 %v12218
      %v12731 = vunpack.c.l.b16 %v12219
      %v12732 = vunpack.c.l.b16 %v12220
      %v12733 = vunpack.c.l.b16 %v12221
      %v12734 = vunpack.c.l.b16 %v12222
      %v12735 = vunpack.c.l.b16 %v12223
      %v12736 = vunpack.c.l.b16 %v12224
      %v12737 = vunpack.c.l.b16 %v12225
      %v12738 = vunpack.c.l.b16 %v12226
      %v12739 = vunpack.c.l.b16 %v12227
      %v12740 = vunpack.c.l.b16 %v12228
      %v12741 = vunpack.c.l.b16 %v12229
      %v12742 = vunpack.c.l.b16 %v12230
      %v12743 = vunpack.c.l.b16 %v12231
      %v12744 = vunpack.c.l.b16 %v12232
      %v12745 = vunpack.c.l.b16 %v12233
      %v12746 = vunpack.c.l.b16 %v12234
      %v12747 = vunpack.c.l.b16 %v12235
      %v12748 = vunpack.c.l.b16 %v12236
      %v12749 = vunpack.c.l.b16 %v12237
      %v12750 = vunpack.c.l.b16 %v12238
      %v12751 = vunpack.c.l.b16 %v12239
      %v12752 = vunpack.c.l.b16 %v12240
      %v12753 = vunpack.c.l.b16 %v12241
      %v12754 = vunpack.c.l.b16 %v12242
      %v12755 = vunpack.c.l.b16 %v12243
      %v12756 = vunpack.c.l.b16 %v12244
      %v12757 = vunpack.c.l.b16 %v12245
      %v12758 = vunpack.c.l.b16 %v12246
      %v12759 = vunpack.c.l.b16 %v12247
      %v12760 = vunpack.c.l.b16 %v12248
      %v12761 = vunpack.c.l.b16 %v12249
      %v12762 = vunpack.c.l.b16 %v12250
      %v12763 = vunpack.c.l.b16 %v12251
      %v12764 = vunpack.c.l.b16 %v12252
      %v12765 = vunpack.c.l.b16 %v12253
      %v12766 = vunpack.c.l.b16 %v12254
      %v12767 = vunpack.c.l.b16 %v12255
      %v12768 = vunpack.c.l.b16 %v12256
      %v12769 = vunpack.c.l.b16 %v12257
      %v12770 = vunpack.c.l.b16 %v12258
      %v12771 = vunpack.c.l.b16 %v12259
      %v12772 = vunpack.c.l.b16 %v12260
      %v12773 = vunpack.c.l.b16 %v12261
      %v12774 = vunpack.c.l.b16 %v12262
      %v12775 = vunpack.c.l.b16 %v12263
      %v12776 = vunpack.c.l.b16 %v12264
      %v12777 = vunpack.c.l.b16 %v12265
      %v12778 = vunpack.c.l.b16 %v12266
      %v12779 = vunpack.c.l.b16 %v12267
      %v12780 = vunpack.c.l.b16 %v12268
      %v12781 = vunpack.c.l.b16 %v12269
      %v12782 = vunpack.c.l.b16 %v12270
      %v12783 = vunpack.c.l.b16 %v12271
      %v12784 = vunpack.c.l.b16 %v12272
      %v12785 = vunpack.c.l.b16 %v12273
      %v12786 = vunpack.c.l.b16 %v12274
      %v12787 = vunpack.c.l.b16 %v12275
      %v12788 = vunpack.c.l.b16 %v12276
      %v12789 = vunpack.c.l.b16 %v12277
      %v12790 = vunpack.c.l.b16 %v12278
      %v12791 = vunpack.c.l.b16 %v12279
      %v12792 = vunpack.c.l.b16 %v12280
      %v12793 = vunpack.c.l.b16 %v12281
      %v12794 = vpack.c.b16 %v12683, %v12682
      %v12795 = vpack.c.b16 %v12685, %v12684
      %v12796 = vpack.c.b16 %v12687, %v12686
      %v12797 = vpack.c.b16 %v12689, %v12688
      %v12798 = vpack.c.b16 %v12691, %v12690
      %v12799 = vpack.c.b16 %v12693, %v12692
      %v12800 = vpack.c.b16 %v12695, %v12694
      %v12801 = vpack.c.b16 %v12697, %v12696
      %v12802 = vpack.c.b16 %v12699, %v12698
      %v12803 = vpack.c.b16 %v12701, %v12700
      %v12804 = vpack.c.b16 %v12703, %v12702
      %v12805 = vpack.c.b16 %v12705, %v12704
      %v12806 = vpack.c.b16 %v12707, %v12706
      %v12807 = vpack.c.b16 %v12709, %v12708
      %v12808 = vpack.c.b16 %v12711, %v12710
      %v12809 = vpack.c.b16 %v12713, %v12712
      %v12810 = vpack.c.b16 %v12715, %v12714
      %v12811 = vpack.c.b16 %v12717, %v12716
      %v12812 = vpack.c.b16 %v12719, %v12718
      %v12813 = vpack.c.b16 %v12721, %v12720
      %v12814 = vpack.c.b16 %v12723, %v12722
      %v12815 = vpack.c.b16 %v12725, %v12724
      %v12816 = vpack.c.b16 %v12727, %v12726
      %v12817 = vpack.c.b16 %v12729, %v12728
      %v12818 = vpack.c.b16 %v12731, %v12730
      %v12819 = vpack.c.b16 %v12733, %v12732
      %v12820 = vpack.c.b16 %v12735, %v12734
      %v12821 = vpack.c.b16 %v12737, %v12736
      %v12822 = vpack.c.b16 %v12739, %v12738
      %v12823 = vpack.c.b16 %v12741, %v12740
      %v12824 = vpack.c.b16 %v12743, %v12742
      %v12825 = vpack.c.b16 %v12745, %v12744
      %v12826 = vpack.c.b16 %v12747, %v12746
      %v12827 = vpack.c.b16 %v12749, %v12748
      %v12828 = vpack.c.b16 %v12751, %v12750
      %v12829 = vpack.c.b16 %v12753, %v12752
      %v12830 = vpack.c.b16 %v12755, %v12754
      %v12831 = vpack.c.b16 %v12757, %v12756
      %v12832 = vpack.c.b16 %v12759, %v12758
      %v12833 = vpack.c.b16 %v12761, %v12760
      %v12834 = vpack.c.b16 %v12763, %v12762
      %v12835 = vpack.c.b16 %v12765, %v12764
      %v12836 = vpack.c.b16 %v12767, %v12766
      %v12837 = vpack.c.b16 %v12769, %v12768
      %v12838 = vpack.c.b16 %v12771, %v12770
      %v12839 = vpack.c.b16 %v12773, %v12772
      %v12840 = vpack.c.b16 %v12775, %v12774
      %v12841 = vpack.c.b16 %v12777, %v12776
      %v12842 = vpack.c.b16 %v12779, %v12778
      %v12843 = vpack.c.b16 %v12781, %v12780
      %v12844 = vpack.c.b16 %v12783, %v12782
      %v12845 = vpack.c.b16 %v12785, %v12784
      %v12846 = vpack.c.b16 %v12787, %v12786
      %v12847 = vpack.c.b16 %v12789, %v12788
      %v12848 = vpack.c.b16 %v12791, %v12790
      %v12849 = vpack.c.b16 %v12793, %v12792
      %12906 = vmatprep.subr.bf16.mxu0 0
      %12907 = vmatpush1.bf16.msra.mxu0 %v12801
      %12908 = vmatprep.subr.bf16.mxu0 0
      %12909 = vmatpush1.bf16.msra.mxu0 %v12800
      %12910 = vmatprep.subr.bf16.mxu0 0
      %12911 = vmatpush1.bf16.msra.mxu0 %v12799
      %12912 = vmatprep.subr.bf16.mxu0 0
      %12913 = vmatpush1.bf16.msra.mxu0 %v12798
      %12914 = vmatprep.subr.bf16.mxu0 0
      %12915 = vmatpush1.bf16.msra.mxu0 %v12797
      %12916 = vmatprep.subr.bf16.mxu0 0
      %12917 = vmatpush1.bf16.msra.mxu0 %v12796
      %12918 = vmatprep.subr.bf16.mxu0 0
      %12919 = vmatpush1.bf16.msra.mxu0 %v12795
      %12920 = vmatprep.subr.bf16.mxu0 0
      %12921 = vmatpush1.bf16.msra.mxu0 %v12794
      %12922 = vmatprep.subr.bf16.mxu0 0
      %12923 = vmatpush2.bf16.msra.mxu0 %v12809
      %12924 = vmatprep.subr.bf16.mxu0 0
      %12925 = vmatpush2.bf16.msra.mxu0 %v12808
      %12926 = vmatprep.subr.bf16.mxu0 0
      %12927 = vmatpush2.bf16.msra.mxu0 %v12807
      %12928 = vmatprep.subr.bf16.mxu0 0
      %12929 = vmatpush2.bf16.msra.mxu0 %v12806
      %12930 = vmatprep.subr.bf16.mxu0 0
      %12931 = vmatpush2.bf16.msra.mxu0 %v12805
      %12932 = vmatprep.subr.bf16.mxu0 0
      %12933 = vmatpush2.bf16.msra.mxu0 %v12804
      %12934 = vmatprep.subr.bf16.mxu0 0
      %12935 = vmatpush2.bf16.msra.mxu0 %v12803
      %12936 = vmatprep.subr.bf16.mxu0 0
      %12937 = vmatpush2.bf16.msra.mxu0 %v12802
      %12938 = vmatprep.mubr.bf16.mxu0 %v12459
      %12939 = vmatmul.mubr.bf16.gmra.mxu0 %v12458
      %v12940 = vpop.f32.mrf.mxu0
      %v12941 = vadd.f32 0.0, %v12940
      %v12942 = vpop.f32.mrf.mxu0
      %v12943 = vpop.f32.mrf.mxu0
      %v12944 = vadd.f32 0.0, %v12943
      %v12945 = vpop.f32.mrf.mxu0
      %12946 = vmatprep.mubr.bf16.mxu0 %v12466
      %12947 = vmatmul.mubr.bf16.gmra.mxu0 %v12465
      %v12948 = vpop.f32.mrf.mxu0
      %v12949 = vadd.f32 0.0, %v12948
      %v12950 = vpop.f32.mrf.mxu0
      %v12951 = vpop.f32.mrf.mxu0
      %v12952 = vadd.f32 0.0, %v12951
      %v12953 = vpop.f32.mrf.mxu0
      %12954 = vmatprep.mubr.bf16.mxu0 %v12473
      %12955 = vmatmul.mubr.bf16.gmra.mxu0 %v12472
      %v12956 = vpop.f32.mrf.mxu0
      %v12957 = vadd.f32 0.0, %v12956
      %v12958 = vpop.f32.mrf.mxu0
      %v12959 = vpop.f32.mrf.mxu0
      %v12960 = vadd.f32 0.0, %v12959
      %v12961 = vpop.f32.mrf.mxu0
      %12962 = vmatprep.mubr.bf16.mxu0 %v12480
      %12963 = vmatmul.mubr.bf16.gmra.mxu0 %v12479
      %v12964 = vpop.f32.mrf.mxu0
      %v12965 = vadd.f32 0.0, %v12964
      %v12966 = vpop.f32.mrf.mxu0
      %v12967 = vpop.f32.mrf.mxu0
      %v12968 = vadd.f32 0.0, %v12967
      %v12969 = vpop.f32.mrf.mxu0
      %12970 = vmatprep.mubr.bf16.mxu0 %v12487
      %12971 = vmatmul.mubr.bf16.gmra.mxu0 %v12486
      %v12972 = vpop.f32.mrf.mxu0
      %v12973 = vadd.f32 0.0, %v12972
      %v12974 = vpop.f32.mrf.mxu0
      %v12975 = vpop.f32.mrf.mxu0
      %v12976 = vadd.f32 0.0, %v12975
      %v12977 = vpop.f32.mrf.mxu0
      %12978 = vmatprep.mubr.bf16.mxu0 %v12494
      %12979 = vmatmul.mubr.bf16.gmra.mxu0 %v12493
      %v12980 = vpop.f32.mrf.mxu0
      %v12981 = vadd.f32 0.0, %v12980
      %v12982 = vpop.f32.mrf.mxu0
      %v12983 = vpop.f32.mrf.mxu0
      %v12984 = vadd.f32 0.0, %v12983
      %v12985 = vpop.f32.mrf.mxu0
      %12986 = vmatprep.mubr.bf16.mxu0 %v12501
      %12987 = vmatmul.mubr.bf16.gmra.mxu0 %v12500
      %v12988 = vpop.f32.mrf.mxu0
      %v12989 = vadd.f32 0.0, %v12988
      %v12990 = vpop.f32.mrf.mxu0
      %v12991 = vpop.f32.mrf.mxu0
      %v12992 = vadd.f32 0.0, %v12991
      %v12993 = vpop.f32.mrf.mxu0
      %12994 = vmatprep.mubr.bf16.mxu0 %v12508
      %12995 = vmatmul.mubr.bf16.gmra.mxu0 %v12507
      %v12996 = vpop.f32.mrf.mxu0
      %v12997 = vadd.f32 0.0, %v12996
      %v12998 = vpop.f32.mrf.mxu0
      %v12999 = vpop.f32.mrf.mxu0
      %v13000 = vadd.f32 0.0, %v12999
      %v13001 = vpop.f32.mrf.mxu0
      %13002 = vdwg.mxu0
      %13003 = vmatprep.subr.bf16.mxu0 0
      %13004 = vmatpush1.bf16.msra.mxu0 %v12817
      %13005 = vmatprep.subr.bf16.mxu0 0
      %13006 = vmatpush1.bf16.msra.mxu0 %v12816
      %13007 = vmatprep.subr.bf16.mxu0 0
      %13008 = vmatpush1.bf16.msra.mxu0 %v12815
      %13009 = vmatprep.subr.bf16.mxu0 0
      %13010 = vmatpush1.bf16.msra.mxu0 %v12814
      %13011 = vmatprep.subr.bf16.mxu0 0
      %13012 = vmatpush1.bf16.msra.mxu0 %v12813
      %13013 = vmatprep.subr.bf16.mxu0 0
      %13014 = vmatpush1.bf16.msra.mxu0 %v12812
      %13015 = vmatprep.subr.bf16.mxu0 0
      %13016 = vmatpush1.bf16.msra.mxu0 %v12811
      %13017 = vmatprep.subr.bf16.mxu0 0
      %13018 = vmatpush1.bf16.msra.mxu0 %v12810
      %13019 = vmatprep.subr.bf16.mxu0 0
      %13020 = vmatpush2.bf16.msra.mxu0 %v12825
      %13021 = vmatprep.subr.bf16.mxu0 0
      %13022 = vmatpush2.bf16.msra.mxu0 %v12824
      %13023 = vmatprep.subr.bf16.mxu0 0
      %13024 = vmatpush2.bf16.msra.mxu0 %v12823
      %13025 = vmatprep.subr.bf16.mxu0 0
      %13026 = vmatpush2.bf16.msra.mxu0 %v12822
      %13027 = vmatprep.subr.bf16.mxu0 0
      %13028 = vmatpush2.bf16.msra.mxu0 %v12821
      %13029 = vmatprep.subr.bf16.mxu0 0
      %13030 = vmatpush2.bf16.msra.mxu0 %v12820
      %13031 = vmatprep.subr.bf16.mxu0 0
      %13032 = vmatpush2.bf16.msra.mxu0 %v12819
      %13033 = vmatprep.subr.bf16.mxu0 0
      %13034 = vmatpush2.bf16.msra.mxu0 %v12818
      %13035 = vmatprep.mubr.bf16.mxu0 %v12461
      %13036 = vmatmul.mubr.bf16.gmra.mxu0 %v12460
      %v13037 = vpop.f32.mrf.mxu0
      %v13038 = vadd.f32 %v12941, %v13037
      %v13039 = vpop.f32.mrf.mxu0
      %v13040 = vpop.f32.mrf.mxu0
      %v13041 = vadd.f32 %v12944, %v13040
      %v13042 = vpop.f32.mrf.mxu0
      %13043 = vmatprep.mubr.bf16.mxu0 %v12468
      %13044 = vmatmul.mubr.bf16.gmra.mxu0 %v12467
      %v13045 = vpop.f32.mrf.mxu0
      %v13046 = vadd.f32 %v12949, %v13045
      %v13047 = vpop.f32.mrf.mxu0
      %v13048 = vpop.f32.mrf.mxu0
      %v13049 = vadd.f32 %v12952, %v13048
      %v13050 = vpop.f32.mrf.mxu0
      %13051 = vmatprep.mubr.bf16.mxu0 %v12475
      %13052 = vmatmul.mubr.bf16.gmra.mxu0 %v12474
      %v13053 = vpop.f32.mrf.mxu0
      %v13054 = vadd.f32 %v12957, %v13053
      %v13055 = vpop.f32.mrf.mxu0
      %v13056 = vpop.f32.mrf.mxu0
      %v13057 = vadd.f32 %v12960, %v13056
      %v13058 = vpop.f32.mrf.mxu0
      %13059 = vmatprep.mubr.bf16.mxu0 %v12482
      %13060 = vmatmul.mubr.bf16.gmra.mxu0 %v12481
      %v13061 = vpop.f32.mrf.mxu0
      %v13062 = vadd.f32 %v12965, %v13061
      %v13063 = vpop.f32.mrf.mxu0
      %v13064 = vpop.f32.mrf.mxu0
      %v13065 = vadd.f32 %v12968, %v13064
      %v13066 = vpop.f32.mrf.mxu0
      %13067 = vmatprep.mubr.bf16.mxu0 %v12489
      %13068 = vmatmul.mubr.bf16.gmra.mxu0 %v12488
      %v13069 = vpop.f32.mrf.mxu0
      %v13070 = vadd.f32 %v12973, %v13069
      %v13071 = vpop.f32.mrf.mxu0
      %v13072 = vpop.f32.mrf.mxu0
      %v13073 = vadd.f32 %v12976, %v13072
      %v13074 = vpop.f32.mrf.mxu0
      %13075 = vmatprep.mubr.bf16.mxu0 %v12496
      %13076 = vmatmul.mubr.bf16.gmra.mxu0 %v12495
      %v13077 = vpop.f32.mrf.mxu0
      %v13078 = vadd.f32 %v12981, %v13077
      %v13079 = vpop.f32.mrf.mxu0
      %v13080 = vpop.f32.mrf.mxu0
      %v13081 = vadd.f32 %v12984, %v13080
      %v13082 = vpop.f32.mrf.mxu0
      %13083 = vmatprep.mubr.bf16.mxu0 %v12503
      %13084 = vmatmul.mubr.bf16.gmra.mxu0 %v12502
      %v13085 = vpop.f32.mrf.mxu0
      %v13086 = vadd.f32 %v12989, %v13085
      %v13087 = vpop.f32.mrf.mxu0
      %v13088 = vpop.f32.mrf.mxu0
      %v13089 = vadd.f32 %v12992, %v13088
      %v13090 = vpop.f32.mrf.mxu0
      %13091 = vmatprep.mubr.bf16.mxu0 %v12510
      %13092 = vmatmul.mubr.bf16.gmra.mxu0 %v12509
      %v13093 = vpop.f32.mrf.mxu0
      %v13094 = vadd.f32 %v12997, %v13093
      %v13095 = vpop.f32.mrf.mxu0
      %v13096 = vpop.f32.mrf.mxu0
      %v13097 = vadd.f32 %v13000, %v13096
      %v13098 = vpop.f32.mrf.mxu0
      %13099 = vdwg.mxu0
      %13100 = vmatprep.subr.bf16.mxu0 0
      %13101 = vmatpush1.bf16.msra.mxu0 %v12833
      %13102 = vmatprep.subr.bf16.mxu0 0
      %13103 = vmatpush1.bf16.msra.mxu0 %v12832
      %13104 = vmatprep.subr.bf16.mxu0 0
      %13105 = vmatpush1.bf16.msra.mxu0 %v12831
      %13106 = vmatprep.subr.bf16.mxu0 0
      %13107 = vmatpush1.bf16.msra.mxu0 %v12830
      %13108 = vmatprep.subr.bf16.mxu0 0
      %13109 = vmatpush1.bf16.msra.mxu0 %v12829
      %13110 = vmatprep.subr.bf16.mxu0 0
      %13111 = vmatpush1.bf16.msra.mxu0 %v12828
      %13112 = vmatprep.subr.bf16.mxu0 0
      %13113 = vmatpush1.bf16.msra.mxu0 %v12827
      %13114 = vmatprep.subr.bf16.mxu0 0
      %13115 = vmatpush1.bf16.msra.mxu0 %v12826
      %13116 = vmatprep.subr.bf16.mxu0 0
      %13117 = vmatpush2.bf16.msra.mxu0 %v12841
      %13118 = vmatprep.subr.bf16.mxu0 0
      %13119 = vmatpush2.bf16.msra.mxu0 %v12840
      %13120 = vmatprep.subr.bf16.mxu0 0
      %13121 = vmatpush2.bf16.msra.mxu0 %v12839
      %13122 = vmatprep.subr.bf16.mxu0 0
      %13123 = vmatpush2.bf16.msra.mxu0 %v12838
      %13124 = vmatprep.subr.bf16.mxu0 0
      %13125 = vmatpush2.bf16.msra.mxu0 %v12837
      %13126 = vmatprep.subr.bf16.mxu0 0
      %13127 = vmatpush2.bf16.msra.mxu0 %v12836
      %13128 = vmatprep.subr.bf16.mxu0 0
      %13129 = vmatpush2.bf16.msra.mxu0 %v12835
      %13130 = vmatprep.subr.bf16.mxu0 0
      %13131 = vmatpush2.bf16.msra.mxu0 %v12834
      %13132 = vmatprep.mubr.bf16.mxu0 %v12463
      %13133 = vmatmul.mubr.bf16.gmra.mxu0 %v12462
      %v13134 = vpop.f32.mrf.mxu0
      %v13135 = vadd.f32 %v13038, %v13134
      %v13136 = vpop.f32.mrf.mxu0
      %v13137 = vpop.f32.mrf.mxu0
      %v13138 = vadd.f32 %v13041, %v13137
      %v13139 = vpop.f32.mrf.mxu0
      %13140 = vmatprep.mubr.bf16.mxu0 %v12470
      %13141 = vmatmul.mubr.bf16.gmra.mxu0 %v12469
      %v13142 = vpop.f32.mrf.mxu0
      %v13143 = vadd.f32 %v13046, %v13142
      %v13144 = vpop.f32.mrf.mxu0
      %v13145 = vpop.f32.mrf.mxu0
      %v13146 = vadd.f32 %v13049, %v13145
      %v13147 = vpop.f32.mrf.mxu0
      %13148 = vmatprep.mubr.bf16.mxu0 %v12477
      %13149 = vmatmul.mubr.bf16.gmra.mxu0 %v12476
      %v13150 = vpop.f32.mrf.mxu0
      %v13151 = vadd.f32 %v13054, %v13150
      %v13152 = vpop.f32.mrf.mxu0
      %v13153 = vpop.f32.mrf.mxu0
      %v13154 = vadd.f32 %v13057, %v13153
      %v13155 = vpop.f32.mrf.mxu0
      %13156 = vmatprep.mubr.bf16.mxu0 %v12484
      %13157 = vmatmul.mubr.bf16.gmra.mxu0 %v12483
      %v13158 = vpop.f32.mrf.mxu0
      %v13159 = vadd.f32 %v13062, %v13158
      %v13160 = vpop.f32.mrf.mxu0
      %v13161 = vpop.f32.mrf.mxu0
      %v13162 = vadd.f32 %v13065, %v13161
      %v13163 = vpop.f32.mrf.mxu0
      %13164 = vmatprep.mubr.bf16.mxu0 %v12491
      %13165 = vmatmul.mubr.bf16.gmra.mxu0 %v12490
      %v13166 = vpop.f32.mrf.mxu0
      %v13167 = vadd.f32 %v13070, %v13166
      %v13168 = vpop.f32.mrf.mxu0
      %v13169 = vpop.f32.mrf.mxu0
      %v13170 = vadd.f32 %v13073, %v13169
      %v13171 = vpop.f32.mrf.mxu0
      %13172 = vmatprep.mubr.bf16.mxu0 %v12498
      %13173 = vmatmul.mubr.bf16.gmra.mxu0 %v12497
      %v13174 = vpop.f32.mrf.mxu0
      %v13175 = vadd.f32 %v13078, %v13174
      %v13176 = vpop.f32.mrf.mxu0
      %v13177 = vpop.f32.mrf.mxu0
      %v13178 = vadd.f32 %v13081, %v13177
      %v13179 = vpop.f32.mrf.mxu0
      %13180 = vmatprep.mubr.bf16.mxu0 %v12505
      %13181 = vmatmul.mubr.bf16.gmra.mxu0 %v12504
      %v13182 = vpop.f32.mrf.mxu0
      %v13183 = vadd.f32 %v13086, %v13182
      %v13184 = vpop.f32.mrf.mxu0
      %v13185 = vpop.f32.mrf.mxu0
      %v13186 = vadd.f32 %v13089, %v13185
      %v13187 = vpop.f32.mrf.mxu0
      %13188 = vmatprep.mubr.bf16.mxu0 %v12512
      %13189 = vmatmul.mubr.bf16.gmra.mxu0 %v12511
      %v13190 = vpop.f32.mrf.mxu0
      %v13191 = vadd.f32 %v13094, %v13190
      %v13192 = vpop.f32.mrf.mxu0
      %v13193 = vpop.f32.mrf.mxu0
      %v13194 = vadd.f32 %v13097, %v13193
      %v13195 = vpop.f32.mrf.mxu0
      %13196 = vdwg.mxu0
      %13197 = vmatprep.subr.bf16.mxu0 0
      %13198 = vmatpush1.bf16.msra.mxu0 %v12849
      %13199 = vmatprep.subr.bf16.mxu0 0
      %13200 = vmatpush1.bf16.msra.mxu0 %v12848
      %13201 = vmatprep.subr.bf16.mxu0 0
      %13202 = vmatpush1.bf16.msra.mxu0 %v12847
      %13203 = vmatprep.subr.bf16.mxu0 0
      %13204 = vmatpush1.bf16.msra.mxu0 %v12846
      %13205 = vmatprep.subr.bf16.mxu0 0
      %13206 = vmatpush1.bf16.msra.mxu0 %v12845
      %13207 = vmatprep.subr.bf16.mxu0 0
      %13208 = vmatpush1.bf16.msra.mxu0 %v12844
      %13209 = vmatprep.subr.bf16.mxu0 0
      %13210 = vmatpush1.bf16.msra.mxu0 %v12843
      %13211 = vmatprep.subr.bf16.mxu0 0
      %13212 = vmatpush1.bf16.msra.mxu0 %v12842
      %13213 = vmatprep.subr.bf16.mxu0 0
      %13214 = vmatpush2.bf16.msra.mxu0 0
      %13215 = vmatprep.subr.bf16.mxu0 0
      %13216 = vmatpush2.bf16.msra.mxu0 0
      %13217 = vmatprep.subr.bf16.mxu0 0
      %13218 = vmatpush2.bf16.msra.mxu0 0
      %13219 = vmatprep.subr.bf16.mxu0 0
      %13220 = vmatpush2.bf16.msra.mxu0 0
      %13221 = vmatprep.subr.bf16.mxu0 0
      %13222 = vmatpush2.bf16.msra.mxu0 0
      %13223 = vmatprep.subr.bf16.mxu0 0
      %13224 = vmatpush2.bf16.msra.mxu0 0
      %13225 = vmatprep.subr.bf16.mxu0 0
      %13226 = vmatpush2.bf16.msra.mxu0 0
      %13227 = vmatprep.subr.bf16.mxu0 0
      %13228 = vmatpush2.bf16.msra.mxu0 0
      %13229 = vmatprep.mubr.bf16.mxu0 0
      %13230 = vmatmul.mubr.bf16.gmra.mxu0 %v12464
      %v13231 = vpop.f32.mrf.mxu0
      %v13232 = vadd.f32 %v13135, %v13231
      %v13233 = vpop.f32.mrf.mxu0
      %v13234 = vpop.f32.mrf.mxu0
      %v13235 = vadd.f32 %v13138, %v13234
      %v13236 = vpop.f32.mrf.mxu0
      %13237 = vmatprep.mubr.bf16.mxu0 0
      %13238 = vmatmul.mubr.bf16.gmra.mxu0 %v12471
      %v13239 = vpop.f32.mrf.mxu0
      %v13240 = vadd.f32 %v13143, %v13239
      %v13241 = vpop.f32.mrf.mxu0
      %v13242 = vpop.f32.mrf.mxu0
      %v13243 = vadd.f32 %v13146, %v13242
      %v13244 = vpop.f32.mrf.mxu0
      %13245 = vmatprep.mubr.bf16.mxu0 0
      %13246 = vmatmul.mubr.bf16.gmra.mxu0 %v12478
      %v13247 = vpop.f32.mrf.mxu0
      %v13248 = vadd.f32 %v13151, %v13247
      %v13249 = vpop.f32.mrf.mxu0
      %v13250 = vpop.f32.mrf.mxu0
      %v13251 = vadd.f32 %v13154, %v13250
      %v13252 = vpop.f32.mrf.mxu0
      %13253 = vmatprep.mubr.bf16.mxu0 0
      %13254 = vmatmul.mubr.bf16.gmra.mxu0 %v12485
      %v13255 = vpop.f32.mrf.mxu0
      %v13256 = vadd.f32 %v13159, %v13255
      %v13257 = vpop.f32.mrf.mxu0
      %v13258 = vpop.f32.mrf.mxu0
      %v13259 = vadd.f32 %v13162, %v13258
      %v13260 = vpop.f32.mrf.mxu0
      %13261 = vmatprep.mubr.bf16.mxu0 0
      %13262 = vmatmul.mubr.bf16.gmra.mxu0 %v12492
      %v13263 = vpop.f32.mrf.mxu0
      %v13264 = vadd.f32 %v13167, %v13263
      %v13265 = vpop.f32.mrf.mxu0
      %v13266 = vpop.f32.mrf.mxu0
      %v13267 = vadd.f32 %v13170, %v13266
      %v13268 = vpop.f32.mrf.mxu0
      %13269 = vmatprep.mubr.bf16.mxu0 0
      %13270 = vmatmul.mubr.bf16.gmra.mxu0 %v12499
      %v13271 = vpop.f32.mrf.mxu0
      %v13272 = vadd.f32 %v13175, %v13271
      %v13273 = vpop.f32.mrf.mxu0
      %v13274 = vpop.f32.mrf.mxu0
      %v13275 = vadd.f32 %v13178, %v13274
      %v13276 = vpop.f32.mrf.mxu0
      %13277 = vmatprep.mubr.bf16.mxu0 0
      %13278 = vmatmul.mubr.bf16.gmra.mxu0 %v12506
      %v13279 = vpop.f32.mrf.mxu0
      %v13280 = vadd.f32 %v13183, %v13279
      %v13281 = vpop.f32.mrf.mxu0
      %v13282 = vpop.f32.mrf.mxu0
      %v13283 = vadd.f32 %v13186, %v13282
      %v13284 = vpop.f32.mrf.mxu0
      %13285 = vmatprep.mubr.bf16.mxu0 0
      %13286 = vmatmul.mubr.bf16.gmra.mxu0 %v12513
      %v13287 = vpop.f32.mrf.mxu0
      %v13288 = vadd.f32 %v13191, %v13287
      %v13289 = vpop.f32.mrf.mxu0
      %v13290 = vpop.f32.mrf.mxu0
      %v13291 = vadd.f32 %v13194, %v13290
      %v13292 = vpop.f32.mrf.mxu0
      %13293 = vdwg.mxu0
      %13294 = vst.msk [vmem:[%s204 + $0x80] sm:$0xff] %vm705, %v13232
      %13295 = vst.msk [vmem:[%s204 + $0x88] sm:$0xff] %vm705, %v13235
      %13296 = vst.msk [vmem:[%s204 + $0x90] sm:$0xff] %vm705, %v13240
      %13297 = vst.msk [vmem:[%s204 + $0x98] sm:$0xff] %vm705, %v13243
      %13298 = vst.msk [vmem:[%s204 + $0xa0] sm:$0xff] %vm705, %v13248
      %13299 = vst.msk [vmem:[%s204 + $0xa8] sm:$0xff] %vm705, %v13251
      %13300 = vst.msk [vmem:[%s204 + $0xb0] sm:$0xff] %vm705, %v13256
      %13301 = vst.msk [vmem:[%s204 + $0xb8] sm:$0xff] %vm705, %v13259
      %13302 = vst.msk [vmem:[%s204 + $0xc0] sm:$0xff] %vm705, %v13264
      %13303 = vst.msk [vmem:[%s204 + $0xc8] sm:$0xff] %vm705, %v13267
      %13304 = vst.msk [vmem:[%s204 + $0xd0] sm:$0xff] %vm705, %v13272
      %13305 = vst.msk [vmem:[%s204 + $0xd8] sm:$0xff] %vm705, %v13275
      %13306 = vst.msk [vmem:[%s204 + $0xe0] sm:$0xff] %vm705, %v13280
      %13307 = vst.msk [vmem:[%s204 + $0xe8] sm:$0xff] %vm705, %v13283
      %13308 = vst.msk [vmem:[%s204 + $0xf0] sm:$0xff] %vm705, %v13288
      %13309 = vst.msk [vmem:[%s204 + $0xf8] sm:$0xff] %vm705, %v13291
      %v13310 = vsel %vm705, %v13232, 0.0
      %v13311 = vsel %vm705, %v13235, 0.0
      %v13312 = vadd.f32 %v13310, %v13311
      %v13313 = vsel %vm705, %v13240, 0.0
      %v13314 = vadd.f32 %v13312, %v13313
      %v13315 = vsel %vm705, %v13243, 0.0
      %v13316 = vadd.f32 %v13314, %v13315
      %v13317 = vsel %vm705, %v13248, 0.0
      %v13318 = vadd.f32 %v13316, %v13317
      %v13319 = vsel %vm705, %v13251, 0.0
      %v13320 = vadd.f32 %v13318, %v13319
      %v13321 = vsel %vm705, %v13256, 0.0
      %v13322 = vadd.f32 %v13320, %v13321
      %v13323 = vsel %vm705, %v13259, 0.0
      %v13324 = vadd.f32 %v13322, %v13323
      %v13325 = vsel %vm705, %v13264, 0.0
      %v13326 = vadd.f32 %v13324, %v13325
      %v13327 = vsel %vm705, %v13267, 0.0
      %v13328 = vadd.f32 %v13326, %v13327
      %v13329 = vsel %vm705, %v13272, 0.0
      %v13330 = vadd.f32 %v13328, %v13329
      %v13331 = vsel %vm705, %v13275, 0.0
      %v13332 = vadd.f32 %v13330, %v13331
      %v13333 = vsel %vm705, %v13280, 0.0
      %v13334 = vadd.f32 %v13332, %v13333
      %v13335 = vsel %vm705, %v13283, 0.0
      %v13336 = vadd.f32 %v13334, %v13335
      %v13337 = vsel %vm705, %v13288, 0.0
      %v13338 = vadd.f32 %v13336, %v13337
      %v13339 = vsel %vm705, %v13291, 0.0
      %v13340 = vadd.f32 %v13338, %v13339
      %v13341 = vrot.slane %v13340, 4
      %v13342 = vadd.f32 %v13340, %v13341
      %v13343 = vrot.slane %v13342, 2
      %v13344 = vadd.f32 %v13342, %v13343
      %v13345 = vrot.slane %v13344, 1
      %v13346 = vadd.f32 %v13344, %v13345
      %v13347 = vadd.f32 %v6759, %v13346
      %v13348 = vmul.f32 %v13232, %v13232
      %v13349 = vmul.f32 %v13235, %v13235
      %v13350 = vmul.f32 %v13240, %v13240
      %v13351 = vmul.f32 %v13243, %v13243
      %v13352 = vmul.f32 %v13248, %v13248
      %v13353 = vmul.f32 %v13251, %v13251
      %v13354 = vmul.f32 %v13256, %v13256
      %v13355 = vmul.f32 %v13259, %v13259
      %v13356 = vmul.f32 %v13264, %v13264
      %v13357 = vmul.f32 %v13267, %v13267
      %v13358 = vmul.f32 %v13272, %v13272
      %v13359 = vmul.f32 %v13275, %v13275
      %v13360 = vmul.f32 %v13280, %v13280
      %v13361 = vmul.f32 %v13283, %v13283
      %v13362 = vmul.f32 %v13288, %v13288
      %v13363 = vmul.f32 %v13291, %v13291
      %v13364 = vsel %vm705, %v13348, 0.0
      %v13365 = vsel %vm705, %v13349, 0.0
      %v13366 = vadd.f32 %v13364, %v13365
      %v13367 = vsel %vm705, %v13350, 0.0
      %v13368 = vadd.f32 %v13366, %v13367
      %v13369 = vsel %vm705, %v13351, 0.0
      %v13370 = vadd.f32 %v13368, %v13369
      %v13371 = vsel %vm705, %v13352, 0.0
      %v13372 = vadd.f32 %v13370, %v13371
      %v13373 = vsel %vm705, %v13353, 0.0
      %v13374 = vadd.f32 %v13372, %v13373
      %v13375 = vsel %vm705, %v13354, 0.0
      %v13376 = vadd.f32 %v13374, %v13375
      %v13377 = vsel %vm705, %v13355, 0.0
      %v13378 = vadd.f32 %v13376, %v13377
      %v13379 = vsel %vm705, %v13356, 0.0
      %v13380 = vadd.f32 %v13378, %v13379
      %v13381 = vsel %vm705, %v13357, 0.0
      %v13382 = vadd.f32 %v13380, %v13381
      %v13383 = vsel %vm705, %v13358, 0.0
      %v13384 = vadd.f32 %v13382, %v13383
      %v13385 = vsel %vm705, %v13359, 0.0
      %v13386 = vadd.f32 %v13384, %v13385
      %v13387 = vsel %vm705, %v13360, 0.0
      %v13388 = vadd.f32 %v13386, %v13387
      %v13389 = vsel %vm705, %v13361, 0.0
      %v13390 = vadd.f32 %v13388, %v13389
      %v13391 = vsel %vm705, %v13362, 0.0
      %v13392 = vadd.f32 %v13390, %v13391
      %v13393 = vsel %vm705, %v13363, 0.0
      %v13394 = vadd.f32 %v13392, %v13393
      %v13395 = vrot.slane %v13394, 4
      %v13396 = vadd.f32 %v13394, %v13395
      %v13397 = vrot.slane %v13396, 2
      %v13398 = vadd.f32 %v13396, %v13397
      %v13399 = vrot.slane %v13398, 1
      %v13400 = vadd.f32 %v13398, %v13399
      %v13401 = vadd.f32 %v6813, %v13400
      %vm13402 = vcmask 1040384
      %v13403 = vsel %vm13402, %v13347, %v13401
      %vm13404 = vcmask 254976
      %13405 = vst.msk [vmem:[%s212] sm:$0x3] %vm13404, %v13403
      %s13406 = smul.u32 32, %s20
      %p13407 = scmp.lt.s32.totalorder %s19, 1
      %s13408 = scalar_select %p13407, %s19, 1
      %p13409 = scmp.lt.s32.totalorder %s13406, 31
      %s13410 = scalar_select %p13409, %s13406, 31
      %s13411 = smul.addr %s13408, 32
      %s13412 = sadd.s32 %s13410, %s13411
      %s13413 = smul.addr %s13412, 8
      %s13414 = scalar_lea.vmem %s2, %s13413
      %p13415 = scmp.lt.s32.totalorder %s19, 1
      %s13416 = scalar_select %p13415, %s19, 1
      %p13417 = scmp.lt.s32.totalorder %s20, 0
      %s13418 = scalar_select %p13417, %s20, 0
      %s13419 = sadd.s32 %s13418, %s13416
      %s13420 = smul.addr %s13419, 2
      %s13421 = scalar_lea.vmem %s3, %s13420
      // Predicated region
      $region29: #{regular_forward.2} parent=27 // pred_check
        %p13422 = pneg %p94
      $region30: #{regular_forward.2} parent=27 // pred_check_branch
        %13424 = sbr.rel (%p13422) target = $region32
      $region31: #{regular_forward.2} parent=27 // pred_region
        %s13425 = smul.u32 32, %s20
      $region32: #{regular_forward.2} parent=27 // pred_fallthru
        _
      // Predicated region
      $region33: #{regular_forward.2} parent=27 // pred_check
        %p13426 = pneg %p122
      $region34: #{regular_forward.2} parent=27 // pred_check_branch
        %13428 = sbr.rel (%p13426) target = $region36
      $region35: #{regular_forward.2} parent=27 // pred_region
        _
      $region36: #{regular_forward.2} parent=27 // pred_fallthru
        _
    $region28: #{regular_forward.2} parent=5 // pred_fallthru
      _
    %p13429 = scmp.le.s32.totalorder 2, %s10
    // Predicated region
    $region37: #{regular_forward.2} parent=5 // pred_check
      %p13430 = pneg %p13429
    $region38: #{regular_forward.2} parent=5 // pred_check_branch
      %13432 = sbr.rel (%p13430) target = $region40
    $region39: #{regular_forward.2} parent=5 // pred_region
      %s13433 = ssub.s32 %s10, 2
      // Predicated region
      $region41: #{regular_forward.2} parent=39 // pred_check
        %p13434 = pneg %p100
      $region42: #{regular_forward.2} parent=39 // pred_check_branch
        %13436 = sbr.rel (%p13434) target = $region44
      $region43: #{regular_forward.2} parent=39 // pred_region
        %s13437 = smul.u32 32, %s22
        %p13438 = scmp.lt.s32.totalorder %s21, 1
        %s13439 = scalar_select %p13438, %s21, 1
        %p13440 = scmp.lt.s32.totalorder %s13437, 31
        %s13441 = scalar_select %p13440, %s13437, 31
        %s13442 = smul.addr %s13439, 32
        %s13443 = sadd.s32 %s13441, %s13442
        %s13444 = smul.addr %s13443, 8
        %s13445 = scalar_lea.vmem %s2, %s13444
      $region44: #{regular_forward.2} parent=39 // pred_fallthru
        _
      // Predicated region
      $region45: #{regular_forward.2} parent=39 // pred_check
        %p13446 = pneg %p128
      $region46: #{regular_forward.2} parent=39 // pred_check_branch
        %13448 = sbr.rel (%p13446) target = $region48
      $region47: #{regular_forward.2} parent=39 // pred_region
        %p13449 = scmp.lt.s32.totalorder %s21, 1
        %s13450 = scalar_select %p13449, %s21, 1
        %p13451 = scmp.lt.s32.totalorder %s22, 0
        %s13452 = scalar_select %p13451, %s22, 0
        %s13453 = sadd.s32 %s13452, %s13450
        %s13454 = smul.addr %s13453, 2
        %s13455 = scalar_lea.vmem %s3, %s13454
      $region48: #{regular_forward.2} parent=39 // pred_fallthru
        _
    $region40: #{regular_forward.2} parent=5 // pred_fallthru
      _
  $region6: #{regular_forward.2} parent=0 // loop_footer
    %s14 = sadd.s32 1, %s10
  $region7: #{regular_forward.2} parent=0 // loop_footer_branch
    %9 = sbr.rel target = $region3
  $region8: #{regular_forward.2} parent=0 // loop_exit
    _

</llo_original>
